<compile_context>
chip_gen: v7x
topology: tpu7x:2x2x1
jax: 0.10.0
libtpu: 0.0.40
codegen_flags: <defaults>
</compile_context>

<pallas_src>
import numpy as np
import jax
import jax.numpy as jnp
from jax.experimental import pallas as pl
from jax.experimental.pallas import tpu as pltpu

WS = [3, 5, 7]            # windows_size
NW = len(WS)              # 3
C1 = 128                  # conv out channels per window
CH = NW * C1              # 384 packed channels
HID = 256                 # LSTM hidden / fc_cnn / fc_rnn width
KT = max(WS)              # unified tap count (7)
MAXP = (KT - 1) // 2      # 3
FEAT = 16                 # config.feature_num (synthetic)
SEQ = 8                   # config.seg_size[0] == sequence length
BATCH = 2


def _sigmoid(v):
    # tanh-form sigmoid: single EUP op, no divide on the serial LSTM chain.
    return 0.5 * jnp.tanh(0.5 * v) + 0.5


def _kernel(slab1_ref, xtb_ref,
            w1_ref, b1_ref, w2_ref, b2_ref,
            wfccnn_ref, bfccnn_ref,
            wih_ref, whh_ref, blstm_ref,
            wfcrnn_ref, bfcrnn_ref,
            wfc1_ref, bfc1_ref, wfc2_ref, bfc2_ref,
            out_ref):
    f32 = jnp.float32
    BT = slab1_ref.shape[0]          # B * T
    B = out_ref.shape[0]
    T = BT // B
    CHn = b1_ref.shape[1]            # 384
    H = whh_ref.shape[0]             # 256

    # ---------------- CNN branch ----------------
    # conv1 (3x Conv2d(1,128,(ws,F)) packed): one im2col matmul, batch folded into M.
    r1 = jnp.clip(
        jnp.dot(slab1_ref[...], w1_ref[...], preferred_element_type=f32)
        + b1_ref[...], 0.0, 6.0)                                      # (BT, 384)

    # conv2 (3x Conv2d(3,128,(ws,128)) packed): build the (BT, KT*CH) im2col slab
    # in registers (shifted slices + per-example zero-pad masks), one matmul.
    t_idx = jax.lax.broadcasted_iota(jnp.int32, (BT, CHn), 0) % T     # time of each row
    zpad = jnp.zeros((MAXP, CHn), f32)
    r1p = jnp.concatenate([zpad, r1, zpad], axis=0)                   # (BT + 6, 384)
    cols = []
    for s in range(KT):
        d = s - MAXP
        shifted = r1p[s:s + BT, :]                                    # == r1[row + d]
        valid = jnp.logical_and(t_idx + d >= 0, t_idx + d < T)        # stay inside example
        cols.append(jnp.where(valid, shifted, 0.0))
    slab2 = jnp.concatenate(cols, axis=1)                             # (BT, 2688)
    r2 = jnp.clip(
        jnp.dot(slab2, w2_ref[...], preferred_element_type=f32)
        + b2_ref[...], 0.0, 6.0)                                      # (BT, 384)

    # MaxPool1d(seg_size[0]) == full max over time, per example.
    pooled = jnp.concatenate(
        [jnp.max(r2[b * T:(b + 1) * T, :], axis=0, keepdims=True) for b in range(B)],
        axis=0)                                                       # (B, 384)
    cnn_feat = jnp.clip(
        jnp.dot(pooled, wfccnn_ref[...], preferred_element_type=f32)
        + bfccnn_ref[...], 0.0, 6.0)                                  # (B, 256)

    # ---------------- RNN branch (1-layer LSTM, zero init state) ----------------
    # Input projection hoisted out of the recurrence: one (T*B, F) @ (F, 4H) matmul.
    zx = (jnp.dot(xtb_ref[...], wih_ref[...], preferred_element_type=f32)
          + blstm_ref[...])                                           # (T*B, 4H)
    w_hh = whh_ref[...]                                               # (H, 4H)
    h = jnp.zeros((B, H), f32)
    c = jnp.zeros((B, H), f32)
    for t in range(T):   # short static sequence -> unrolled; only h @ w_hh is serial
        z = zx[t * B:(t + 1) * B, :] + jnp.dot(h, w_hh, preferred_element_type=f32)
        i_g = _sigmoid(z[:, 0:H])
        f_g = _sigmoid(z[:, H:2 * H])
        g_g = jnp.tanh(z[:, 2 * H:3 * H])
        o_g = _sigmoid(z[:, 3 * H:4 * H])
        c = f_g * c + i_g * g_g
        h = o_g * jnp.tanh(c)

    rnn_feat = jnp.maximum(
        jnp.dot(h, wfcrnn_ref[...], preferred_element_type=f32)
        + bfcrnn_ref[...], 0.0)                                       # (B, 256)

    # ------------- head: fc1(relu) on concat([cnn, rnn]), then fc2 -------------
    # concat folded into a split matmul: feat @ Wfc1 = cnn @ Wfc1[:H] + rnn @ Wfc1[H:]
    z1 = (jnp.dot(cnn_feat, wfc1_ref[0:H, :], preferred_element_type=f32)
          + jnp.dot(rnn_feat, wfc1_ref[H:2 * H, :], preferred_element_type=f32)
          + bfc1_ref[...])
    h1 = jnp.maximum(z1, 0.0)                                         # (B, 512)
    out_ref[...] = (jnp.dot(h1, wfc2_ref[...], preferred_element_type=f32)
                    + bfc2_ref[...])                                  # (B, 1)


@jax.jit
def earthquake_rnncnn_forward(x, params):
    B, T, F = x.shape
    # Layout plumbing (zero flops): im2col slab for conv1 and t-major rows for the
    # hoisted LSTM input projection.
    xp = jnp.pad(x, ((0, 0), (MAXP, MAXP), (0, 0)))                   # (B, T+6, F)
    slab1 = jnp.concatenate([xp[:, s:s + T, :] for s in range(KT)], axis=-1)
    slab1 = slab1.reshape(B * T, KT * F)                              # rows: b*T + t
    x_tb = jnp.transpose(x, (1, 0, 2)).reshape(T * B, F)              # rows: t*B + b

    args = (slab1, x_tb,
            params["w1"].reshape(KT * F, CH), params["b1"],
            params["w2"].reshape(KT * CH, CH), params["b2"],
            params["wfc_cnn"], params["bfc_cnn"],
            params["w_ih"], params["w_hh"], params["b_lstm"],
            params["wfc_rnn"], params["bfc_rnn"],
            params["wfc1"], params["bfc1"], params["wfc2"], params["bfc2"])
    vmem = pl.BlockSpec(memory_space=pltpu.MemorySpace.VMEM)
    out = pl.pallas_call(
        _kernel,
        out_shape=jax.ShapeDtypeStruct((B, 1), jnp.float32),
        in_specs=[vmem] * len(args),
        out_specs=vmem,
    )(*args)
    return out[:, 0]                                                  # final .squeeze()


def init_params(key):
    ks = iter(jax.random.split(key, 30))

    def u(shape, fan_in):
        k = 1.0 / np.sqrt(fan_in)
        return jax.random.uniform(next(ks), shape, jnp.float32, -k, k)

    # conv1: pack the three Conv2d(1,128,(ws,F)) into a centered 7-tap conv (7, F, 384).
    w1 = jnp.zeros((KT, FEAT, CH), jnp.float32)
    b1 = jnp.zeros((1, CH), jnp.float32)
    for i, ws in enumerate(WS):
        fan = 1 * ws * FEAT
        w_pt = u((C1, ws, FEAT), fan)            # torch (out, in=1, ws, F) squeezed
        b_pt = u((C1,), fan)
        off = MAXP - (ws - 1) // 2
        for s in range(ws):
            w1 = w1.at[off + s, :, i * C1:(i + 1) * C1].set(w_pt[:, s, :].T)
        b1 = b1.at[0, i * C1:(i + 1) * C1].set(b_pt)

    # conv2: pack the three Conv2d(3,128,(ws,128)) into (7, 384, 384);
    # input index = c*128 + w  (c = conv1 window index, w = conv1 out channel).
    w2 = jnp.zeros((KT, CH, CH), jnp.float32)
    b2 = jnp.zeros((1, CH), jnp.float32)
    for i, ws in enumerate(WS):
        fan = NW * ws * C1
        w_pt = u((C1, NW, ws, C1), fan)          # torch (out, in_c, ws, width)
        b_pt = u((C1,), fan)
        off = MAXP - (ws - 1) // 2
        for s in range(ws):
            blk = jnp.transpose(w_pt[:, :, s, :], (1, 2, 0)).reshape(NW * C1, C1)
            w2 = w2.at[off + s, :, i * C1:(i + 1) * C1].set(blk)
        b2 = b2.at[0, i * C1:(i + 1) * C1].set(b_pt)

    return dict(
        w1=w1, b1=b1, w2=w2, b2=b2,
        wfc_cnn=u((CH, HID), CH), bfc_cnn=u((1, HID), CH),
        w_ih=u((FEAT, 4 * HID), HID), w_hh=u((HID, 4 * HID), HID),
        b_lstm=u((1, 4 * HID), HID) + u((1, 4 * HID), HID),    # b_ih + b_hh
        wfc_rnn=u((HID, HID), HID), bfc_rnn=u((1, HID), HID),
        wfc1=u((2 * HID, 2 * HID), 2 * HID), bfc1=u((1, 2 * HID), 2 * HID),
        wfc2=u((2 * HID, 1), 2 * HID), bfc2=u((1, 1), 2 * HID),
    )


def reference_forward(x, p):
    """Pure-JAX reference implementing the same math (for correctness check)."""
    hp = jax.lax.Precision.HIGHEST
    B, T, _ = x.shape
    xp = jnp.pad(x, ((0, 0), (MAXP, MAXP), (0, 0)))
    acc1 = jnp.zeros((B, T, CH), jnp.float32)
    for s in range(KT):
        acc1 = acc1 + jnp.einsum("btf,fo->bto", xp[:, s:s + T, :], p["w1"][s], precision=hp)
    r1 = jnp.clip(acc1 + p["b1"], 0.0, 6.0)
    r1p = jnp.pad(r1, ((0, 0), (MAXP, MAXP), (0, 0)))
    acc2 = jnp.zeros((B, T, CH), jnp.float32)
    for s in range(KT):
        acc2 = acc2 + jnp.einsum("btf,fo->bto", r1p[:, s:s + T, :], p["w2"][s], precision=hp)
    r2 = jnp.clip(acc2 + p["b2"], 0.0, 6.0)
    pooled = jnp.max(r2, axis=1)
    cnn_feat = jnp.clip(jnp.dot(pooled, p["wfc_cnn"], precision=hp) + p["bfc_cnn"], 0.0, 6.0)

    def sigmoid(z):
        return 1.0 / (1.0 + jnp.exp(-z))

    h = jnp.zeros((B, HID), jnp.float32)
    c = jnp.zeros((B, HID), jnp.float32)
    for t in range(T):
        z = (jnp.dot(x[:, t, :], p["w_ih"], precision=hp)
             + jnp.dot(h, p["w_hh"], precision=hp) + p["b_lstm"])
        i_g = sigmoid(z[:, :HID]); f_g = sigmoid(z[:, HID:2 * HID])
        g_g = jnp.tanh(z[:, 2 * HID:3 * HID]); o_g = sigmoid(z[:, 3 * HID:])
        c = f_g * c + i_g * g_g
        h = o_g * jnp.tanh(c)
    rnn_feat = jnp.maximum(jnp.dot(h, p["wfc_rnn"], precision=hp) + p["bfc_rnn"], 0.0)
    feat = jnp.concatenate([cnn_feat, rnn_feat], axis=1)
    h1 = jnp.maximum(jnp.dot(feat, p["wfc1"], precision=hp) + p["bfc1"], 0.0)
    out = jnp.dot(h1, p["wfc2"], precision=hp) + p["bfc2"]
    return out[:, 0]


if __name__ == "__main__":
    key = jax.random.PRNGKey(0)
    pkey, xkey = jax.random.split(key)
    params = init_params(pkey)
    x = jax.random.normal(xkey, (BATCH, SEQ, FEAT), jnp.float32)   # (B, T, feature_num)

    out = jax.block_until_ready(earthquake_rnncnn_forward(x, params))
    ref = jax.block_until_ready(reference_forward(x, params))
    np.testing.assert_allclose(np.asarray(out), np.asarray(ref), rtol=1e-2, atol=1e-2)
    print("KERNEL_OK")
</pallas_src>

<mosaic_0001>
module attributes {stable_mosaic.version = 11 : i64} {
  func.func @_kernel(%arg0: memref<16x112xf32, #tpu.memory_space<vmem>>, %arg1: memref<16x16xf32, #tpu.memory_space<vmem>>, %arg2: memref<112x384xf32, #tpu.memory_space<vmem>>, %arg3: memref<1x384xf32, #tpu.memory_space<vmem>>, %arg4: memref<2688x384xf32, #tpu.memory_space<vmem>>, %arg5: memref<1x384xf32, #tpu.memory_space<vmem>>, %arg6: memref<384x256xf32, #tpu.memory_space<vmem>>, %arg7: memref<1x256xf32, #tpu.memory_space<vmem>>, %arg8: memref<16x1024xf32, #tpu.memory_space<vmem>>, %arg9: memref<256x1024xf32, #tpu.memory_space<vmem>>, %arg10: memref<1x1024xf32, #tpu.memory_space<vmem>>, %arg11: memref<256x256xf32, #tpu.memory_space<vmem>>, %arg12: memref<1x256xf32, #tpu.memory_space<vmem>>, %arg13: memref<512x512xf32, #tpu.memory_space<vmem>>, %arg14: memref<1x512xf32, #tpu.memory_space<vmem>>, %arg15: memref<512x1xf32, #tpu.memory_space<vmem>>, %arg16: memref<1x1xf32, #tpu.memory_space<vmem>>, %arg17: memref<2x1xf32, #tpu.memory_space<vmem>>) attributes {dimension_semantics = [], scalar_prefetch = 0 : i64, scratch_operands = 0 : i64, tpu.core_type = #tpu.core_type<tc>} {
    %c0 = arith.constant 0 : index
    %c0_0 = arith.constant 0 : index
    %0 = vector.load %arg0[%c0, %c0_0] : memref<16x112xf32, #tpu.memory_space<vmem>>, vector<16x112xf32>
    %c0_1 = arith.constant 0 : index
    %c0_2 = arith.constant 0 : index
    %1 = vector.load %arg2[%c0_1, %c0_2] : memref<112x384xf32, #tpu.memory_space<vmem>>, vector<112x384xf32>
    %cst = arith.constant dense<0.000000e+00> : vector<16x384xf32>
    %2 = tpu.matmul %0, %1, %cst {dimension_numbers = #tpu.dot_dimension_numbers<[1], [0], [0], [1], [0, 0, 1, 1], [], []>} : vector<16x112xf32>, vector<112x384xf32>, vector<16x384xf32> -> vector<16x384xf32>
    %c0_3 = arith.constant 0 : index
    %c0_4 = arith.constant 0 : index
    %3 = vector.load %arg3[%c0_3, %c0_4] : memref<1x384xf32, #tpu.memory_space<vmem>>, vector<1x384xf32>
    %4 = vector.broadcast %3 : vector<1x384xf32> to vector<16x384xf32>
    %5 = arith.addf %2, %4 : vector<16x384xf32>
    %cst_5 = arith.constant 0.000000e+00 : f32
    %cst_6 = arith.constant 6.000000e+00 : f32
    %6 = vector.broadcast %cst_5 : f32 to vector<16x384xf32>
    %7 = arith.maximumf %6, %5 : vector<16x384xf32>
    %8 = vector.broadcast %cst_6 : f32 to vector<16x384xf32>
    %9 = arith.minimumf %8, %7 : vector<16x384xf32>
    %10 = tpu.iota {dimensions = array<i32: 0>} : vector<16x384xi32>
    %c8_i32 = arith.constant 8 : i32
    %c0_i32 = arith.constant 0 : i32
    %11 = arith.cmpi eq, %c8_i32, %c0_i32 : i32
    %c1_i32 = arith.constant 1 : i32
    %12 = arith.select %11, %c1_i32, %c8_i32 : i32
    %13 = vector.broadcast %12 : i32 to vector<16x384xi32>
    %14 = arith.remsi %10, %13 : vector<16x384xi32>
    %c0_i32_7 = arith.constant 0 : i32
    %15 = vector.broadcast %c0_i32_7 : i32 to vector<16x384xi32>
    %16 = arith.cmpi ne, %14, %15 : vector<16x384xi32>
    %c0_i32_8 = arith.constant 0 : i32
    %17 = vector.broadcast %c0_i32_8 : i32 to vector<16x384xi32>
    %18 = arith.cmpi slt, %14, %17 : vector<16x384xi32>
    %c0_i32_9 = arith.constant 0 : i32
    %19 = arith.cmpi slt, %12, %c0_i32_9 : i32
    %20 = vector.broadcast %19 : i1 to vector<16x384xi1>
    %21 = vector.broadcast %20 : vector<16x384xi1> to vector<16x384xi1>
    %22 = arith.xori %18, %21 : vector<16x384xi1>
    %23 = arith.andi %22, %16 : vector<16x384xi1>
    %24 = vector.broadcast %12 : i32 to vector<16x384xi32>
    %25 = arith.addi %14, %24 : vector<16x384xi32>
    %26 = arith.select %23, %25, %14 : vector<16x384xi1>, vector<16x384xi32>
    %cst_10 = arith.constant 0.000000e+00 : f32
    %27 = vector.broadcast %cst_10 : f32 to vector<3x384xf32>
    %28 = tpu.concatenate %27, %9, %27 in 0 : vector<3x384xf32>, vector<16x384xf32>, vector<3x384xf32> -> vector<22x384xf32>
    %29 = vector.extract_strided_slice %28 {offsets = [0, 0], sizes = [16, 384], strides = [1, 1]} : vector<22x384xf32> to vector<16x384xf32>
    %c-3_i32 = arith.constant -3 : i32
    %30 = vector.broadcast %c-3_i32 : i32 to vector<16x384xi32>
    %31 = arith.addi %26, %30 : vector<16x384xi32>
    %c0_i32_11 = arith.constant 0 : i32
    %32 = vector.broadcast %c0_i32_11 : i32 to vector<16x384xi32>
    %33 = arith.cmpi sge, %31, %32 : vector<16x384xi32>
    %c-3_i32_12 = arith.constant -3 : i32
    %34 = vector.broadcast %c-3_i32_12 : i32 to vector<16x384xi32>
    %35 = arith.addi %26, %34 : vector<16x384xi32>
    %c8_i32_13 = arith.constant 8 : i32
    %36 = vector.broadcast %c8_i32_13 : i32 to vector<16x384xi32>
    %37 = arith.cmpi slt, %35, %36 : vector<16x384xi32>
    %38 = arith.andi %33, %37 : vector<16x384xi1>
    %cst_14 = arith.constant 0.000000e+00 : f32
    %39 = vector.broadcast %cst_14 : f32 to vector<16x384xf32>
    %40 = arith.select %38, %29, %39 : vector<16x384xi1>, vector<16x384xf32>
    %41 = vector.extract_strided_slice %28 {offsets = [1, 0], sizes = [16, 384], strides = [1, 1]} : vector<22x384xf32> to vector<16x384xf32>
    %c-2_i32 = arith.constant -2 : i32
    %42 = vector.broadcast %c-2_i32 : i32 to vector<16x384xi32>
    %43 = arith.addi %26, %42 : vector<16x384xi32>
    %c0_i32_15 = arith.constant 0 : i32
    %44 = vector.broadcast %c0_i32_15 : i32 to vector<16x384xi32>
    %45 = arith.cmpi sge, %43, %44 : vector<16x384xi32>
    %c-2_i32_16 = arith.constant -2 : i32
    %46 = vector.broadcast %c-2_i32_16 : i32 to vector<16x384xi32>
    %47 = arith.addi %26, %46 : vector<16x384xi32>
    %c8_i32_17 = arith.constant 8 : i32
    %48 = vector.broadcast %c8_i32_17 : i32 to vector<16x384xi32>
    %49 = arith.cmpi slt, %47, %48 : vector<16x384xi32>
    %50 = arith.andi %45, %49 : vector<16x384xi1>
    %cst_18 = arith.constant 0.000000e+00 : f32
    %51 = vector.broadcast %cst_18 : f32 to vector<16x384xf32>
    %52 = arith.select %50, %41, %51 : vector<16x384xi1>, vector<16x384xf32>
    %53 = vector.extract_strided_slice %28 {offsets = [2, 0], sizes = [16, 384], strides = [1, 1]} : vector<22x384xf32> to vector<16x384xf32>
    %c-1_i32 = arith.constant -1 : i32
    %54 = vector.broadcast %c-1_i32 : i32 to vector<16x384xi32>
    %55 = arith.addi %26, %54 : vector<16x384xi32>
    %c0_i32_19 = arith.constant 0 : i32
    %56 = vector.broadcast %c0_i32_19 : i32 to vector<16x384xi32>
    %57 = arith.cmpi sge, %55, %56 : vector<16x384xi32>
    %c-1_i32_20 = arith.constant -1 : i32
    %58 = vector.broadcast %c-1_i32_20 : i32 to vector<16x384xi32>
    %59 = arith.addi %26, %58 : vector<16x384xi32>
    %c8_i32_21 = arith.constant 8 : i32
    %60 = vector.broadcast %c8_i32_21 : i32 to vector<16x384xi32>
    %61 = arith.cmpi slt, %59, %60 : vector<16x384xi32>
    %62 = arith.andi %57, %61 : vector<16x384xi1>
    %cst_22 = arith.constant 0.000000e+00 : f32
    %63 = vector.broadcast %cst_22 : f32 to vector<16x384xf32>
    %64 = arith.select %62, %53, %63 : vector<16x384xi1>, vector<16x384xf32>
    %65 = vector.extract_strided_slice %28 {offsets = [3, 0], sizes = [16, 384], strides = [1, 1]} : vector<22x384xf32> to vector<16x384xf32>
    %c0_i32_23 = arith.constant 0 : i32
    %66 = vector.broadcast %c0_i32_23 : i32 to vector<16x384xi32>
    %67 = arith.addi %26, %66 : vector<16x384xi32>
    %c0_i32_24 = arith.constant 0 : i32
    %68 = vector.broadcast %c0_i32_24 : i32 to vector<16x384xi32>
    %69 = arith.cmpi sge, %67, %68 : vector<16x384xi32>
    %c0_i32_25 = arith.constant 0 : i32
    %70 = vector.broadcast %c0_i32_25 : i32 to vector<16x384xi32>
    %71 = arith.addi %26, %70 : vector<16x384xi32>
    %c8_i32_26 = arith.constant 8 : i32
    %72 = vector.broadcast %c8_i32_26 : i32 to vector<16x384xi32>
    %73 = arith.cmpi slt, %71, %72 : vector<16x384xi32>
    %74 = arith.andi %69, %73 : vector<16x384xi1>
    %cst_27 = arith.constant 0.000000e+00 : f32
    %75 = vector.broadcast %cst_27 : f32 to vector<16x384xf32>
    %76 = arith.select %74, %65, %75 : vector<16x384xi1>, vector<16x384xf32>
    %77 = vector.extract_strided_slice %28 {offsets = [4, 0], sizes = [16, 384], strides = [1, 1]} : vector<22x384xf32> to vector<16x384xf32>
    %c1_i32_28 = arith.constant 1 : i32
    %78 = vector.broadcast %c1_i32_28 : i32 to vector<16x384xi32>
    %79 = arith.addi %26, %78 : vector<16x384xi32>
    %c0_i32_29 = arith.constant 0 : i32
    %80 = vector.broadcast %c0_i32_29 : i32 to vector<16x384xi32>
    %81 = arith.cmpi sge, %79, %80 : vector<16x384xi32>
    %c1_i32_30 = arith.constant 1 : i32
    %82 = vector.broadcast %c1_i32_30 : i32 to vector<16x384xi32>
    %83 = arith.addi %26, %82 : vector<16x384xi32>
    %c8_i32_31 = arith.constant 8 : i32
    %84 = vector.broadcast %c8_i32_31 : i32 to vector<16x384xi32>
    %85 = arith.cmpi slt, %83, %84 : vector<16x384xi32>
    %86 = arith.andi %81, %85 : vector<16x384xi1>
    %cst_32 = arith.constant 0.000000e+00 : f32
    %87 = vector.broadcast %cst_32 : f32 to vector<16x384xf32>
    %88 = arith.select %86, %77, %87 : vector<16x384xi1>, vector<16x384xf32>
    %89 = vector.extract_strided_slice %28 {offsets = [5, 0], sizes = [16, 384], strides = [1, 1]} : vector<22x384xf32> to vector<16x384xf32>
    %c2_i32 = arith.constant 2 : i32
    %90 = vector.broadcast %c2_i32 : i32 to vector<16x384xi32>
    %91 = arith.addi %26, %90 : vector<16x384xi32>
    %c0_i32_33 = arith.constant 0 : i32
    %92 = vector.broadcast %c0_i32_33 : i32 to vector<16x384xi32>
    %93 = arith.cmpi sge, %91, %92 : vector<16x384xi32>
    %c2_i32_34 = arith.constant 2 : i32
    %94 = vector.broadcast %c2_i32_34 : i32 to vector<16x384xi32>
    %95 = arith.addi %26, %94 : vector<16x384xi32>
    %c8_i32_35 = arith.constant 8 : i32
    %96 = vector.broadcast %c8_i32_35 : i32 to vector<16x384xi32>
    %97 = arith.cmpi slt, %95, %96 : vector<16x384xi32>
    %98 = arith.andi %93, %97 : vector<16x384xi1>
    %cst_36 = arith.constant 0.000000e+00 : f32
    %99 = vector.broadcast %cst_36 : f32 to vector<16x384xf32>
    %100 = arith.select %98, %89, %99 : vector<16x384xi1>, vector<16x384xf32>
    %101 = vector.extract_strided_slice %28 {offsets = [6, 0], sizes = [16, 384], strides = [1, 1]} : vector<22x384xf32> to vector<16x384xf32>
    %c3_i32 = arith.constant 3 : i32
    %102 = vector.broadcast %c3_i32 : i32 to vector<16x384xi32>
    %103 = arith.addi %26, %102 : vector<16x384xi32>
    %c0_i32_37 = arith.constant 0 : i32
    %104 = vector.broadcast %c0_i32_37 : i32 to vector<16x384xi32>
    %105 = arith.cmpi sge, %103, %104 : vector<16x384xi32>
    %c3_i32_38 = arith.constant 3 : i32
    %106 = vector.broadcast %c3_i32_38 : i32 to vector<16x384xi32>
    %107 = arith.addi %26, %106 : vector<16x384xi32>
    %c8_i32_39 = arith.constant 8 : i32
    %108 = vector.broadcast %c8_i32_39 : i32 to vector<16x384xi32>
    %109 = arith.cmpi slt, %107, %108 : vector<16x384xi32>
    %110 = arith.andi %105, %109 : vector<16x384xi1>
    %cst_40 = arith.constant 0.000000e+00 : f32
    %111 = vector.broadcast %cst_40 : f32 to vector<16x384xf32>
    %112 = arith.select %110, %101, %111 : vector<16x384xi1>, vector<16x384xf32>
    %113 = tpu.concatenate %40, %52, %64, %76, %88, %100, %112 in 1 : vector<16x384xf32>, vector<16x384xf32>, vector<16x384xf32>, vector<16x384xf32>, vector<16x384xf32>, vector<16x384xf32>, vector<16x384xf32> -> vector<16x2688xf32>
    %c0_41 = arith.constant 0 : index
    %c0_42 = arith.constant 0 : index
    %114 = vector.load %arg4[%c0_41, %c0_42] : memref<2688x384xf32, #tpu.memory_space<vmem>>, vector<2688x384xf32>
    %cst_43 = arith.constant dense<0.000000e+00> : vector<16x384xf32>
    %115 = tpu.matmul %113, %114, %cst_43 {dimension_numbers = #tpu.dot_dimension_numbers<[1], [0], [0], [1], [0, 0, 1, 1], [], []>} : vector<16x2688xf32>, vector<2688x384xf32>, vector<16x384xf32> -> vector<16x384xf32>
    %c0_44 = arith.constant 0 : index
    %c0_45 = arith.constant 0 : index
    %116 = vector.load %arg5[%c0_44, %c0_45] : memref<1x384xf32, #tpu.memory_space<vmem>>, vector<1x384xf32>
    %117 = vector.broadcast %116 : vector<1x384xf32> to vector<16x384xf32>
    %118 = arith.addf %115, %117 : vector<16x384xf32>
    %cst_46 = arith.constant 0.000000e+00 : f32
    %cst_47 = arith.constant 6.000000e+00 : f32
    %119 = vector.broadcast %cst_46 : f32 to vector<16x384xf32>
    %120 = arith.maximumf %119, %118 : vector<16x384xf32>
    %121 = vector.broadcast %cst_47 : f32 to vector<16x384xf32>
    %122 = arith.minimumf %121, %120 : vector<16x384xf32>
    %123 = vector.extract_strided_slice %122 {offsets = [0, 0], sizes = [8, 384], strides = [1, 1]} : vector<16x384xf32> to vector<8x384xf32>
    %cst_48 = arith.constant dense<0xFF800000> : vector<384xf32>
    %124 = vector.multi_reduction <maximumf>, %123, %cst_48 [0] : vector<8x384xf32> to vector<384xf32>
    %125 = vector.shape_cast %124 : vector<384xf32> to vector<1x384xf32>
    %126 = vector.extract_strided_slice %122 {offsets = [8, 0], sizes = [8, 384], strides = [1, 1]} : vector<16x384xf32> to vector<8x384xf32>
    %cst_49 = arith.constant dense<0xFF800000> : vector<384xf32>
    %127 = vector.multi_reduction <maximumf>, %126, %cst_49 [0] : vector<8x384xf32> to vector<384xf32>
    %128 = vector.shape_cast %127 : vector<384xf32> to vector<1x384xf32>
    %129 = tpu.concatenate %125, %128 in 0 : vector<1x384xf32>, vector<1x384xf32> -> vector<2x384xf32>
    %c0_50 = arith.constant 0 : index
    %c0_51 = arith.constant 0 : index
    %130 = vector.load %arg6[%c0_50, %c0_51] : memref<384x256xf32, #tpu.memory_space<vmem>>, vector<384x256xf32>
    %cst_52 = arith.constant dense<0.000000e+00> : vector<2x256xf32>
    %131 = tpu.matmul %129, %130, %cst_52 {dimension_numbers = #tpu.dot_dimension_numbers<[1], [0], [0], [1], [0, 0, 1, 1], [], []>} : vector<2x384xf32>, vector<384x256xf32>, vector<2x256xf32> -> vector<2x256xf32>
    %c0_53 = arith.constant 0 : index
    %c0_54 = arith.constant 0 : index
    %132 = vector.load %arg7[%c0_53, %c0_54] : memref<1x256xf32, #tpu.memory_space<vmem>>, vector<1x256xf32>
    %133 = vector.broadcast %132 : vector<1x256xf32> to vector<2x256xf32>
    %134 = arith.addf %131, %133 : vector<2x256xf32>
    %cst_55 = arith.constant 0.000000e+00 : f32
    %cst_56 = arith.constant 6.000000e+00 : f32
    %135 = vector.broadcast %cst_55 : f32 to vector<2x256xf32>
    %136 = arith.maximumf %135, %134 : vector<2x256xf32>
    %137 = vector.broadcast %cst_56 : f32 to vector<2x256xf32>
    %138 = arith.minimumf %137, %136 : vector<2x256xf32>
    %c0_57 = arith.constant 0 : index
    %c0_58 = arith.constant 0 : index
    %139 = vector.load %arg1[%c0_57, %c0_58] : memref<16x16xf32, #tpu.memory_space<vmem>>, vector<16x16xf32>
    %c0_59 = arith.constant 0 : index
    %c0_60 = arith.constant 0 : index
    %140 = vector.load %arg8[%c0_59, %c0_60] : memref<16x1024xf32, #tpu.memory_space<vmem>>, vector<16x1024xf32>
    %cst_61 = arith.constant dense<0.000000e+00> : vector<16x1024xf32>
    %141 = tpu.matmul %139, %140, %cst_61 {dimension_numbers = #tpu.dot_dimension_numbers<[1], [0], [0], [1], [0, 0, 1, 1], [], []>} : vector<16x16xf32>, vector<16x1024xf32>, vector<16x1024xf32> -> vector<16x1024xf32>
    %c0_62 = arith.constant 0 : index
    %c0_63 = arith.constant 0 : index
    %142 = vector.load %arg10[%c0_62, %c0_63] : memref<1x1024xf32, #tpu.memory_space<vmem>>, vector<1x1024xf32>
    %143 = vector.broadcast %142 : vector<1x1024xf32> to vector<16x1024xf32>
    %144 = arith.addf %141, %143 : vector<16x1024xf32>
    %c0_64 = arith.constant 0 : index
    %c0_65 = arith.constant 0 : index
    %145 = vector.load %arg9[%c0_64, %c0_65] : memref<256x1024xf32, #tpu.memory_space<vmem>>, vector<256x1024xf32>
    %cst_66 = arith.constant 0.000000e+00 : f32
    %146 = vector.broadcast %cst_66 : f32 to vector<2x256xf32>
    %cst_67 = arith.constant 0.000000e+00 : f32
    %147 = vector.broadcast %cst_67 : f32 to vector<2x256xf32>
    %148 = vector.extract_strided_slice %144 {offsets = [0, 0], sizes = [2, 1024], strides = [1, 1]} : vector<16x1024xf32> to vector<2x1024xf32>
    %cst_68 = arith.constant dense<0.000000e+00> : vector<2x1024xf32>
    %149 = tpu.matmul %146, %145, %cst_68 {dimension_numbers = #tpu.dot_dimension_numbers<[1], [0], [0], [1], [0, 0, 1, 1], [], []>} : vector<2x256xf32>, vector<256x1024xf32>, vector<2x1024xf32> -> vector<2x1024xf32>
    %150 = arith.addf %148, %149 : vector<2x1024xf32>
    %151 = vector.extract_strided_slice %150 {offsets = [0, 0], sizes = [2, 256], strides = [1, 1]} : vector<2x1024xf32> to vector<2x256xf32>
    %cst_69 = arith.constant 5.000000e-01 : f32
    %152 = vector.broadcast %cst_69 : f32 to vector<2x256xf32>
    %153 = arith.mulf %152, %151 : vector<2x256xf32>
    %154 = math.tanh %153 : vector<2x256xf32>
    %cst_70 = arith.constant 5.000000e-01 : f32
    %155 = vector.broadcast %cst_70 : f32 to vector<2x256xf32>
    %156 = arith.mulf %155, %154 : vector<2x256xf32>
    %cst_71 = arith.constant 5.000000e-01 : f32
    %157 = vector.broadcast %cst_71 : f32 to vector<2x256xf32>
    %158 = arith.addf %156, %157 : vector<2x256xf32>
    %159 = vector.extract_strided_slice %150 {offsets = [0, 256], sizes = [2, 256], strides = [1, 1]} : vector<2x1024xf32> to vector<2x256xf32>
    %cst_72 = arith.constant 5.000000e-01 : f32
    %160 = vector.broadcast %cst_72 : f32 to vector<2x256xf32>
    %161 = arith.mulf %160, %159 : vector<2x256xf32>
    %162 = math.tanh %161 : vector<2x256xf32>
    %cst_73 = arith.constant 5.000000e-01 : f32
    %163 = vector.broadcast %cst_73 : f32 to vector<2x256xf32>
    %164 = arith.mulf %163, %162 : vector<2x256xf32>
    %cst_74 = arith.constant 5.000000e-01 : f32
    %165 = vector.broadcast %cst_74 : f32 to vector<2x256xf32>
    %166 = arith.addf %164, %165 : vector<2x256xf32>
    %167 = vector.extract_strided_slice %150 {offsets = [0, 512], sizes = [2, 256], strides = [1, 1]} : vector<2x1024xf32> to vector<2x256xf32>
    %168 = math.tanh %167 : vector<2x256xf32>
    %169 = vector.extract_strided_slice %150 {offsets = [0, 768], sizes = [2, 256], strides = [1, 1]} : vector<2x1024xf32> to vector<2x256xf32>
    %cst_75 = arith.constant 5.000000e-01 : f32
    %170 = vector.broadcast %cst_75 : f32 to vector<2x256xf32>
    %171 = arith.mulf %170, %169 : vector<2x256xf32>
    %172 = math.tanh %171 : vector<2x256xf32>
    %cst_76 = arith.constant 5.000000e-01 : f32
    %173 = vector.broadcast %cst_76 : f32 to vector<2x256xf32>
    %174 = arith.mulf %173, %172 : vector<2x256xf32>
    %cst_77 = arith.constant 5.000000e-01 : f32
    %175 = vector.broadcast %cst_77 : f32 to vector<2x256xf32>
    %176 = arith.addf %174, %175 : vector<2x256xf32>
    %177 = arith.mulf %166, %147 : vector<2x256xf32>
    %178 = arith.mulf %158, %168 : vector<2x256xf32>
    %179 = arith.addf %177, %178 : vector<2x256xf32>
    %180 = math.tanh %179 : vector<2x256xf32>
    %181 = arith.mulf %176, %180 : vector<2x256xf32>
    %182 = vector.extract_strided_slice %144 {offsets = [2, 0], sizes = [2, 1024], strides = [1, 1]} : vector<16x1024xf32> to vector<2x1024xf32>
    %cst_78 = arith.constant dense<0.000000e+00> : vector<2x1024xf32>
    %183 = tpu.matmul %181, %145, %cst_78 {dimension_numbers = #tpu.dot_dimension_numbers<[1], [0], [0], [1], [0, 0, 1, 1], [], []>} : vector<2x256xf32>, vector<256x1024xf32>, vector<2x1024xf32> -> vector<2x1024xf32>
    %184 = arith.addf %182, %183 : vector<2x1024xf32>
    %185 = vector.extract_strided_slice %184 {offsets = [0, 0], sizes = [2, 256], strides = [1, 1]} : vector<2x1024xf32> to vector<2x256xf32>
    %cst_79 = arith.constant 5.000000e-01 : f32
    %186 = vector.broadcast %cst_79 : f32 to vector<2x256xf32>
    %187 = arith.mulf %186, %185 : vector<2x256xf32>
    %188 = math.tanh %187 : vector<2x256xf32>
    %cst_80 = arith.constant 5.000000e-01 : f32
    %189 = vector.broadcast %cst_80 : f32 to vector<2x256xf32>
    %190 = arith.mulf %189, %188 : vector<2x256xf32>
    %cst_81 = arith.constant 5.000000e-01 : f32
    %191 = vector.broadcast %cst_81 : f32 to vector<2x256xf32>
    %192 = arith.addf %190, %191 : vector<2x256xf32>
    %193 = vector.extract_strided_slice %184 {offsets = [0, 256], sizes = [2, 256], strides = [1, 1]} : vector<2x1024xf32> to vector<2x256xf32>
    %cst_82 = arith.constant 5.000000e-01 : f32
    %194 = vector.broadcast %cst_82 : f32 to vector<2x256xf32>
    %195 = arith.mulf %194, %193 : vector<2x256xf32>
    %196 = math.tanh %195 : vector<2x256xf32>
    %cst_83 = arith.constant 5.000000e-01 : f32
    %197 = vector.broadcast %cst_83 : f32 to vector<2x256xf32>
    %198 = arith.mulf %197, %196 : vector<2x256xf32>
    %cst_84 = arith.constant 5.000000e-01 : f32
    %199 = vector.broadcast %cst_84 : f32 to vector<2x256xf32>
    %200 = arith.addf %198, %199 : vector<2x256xf32>
    %201 = vector.extract_strided_slice %184 {offsets = [0, 512], sizes = [2, 256], strides = [1, 1]} : vector<2x1024xf32> to vector<2x256xf32>
    %202 = math.tanh %201 : vector<2x256xf32>
    %203 = vector.extract_strided_slice %184 {offsets = [0, 768], sizes = [2, 256], strides = [1, 1]} : vector<2x1024xf32> to vector<2x256xf32>
    %cst_85 = arith.constant 5.000000e-01 : f32
    %204 = vector.broadcast %cst_85 : f32 to vector<2x256xf32>
    %205 = arith.mulf %204, %203 : vector<2x256xf32>
    %206 = math.tanh %205 : vector<2x256xf32>
    %cst_86 = arith.constant 5.000000e-01 : f32
    %207 = vector.broadcast %cst_86 : f32 to vector<2x256xf32>
    %208 = arith.mulf %207, %206 : vector<2x256xf32>
    %cst_87 = arith.constant 5.000000e-01 : f32
    %209 = vector.broadcast %cst_87 : f32 to vector<2x256xf32>
    %210 = arith.addf %208, %209 : vector<2x256xf32>
    %211 = arith.mulf %200, %179 : vector<2x256xf32>
    %212 = arith.mulf %192, %202 : vector<2x256xf32>
    %213 = arith.addf %211, %212 : vector<2x256xf32>
    %214 = math.tanh %213 : vector<2x256xf32>
    %215 = arith.mulf %210, %214 : vector<2x256xf32>
    %216 = vector.extract_strided_slice %144 {offsets = [4, 0], sizes = [2, 1024], strides = [1, 1]} : vector<16x1024xf32> to vector<2x1024xf32>
    %cst_88 = arith.constant dense<0.000000e+00> : vector<2x1024xf32>
    %217 = tpu.matmul %215, %145, %cst_88 {dimension_numbers = #tpu.dot_dimension_numbers<[1], [0], [0], [1], [0, 0, 1, 1], [], []>} : vector<2x256xf32>, vector<256x1024xf32>, vector<2x1024xf32> -> vector<2x1024xf32>
    %218 = arith.addf %216, %217 : vector<2x1024xf32>
    %219 = vector.extract_strided_slice %218 {offsets = [0, 0], sizes = [2, 256], strides = [1, 1]} : vector<2x1024xf32> to vector<2x256xf32>
    %cst_89 = arith.constant 5.000000e-01 : f32
    %220 = vector.broadcast %cst_89 : f32 to vector<2x256xf32>
    %221 = arith.mulf %220, %219 : vector<2x256xf32>
    %222 = math.tanh %221 : vector<2x256xf32>
    %cst_90 = arith.constant 5.000000e-01 : f32
    %223 = vector.broadcast %cst_90 : f32 to vector<2x256xf32>
    %224 = arith.mulf %223, %222 : vector<2x256xf32>
    %cst_91 = arith.constant 5.000000e-01 : f32
    %225 = vector.broadcast %cst_91 : f32 to vector<2x256xf32>
    %226 = arith.addf %224, %225 : vector<2x256xf32>
    %227 = vector.extract_strided_slice %218 {offsets = [0, 256], sizes = [2, 256], strides = [1, 1]} : vector<2x1024xf32> to vector<2x256xf32>
    %cst_92 = arith.constant 5.000000e-01 : f32
    %228 = vector.broadcast %cst_92 : f32 to vector<2x256xf32>
    %229 = arith.mulf %228, %227 : vector<2x256xf32>
    %230 = math.tanh %229 : vector<2x256xf32>
    %cst_93 = arith.constant 5.000000e-01 : f32
    %231 = vector.broadcast %cst_93 : f32 to vector<2x256xf32>
    %232 = arith.mulf %231, %230 : vector<2x256xf32>
    %cst_94 = arith.constant 5.000000e-01 : f32
    %233 = vector.broadcast %cst_94 : f32 to vector<2x256xf32>
    %234 = arith.addf %232, %233 : vector<2x256xf32>
    %235 = vector.extract_strided_slice %218 {offsets = [0, 512], sizes = [2, 256], strides = [1, 1]} : vector<2x1024xf32> to vector<2x256xf32>
    %236 = math.tanh %235 : vector<2x256xf32>
    %237 = vector.extract_strided_slice %218 {offsets = [0, 768], sizes = [2, 256], strides = [1, 1]} : vector<2x1024xf32> to vector<2x256xf32>
    %cst_95 = arith.constant 5.000000e-01 : f32
    %238 = vector.broadcast %cst_95 : f32 to vector<2x256xf32>
    %239 = arith.mulf %238, %237 : vector<2x256xf32>
    %240 = math.tanh %239 : vector<2x256xf32>
    %cst_96 = arith.constant 5.000000e-01 : f32
    %241 = vector.broadcast %cst_96 : f32 to vector<2x256xf32>
    %242 = arith.mulf %241, %240 : vector<2x256xf32>
    %cst_97 = arith.constant 5.000000e-01 : f32
    %243 = vector.broadcast %cst_97 : f32 to vector<2x256xf32>
    %244 = arith.addf %242, %243 : vector<2x256xf32>
    %245 = arith.mulf %234, %213 : vector<2x256xf32>
    %246 = arith.mulf %226, %236 : vector<2x256xf32>
    %247 = arith.addf %245, %246 : vector<2x256xf32>
    %248 = math.tanh %247 : vector<2x256xf32>
    %249 = arith.mulf %244, %248 : vector<2x256xf32>
    %250 = vector.extract_strided_slice %144 {offsets = [6, 0], sizes = [2, 1024], strides = [1, 1]} : vector<16x1024xf32> to vector<2x1024xf32>
    %cst_98 = arith.constant dense<0.000000e+00> : vector<2x1024xf32>
    %251 = tpu.matmul %249, %145, %cst_98 {dimension_numbers = #tpu.dot_dimension_numbers<[1], [0], [0], [1], [0, 0, 1, 1], [], []>} : vector<2x256xf32>, vector<256x1024xf32>, vector<2x1024xf32> -> vector<2x1024xf32>
    %252 = arith.addf %250, %251 : vector<2x1024xf32>
    %253 = vector.extract_strided_slice %252 {offsets = [0, 0], sizes = [2, 256], strides = [1, 1]} : vector<2x1024xf32> to vector<2x256xf32>
    %cst_99 = arith.constant 5.000000e-01 : f32
    %254 = vector.broadcast %cst_99 : f32 to vector<2x256xf32>
    %255 = arith.mulf %254, %253 : vector<2x256xf32>
    %256 = math.tanh %255 : vector<2x256xf32>
    %cst_100 = arith.constant 5.000000e-01 : f32
    %257 = vector.broadcast %cst_100 : f32 to vector<2x256xf32>
    %258 = arith.mulf %257, %256 : vector<2x256xf32>
    %cst_101 = arith.constant 5.000000e-01 : f32
    %259 = vector.broadcast %cst_101 : f32 to vector<2x256xf32>
    %260 = arith.addf %258, %259 : vector<2x256xf32>
    %261 = vector.extract_strided_slice %252 {offsets = [0, 256], sizes = [2, 256], strides = [1, 1]} : vector<2x1024xf32> to vector<2x256xf32>
    %cst_102 = arith.constant 5.000000e-01 : f32
    %262 = vector.broadcast %cst_102 : f32 to vector<2x256xf32>
    %263 = arith.mulf %262, %261 : vector<2x256xf32>
    %264 = math.tanh %263 : vector<2x256xf32>
    %cst_103 = arith.constant 5.000000e-01 : f32
    %265 = vector.broadcast %cst_103 : f32 to vector<2x256xf32>
    %266 = arith.mulf %265, %264 : vector<2x256xf32>
    %cst_104 = arith.constant 5.000000e-01 : f32
    %267 = vector.broadcast %cst_104 : f32 to vector<2x256xf32>
    %268 = arith.addf %266, %267 : vector<2x256xf32>
    %269 = vector.extract_strided_slice %252 {offsets = [0, 512], sizes = [2, 256], strides = [1, 1]} : vector<2x1024xf32> to vector<2x256xf32>
    %270 = math.tanh %269 : vector<2x256xf32>
    %271 = vector.extract_strided_slice %252 {offsets = [0, 768], sizes = [2, 256], strides = [1, 1]} : vector<2x1024xf32> to vector<2x256xf32>
    %cst_105 = arith.constant 5.000000e-01 : f32
    %272 = vector.broadcast %cst_105 : f32 to vector<2x256xf32>
    %273 = arith.mulf %272, %271 : vector<2x256xf32>
    %274 = math.tanh %273 : vector<2x256xf32>
    %cst_106 = arith.constant 5.000000e-01 : f32
    %275 = vector.broadcast %cst_106 : f32 to vector<2x256xf32>
    %276 = arith.mulf %275, %274 : vector<2x256xf32>
    %cst_107 = arith.constant 5.000000e-01 : f32
    %277 = vector.broadcast %cst_107 : f32 to vector<2x256xf32>
    %278 = arith.addf %276, %277 : vector<2x256xf32>
    %279 = arith.mulf %268, %247 : vector<2x256xf32>
    %280 = arith.mulf %260, %270 : vector<2x256xf32>
    %281 = arith.addf %279, %280 : vector<2x256xf32>
    %282 = math.tanh %281 : vector<2x256xf32>
    %283 = arith.mulf %278, %282 : vector<2x256xf32>
    %284 = vector.extract_strided_slice %144 {offsets = [8, 0], sizes = [2, 1024], strides = [1, 1]} : vector<16x1024xf32> to vector<2x1024xf32>
    %cst_108 = arith.constant dense<0.000000e+00> : vector<2x1024xf32>
    %285 = tpu.matmul %283, %145, %cst_108 {dimension_numbers = #tpu.dot_dimension_numbers<[1], [0], [0], [1], [0, 0, 1, 1], [], []>} : vector<2x256xf32>, vector<256x1024xf32>, vector<2x1024xf32> -> vector<2x1024xf32>
    %286 = arith.addf %284, %285 : vector<2x1024xf32>
    %287 = vector.extract_strided_slice %286 {offsets = [0, 0], sizes = [2, 256], strides = [1, 1]} : vector<2x1024xf32> to vector<2x256xf32>
    %cst_109 = arith.constant 5.000000e-01 : f32
    %288 = vector.broadcast %cst_109 : f32 to vector<2x256xf32>
    %289 = arith.mulf %288, %287 : vector<2x256xf32>
    %290 = math.tanh %289 : vector<2x256xf32>
    %cst_110 = arith.constant 5.000000e-01 : f32
    %291 = vector.broadcast %cst_110 : f32 to vector<2x256xf32>
    %292 = arith.mulf %291, %290 : vector<2x256xf32>
    %cst_111 = arith.constant 5.000000e-01 : f32
    %293 = vector.broadcast %cst_111 : f32 to vector<2x256xf32>
    %294 = arith.addf %292, %293 : vector<2x256xf32>
    %295 = vector.extract_strided_slice %286 {offsets = [0, 256], sizes = [2, 256], strides = [1, 1]} : vector<2x1024xf32> to vector<2x256xf32>
    %cst_112 = arith.constant 5.000000e-01 : f32
    %296 = vector.broadcast %cst_112 : f32 to vector<2x256xf32>
    %297 = arith.mulf %296, %295 : vector<2x256xf32>
    %298 = math.tanh %297 : vector<2x256xf32>
    %cst_113 = arith.constant 5.000000e-01 : f32
    %299 = vector.broadcast %cst_113 : f32 to vector<2x256xf32>
    %300 = arith.mulf %299, %298 : vector<2x256xf32>
    %cst_114 = arith.constant 5.000000e-01 : f32
    %301 = vector.broadcast %cst_114 : f32 to vector<2x256xf32>
    %302 = arith.addf %300, %301 : vector<2x256xf32>
    %303 = vector.extract_strided_slice %286 {offsets = [0, 512], sizes = [2, 256], strides = [1, 1]} : vector<2x1024xf32> to vector<2x256xf32>
    %304 = math.tanh %303 : vector<2x256xf32>
    %305 = vector.extract_strided_slice %286 {offsets = [0, 768], sizes = [2, 256], strides = [1, 1]} : vector<2x1024xf32> to vector<2x256xf32>
    %cst_115 = arith.constant 5.000000e-01 : f32
    %306 = vector.broadcast %cst_115 : f32 to vector<2x256xf32>
    %307 = arith.mulf %306, %305 : vector<2x256xf32>
    %308 = math.tanh %307 : vector<2x256xf32>
    %cst_116 = arith.constant 5.000000e-01 : f32
    %309 = vector.broadcast %cst_116 : f32 to vector<2x256xf32>
    %310 = arith.mulf %309, %308 : vector<2x256xf32>
    %cst_117 = arith.constant 5.000000e-01 : f32
    %311 = vector.broadcast %cst_117 : f32 to vector<2x256xf32>
    %312 = arith.addf %310, %311 : vector<2x256xf32>
    %313 = arith.mulf %302, %281 : vector<2x256xf32>
    %314 = arith.mulf %294, %304 : vector<2x256xf32>
    %315 = arith.addf %313, %314 : vector<2x256xf32>
    %316 = math.tanh %315 : vector<2x256xf32>
    %317 = arith.mulf %312, %316 : vector<2x256xf32>
    %318 = vector.extract_strided_slice %144 {offsets = [10, 0], sizes = [2, 1024], strides = [1, 1]} : vector<16x1024xf32> to vector<2x1024xf32>
    %cst_118 = arith.constant dense<0.000000e+00> : vector<2x1024xf32>
    %319 = tpu.matmul %317, %145, %cst_118 {dimension_numbers = #tpu.dot_dimension_numbers<[1], [0], [0], [1], [0, 0, 1, 1], [], []>} : vector<2x256xf32>, vector<256x1024xf32>, vector<2x1024xf32> -> vector<2x1024xf32>
    %320 = arith.addf %318, %319 : vector<2x1024xf32>
    %321 = vector.extract_strided_slice %320 {offsets = [0, 0], sizes = [2, 256], strides = [1, 1]} : vector<2x1024xf32> to vector<2x256xf32>
    %cst_119 = arith.constant 5.000000e-01 : f32
    %322 = vector.broadcast %cst_119 : f32 to vector<2x256xf32>
    %323 = arith.mulf %322, %321 : vector<2x256xf32>
    %324 = math.tanh %323 : vector<2x256xf32>
    %cst_120 = arith.constant 5.000000e-01 : f32
    %325 = vector.broadcast %cst_120 : f32 to vector<2x256xf32>
    %326 = arith.mulf %325, %324 : vector<2x256xf32>
    %cst_121 = arith.constant 5.000000e-01 : f32
    %327 = vector.broadcast %cst_121 : f32 to vector<2x256xf32>
    %328 = arith.addf %326, %327 : vector<2x256xf32>
    %329 = vector.extract_strided_slice %320 {offsets = [0, 256], sizes = [2, 256], strides = [1, 1]} : vector<2x1024xf32> to vector<2x256xf32>
    %cst_122 = arith.constant 5.000000e-01 : f32
    %330 = vector.broadcast %cst_122 : f32 to vector<2x256xf32>
    %331 = arith.mulf %330, %329 : vector<2x256xf32>
    %332 = math.tanh %331 : vector<2x256xf32>
    %cst_123 = arith.constant 5.000000e-01 : f32
    %333 = vector.broadcast %cst_123 : f32 to vector<2x256xf32>
    %334 = arith.mulf %333, %332 : vector<2x256xf32>
    %cst_124 = arith.constant 5.000000e-01 : f32
    %335 = vector.broadcast %cst_124 : f32 to vector<2x256xf32>
    %336 = arith.addf %334, %335 : vector<2x256xf32>
    %337 = vector.extract_strided_slice %320 {offsets = [0, 512], sizes = [2, 256], strides = [1, 1]} : vector<2x1024xf32> to vector<2x256xf32>
    %338 = math.tanh %337 : vector<2x256xf32>
    %339 = vector.extract_strided_slice %320 {offsets = [0, 768], sizes = [2, 256], strides = [1, 1]} : vector<2x1024xf32> to vector<2x256xf32>
    %cst_125 = arith.constant 5.000000e-01 : f32
    %340 = vector.broadcast %cst_125 : f32 to vector<2x256xf32>
    %341 = arith.mulf %340, %339 : vector<2x256xf32>
    %342 = math.tanh %341 : vector<2x256xf32>
    %cst_126 = arith.constant 5.000000e-01 : f32
    %343 = vector.broadcast %cst_126 : f32 to vector<2x256xf32>
    %344 = arith.mulf %343, %342 : vector<2x256xf32>
    %cst_127 = arith.constant 5.000000e-01 : f32
    %345 = vector.broadcast %cst_127 : f32 to vector<2x256xf32>
    %346 = arith.addf %344, %345 : vector<2x256xf32>
    %347 = arith.mulf %336, %315 : vector<2x256xf32>
    %348 = arith.mulf %328, %338 : vector<2x256xf32>
    %349 = arith.addf %347, %348 : vector<2x256xf32>
    %350 = math.tanh %349 : vector<2x256xf32>
    %351 = arith.mulf %346, %350 : vector<2x256xf32>
    %352 = vector.extract_strided_slice %144 {offsets = [12, 0], sizes = [2, 1024], strides = [1, 1]} : vector<16x1024xf32> to vector<2x1024xf32>
    %cst_128 = arith.constant dense<0.000000e+00> : vector<2x1024xf32>
    %353 = tpu.matmul %351, %145, %cst_128 {dimension_numbers = #tpu.dot_dimension_numbers<[1], [0], [0], [1], [0, 0, 1, 1], [], []>} : vector<2x256xf32>, vector<256x1024xf32>, vector<2x1024xf32> -> vector<2x1024xf32>
    %354 = arith.addf %352, %353 : vector<2x1024xf32>
    %355 = vector.extract_strided_slice %354 {offsets = [0, 0], sizes = [2, 256], strides = [1, 1]} : vector<2x1024xf32> to vector<2x256xf32>
    %cst_129 = arith.constant 5.000000e-01 : f32
    %356 = vector.broadcast %cst_129 : f32 to vector<2x256xf32>
    %357 = arith.mulf %356, %355 : vector<2x256xf32>
    %358 = math.tanh %357 : vector<2x256xf32>
    %cst_130 = arith.constant 5.000000e-01 : f32
    %359 = vector.broadcast %cst_130 : f32 to vector<2x256xf32>
    %360 = arith.mulf %359, %358 : vector<2x256xf32>
    %cst_131 = arith.constant 5.000000e-01 : f32
    %361 = vector.broadcast %cst_131 : f32 to vector<2x256xf32>
    %362 = arith.addf %360, %361 : vector<2x256xf32>
    %363 = vector.extract_strided_slice %354 {offsets = [0, 256], sizes = [2, 256], strides = [1, 1]} : vector<2x1024xf32> to vector<2x256xf32>
    %cst_132 = arith.constant 5.000000e-01 : f32
    %364 = vector.broadcast %cst_132 : f32 to vector<2x256xf32>
    %365 = arith.mulf %364, %363 : vector<2x256xf32>
    %366 = math.tanh %365 : vector<2x256xf32>
    %cst_133 = arith.constant 5.000000e-01 : f32
    %367 = vector.broadcast %cst_133 : f32 to vector<2x256xf32>
    %368 = arith.mulf %367, %366 : vector<2x256xf32>
    %cst_134 = arith.constant 5.000000e-01 : f32
    %369 = vector.broadcast %cst_134 : f32 to vector<2x256xf32>
    %370 = arith.addf %368, %369 : vector<2x256xf32>
    %371 = vector.extract_strided_slice %354 {offsets = [0, 512], sizes = [2, 256], strides = [1, 1]} : vector<2x1024xf32> to vector<2x256xf32>
    %372 = math.tanh %371 : vector<2x256xf32>
    %373 = vector.extract_strided_slice %354 {offsets = [0, 768], sizes = [2, 256], strides = [1, 1]} : vector<2x1024xf32> to vector<2x256xf32>
    %cst_135 = arith.constant 5.000000e-01 : f32
    %374 = vector.broadcast %cst_135 : f32 to vector<2x256xf32>
    %375 = arith.mulf %374, %373 : vector<2x256xf32>
    %376 = math.tanh %375 : vector<2x256xf32>
    %cst_136 = arith.constant 5.000000e-01 : f32
    %377 = vector.broadcast %cst_136 : f32 to vector<2x256xf32>
    %378 = arith.mulf %377, %376 : vector<2x256xf32>
    %cst_137 = arith.constant 5.000000e-01 : f32
    %379 = vector.broadcast %cst_137 : f32 to vector<2x256xf32>
    %380 = arith.addf %378, %379 : vector<2x256xf32>
    %381 = arith.mulf %370, %349 : vector<2x256xf32>
    %382 = arith.mulf %362, %372 : vector<2x256xf32>
    %383 = arith.addf %381, %382 : vector<2x256xf32>
    %384 = math.tanh %383 : vector<2x256xf32>
    %385 = arith.mulf %380, %384 : vector<2x256xf32>
    %386 = vector.extract_strided_slice %144 {offsets = [14, 0], sizes = [2, 1024], strides = [1, 1]} : vector<16x1024xf32> to vector<2x1024xf32>
    %cst_138 = arith.constant dense<0.000000e+00> : vector<2x1024xf32>
    %387 = tpu.matmul %385, %145, %cst_138 {dimension_numbers = #tpu.dot_dimension_numbers<[1], [0], [0], [1], [0, 0, 1, 1], [], []>} : vector<2x256xf32>, vector<256x1024xf32>, vector<2x1024xf32> -> vector<2x1024xf32>
    %388 = arith.addf %386, %387 : vector<2x1024xf32>
    %389 = vector.extract_strided_slice %388 {offsets = [0, 0], sizes = [2, 256], strides = [1, 1]} : vector<2x1024xf32> to vector<2x256xf32>
    %cst_139 = arith.constant 5.000000e-01 : f32
    %390 = vector.broadcast %cst_139 : f32 to vector<2x256xf32>
    %391 = arith.mulf %390, %389 : vector<2x256xf32>
    %392 = math.tanh %391 : vector<2x256xf32>
    %cst_140 = arith.constant 5.000000e-01 : f32
    %393 = vector.broadcast %cst_140 : f32 to vector<2x256xf32>
    %394 = arith.mulf %393, %392 : vector<2x256xf32>
    %cst_141 = arith.constant 5.000000e-01 : f32
    %395 = vector.broadcast %cst_141 : f32 to vector<2x256xf32>
    %396 = arith.addf %394, %395 : vector<2x256xf32>
    %397 = vector.extract_strided_slice %388 {offsets = [0, 256], sizes = [2, 256], strides = [1, 1]} : vector<2x1024xf32> to vector<2x256xf32>
    %cst_142 = arith.constant 5.000000e-01 : f32
    %398 = vector.broadcast %cst_142 : f32 to vector<2x256xf32>
    %399 = arith.mulf %398, %397 : vector<2x256xf32>
    %400 = math.tanh %399 : vector<2x256xf32>
    %cst_143 = arith.constant 5.000000e-01 : f32
    %401 = vector.broadcast %cst_143 : f32 to vector<2x256xf32>
    %402 = arith.mulf %401, %400 : vector<2x256xf32>
    %cst_144 = arith.constant 5.000000e-01 : f32
    %403 = vector.broadcast %cst_144 : f32 to vector<2x256xf32>
    %404 = arith.addf %402, %403 : vector<2x256xf32>
    %405 = vector.extract_strided_slice %388 {offsets = [0, 512], sizes = [2, 256], strides = [1, 1]} : vector<2x1024xf32> to vector<2x256xf32>
    %406 = math.tanh %405 : vector<2x256xf32>
    %407 = vector.extract_strided_slice %388 {offsets = [0, 768], sizes = [2, 256], strides = [1, 1]} : vector<2x1024xf32> to vector<2x256xf32>
    %cst_145 = arith.constant 5.000000e-01 : f32
    %408 = vector.broadcast %cst_145 : f32 to vector<2x256xf32>
    %409 = arith.mulf %408, %407 : vector<2x256xf32>
    %410 = math.tanh %409 : vector<2x256xf32>
    %cst_146 = arith.constant 5.000000e-01 : f32
    %411 = vector.broadcast %cst_146 : f32 to vector<2x256xf32>
    %412 = arith.mulf %411, %410 : vector<2x256xf32>
    %cst_147 = arith.constant 5.000000e-01 : f32
    %413 = vector.broadcast %cst_147 : f32 to vector<2x256xf32>
    %414 = arith.addf %412, %413 : vector<2x256xf32>
    %415 = arith.mulf %404, %383 : vector<2x256xf32>
    %416 = arith.mulf %396, %406 : vector<2x256xf32>
    %417 = arith.addf %415, %416 : vector<2x256xf32>
    %418 = math.tanh %417 : vector<2x256xf32>
    %419 = arith.mulf %414, %418 : vector<2x256xf32>
    %c0_148 = arith.constant 0 : index
    %c0_149 = arith.constant 0 : index
    %420 = vector.load %arg11[%c0_148, %c0_149] : memref<256x256xf32, #tpu.memory_space<vmem>>, vector<256x256xf32>
    %cst_150 = arith.constant dense<0.000000e+00> : vector<2x256xf32>
    %421 = tpu.matmul %419, %420, %cst_150 {dimension_numbers = #tpu.dot_dimension_numbers<[1], [0], [0], [1], [0, 0, 1, 1], [], []>} : vector<2x256xf32>, vector<256x256xf32>, vector<2x256xf32> -> vector<2x256xf32>
    %c0_151 = arith.constant 0 : index
    %c0_152 = arith.constant 0 : index
    %422 = vector.load %arg12[%c0_151, %c0_152] : memref<1x256xf32, #tpu.memory_space<vmem>>, vector<1x256xf32>
    %423 = vector.broadcast %422 : vector<1x256xf32> to vector<2x256xf32>
    %424 = arith.addf %421, %423 : vector<2x256xf32>
    %cst_153 = arith.constant 0.000000e+00 : f32
    %425 = vector.broadcast %cst_153 : f32 to vector<2x256xf32>
    %426 = arith.maximumf %424, %425 : vector<2x256xf32>
    %c0_154 = arith.constant 0 : index
    %c0_155 = arith.constant 0 : index
    %427 = vector.load %arg13[%c0_154, %c0_155] : memref<512x512xf32, #tpu.memory_space<vmem>>, vector<256x512xf32>
    %cst_156 = arith.constant dense<0.000000e+00> : vector<2x512xf32>
    %428 = tpu.matmul %138, %427, %cst_156 {dimension_numbers = #tpu.dot_dimension_numbers<[1], [0], [0], [1], [0, 0, 1, 1], [], []>} : vector<2x256xf32>, vector<256x512xf32>, vector<2x512xf32> -> vector<2x512xf32>
    %c256 = arith.constant 256 : index
    %c0_157 = arith.constant 0 : index
    %429 = vector.load %arg13[%c256, %c0_157] : memref<512x512xf32, #tpu.memory_space<vmem>>, vector<256x512xf32>
    %cst_158 = arith.constant dense<0.000000e+00> : vector<2x512xf32>
    %430 = tpu.matmul %426, %429, %cst_158 {dimension_numbers = #tpu.dot_dimension_numbers<[1], [0], [0], [1], [0, 0, 1, 1], [], []>} : vector<2x256xf32>, vector<256x512xf32>, vector<2x512xf32> -> vector<2x512xf32>
    %431 = arith.addf %428, %430 : vector<2x512xf32>
    %c0_159 = arith.constant 0 : index
    %c0_160 = arith.constant 0 : index
    %432 = vector.load %arg14[%c0_159, %c0_160] : memref<1x512xf32, #tpu.memory_space<vmem>>, vector<1x512xf32>
    %433 = vector.broadcast %432 : vector<1x512xf32> to vector<2x512xf32>
    %434 = arith.addf %431, %433 : vector<2x512xf32>
    %cst_161 = arith.constant 0.000000e+00 : f32
    %435 = vector.broadcast %cst_161 : f32 to vector<2x512xf32>
    %436 = arith.maximumf %434, %435 : vector<2x512xf32>
    %c0_162 = arith.constant 0 : index
    %c0_163 = arith.constant 0 : index
    %437 = vector.load %arg15[%c0_162, %c0_163] : memref<512x1xf32, #tpu.memory_space<vmem>>, vector<512x1xf32>
    %cst_164 = arith.constant dense<0.000000e+00> : vector<2x1xf32>
    %438 = tpu.matmul %436, %437, %cst_164 {dimension_numbers = #tpu.dot_dimension_numbers<[1], [0], [0], [1], [0, 0, 1, 1], [], []>} : vector<2x512xf32>, vector<512x1xf32>, vector<2x1xf32> -> vector<2x1xf32>
    %c0_165 = arith.constant 0 : index
    %c0_166 = arith.constant 0 : index
    %439 = vector.load %arg16[%c0_165, %c0_166] : memref<1x1xf32, #tpu.memory_space<vmem>>, vector<1x1xf32>
    %440 = vector.broadcast %439 : vector<1x1xf32> to vector<2x1xf32>
    %441 = arith.addf %438, %440 : vector<2x1xf32>
    %c0_167 = arith.constant 0 : index
    %c0_168 = arith.constant 0 : index
    %442 = vector.load %arg17[%c0_167, %c0_168] : memref<2x1xf32, #tpu.memory_space<vmem>>, vector<2x1xf32>
    tpu.vector_store %arg17[%c0_167, %c0_168], %441 {strides = array<i32>} : memref<2x1xf32, #tpu.memory_space<vmem>>, vector<2x1xf32>,
    return
  }
}

</mosaic_0001>

<llo_original>
// kernel: earthquake_rnncnn_forward.1
$region0: #{earthquake_rnncnn_forward.1}
  #allocation0 [shape = 'u32[]', space=smem, size = 0x4, offset = 0x4, fixed_abs, tag = 'smem constant byte address 0x4 - core index']
  #allocation1 [shape = 'u32[144,128]{1,0:T(1,128)}', space=vmem, size = 0x12000, scoped, tag = 'internal scratch']
  #allocation2 [shape = 'f32[1,1]{1,0:T(1,128)S(1)}', space=vmem, size = 0x200, scoped, tag = 'scoped memory for earthquake_rnncnn_forward.1']
  %s0 = inlined_call_operand.vmem [shape: f32[16,112], index: 0, kind: input, shape index: {}]
  %s1 = inlined_call_operand.vmem [shape: f32[16,16], index: 1, kind: input, shape index: {}]
  %s2 = inlined_call_operand.hbm [shape: f32[112,384], index: 2, kind: input, shape index: {}]
  %s3 = inlined_call_operand.hbm [shape: f32[1,384], index: 3, kind: input, shape index: {}]
  %s4 = inlined_call_operand.hbm [shape: f32[2688,384], index: 4, kind: input, shape index: {}]
  %s5 = inlined_call_operand.hbm [shape: f32[1,384], index: 5, kind: input, shape index: {}]
  %s6 = inlined_call_operand.hbm [shape: f32[384,256], index: 6, kind: input, shape index: {}]
  %s7 = inlined_call_operand.hbm [shape: f32[1,256], index: 7, kind: input, shape index: {}]
  %s8 = inlined_call_operand.hbm [shape: f32[16,1024], index: 8, kind: input, shape index: {}]
  %s9 = inlined_call_operand.hbm [shape: f32[256,1024], index: 9, kind: input, shape index: {}]
  %s10 = inlined_call_operand.hbm [shape: f32[1,1024], index: 10, kind: input, shape index: {}]
  %s11 = inlined_call_operand.hbm [shape: f32[256,256], index: 11, kind: input, shape index: {}]
  %s12 = inlined_call_operand.hbm [shape: f32[1,256], index: 12, kind: input, shape index: {}]
  %s13 = inlined_call_operand.hbm [shape: f32[512,512], index: 13, kind: input, shape index: {}]
  %s14 = inlined_call_operand.hbm [shape: f32[1,512], index: 14, kind: input, shape index: {}]
  %s15 = inlined_call_operand.vmem [shape: f32[512,1], index: 15, kind: input, shape index: {}]
  %s16 = inlined_call_operand.<no memory space> [shape: f32[1,1], index: 16, kind: input, shape index: {}]
  %s17 = inlined_call_operand.vmem [shape: f32[2,1], index: 17, kind: output, shape index: {}]
  %s18 = sld [smem:[#allocation0]]
  $region130: #{earthquake_rnncnn_forward.1} parent=0
    _
  %s20 = ssub.s32 1, %s18
  %s21 = scalar_select 0, %s20, %s18
  %v22 = vstv %s16
  %23 = vst [vmem:[#allocation2] sm:$0x1] %v22
  $region1: #{earthquake_rnncnn_forward.1} parent=0
    #allocation3 [shape = 'u8[172032]{0}', space=vmem, size = 0x2a000, scoped, tag = 'input window, operand 2, single buffered']
    #allocation4 [shape = 's32[1]{0}', space=sflag, size = 0x4, scoped, tag = 'scoped memory for earthquake_rnncnn_forward.1']
    #allocation5 [shape = 'u8[1536]{0}', space=vmem, size = 0x800, scoped, tag = 'input window, operand 3, single buffered']
    #allocation6 [shape = 's32[1]{0}', space=sflag, size = 0x4, scoped, tag = 'scoped memory for earthquake_rnncnn_forward.1']
    #allocation7 [shape = 'u8[4128768]{0}', space=vmem, size = 0x3f0000, scoped, tag = 'input window, operand 4, single buffered']
    #allocation8 [shape = 'u8[1536]{0}', space=vmem, size = 0x800, scoped, tag = 'input window, operand 5, single buffered']
    #allocation9 [shape = 's32[1]{0}', space=sflag, size = 0x4, scoped, tag = 'scoped memory for earthquake_rnncnn_forward.1']
    #allocation10 [shape = 'u8[393216]{0}', space=vmem, size = 0x60000, scoped, tag = 'input window, operand 6, single buffered']
    #allocation11 [shape = 'u8[1024]{0}', space=vmem, size = 0x400, scoped, tag = 'input window, operand 7, single buffered']
    #allocation12 [shape = 's32[1]{0}', space=sflag, size = 0x4, scoped, tag = 'scoped memory for earthquake_rnncnn_forward.1']
    #allocation13 [shape = 'u8[65536]{0}', space=vmem, size = 0x10000, scoped, tag = 'input window, operand 8, single buffered']
    #allocation14 [shape = 'u8[1048576]{0}', space=vmem, size = 0x100000, scoped, tag = 'input window, operand 9, single buffered']
    #allocation15 [shape = 's32[1]{0}', space=sflag, size = 0x4, scoped, tag = 'scoped memory for earthquake_rnncnn_forward.1']
    #allocation16 [shape = 'u8[4096]{0}', space=vmem, size = 0x1000, scoped, tag = 'input window, operand 10, single buffered']
    #allocation17 [shape = 'u8[262144]{0}', space=vmem, size = 0x40000, scoped, tag = 'input window, operand 11, single buffered']
    #allocation18 [shape = 's32[1]{0}', space=sflag, size = 0x4, scoped, tag = 'scoped memory for earthquake_rnncnn_forward.1']
    #allocation19 [shape = 'u8[1024]{0}', space=vmem, size = 0x400, scoped, tag = 'input window, operand 12, single buffered']
    #allocation20 [shape = 'u8[1048576]{0}', space=vmem, size = 0x100000, scoped, tag = 'input window, operand 13, single buffered']
    #allocation21 [shape = 's32[1]{0}', space=sflag, size = 0x4, scoped, tag = 'scoped memory for earthquake_rnncnn_forward.1']
    #allocation22 [shape = 'u8[2048]{0}', space=vmem, size = 0x800, scoped, tag = 'input window, operand 14, single buffered']
    %24 = vsyncpa [#allocation4], 0
    %25 = vsyncpa [#allocation6], 0
    %26 = vsyncpa [#allocation9], 0
    %27 = vsyncpa [#allocation12], 0
    %28 = vsyncpa [#allocation15], 0
    %29 = vsyncpa [#allocation18], 0
    %30 = vsyncpa [#allocation21], 0
    // Predicated region
    $region2: #{earthquake_rnncnn_forward.1} parent=1 // pred_check
      _
    $region3: #{earthquake_rnncnn_forward.1} parent=1 // pred_check_branch
      %32 = sbr.rel (0) target = $region5
    $region4: #{earthquake_rnncnn_forward.1} parent=1 // pred_region
      _
    $region5: #{earthquake_rnncnn_forward.1} parent=1 // pred_fallthru
      _
    // Predicated region
    $region6: #{earthquake_rnncnn_forward.1} parent=1 // pred_check
      _
    $region7: #{earthquake_rnncnn_forward.1} parent=1 // pred_check_branch
      %34 = sbr.rel (0) target = $region9
    $region8: #{earthquake_rnncnn_forward.1} parent=1 // pred_region
      _
    $region9: #{earthquake_rnncnn_forward.1} parent=1 // pred_fallthru
      _
    // Predicated region
    $region10: #{earthquake_rnncnn_forward.1} parent=1 // pred_check
      _
    $region11: #{earthquake_rnncnn_forward.1} parent=1 // pred_check_branch
      %36 = sbr.rel (0) target = $region13
    $region12: #{earthquake_rnncnn_forward.1} parent=1 // pred_region
      %s38 = ssub.s32 5376, 5376
      %39 = vsyncadd [#allocation4], %s38
      %s40 = sshll.u32 [#allocation3], 4
      %s41 = int_to_ptr.vmem [resolvable:$true] %s40
      %46 = dma.hbm_to_vmem [thread:$0]  %s2, 5376, %s41, [#allocation4], 384, 384, 24
    $region13: #{earthquake_rnncnn_forward.1} parent=1 // pred_fallthru
      _
    // Predicated region
    $region14: #{earthquake_rnncnn_forward.1} parent=1 // pred_check
      _
    $region15: #{earthquake_rnncnn_forward.1} parent=1 // pred_check_branch
      %48 = sbr.rel (0) target = $region17
    $region16: #{earthquake_rnncnn_forward.1} parent=1 // pred_region
      %s50 = ssub.s32 48, 48
      %51 = vsyncadd [#allocation6], %s50
      %s53 = sshll.u32 [#allocation5], 4
      %s54 = int_to_ptr.vmem [resolvable:$true] %s53
      %56 = dma.hbm_to_vmem [thread:$0]  %s3, 48, %s54, [#allocation6]
    $region17: #{earthquake_rnncnn_forward.1} parent=1 // pred_fallthru
      _
    // Predicated region
    $region18: #{earthquake_rnncnn_forward.1} parent=1 // pred_check
      _
    $region19: #{earthquake_rnncnn_forward.1} parent=1 // pred_check_branch
      %58 = sbr.rel (0) target = $region21
    $region20: #{earthquake_rnncnn_forward.1} parent=1 // pred_region
      %s60 = ssub.s32 129024, 129024
      %61 = vsyncadd [#allocation6], %s60
      %s62 = sshll.u32 [#allocation7], 4
      %s63 = int_to_ptr.vmem [resolvable:$true] %s62
      %68 = dma.hbm_to_vmem [thread:$0]  %s4, 129024, %s63, [#allocation6], 384, 384, 24
    $region21: #{earthquake_rnncnn_forward.1} parent=1 // pred_fallthru
      _
    // Predicated region
    $region22: #{earthquake_rnncnn_forward.1} parent=1 // pred_check
      _
    $region23: #{earthquake_rnncnn_forward.1} parent=1 // pred_check_branch
      %70 = sbr.rel (0) target = $region25
    $region24: #{earthquake_rnncnn_forward.1} parent=1 // pred_region
      %s72 = ssub.s32 48, 48
      %73 = vsyncadd [#allocation9], %s72
      %s75 = sshll.u32 [#allocation8], 4
      %s76 = int_to_ptr.vmem [resolvable:$true] %s75
      %78 = dma.hbm_to_vmem [thread:$0]  %s5, 48, %s76, [#allocation9]
    $region25: #{earthquake_rnncnn_forward.1} parent=1 // pred_fallthru
      _
    // Predicated region
    $region26: #{earthquake_rnncnn_forward.1} parent=1 // pred_check
      _
    $region27: #{earthquake_rnncnn_forward.1} parent=1 // pred_check_branch
      %80 = sbr.rel (0) target = $region29
    $region28: #{earthquake_rnncnn_forward.1} parent=1 // pred_region
      %s82 = ssub.s32 12288, 12288
      %83 = vsyncadd [#allocation9], %s82
      %s84 = sshll.u32 [#allocation10], 4
      %s85 = int_to_ptr.vmem [resolvable:$true] %s84
      %90 = dma.hbm_to_vmem [thread:$0]  %s6, 12288, %s85, [#allocation9], 256, 256, 16
    $region29: #{earthquake_rnncnn_forward.1} parent=1 // pred_fallthru
      _
    // Predicated region
    $region30: #{earthquake_rnncnn_forward.1} parent=1 // pred_check
      _
    $region31: #{earthquake_rnncnn_forward.1} parent=1 // pred_check_branch
      %92 = sbr.rel (0) target = $region33
    $region32: #{earthquake_rnncnn_forward.1} parent=1 // pred_region
      %s94 = ssub.s32 32, 32
      %95 = vsyncadd [#allocation12], %s94
      %s97 = sshll.u32 [#allocation11], 4
      %s98 = int_to_ptr.vmem [resolvable:$true] %s97
      %100 = dma.hbm_to_vmem [thread:$0]  %s7, 32, %s98, [#allocation12]
    $region33: #{earthquake_rnncnn_forward.1} parent=1 // pred_fallthru
      _
    // Predicated region
    $region34: #{earthquake_rnncnn_forward.1} parent=1 // pred_check
      _
    $region35: #{earthquake_rnncnn_forward.1} parent=1 // pred_check_branch
      %102 = sbr.rel (0) target = $region37
    $region36: #{earthquake_rnncnn_forward.1} parent=1 // pred_region
      %s104 = ssub.s32 2048, 2048
      %105 = vsyncadd [#allocation12], %s104
      %s106 = sshll.u32 [#allocation13], 4
      %s107 = int_to_ptr.vmem [resolvable:$true] %s106
      %112 = dma.hbm_to_vmem [thread:$0]  %s8, 2048, %s107, [#allocation12], 1024, 1024, 64
    $region37: #{earthquake_rnncnn_forward.1} parent=1 // pred_fallthru
      _
    // Predicated region
    $region38: #{earthquake_rnncnn_forward.1} parent=1 // pred_check
      _
    $region39: #{earthquake_rnncnn_forward.1} parent=1 // pred_check_branch
      %114 = sbr.rel (0) target = $region41
    $region40: #{earthquake_rnncnn_forward.1} parent=1 // pred_region
      %s116 = ssub.s32 32768, 32768
      %117 = vsyncadd [#allocation15], %s116
      %s118 = sshll.u32 [#allocation14], 4
      %s119 = int_to_ptr.vmem [resolvable:$true] %s118
      %124 = dma.hbm_to_vmem [thread:$0]  %s9, 32768, %s119, [#allocation15], 1024, 1024, 64
    $region41: #{earthquake_rnncnn_forward.1} parent=1 // pred_fallthru
      _
    // Predicated region
    $region42: #{earthquake_rnncnn_forward.1} parent=1 // pred_check
      _
    $region43: #{earthquake_rnncnn_forward.1} parent=1 // pred_check_branch
      %126 = sbr.rel (0) target = $region45
    $region44: #{earthquake_rnncnn_forward.1} parent=1 // pred_region
      %s128 = ssub.s32 128, 128
      %129 = vsyncadd [#allocation15], %s128
      %s131 = sshll.u32 [#allocation16], 4
      %s132 = int_to_ptr.vmem [resolvable:$true] %s131
      %134 = dma.hbm_to_vmem [thread:$0]  %s10, 128, %s132, [#allocation15]
    $region45: #{earthquake_rnncnn_forward.1} parent=1 // pred_fallthru
      _
    // Predicated region
    $region46: #{earthquake_rnncnn_forward.1} parent=1 // pred_check
      _
    $region47: #{earthquake_rnncnn_forward.1} parent=1 // pred_check_branch
      %136 = sbr.rel (0) target = $region49
    $region48: #{earthquake_rnncnn_forward.1} parent=1 // pred_region
      %s138 = ssub.s32 8192, 8192
      %139 = vsyncadd [#allocation18], %s138
      %s140 = sshll.u32 [#allocation17], 4
      %s141 = int_to_ptr.vmem [resolvable:$true] %s140
      %146 = dma.hbm_to_vmem [thread:$0]  %s11, 8192, %s141, [#allocation18], 256, 256, 16
    $region49: #{earthquake_rnncnn_forward.1} parent=1 // pred_fallthru
      _
    // Predicated region
    $region50: #{earthquake_rnncnn_forward.1} parent=1 // pred_check
      _
    $region51: #{earthquake_rnncnn_forward.1} parent=1 // pred_check_branch
      %148 = sbr.rel (0) target = $region53
    $region52: #{earthquake_rnncnn_forward.1} parent=1 // pred_region
      %s150 = ssub.s32 32, 32
      %151 = vsyncadd [#allocation18], %s150
      %s153 = sshll.u32 [#allocation19], 4
      %s154 = int_to_ptr.vmem [resolvable:$true] %s153
      %156 = dma.hbm_to_vmem [thread:$0]  %s12, 32, %s154, [#allocation18]
    $region53: #{earthquake_rnncnn_forward.1} parent=1 // pred_fallthru
      _
    // Predicated region
    $region54: #{earthquake_rnncnn_forward.1} parent=1 // pred_check
      _
    $region55: #{earthquake_rnncnn_forward.1} parent=1 // pred_check_branch
      %158 = sbr.rel (0) target = $region57
    $region56: #{earthquake_rnncnn_forward.1} parent=1 // pred_region
      %s160 = ssub.s32 32768, 32768
      %161 = vsyncadd [#allocation21], %s160
      %s162 = sshll.u32 [#allocation20], 4
      %s163 = int_to_ptr.vmem [resolvable:$true] %s162
      %168 = dma.hbm_to_vmem [thread:$0]  %s13, 32768, %s163, [#allocation21], 512, 512, 32
    $region57: #{earthquake_rnncnn_forward.1} parent=1 // pred_fallthru
      _
    // Predicated region
    $region58: #{earthquake_rnncnn_forward.1} parent=1 // pred_check
      _
    $region59: #{earthquake_rnncnn_forward.1} parent=1 // pred_check_branch
      %170 = sbr.rel (0) target = $region61
    $region60: #{earthquake_rnncnn_forward.1} parent=1 // pred_region
      %s172 = ssub.s32 64, 64
      %173 = vsyncadd [#allocation21], %s172
      %s175 = sshll.u32 [#allocation22], 4
      %s176 = int_to_ptr.vmem [resolvable:$true] %s175
      %178 = dma.hbm_to_vmem [thread:$0]  %s14, 64, %s176, [#allocation21]
    $region61: #{earthquake_rnncnn_forward.1} parent=1 // pred_fallthru
      _
    // Predicated region
    $region62: #{earthquake_rnncnn_forward.1} parent=1 // pred_check
      _
    $region63: #{earthquake_rnncnn_forward.1} parent=1 // pred_check_branch
      %180 = sbr.rel (0) target = $region65
    $region64: #{earthquake_rnncnn_forward.1} parent=1 // pred_region
      _
    $region65: #{earthquake_rnncnn_forward.1} parent=1 // pred_fallthru
      _
    // Predicated region
    $region66: #{earthquake_rnncnn_forward.1} parent=1 // pred_check
      _
    $region67: #{earthquake_rnncnn_forward.1} parent=1 // pred_check_branch
      %182 = sbr.rel (0) target = $region69
    $region68: #{earthquake_rnncnn_forward.1} parent=1 // pred_region
      _
    $region69: #{earthquake_rnncnn_forward.1} parent=1 // pred_fallthru
      _
    // Predicated region
    $region70: #{earthquake_rnncnn_forward.1} parent=1 // pred_check
      _
    $region71: #{earthquake_rnncnn_forward.1} parent=1 // pred_check_branch
      %184 = sbr.rel (0) target = $region73
    $region72: #{earthquake_rnncnn_forward.1} parent=1 // pred_region
      %185 = dma.done [#allocation4], 5376
    $region73: #{earthquake_rnncnn_forward.1} parent=1 // pred_fallthru
      _
    // Predicated region
    $region74: #{earthquake_rnncnn_forward.1} parent=1 // pred_check
      _
    $region75: #{earthquake_rnncnn_forward.1} parent=1 // pred_check_branch
      %187 = sbr.rel (0) target = $region77
    $region76: #{earthquake_rnncnn_forward.1} parent=1 // pred_region
      %188 = dma.done [#allocation6], 48
    $region77: #{earthquake_rnncnn_forward.1} parent=1 // pred_fallthru
      _
    // Predicated region
    $region78: #{earthquake_rnncnn_forward.1} parent=1 // pred_check
      _
    $region79: #{earthquake_rnncnn_forward.1} parent=1 // pred_check_branch
      %190 = sbr.rel (0) target = $region81
    $region80: #{earthquake_rnncnn_forward.1} parent=1 // pred_region
      %191 = dma.done [#allocation6], 129024
    $region81: #{earthquake_rnncnn_forward.1} parent=1 // pred_fallthru
      _
    // Predicated region
    $region82: #{earthquake_rnncnn_forward.1} parent=1 // pred_check
      _
    $region83: #{earthquake_rnncnn_forward.1} parent=1 // pred_check_branch
      %193 = sbr.rel (0) target = $region85
    $region84: #{earthquake_rnncnn_forward.1} parent=1 // pred_region
      %194 = dma.done [#allocation9], 48
    $region85: #{earthquake_rnncnn_forward.1} parent=1 // pred_fallthru
      _
    // Predicated region
    $region86: #{earthquake_rnncnn_forward.1} parent=1 // pred_check
      _
    $region87: #{earthquake_rnncnn_forward.1} parent=1 // pred_check_branch
      %196 = sbr.rel (0) target = $region89
    $region88: #{earthquake_rnncnn_forward.1} parent=1 // pred_region
      %197 = dma.done [#allocation9], 12288
    $region89: #{earthquake_rnncnn_forward.1} parent=1 // pred_fallthru
      _
    // Predicated region
    $region90: #{earthquake_rnncnn_forward.1} parent=1 // pred_check
      _
    $region91: #{earthquake_rnncnn_forward.1} parent=1 // pred_check_branch
      %199 = sbr.rel (0) target = $region93
    $region92: #{earthquake_rnncnn_forward.1} parent=1 // pred_region
      %200 = dma.done [#allocation12], 32
    $region93: #{earthquake_rnncnn_forward.1} parent=1 // pred_fallthru
      _
    // Predicated region
    $region94: #{earthquake_rnncnn_forward.1} parent=1 // pred_check
      _
    $region95: #{earthquake_rnncnn_forward.1} parent=1 // pred_check_branch
      %202 = sbr.rel (0) target = $region97
    $region96: #{earthquake_rnncnn_forward.1} parent=1 // pred_region
      %203 = dma.done [#allocation12], 2048
    $region97: #{earthquake_rnncnn_forward.1} parent=1 // pred_fallthru
      _
    // Predicated region
    $region98: #{earthquake_rnncnn_forward.1} parent=1 // pred_check
      _
    $region99: #{earthquake_rnncnn_forward.1} parent=1 // pred_check_branch
      %205 = sbr.rel (0) target = $region101
    $region100: #{earthquake_rnncnn_forward.1} parent=1 // pred_region
      %206 = dma.done [#allocation15], 32768
    $region101: #{earthquake_rnncnn_forward.1} parent=1 // pred_fallthru
      _
    // Predicated region
    $region102: #{earthquake_rnncnn_forward.1} parent=1 // pred_check
      _
    $region103: #{earthquake_rnncnn_forward.1} parent=1 // pred_check_branch
      %208 = sbr.rel (0) target = $region105
    $region104: #{earthquake_rnncnn_forward.1} parent=1 // pred_region
      %209 = dma.done [#allocation15], 128
    $region105: #{earthquake_rnncnn_forward.1} parent=1 // pred_fallthru
      _
    // Predicated region
    $region106: #{earthquake_rnncnn_forward.1} parent=1 // pred_check
      _
    $region107: #{earthquake_rnncnn_forward.1} parent=1 // pred_check_branch
      %211 = sbr.rel (0) target = $region109
    $region108: #{earthquake_rnncnn_forward.1} parent=1 // pred_region
      %212 = dma.done [#allocation18], 8192
    $region109: #{earthquake_rnncnn_forward.1} parent=1 // pred_fallthru
      _
    // Predicated region
    $region110: #{earthquake_rnncnn_forward.1} parent=1 // pred_check
      _
    $region111: #{earthquake_rnncnn_forward.1} parent=1 // pred_check_branch
      %214 = sbr.rel (0) target = $region113
    $region112: #{earthquake_rnncnn_forward.1} parent=1 // pred_region
      %215 = dma.done [#allocation18], 32
    $region113: #{earthquake_rnncnn_forward.1} parent=1 // pred_fallthru
      _
    // Predicated region
    $region114: #{earthquake_rnncnn_forward.1} parent=1 // pred_check
      _
    $region115: #{earthquake_rnncnn_forward.1} parent=1 // pred_check_branch
      %217 = sbr.rel (0) target = $region117
    $region116: #{earthquake_rnncnn_forward.1} parent=1 // pred_region
      %218 = dma.done [#allocation21], 32768
    $region117: #{earthquake_rnncnn_forward.1} parent=1 // pred_fallthru
      _
    // Predicated region
    $region118: #{earthquake_rnncnn_forward.1} parent=1 // pred_check
      _
    $region119: #{earthquake_rnncnn_forward.1} parent=1 // pred_check_branch
      %220 = sbr.rel (0) target = $region121
    $region120: #{earthquake_rnncnn_forward.1} parent=1 // pred_region
      %221 = dma.done [#allocation21], 64
    $region121: #{earthquake_rnncnn_forward.1} parent=1 // pred_fallthru
      _
    %v222 = vld [vmem:[%s0] sm:$0xff]
    %v223 = vld [vmem:[%s0 + $0x8] sm:$0xff]
    %v224 = vld [vmem:[#allocation3] sm:$0xff]
    %v225 = vld [vmem:[#allocation3 + $0x8] sm:$0xff]
    %v226 = vld [vmem:[#allocation3 + $0x10] sm:$0xff]
    %v227 = vld [vmem:[#allocation3 + $0x18] sm:$0xff]
    %v228 = vld [vmem:[#allocation3 + $0x20] sm:$0xff]
    %v229 = vld [vmem:[#allocation3 + $0x28] sm:$0xff]
    %v230 = vld [vmem:[#allocation3 + $0x30] sm:$0xff]
    %v231 = vld [vmem:[#allocation3 + $0x38] sm:$0xff]
    %v232 = vld [vmem:[#allocation3 + $0x40] sm:$0xff]
    %v233 = vld [vmem:[#allocation3 + $0x48] sm:$0xff]
    %v234 = vld [vmem:[#allocation3 + $0x50] sm:$0xff]
    %v235 = vld [vmem:[#allocation3 + $0x58] sm:$0xff]
    %v236 = vld [vmem:[#allocation3 + $0x60] sm:$0xff]
    %v237 = vld [vmem:[#allocation3 + $0x68] sm:$0xff]
    %v238 = vld [vmem:[#allocation3 + $0x70] sm:$0xff]
    %v239 = vld [vmem:[#allocation3 + $0x78] sm:$0xff]
    %v240 = vld [vmem:[#allocation3 + $0x80] sm:$0xff]
    %v241 = vld [vmem:[#allocation3 + $0x88] sm:$0xff]
    %v242 = vld [vmem:[#allocation3 + $0x90] sm:$0xff]
    %v243 = vld [vmem:[#allocation3 + $0x98] sm:$0xff]
    %v244 = vld [vmem:[#allocation3 + $0xa0] sm:$0xff]
    %v245 = vld [vmem:[#allocation3 + $0xa8] sm:$0xff]
    %v246 = vld [vmem:[#allocation3 + $0xb0] sm:$0xff]
    %v247 = vld [vmem:[#allocation3 + $0xb8] sm:$0xff]
    %v248 = vld [vmem:[#allocation3 + $0xc0] sm:$0xff]
    %v249 = vld [vmem:[#allocation3 + $0xc8] sm:$0xff]
    %v250 = vld [vmem:[#allocation3 + $0xd0] sm:$0xff]
    %v251 = vld [vmem:[#allocation3 + $0xd8] sm:$0xff]
    %v252 = vld [vmem:[#allocation3 + $0xe0] sm:$0xff]
    %v253 = vld [vmem:[#allocation3 + $0xe8] sm:$0xff]
    %v254 = vld [vmem:[#allocation3 + $0xf0] sm:$0xff]
    %v255 = vld [vmem:[#allocation3 + $0xf8] sm:$0xff]
    %v256 = vld [vmem:[#allocation3 + $0x100] sm:$0xff]
    %v257 = vld [vmem:[#allocation3 + $0x108] sm:$0xff]
    %v258 = vld [vmem:[#allocation3 + $0x110] sm:$0xff]
    %v259 = vld [vmem:[#allocation3 + $0x118] sm:$0xff]
    %v260 = vld [vmem:[#allocation3 + $0x120] sm:$0xff]
    %v261 = vld [vmem:[#allocation3 + $0x128] sm:$0xff]
    %v262 = vld [vmem:[#allocation3 + $0x130] sm:$0xff]
    %v263 = vld [vmem:[#allocation3 + $0x138] sm:$0xff]
    %v264 = vld [vmem:[#allocation3 + $0x140] sm:$0xff]
    %v265 = vld [vmem:[#allocation3 + $0x148] sm:$0xff]
    %v266 = vld [vmem:[#allocation5] sm:$0x7]
    %v268 = vlaneseq
    %v269 = vshrl.u32 %v268, 7
    %v270 = vsub.s32 0, %v269
    %v271 = vrot.slane %v266, %v270
    %v272 = vlaneseq
    %v273 = vshrl.u32 %v272, 7
    %v274 = vsub.s32 1, %v273
    %v275 = vrot.slane %v266, %v274
    %v276 = vlaneseq
    %v277 = vshrl.u32 %v276, 7
    %v278 = vsub.s32 2, %v277
    %v279 = vrot.slane %v266, %v278
    %vm283 = vcmask 916480
    %v285 = vsel %vm283, %v222, 0
    %v288 = vsel %vm283, %v223, 0
    %290 = vmatprep.subr.mxu0 %v225
    %291 = vmatpush1.msra.mxu0 %v224
    %292 = vmatprep.subr.mxu0 %v228
    %293 = vmatpush1.msra.mxu0 %v227
    %294 = vmatprep.subr.mxu0 %v231
    %295 = vmatpush1.msra.mxu0 %v230
    %296 = vmatprep.subr.mxu0 %v234
    %297 = vmatpush1.msra.mxu0 %v233
    %298 = vmatprep.subr.mxu0 %v237
    %299 = vmatpush1.msra.mxu0 %v236
    %300 = vmatprep.subr.mxu0 %v240
    %301 = vmatpush1.msra.mxu0 %v239
    %302 = vmatprep.subr.mxu0 %v243
    %303 = vmatpush1.msra.mxu0 %v242
    %304 = vmatprep.subr.mxu0 %v246
    %305 = vmatpush1.msra.mxu0 %v245
    %306 = vmatprep.subr.mxu0 %v249
    %307 = vmatpush1.msra.mxu0 %v248
    %308 = vmatprep.subr.mxu0 %v252
    %309 = vmatpush1.msra.mxu0 %v251
    %310 = vmatprep.subr.mxu0 %v255
    %311 = vmatpush1.msra.mxu0 %v254
    %312 = vmatprep.subr.mxu0 %v258
    %313 = vmatpush1.msra.mxu0 %v257
    %314 = vmatprep.subr.mxu0 %v261
    %315 = vmatpush1.msra.mxu0 %v260
    %316 = vmatprep.subr.mxu0 %v264
    %317 = vmatpush1.msra.mxu0 %v263
    %318 = vmatprep.subr.mxu0 0.0
    %319 = vmatpush1.msra.mxu0 0.0
    %320 = vmatprep.subr.mxu0 0.0
    %321 = vmatpush1.msra.mxu0 0.0
    %322 = vmatprep.subr.mxu0 0.0
    %323 = vmatpush1.msra.mxu0 0.0
    %324 = vmatprep.subr.mxu0 0.0
    %325 = vmatpush1.msra.mxu0 0.0
    %326 = vmatprep.subr.mxu0 0.0
    %327 = vmatpush1.msra.mxu0 0.0
    %328 = vmatprep.subr.mxu0 0.0
    %329 = vmatpush1.msra.mxu0 0.0
    %330 = vmatprep.subr.mxu0 0.0
    %331 = vmatpush1.msra.mxu0 0.0
    %332 = vmatprep.subr.mxu0 0.0
    %333 = vmatpush1.msra.mxu0 0.0
    %334 = vmatprep.subr.mxu0 0.0
    %335 = vmatpush1.msra.mxu0 0.0
    %336 = vmatprep.subr.mxu0 0.0
    %337 = vmatpush1.msra.mxu0 0.0
    %338 = vmatprep.subr.mxu0 0.0
    %339 = vmatpush1.msra.mxu0 0.0
    %340 = vmatprep.subr.mxu0 0.0
    %341 = vmatpush1.msra.mxu0 0.0
    %342 = vmatprep.subr.mxu0 0.0
    %343 = vmatpush1.msra.mxu0 0.0
    %344 = vmatprep.subr.mxu0 0.0
    %345 = vmatpush1.msra.mxu0 0.0
    %346 = vmatprep.subr.mxu0 0.0
    %347 = vmatpush1.msra.mxu0 0.0
    %348 = vmatprep.subr.mxu0 0.0
    %349 = vmatpush1.msra.mxu0 0.0
    %350 = vmatprep.subr.mxu0 0.0
    %351 = vmatpush1.msra.mxu0 0.0
    %352 = vmatprep.subr.mxu0 0.0
    %353 = vmatpush1.msra.mxu0 0.0
    %354 = vmatprep.mubr.f32.mxu0 0.0
    %355 = vmatmul.mubr.f32.gmra.mrb[0].mxu0 %v285
    %v356 = vpop.f32.mrb[0].mxu0
    %v357 = vadd.f32 %v271, %v356
    %v358 = vpop.f32.mrb[0].mxu0
    %v359 = vadd.f32 %v275, %v358
    %360 = vmatprep.mubr.f32.mxu0 0.0
    %361 = vmatmul.mubr.f32.gmra.mrb[0].mxu0 %v288
    %v362 = vpop.f32.mrb[0].mxu0
    %v363 = vadd.f32 %v271, %v362
    %v364 = vpop.f32.mrb[0].mxu0
    %v365 = vadd.f32 %v275, %v364
    %366 = vdwg.mxu0
    %367 = vmatprep.subr.mxu0 0.0
    %368 = vmatpush1.msra.mxu0 %v226
    %369 = vmatprep.subr.mxu0 0.0
    %370 = vmatpush1.msra.mxu0 %v229
    %371 = vmatprep.subr.mxu0 0.0
    %372 = vmatpush1.msra.mxu0 %v232
    %373 = vmatprep.subr.mxu0 0.0
    %374 = vmatpush1.msra.mxu0 %v235
    %375 = vmatprep.subr.mxu0 0.0
    %376 = vmatpush1.msra.mxu0 %v238
    %377 = vmatprep.subr.mxu0 0.0
    %378 = vmatpush1.msra.mxu0 %v241
    %379 = vmatprep.subr.mxu0 0.0
    %380 = vmatpush1.msra.mxu0 %v244
    %381 = vmatprep.subr.mxu0 0.0
    %382 = vmatpush1.msra.mxu0 %v247
    %383 = vmatprep.subr.mxu0 0.0
    %384 = vmatpush1.msra.mxu0 %v250
    %385 = vmatprep.subr.mxu0 0.0
    %386 = vmatpush1.msra.mxu0 %v253
    %387 = vmatprep.subr.mxu0 0.0
    %388 = vmatpush1.msra.mxu0 %v256
    %389 = vmatprep.subr.mxu0 0.0
    %390 = vmatpush1.msra.mxu0 %v259
    %391 = vmatprep.subr.mxu0 0.0
    %392 = vmatpush1.msra.mxu0 %v262
    %393 = vmatprep.subr.mxu0 0.0
    %394 = vmatpush1.msra.mxu0 %v265
    %395 = vmatprep.subr.mxu0 0.0
    %396 = vmatpush1.msra.mxu0 0.0
    %397 = vmatprep.subr.mxu0 0.0
    %398 = vmatpush1.msra.mxu0 0.0
    %399 = vmatprep.subr.mxu0 0.0
    %400 = vmatpush1.msra.mxu0 0.0
    %401 = vmatprep.subr.mxu0 0.0
    %402 = vmatpush1.msra.mxu0 0.0
    %403 = vmatprep.subr.mxu0 0.0
    %404 = vmatpush1.msra.mxu0 0.0
    %405 = vmatprep.subr.mxu0 0.0
    %406 = vmatpush1.msra.mxu0 0.0
    %407 = vmatprep.subr.mxu0 0.0
    %408 = vmatpush1.msra.mxu0 0.0
    %409 = vmatprep.subr.mxu0 0.0
    %410 = vmatpush1.msra.mxu0 0.0
    %411 = vmatprep.subr.mxu0 0.0
    %412 = vmatpush1.msra.mxu0 0.0
    %413 = vmatprep.subr.mxu0 0.0
    %414 = vmatpush1.msra.mxu0 0.0
    %415 = vmatprep.subr.mxu0 0.0
    %416 = vmatpush1.msra.mxu0 0.0
    %417 = vmatprep.subr.mxu0 0.0
    %418 = vmatpush1.msra.mxu0 0.0
    %419 = vmatprep.subr.mxu0 0.0
    %420 = vmatpush1.msra.mxu0 0.0
    %421 = vmatprep.subr.mxu0 0.0
    %422 = vmatpush1.msra.mxu0 0.0
    %423 = vmatprep.subr.mxu0 0.0
    %424 = vmatpush1.msra.mxu0 0.0
    %425 = vmatprep.subr.mxu0 0.0
    %426 = vmatpush1.msra.mxu0 0.0
    %427 = vmatprep.subr.mxu0 0.0
    %428 = vmatpush1.msra.mxu0 0.0
    %429 = vmatprep.subr.mxu0 0.0
    %430 = vmatpush1.msra.mxu0 0.0
    %431 = vmatprep.mubr.f32.mxu0 0.0
    %432 = vmatmul.mubr.f32.gmra.mrb[0].mxu0 %v285
    %v433 = vpop.f32.mrb[0].mxu0
    %v434 = vadd.f32 %v279, %v433
    %v435 = vpop.f32.mrb[0].mxu0
    %436 = vmatprep.mubr.f32.mxu0 0.0
    %437 = vmatmul.mubr.f32.gmra.mrb[0].mxu0 %v288
    %v438 = vpop.f32.mrb[0].mxu0
    %v439 = vadd.f32 %v279, %v438
    %v440 = vpop.f32.mrb[0].mxu0
    %441 = vdwg.mxu0
    %v442 = vmax.f32 %v357, 0.0
    %v443 = vmax.f32 %v359, 0.0
    %v444 = vmax.f32 %v434, 0.0
    %v445 = vmax.f32 %v363, 0.0
    %v446 = vmax.f32 %v365, 0.0
    %v447 = vmax.f32 %v439, 0.0
    %v448 = vmin.f32 %v442, 6.0
    %v449 = vmin.f32 %v443, 6.0
    %v450 = vmin.f32 %v444, 6.0
    %v451 = vmin.f32 %v445, 6.0
    %v452 = vmin.f32 %v446, 6.0
    %v453 = vmin.f32 %v447, 6.0
    %v454 = vlaneseq
    %v455 = vshrl.u32 %v454, 7
    %v456 = vadd.s32 %v455, 8
    %vm457 = vcmp.lt.s32.totalorder %v455, 0
    %v458 = vsub.s32 0, %v455
    %v459 = vsel %vm457, %v458, %v455
    %v460 = vshrl.u32 %v459, 3
    %v461 = vand.u32 %v459, 7
    %v462 = vsub.s32 0, %v461
    %v463 = vsel %vm457, %v462, %v461
    %vm464 = vcmp.lt.s32.totalorder %v456, 0
    %v465 = vsub.s32 0, %v456
    %v466 = vsel %vm464, %v465, %v456
    %v467 = vshrl.u32 %v466, 3
    %v468 = vand.u32 %v466, 7
    %v469 = vsub.s32 0, %v468
    %v470 = vsel %vm464, %v469, %v468
    %vm471 = vcmp.ne.s32.totalorder %v463, 0
    %vm472 = vcmp.ne.s32.totalorder %v470, 0
    %vm473 = vcmp.lt.s32.totalorder %v463, 0
    %vm474 = vcmp.lt.s32.totalorder %v470, 0
    %vm475 = vmand %vm473, %vm471
    %vm476 = vmand %vm474, %vm472
    %v477 = vadd.s32 %v463, 8
    %v478 = vadd.s32 %v470, 8
    %v479 = vsel %vm475, %v477, %v463
    %v480 = vsel %vm476, %v478, %v470
    %vm487 = vcmask 1042432
    %v488 = vrot.slane %v448, 5
    %v489 = vrot.slane %v449, 5
    %v490 = vrot.slane %v450, 5
    %v491 = vrot.slane %v451, 5
    %v492 = vsel %vm487, %v488, %v491
    %v493 = vrot.slane %v452, 5
    %v494 = vsel %vm487, %v489, %v493
    %v495 = vrot.slane %v453, 5
    %v496 = vsel %vm487, %v490, %v495
    %v506 = vsel %vm487, 0.0, %v488
    %v507 = vsel %vm487, 0.0, %v489
    %v508 = vsel %vm487, 0.0, %v490
    %v509 = vsel %vm487, %v491, 0.0
    %v510 = vsel %vm487, %v493, 0.0
    %v511 = vsel %vm487, %v495, 0.0
    %v512 = vadd.s32 %v479, 4294967293
    %v513 = vadd.s32 %v480, 4294967293
    %vm514 = vcmp.ge.s32.totalorder %v512, 0
    %vm515 = vcmp.ge.s32.totalorder %v513, 0
    %vm516 = vcmp.lt.s32.totalorder %v512, 8
    %vm517 = vcmp.lt.s32.totalorder %v513, 8
    %vm518 = vmand %vm514, %vm516
    %vm519 = vmand %vm515, %vm517
    %v520 = vsel %vm518, %v506, 0.0
    %v521 = vsel %vm518, %v507, 0.0
    %v522 = vsel %vm518, %v508, 0.0
    %v523 = vsel %vm519, %v492, 0.0
    %v524 = vsel %vm519, %v494, 0.0
    %v525 = vsel %vm519, %v496, 0.0
    %v526 = vadd.s32 %v479, 4294967294
    %v527 = vadd.s32 %v480, 4294967294
    %vm528 = vcmp.ge.s32.totalorder %v526, 0
    %vm529 = vcmp.ge.s32.totalorder %v527, 0
    %vm530 = vcmp.lt.s32.totalorder %v526, 8
    %vm531 = vcmp.lt.s32.totalorder %v527, 8
    %vm532 = vmand %vm528, %vm530
    %vm533 = vmand %vm529, %vm531
    %vm540 = vcmask 1046528
    %v541 = vrot.slane %v506, 1
    %v542 = vrot.slane %v492, 1
    %v543 = vsel %vm540, %v541, %v542
    %v544 = vrot.slane %v507, 1
    %v545 = vrot.slane %v494, 1
    %v546 = vsel %vm540, %v544, %v545
    %v547 = vrot.slane %v508, 1
    %v548 = vrot.slane %v496, 1
    %v549 = vsel %vm540, %v547, %v548
    %v550 = vrot.slane %v509, 1
    %v551 = vsel %vm540, %v542, %v550
    %v552 = vrot.slane %v510, 1
    %v553 = vsel %vm540, %v545, %v552
    %v554 = vrot.slane %v511, 1
    %v555 = vsel %vm540, %v548, %v554
    %v562 = vsel %vm532, %v543, 0.0
    %v563 = vsel %vm532, %v546, 0.0
    %v564 = vsel %vm532, %v549, 0.0
    %v565 = vsel %vm533, %v551, 0.0
    %v566 = vsel %vm533, %v553, 0.0
    %v567 = vsel %vm533, %v555, 0.0
    %v568 = vadd.s32 %v479, 4294967295
    %v569 = vadd.s32 %v480, 4294967295
    %vm570 = vcmp.ge.s32.totalorder %v568, 0
    %vm571 = vcmp.ge.s32.totalorder %v569, 0
    %vm572 = vcmp.lt.s32.totalorder %v568, 8
    %vm573 = vcmp.lt.s32.totalorder %v569, 8
    %vm574 = vmand %vm570, %vm572
    %vm575 = vmand %vm571, %vm573
    %vm576 = vcmask 1045504
    %v577 = vrot.slane %v506, 2
    %v578 = vrot.slane %v492, 2
    %v579 = vsel %vm576, %v577, %v578
    %v580 = vrot.slane %v507, 2
    %v581 = vrot.slane %v494, 2
    %v582 = vsel %vm576, %v580, %v581
    %v583 = vrot.slane %v508, 2
    %v584 = vrot.slane %v496, 2
    %v585 = vsel %vm576, %v583, %v584
    %v586 = vrot.slane %v509, 2
    %v587 = vsel %vm576, %v578, %v586
    %v588 = vrot.slane %v510, 2
    %v589 = vsel %vm576, %v581, %v588
    %v590 = vrot.slane %v511, 2
    %v591 = vsel %vm576, %v584, %v590
    %v598 = vsel %vm574, %v579, 0.0
    %v599 = vsel %vm574, %v582, 0.0
    %v600 = vsel %vm574, %v585, 0.0
    %v601 = vsel %vm575, %v587, 0.0
    %v602 = vsel %vm575, %v589, 0.0
    %v603 = vsel %vm575, %v591, 0.0
    %vm604 = vcmp.ge.s32.totalorder %v479, 0
    %vm605 = vcmp.ge.s32.totalorder %v480, 0
    %vm606 = vcmp.lt.s32.totalorder %v479, 8
    %vm607 = vcmp.lt.s32.totalorder %v480, 8
    %vm608 = vmand %vm604, %vm606
    %vm609 = vmand %vm605, %vm607
    %vm610 = vcmask 1044480
    %v611 = vrot.slane %v506, 3
    %v612 = vrot.slane %v492, 3
    %v613 = vsel %vm610, %v611, %v612
    %v614 = vrot.slane %v507, 3
    %v615 = vrot.slane %v494, 3
    %v616 = vsel %vm610, %v614, %v615
    %v617 = vrot.slane %v508, 3
    %v618 = vrot.slane %v496, 3
    %v619 = vsel %vm610, %v617, %v618
    %v620 = vrot.slane %v509, 3
    %v621 = vsel %vm610, %v612, %v620
    %v622 = vrot.slane %v510, 3
    %v623 = vsel %vm610, %v615, %v622
    %v624 = vrot.slane %v511, 3
    %v625 = vsel %vm610, %v618, %v624
    %v632 = vsel %vm608, %v613, 0.0
    %v633 = vsel %vm608, %v616, 0.0
    %v634 = vsel %vm608, %v619, 0.0
    %v635 = vsel %vm609, %v621, 0.0
    %v636 = vsel %vm609, %v623, 0.0
    %v637 = vsel %vm609, %v625, 0.0
    %v638 = vadd.s32 %v479, 1
    %v639 = vadd.s32 %v480, 1
    %vm640 = vcmp.ge.s32.totalorder %v638, 0
    %vm641 = vcmp.ge.s32.totalorder %v639, 0
    %vm642 = vcmp.lt.s32.totalorder %v638, 8
    %vm643 = vcmp.lt.s32.totalorder %v639, 8
    %vm644 = vmand %vm640, %vm642
    %vm645 = vmand %vm641, %vm643
    %vm646 = vcmask 1043456
    %v647 = vrot.slane %v506, 4
    %v648 = vrot.slane %v492, 4
    %v649 = vsel %vm646, %v647, %v648
    %v650 = vrot.slane %v507, 4
    %v651 = vrot.slane %v494, 4
    %v652 = vsel %vm646, %v650, %v651
    %v653 = vrot.slane %v508, 4
    %v654 = vrot.slane %v496, 4
    %v655 = vsel %vm646, %v653, %v654
    %v656 = vrot.slane %v509, 4
    %v657 = vsel %vm646, %v648, %v656
    %v658 = vrot.slane %v510, 4
    %v659 = vsel %vm646, %v651, %v658
    %v660 = vrot.slane %v511, 4
    %v661 = vsel %vm646, %v654, %v660
    %v668 = vsel %vm644, %v649, 0.0
    %v669 = vsel %vm644, %v652, 0.0
    %v670 = vsel %vm644, %v655, 0.0
    %v671 = vsel %vm645, %v657, 0.0
    %v672 = vsel %vm645, %v659, 0.0
    %v673 = vsel %vm645, %v661, 0.0
    %v674 = vadd.s32 %v479, 2
    %v675 = vadd.s32 %v480, 2
    %vm676 = vcmp.ge.s32.totalorder %v674, 0
    %vm677 = vcmp.ge.s32.totalorder %v675, 0
    %vm678 = vcmp.lt.s32.totalorder %v674, 8
    %vm679 = vcmp.lt.s32.totalorder %v675, 8
    %vm680 = vmand %vm676, %vm678
    %vm681 = vmand %vm677, %vm679
    %v682 = vrot.slane %v506, 5
    %v683 = vrot.slane %v492, 5
    %v684 = vsel %vm487, %v682, %v683
    %v685 = vrot.slane %v507, 5
    %v686 = vrot.slane %v494, 5
    %v687 = vsel %vm487, %v685, %v686
    %v688 = vrot.slane %v508, 5
    %v689 = vrot.slane %v496, 5
    %v690 = vsel %vm487, %v688, %v689
    %v691 = vrot.slane %v509, 5
    %v692 = vsel %vm487, %v683, %v691
    %v693 = vrot.slane %v510, 5
    %v694 = vsel %vm487, %v686, %v693
    %v695 = vrot.slane %v511, 5
    %v696 = vsel %vm487, %v689, %v695
    %v703 = vsel %vm680, %v684, 0.0
    %v704 = vsel %vm680, %v687, 0.0
    %v705 = vsel %vm680, %v690, 0.0
    %v706 = vsel %vm681, %v692, 0.0
    %v707 = vsel %vm681, %v694, 0.0
    %v708 = vsel %vm681, %v696, 0.0
    %v709 = vadd.s32 %v479, 3
    %v710 = vadd.s32 %v480, 3
    %vm711 = vcmp.ge.s32.totalorder %v709, 0
    %vm712 = vcmp.ge.s32.totalorder %v710, 0
    %vm713 = vcmp.lt.s32.totalorder %v709, 8
    %vm714 = vcmp.lt.s32.totalorder %v710, 8
    %vm715 = vmand %vm711, %vm713
    %vm716 = vmand %vm712, %vm714
    %vm717 = vcmask 1041408
    %v718 = vrot.slane %v506, 6
    %v719 = vrot.slane %v492, 6
    %v720 = vsel %vm717, %v718, %v719
    %v721 = vrot.slane %v507, 6
    %v722 = vrot.slane %v494, 6
    %v723 = vsel %vm717, %v721, %v722
    %v724 = vrot.slane %v508, 6
    %v725 = vrot.slane %v496, 6
    %v726 = vsel %vm717, %v724, %v725
    %v727 = vrot.slane %v509, 6
    %v728 = vsel %vm717, %v719, %v727
    %v729 = vrot.slane %v510, 6
    %v730 = vsel %vm717, %v722, %v729
    %v731 = vrot.slane %v511, 6
    %v732 = vsel %vm717, %v725, %v731
    %v739 = vsel %vm715, %v720, 0.0
    %v740 = vsel %vm715, %v723, 0.0
    %v741 = vsel %vm715, %v726, 0.0
    %v742 = vsel %vm716, %v728, 0.0
    %v743 = vsel %vm716, %v730, 0.0
    %v744 = vsel %vm716, %v732, 0.0
    %v745 = vld [vmem:[#allocation7] sm:$0xff]
    %v746 = vld [vmem:[#allocation7 + $0x8] sm:$0xff]
    %v747 = vld [vmem:[#allocation7 + $0x10] sm:$0xff]
    %v748 = vld [vmem:[#allocation7 + $0x18] sm:$0xff]
    %v749 = vld [vmem:[#allocation7 + $0x20] sm:$0xff]
    %v750 = vld [vmem:[#allocation7 + $0x28] sm:$0xff]
    %v751 = vld [vmem:[#allocation7 + $0x30] sm:$0xff]
    %v752 = vld [vmem:[#allocation7 + $0x38] sm:$0xff]
    %v753 = vld [vmem:[#allocation7 + $0x40] sm:$0xff]
    %v754 = vld [vmem:[#allocation7 + $0x48] sm:$0xff]
    %v755 = vld [vmem:[#allocation7 + $0x50] sm:$0xff]
    %v756 = vld [vmem:[#allocation7 + $0x58] sm:$0xff]
    %v757 = vld [vmem:[#allocation7 + $0x60] sm:$0xff]
    %v758 = vld [vmem:[#allocation7 + $0x68] sm:$0xff]
    %v759 = vld [vmem:[#allocation7 + $0x70] sm:$0xff]
    %v760 = vld [vmem:[#allocation7 + $0x78] sm:$0xff]
    %v761 = vld [vmem:[#allocation7 + $0x80] sm:$0xff]
    %v762 = vld [vmem:[#allocation7 + $0x88] sm:$0xff]
    %v763 = vld [vmem:[#allocation7 + $0x90] sm:$0xff]
    %v764 = vld [vmem:[#allocation7 + $0x98] sm:$0xff]
    %v765 = vld [vmem:[#allocation7 + $0xa0] sm:$0xff]
    %v766 = vld [vmem:[#allocation7 + $0xa8] sm:$0xff]
    %v767 = vld [vmem:[#allocation7 + $0xb0] sm:$0xff]
    %v768 = vld [vmem:[#allocation7 + $0xb8] sm:$0xff]
    %v769 = vld [vmem:[#allocation7 + $0xc0] sm:$0xff]
    %v770 = vld [vmem:[#allocation7 + $0xc8] sm:$0xff]
    %v771 = vld [vmem:[#allocation7 + $0xd0] sm:$0xff]
    %v772 = vld [vmem:[#allocation7 + $0xd8] sm:$0xff]
    %v773 = vld [vmem:[#allocation7 + $0xe0] sm:$0xff]
    %v774 = vld [vmem:[#allocation7 + $0xe8] sm:$0xff]
    %v775 = vld [vmem:[#allocation7 + $0xf0] sm:$0xff]
    %v776 = vld [vmem:[#allocation7 + $0xf8] sm:$0xff]
    %v777 = vld [vmem:[#allocation7 + $0x100] sm:$0xff]
    %v778 = vld [vmem:[#allocation7 + $0x108] sm:$0xff]
    %v779 = vld [vmem:[#allocation7 + $0x110] sm:$0xff]
    %v780 = vld [vmem:[#allocation7 + $0x118] sm:$0xff]
    %v781 = vld [vmem:[#allocation7 + $0x120] sm:$0xff]
    %v782 = vld [vmem:[#allocation7 + $0x128] sm:$0xff]
    %v783 = vld [vmem:[#allocation7 + $0x130] sm:$0xff]
    %v784 = vld [vmem:[#allocation7 + $0x138] sm:$0xff]
    %v785 = vld [vmem:[#allocation7 + $0x140] sm:$0xff]
    %v786 = vld [vmem:[#allocation7 + $0x148] sm:$0xff]
    %v787 = vld [vmem:[#allocation7 + $0x150] sm:$0xff]
    %v788 = vld [vmem:[#allocation7 + $0x158] sm:$0xff]
    %v789 = vld [vmem:[#allocation7 + $0x160] sm:$0xff]
    %v790 = vld [vmem:[#allocation7 + $0x168] sm:$0xff]
    %v791 = vld [vmem:[#allocation7 + $0x170] sm:$0xff]
    %v792 = vld [vmem:[#allocation7 + $0x178] sm:$0xff]
    %v793 = vld [vmem:[#allocation7 + $0x180] sm:$0xff]
    %v794 = vld [vmem:[#allocation7 + $0x188] sm:$0xff]
    %v795 = vld [vmem:[#allocation7 + $0x190] sm:$0xff]
    %v796 = vld [vmem:[#allocation7 + $0x198] sm:$0xff]
    %v797 = vld [vmem:[#allocation7 + $0x1a0] sm:$0xff]
    %v798 = vld [vmem:[#allocation7 + $0x1a8] sm:$0xff]
    %v799 = vld [vmem:[#allocation7 + $0x1b0] sm:$0xff]
    %v800 = vld [vmem:[#allocation7 + $0x1b8] sm:$0xff]
    %v801 = vld [vmem:[#allocation7 + $0x1c0] sm:$0xff]
    %v802 = vld [vmem:[#allocation7 + $0x1c8] sm:$0xff]
    %v803 = vld [vmem:[#allocation7 + $0x1d0] sm:$0xff]
    %v804 = vld [vmem:[#allocation7 + $0x1d8] sm:$0xff]
    %v805 = vld [vmem:[#allocation7 + $0x1e0] sm:$0xff]
    %v806 = vld [vmem:[#allocation7 + $0x1e8] sm:$0xff]
    %v807 = vld [vmem:[#allocation7 + $0x1f0] sm:$0xff]
    %v808 = vld [vmem:[#allocation7 + $0x1f8] sm:$0xff]
    %v809 = vld [vmem:[#allocation7 + $0x200] sm:$0xff]
    %v810 = vld [vmem:[#allocation7 + $0x208] sm:$0xff]
    %v811 = vld [vmem:[#allocation7 + $0x210] sm:$0xff]
    %v812 = vld [vmem:[#allocation7 + $0x218] sm:$0xff]
    %v813 = vld [vmem:[#allocation7 + $0x220] sm:$0xff]
    %v814 = vld [vmem:[#allocation7 + $0x228] sm:$0xff]
    %v815 = vld [vmem:[#allocation7 + $0x230] sm:$0xff]
    %v816 = vld [vmem:[#allocation7 + $0x238] sm:$0xff]
    %v817 = vld [vmem:[#allocation7 + $0x240] sm:$0xff]
    %v818 = vld [vmem:[#allocation7 + $0x248] sm:$0xff]
    %v819 = vld [vmem:[#allocation7 + $0x250] sm:$0xff]
    %v820 = vld [vmem:[#allocation7 + $0x258] sm:$0xff]
    %v821 = vld [vmem:[#allocation7 + $0x260] sm:$0xff]
    %v822 = vld [vmem:[#allocation7 + $0x268] sm:$0xff]
    %v823 = vld [vmem:[#allocation7 + $0x270] sm:$0xff]
    %v824 = vld [vmem:[#allocation7 + $0x278] sm:$0xff]
    %v825 = vld [vmem:[#allocation7 + $0x280] sm:$0xff]
    %v826 = vld [vmem:[#allocation7 + $0x288] sm:$0xff]
    %v827 = vld [vmem:[#allocation7 + $0x290] sm:$0xff]
    %v828 = vld [vmem:[#allocation7 + $0x298] sm:$0xff]
    %v829 = vld [vmem:[#allocation7 + $0x2a0] sm:$0xff]
    %v830 = vld [vmem:[#allocation7 + $0x2a8] sm:$0xff]
    %v831 = vld [vmem:[#allocation7 + $0x2b0] sm:$0xff]
    %v832 = vld [vmem:[#allocation7 + $0x2b8] sm:$0xff]
    %v833 = vld [vmem:[#allocation7 + $0x2c0] sm:$0xff]
    %v834 = vld [vmem:[#allocation7 + $0x2c8] sm:$0xff]
    %v835 = vld [vmem:[#allocation7 + $0x2d0] sm:$0xff]
    %v836 = vld [vmem:[#allocation7 + $0x2d8] sm:$0xff]
    %v837 = vld [vmem:[#allocation7 + $0x2e0] sm:$0xff]
    %v838 = vld [vmem:[#allocation7 + $0x2e8] sm:$0xff]
    %v839 = vld [vmem:[#allocation7 + $0x2f0] sm:$0xff]
    %v840 = vld [vmem:[#allocation7 + $0x2f8] sm:$0xff]
    %v841 = vld [vmem:[#allocation7 + $0x300] sm:$0xff]
    %v842 = vld [vmem:[#allocation7 + $0x308] sm:$0xff]
    %v843 = vld [vmem:[#allocation7 + $0x310] sm:$0xff]
    %v844 = vld [vmem:[#allocation7 + $0x318] sm:$0xff]
    %v845 = vld [vmem:[#allocation7 + $0x320] sm:$0xff]
    %v846 = vld [vmem:[#allocation7 + $0x328] sm:$0xff]
    %v847 = vld [vmem:[#allocation7 + $0x330] sm:$0xff]
    %v848 = vld [vmem:[#allocation7 + $0x338] sm:$0xff]
    %v849 = vld [vmem:[#allocation7 + $0x340] sm:$0xff]
    %v850 = vld [vmem:[#allocation7 + $0x348] sm:$0xff]
    %v851 = vld [vmem:[#allocation7 + $0x350] sm:$0xff]
    %v852 = vld [vmem:[#allocation7 + $0x358] sm:$0xff]
    %v853 = vld [vmem:[#allocation7 + $0x360] sm:$0xff]
    %v854 = vld [vmem:[#allocation7 + $0x368] sm:$0xff]
    %v855 = vld [vmem:[#allocation7 + $0x370] sm:$0xff]
    %v856 = vld [vmem:[#allocation7 + $0x378] sm:$0xff]
    %v857 = vld [vmem:[#allocation7 + $0x380] sm:$0xff]
    %v858 = vld [vmem:[#allocation7 + $0x388] sm:$0xff]
    %v859 = vld [vmem:[#allocation7 + $0x390] sm:$0xff]
    %v860 = vld [vmem:[#allocation7 + $0x398] sm:$0xff]
    %v861 = vld [vmem:[#allocation7 + $0x3a0] sm:$0xff]
    %v862 = vld [vmem:[#allocation7 + $0x3a8] sm:$0xff]
    %v863 = vld [vmem:[#allocation7 + $0x3b0] sm:$0xff]
    %v864 = vld [vmem:[#allocation7 + $0x3b8] sm:$0xff]
    %v865 = vld [vmem:[#allocation7 + $0x3c0] sm:$0xff]
    %v866 = vld [vmem:[#allocation7 + $0x3c8] sm:$0xff]
    %v867 = vld [vmem:[#allocation7 + $0x3d0] sm:$0xff]
    %v868 = vld [vmem:[#allocation7 + $0x3d8] sm:$0xff]
    %v869 = vld [vmem:[#allocation7 + $0x3e0] sm:$0xff]
    %v870 = vld [vmem:[#allocation7 + $0x3e8] sm:$0xff]
    %v871 = vld [vmem:[#allocation7 + $0x3f0] sm:$0xff]
    %v872 = vld [vmem:[#allocation7 + $0x3f8] sm:$0xff]
    %v873 = vld [vmem:[#allocation7 + $0x400] sm:$0xff]
    %v874 = vld [vmem:[#allocation7 + $0x408] sm:$0xff]
    %v875 = vld [vmem:[#allocation7 + $0x410] sm:$0xff]
    %v876 = vld [vmem:[#allocation7 + $0x418] sm:$0xff]
    %v877 = vld [vmem:[#allocation7 + $0x420] sm:$0xff]
    %v878 = vld [vmem:[#allocation7 + $0x428] sm:$0xff]
    %v879 = vld [vmem:[#allocation7 + $0x430] sm:$0xff]
    %v880 = vld [vmem:[#allocation7 + $0x438] sm:$0xff]
    %v881 = vld [vmem:[#allocation7 + $0x440] sm:$0xff]
    %v882 = vld [vmem:[#allocation7 + $0x448] sm:$0xff]
    %v883 = vld [vmem:[#allocation7 + $0x450] sm:$0xff]
    %v884 = vld [vmem:[#allocation7 + $0x458] sm:$0xff]
    %v885 = vld [vmem:[#allocation7 + $0x460] sm:$0xff]
    %v886 = vld [vmem:[#allocation7 + $0x468] sm:$0xff]
    %v887 = vld [vmem:[#allocation7 + $0x470] sm:$0xff]
    %v888 = vld [vmem:[#allocation7 + $0x478] sm:$0xff]
    %v889 = vld [vmem:[#allocation7 + $0x480] sm:$0xff]
    %v890 = vld [vmem:[#allocation7 + $0x488] sm:$0xff]
    %v891 = vld [vmem:[#allocation7 + $0x490] sm:$0xff]
    %v892 = vld [vmem:[#allocation7 + $0x498] sm:$0xff]
    %v893 = vld [vmem:[#allocation7 + $0x4a0] sm:$0xff]
    %v894 = vld [vmem:[#allocation7 + $0x4a8] sm:$0xff]
    %v895 = vld [vmem:[#allocation7 + $0x4b0] sm:$0xff]
    %v896 = vld [vmem:[#allocation7 + $0x4b8] sm:$0xff]
    %v897 = vld [vmem:[#allocation7 + $0x4c0] sm:$0xff]
    %v898 = vld [vmem:[#allocation7 + $0x4c8] sm:$0xff]
    %v899 = vld [vmem:[#allocation7 + $0x4d0] sm:$0xff]
    %v900 = vld [vmem:[#allocation7 + $0x4d8] sm:$0xff]
    %v901 = vld [vmem:[#allocation7 + $0x4e0] sm:$0xff]
    %v902 = vld [vmem:[#allocation7 + $0x4e8] sm:$0xff]
    %v903 = vld [vmem:[#allocation7 + $0x4f0] sm:$0xff]
    %v904 = vld [vmem:[#allocation7 + $0x4f8] sm:$0xff]
    %v905 = vld [vmem:[#allocation7 + $0x500] sm:$0xff]
    %v906 = vld [vmem:[#allocation7 + $0x508] sm:$0xff]
    %v907 = vld [vmem:[#allocation7 + $0x510] sm:$0xff]
    %v908 = vld [vmem:[#allocation7 + $0x518] sm:$0xff]
    %v909 = vld [vmem:[#allocation7 + $0x520] sm:$0xff]
    %v910 = vld [vmem:[#allocation7 + $0x528] sm:$0xff]
    %v911 = vld [vmem:[#allocation7 + $0x530] sm:$0xff]
    %v912 = vld [vmem:[#allocation7 + $0x538] sm:$0xff]
    %v913 = vld [vmem:[#allocation7 + $0x540] sm:$0xff]
    %v914 = vld [vmem:[#allocation7 + $0x548] sm:$0xff]
    %v915 = vld [vmem:[#allocation7 + $0x550] sm:$0xff]
    %v916 = vld [vmem:[#allocation7 + $0x558] sm:$0xff]
    %v917 = vld [vmem:[#allocation7 + $0x560] sm:$0xff]
    %v918 = vld [vmem:[#allocation7 + $0x568] sm:$0xff]
    %v919 = vld [vmem:[#allocation7 + $0x570] sm:$0xff]
    %v920 = vld [vmem:[#allocation7 + $0x578] sm:$0xff]
    %v921 = vld [vmem:[#allocation7 + $0x580] sm:$0xff]
    %v922 = vld [vmem:[#allocation7 + $0x588] sm:$0xff]
    %v923 = vld [vmem:[#allocation7 + $0x590] sm:$0xff]
    %v924 = vld [vmem:[#allocation7 + $0x598] sm:$0xff]
    %v925 = vld [vmem:[#allocation7 + $0x5a0] sm:$0xff]
    %v926 = vld [vmem:[#allocation7 + $0x5a8] sm:$0xff]
    %v927 = vld [vmem:[#allocation7 + $0x5b0] sm:$0xff]
    %v928 = vld [vmem:[#allocation7 + $0x5b8] sm:$0xff]
    %v929 = vld [vmem:[#allocation7 + $0x5c0] sm:$0xff]
    %v930 = vld [vmem:[#allocation7 + $0x5c8] sm:$0xff]
    %v931 = vld [vmem:[#allocation7 + $0x5d0] sm:$0xff]
    %v932 = vld [vmem:[#allocation7 + $0x5d8] sm:$0xff]
    %v933 = vld [vmem:[#allocation7 + $0x5e0] sm:$0xff]
    %v934 = vld [vmem:[#allocation7 + $0x5e8] sm:$0xff]
    %v935 = vld [vmem:[#allocation7 + $0x5f0] sm:$0xff]
    %v936 = vld [vmem:[#allocation7 + $0x5f8] sm:$0xff]
    %v937 = vld [vmem:[#allocation7 + $0x600] sm:$0xff]
    %v938 = vld [vmem:[#allocation7 + $0x608] sm:$0xff]
    %v939 = vld [vmem:[#allocation7 + $0x610] sm:$0xff]
    %v940 = vld [vmem:[#allocation7 + $0x618] sm:$0xff]
    %v941 = vld [vmem:[#allocation7 + $0x620] sm:$0xff]
    %v942 = vld [vmem:[#allocation7 + $0x628] sm:$0xff]
    %v943 = vld [vmem:[#allocation7 + $0x630] sm:$0xff]
    %v944 = vld [vmem:[#allocation7 + $0x638] sm:$0xff]
    %v945 = vld [vmem:[#allocation7 + $0x640] sm:$0xff]
    %v946 = vld [vmem:[#allocation7 + $0x648] sm:$0xff]
    %v947 = vld [vmem:[#allocation7 + $0x650] sm:$0xff]
    %v948 = vld [vmem:[#allocation7 + $0x658] sm:$0xff]
    %v949 = vld [vmem:[#allocation7 + $0x660] sm:$0xff]
    %v950 = vld [vmem:[#allocation7 + $0x668] sm:$0xff]
    %v951 = vld [vmem:[#allocation7 + $0x670] sm:$0xff]
    %v952 = vld [vmem:[#allocation7 + $0x678] sm:$0xff]
    %v953 = vld [vmem:[#allocation7 + $0x680] sm:$0xff]
    %v954 = vld [vmem:[#allocation7 + $0x688] sm:$0xff]
    %v955 = vld [vmem:[#allocation7 + $0x690] sm:$0xff]
    %v956 = vld [vmem:[#allocation7 + $0x698] sm:$0xff]
    %v957 = vld [vmem:[#allocation7 + $0x6a0] sm:$0xff]
    %v958 = vld [vmem:[#allocation7 + $0x6a8] sm:$0xff]
    %v959 = vld [vmem:[#allocation7 + $0x6b0] sm:$0xff]
    %v960 = vld [vmem:[#allocation7 + $0x6b8] sm:$0xff]
    %v961 = vld [vmem:[#allocation7 + $0x6c0] sm:$0xff]
    %v962 = vld [vmem:[#allocation7 + $0x6c8] sm:$0xff]
    %v963 = vld [vmem:[#allocation7 + $0x6d0] sm:$0xff]
    %v964 = vld [vmem:[#allocation7 + $0x6d8] sm:$0xff]
    %v965 = vld [vmem:[#allocation7 + $0x6e0] sm:$0xff]
    %v966 = vld [vmem:[#allocation7 + $0x6e8] sm:$0xff]
    %v967 = vld [vmem:[#allocation7 + $0x6f0] sm:$0xff]
    %v968 = vld [vmem:[#allocation7 + $0x6f8] sm:$0xff]
    %v969 = vld [vmem:[#allocation7 + $0x700] sm:$0xff]
    %v970 = vld [vmem:[#allocation7 + $0x708] sm:$0xff]
    %v971 = vld [vmem:[#allocation7 + $0x710] sm:$0xff]
    %v972 = vld [vmem:[#allocation7 + $0x718] sm:$0xff]
    %v973 = vld [vmem:[#allocation7 + $0x720] sm:$0xff]
    %v974 = vld [vmem:[#allocation7 + $0x728] sm:$0xff]
    %v975 = vld [vmem:[#allocation7 + $0x730] sm:$0xff]
    %v976 = vld [vmem:[#allocation7 + $0x738] sm:$0xff]
    %v977 = vld [vmem:[#allocation7 + $0x740] sm:$0xff]
    %v978 = vld [vmem:[#allocation7 + $0x748] sm:$0xff]
    %v979 = vld [vmem:[#allocation7 + $0x750] sm:$0xff]
    %v980 = vld [vmem:[#allocation7 + $0x758] sm:$0xff]
    %v981 = vld [vmem:[#allocation7 + $0x760] sm:$0xff]
    %v982 = vld [vmem:[#allocation7 + $0x768] sm:$0xff]
    %v983 = vld [vmem:[#allocation7 + $0x770] sm:$0xff]
    %v984 = vld [vmem:[#allocation7 + $0x778] sm:$0xff]
    %v985 = vld [vmem:[#allocation7 + $0x780] sm:$0xff]
    %v986 = vld [vmem:[#allocation7 + $0x788] sm:$0xff]
    %v987 = vld [vmem:[#allocation7 + $0x790] sm:$0xff]
    %v988 = vld [vmem:[#allocation7 + $0x798] sm:$0xff]
    %v989 = vld [vmem:[#allocation7 + $0x7a0] sm:$0xff]
    %v990 = vld [vmem:[#allocation7 + $0x7a8] sm:$0xff]
    %v991 = vld [vmem:[#allocation7 + $0x7b0] sm:$0xff]
    %v992 = vld [vmem:[#allocation7 + $0x7b8] sm:$0xff]
    %v993 = vld [vmem:[#allocation7 + $0x7c0] sm:$0xff]
    %v994 = vld [vmem:[#allocation7 + $0x7c8] sm:$0xff]
    %v995 = vld [vmem:[#allocation7 + $0x7d0] sm:$0xff]
    %v996 = vld [vmem:[#allocation7 + $0x7d8] sm:$0xff]
    %v997 = vld [vmem:[#allocation7 + $0x7e0] sm:$0xff]
    %v998 = vld [vmem:[#allocation7 + $0x7e8] sm:$0xff]
    %v999 = vld [vmem:[#allocation7 + $0x7f0] sm:$0xff]
    %v1000 = vld [vmem:[#allocation7 + $0x7f8] sm:$0xff]
    %v1001 = vld [vmem:[#allocation7 + $0x800] sm:$0xff]
    %v1002 = vld [vmem:[#allocation7 + $0x808] sm:$0xff]
    %v1003 = vld [vmem:[#allocation7 + $0x810] sm:$0xff]
    %v1004 = vld [vmem:[#allocation7 + $0x818] sm:$0xff]
    %v1005 = vld [vmem:[#allocation7 + $0x820] sm:$0xff]
    %v1006 = vld [vmem:[#allocation7 + $0x828] sm:$0xff]
    %v1007 = vld [vmem:[#allocation7 + $0x830] sm:$0xff]
    %v1008 = vld [vmem:[#allocation7 + $0x838] sm:$0xff]
    %v1009 = vld [vmem:[#allocation7 + $0x840] sm:$0xff]
    %v1010 = vld [vmem:[#allocation7 + $0x848] sm:$0xff]
    %v1011 = vld [vmem:[#allocation7 + $0x850] sm:$0xff]
    %v1012 = vld [vmem:[#allocation7 + $0x858] sm:$0xff]
    %v1013 = vld [vmem:[#allocation7 + $0x860] sm:$0xff]
    %v1014 = vld [vmem:[#allocation7 + $0x868] sm:$0xff]
    %v1015 = vld [vmem:[#allocation7 + $0x870] sm:$0xff]
    %v1016 = vld [vmem:[#allocation7 + $0x878] sm:$0xff]
    %v1017 = vld [vmem:[#allocation7 + $0x880] sm:$0xff]
    %v1018 = vld [vmem:[#allocation7 + $0x888] sm:$0xff]
    %v1019 = vld [vmem:[#allocation7 + $0x890] sm:$0xff]
    %v1020 = vld [vmem:[#allocation7 + $0x898] sm:$0xff]
    %v1021 = vld [vmem:[#allocation7 + $0x8a0] sm:$0xff]
    %v1022 = vld [vmem:[#allocation7 + $0x8a8] sm:$0xff]
    %v1023 = vld [vmem:[#allocation7 + $0x8b0] sm:$0xff]
    %v1024 = vld [vmem:[#allocation7 + $0x8b8] sm:$0xff]
    %v1025 = vld [vmem:[#allocation7 + $0x8c0] sm:$0xff]
    %v1026 = vld [vmem:[#allocation7 + $0x8c8] sm:$0xff]
    %v1027 = vld [vmem:[#allocation7 + $0x8d0] sm:$0xff]
    %v1028 = vld [vmem:[#allocation7 + $0x8d8] sm:$0xff]
    %v1029 = vld [vmem:[#allocation7 + $0x8e0] sm:$0xff]
    %v1030 = vld [vmem:[#allocation7 + $0x8e8] sm:$0xff]
    %v1031 = vld [vmem:[#allocation7 + $0x8f0] sm:$0xff]
    %v1032 = vld [vmem:[#allocation7 + $0x8f8] sm:$0xff]
    %v1033 = vld [vmem:[#allocation7 + $0x900] sm:$0xff]
    %v1034 = vld [vmem:[#allocation7 + $0x908] sm:$0xff]
    %v1035 = vld [vmem:[#allocation7 + $0x910] sm:$0xff]
    %v1036 = vld [vmem:[#allocation7 + $0x918] sm:$0xff]
    %v1037 = vld [vmem:[#allocation7 + $0x920] sm:$0xff]
    %v1038 = vld [vmem:[#allocation7 + $0x928] sm:$0xff]
    %v1039 = vld [vmem:[#allocation7 + $0x930] sm:$0xff]
    %v1040 = vld [vmem:[#allocation7 + $0x938] sm:$0xff]
    %v1041 = vld [vmem:[#allocation7 + $0x940] sm:$0xff]
    %v1042 = vld [vmem:[#allocation7 + $0x948] sm:$0xff]
    %v1043 = vld [vmem:[#allocation7 + $0x950] sm:$0xff]
    %v1044 = vld [vmem:[#allocation7 + $0x958] sm:$0xff]
    %v1045 = vld [vmem:[#allocation7 + $0x960] sm:$0xff]
    %v1046 = vld [vmem:[#allocation7 + $0x968] sm:$0xff]
    %v1047 = vld [vmem:[#allocation7 + $0x970] sm:$0xff]
    %v1048 = vld [vmem:[#allocation7 + $0x978] sm:$0xff]
    %v1049 = vld [vmem:[#allocation7 + $0x980] sm:$0xff]
    %v1050 = vld [vmem:[#allocation7 + $0x988] sm:$0xff]
    %v1051 = vld [vmem:[#allocation7 + $0x990] sm:$0xff]
    %v1052 = vld [vmem:[#allocation7 + $0x998] sm:$0xff]
    %v1053 = vld [vmem:[#allocation7 + $0x9a0] sm:$0xff]
    %v1054 = vld [vmem:[#allocation7 + $0x9a8] sm:$0xff]
    %v1055 = vld [vmem:[#allocation7 + $0x9b0] sm:$0xff]
    %v1056 = vld [vmem:[#allocation7 + $0x9b8] sm:$0xff]
    %v1057 = vld [vmem:[#allocation7 + $0x9c0] sm:$0xff]
    %v1058 = vld [vmem:[#allocation7 + $0x9c8] sm:$0xff]
    %v1059 = vld [vmem:[#allocation7 + $0x9d0] sm:$0xff]
    %v1060 = vld [vmem:[#allocation7 + $0x9d8] sm:$0xff]
    %v1061 = vld [vmem:[#allocation7 + $0x9e0] sm:$0xff]
    %v1062 = vld [vmem:[#allocation7 + $0x9e8] sm:$0xff]
    %v1063 = vld [vmem:[#allocation7 + $0x9f0] sm:$0xff]
    %v1064 = vld [vmem:[#allocation7 + $0x9f8] sm:$0xff]
    %v1065 = vld [vmem:[#allocation7 + $0xa00] sm:$0xff]
    %v1066 = vld [vmem:[#allocation7 + $0xa08] sm:$0xff]
    %v1067 = vld [vmem:[#allocation7 + $0xa10] sm:$0xff]
    %v1068 = vld [vmem:[#allocation7 + $0xa18] sm:$0xff]
    %v1069 = vld [vmem:[#allocation7 + $0xa20] sm:$0xff]
    %v1070 = vld [vmem:[#allocation7 + $0xa28] sm:$0xff]
    %v1071 = vld [vmem:[#allocation7 + $0xa30] sm:$0xff]
    %v1072 = vld [vmem:[#allocation7 + $0xa38] sm:$0xff]
    %v1073 = vld [vmem:[#allocation7 + $0xa40] sm:$0xff]
    %v1074 = vld [vmem:[#allocation7 + $0xa48] sm:$0xff]
    %v1075 = vld [vmem:[#allocation7 + $0xa50] sm:$0xff]
    %v1076 = vld [vmem:[#allocation7 + $0xa58] sm:$0xff]
    %v1077 = vld [vmem:[#allocation7 + $0xa60] sm:$0xff]
    %v1078 = vld [vmem:[#allocation7 + $0xa68] sm:$0xff]
    %v1079 = vld [vmem:[#allocation7 + $0xa70] sm:$0xff]
    %v1080 = vld [vmem:[#allocation7 + $0xa78] sm:$0xff]
    %v1081 = vld [vmem:[#allocation7 + $0xa80] sm:$0xff]
    %v1082 = vld [vmem:[#allocation7 + $0xa88] sm:$0xff]
    %v1083 = vld [vmem:[#allocation7 + $0xa90] sm:$0xff]
    %v1084 = vld [vmem:[#allocation7 + $0xa98] sm:$0xff]
    %v1085 = vld [vmem:[#allocation7 + $0xaa0] sm:$0xff]
    %v1086 = vld [vmem:[#allocation7 + $0xaa8] sm:$0xff]
    %v1087 = vld [vmem:[#allocation7 + $0xab0] sm:$0xff]
    %v1088 = vld [vmem:[#allocation7 + $0xab8] sm:$0xff]
    %v1089 = vld [vmem:[#allocation7 + $0xac0] sm:$0xff]
    %v1090 = vld [vmem:[#allocation7 + $0xac8] sm:$0xff]
    %v1091 = vld [vmem:[#allocation7 + $0xad0] sm:$0xff]
    %v1092 = vld [vmem:[#allocation7 + $0xad8] sm:$0xff]
    %v1093 = vld [vmem:[#allocation7 + $0xae0] sm:$0xff]
    %v1094 = vld [vmem:[#allocation7 + $0xae8] sm:$0xff]
    %v1095 = vld [vmem:[#allocation7 + $0xaf0] sm:$0xff]
    %v1096 = vld [vmem:[#allocation7 + $0xaf8] sm:$0xff]
    %v1097 = vld [vmem:[#allocation7 + $0xb00] sm:$0xff]
    %v1098 = vld [vmem:[#allocation7 + $0xb08] sm:$0xff]
    %v1099 = vld [vmem:[#allocation7 + $0xb10] sm:$0xff]
    %v1100 = vld [vmem:[#allocation7 + $0xb18] sm:$0xff]
    %v1101 = vld [vmem:[#allocation7 + $0xb20] sm:$0xff]
    %v1102 = vld [vmem:[#allocation7 + $0xb28] sm:$0xff]
    %v1103 = vld [vmem:[#allocation7 + $0xb30] sm:$0xff]
    %v1104 = vld [vmem:[#allocation7 + $0xb38] sm:$0xff]
    %v1105 = vld [vmem:[#allocation7 + $0xb40] sm:$0xff]
    %v1106 = vld [vmem:[#allocation7 + $0xb48] sm:$0xff]
    %v1107 = vld [vmem:[#allocation7 + $0xb50] sm:$0xff]
    %v1108 = vld [vmem:[#allocation7 + $0xb58] sm:$0xff]
    %v1109 = vld [vmem:[#allocation7 + $0xb60] sm:$0xff]
    %v1110 = vld [vmem:[#allocation7 + $0xb68] sm:$0xff]
    %v1111 = vld [vmem:[#allocation7 + $0xb70] sm:$0xff]
    %v1112 = vld [vmem:[#allocation7 + $0xb78] sm:$0xff]
    %v1113 = vld [vmem:[#allocation7 + $0xb80] sm:$0xff]
    %v1114 = vld [vmem:[#allocation7 + $0xb88] sm:$0xff]
    %v1115 = vld [vmem:[#allocation7 + $0xb90] sm:$0xff]
    %v1116 = vld [vmem:[#allocation7 + $0xb98] sm:$0xff]
    %v1117 = vld [vmem:[#allocation7 + $0xba0] sm:$0xff]
    %v1118 = vld [vmem:[#allocation7 + $0xba8] sm:$0xff]
    %v1119 = vld [vmem:[#allocation7 + $0xbb0] sm:$0xff]
    %v1120 = vld [vmem:[#allocation7 + $0xbb8] sm:$0xff]
    %v1121 = vld [vmem:[#allocation7 + $0xbc0] sm:$0xff]
    %v1122 = vld [vmem:[#allocation7 + $0xbc8] sm:$0xff]
    %v1123 = vld [vmem:[#allocation7 + $0xbd0] sm:$0xff]
    %v1124 = vld [vmem:[#allocation7 + $0xbd8] sm:$0xff]
    %v1125 = vld [vmem:[#allocation7 + $0xbe0] sm:$0xff]
    %v1126 = vld [vmem:[#allocation7 + $0xbe8] sm:$0xff]
    %v1127 = vld [vmem:[#allocation7 + $0xbf0] sm:$0xff]
    %v1128 = vld [vmem:[#allocation7 + $0xbf8] sm:$0xff]
    %v1129 = vld [vmem:[#allocation7 + $0xc00] sm:$0xff]
    %v1130 = vld [vmem:[#allocation7 + $0xc08] sm:$0xff]
    %v1131 = vld [vmem:[#allocation7 + $0xc10] sm:$0xff]
    %v1132 = vld [vmem:[#allocation7 + $0xc18] sm:$0xff]
    %v1133 = vld [vmem:[#allocation7 + $0xc20] sm:$0xff]
    %v1134 = vld [vmem:[#allocation7 + $0xc28] sm:$0xff]
    %v1135 = vld [vmem:[#allocation7 + $0xc30] sm:$0xff]
    %v1136 = vld [vmem:[#allocation7 + $0xc38] sm:$0xff]
    %v1137 = vld [vmem:[#allocation7 + $0xc40] sm:$0xff]
    %v1138 = vld [vmem:[#allocation7 + $0xc48] sm:$0xff]
    %v1139 = vld [vmem:[#allocation7 + $0xc50] sm:$0xff]
    %v1140 = vld [vmem:[#allocation7 + $0xc58] sm:$0xff]
    %v1141 = vld [vmem:[#allocation7 + $0xc60] sm:$0xff]
    %v1142 = vld [vmem:[#allocation7 + $0xc68] sm:$0xff]
    %v1143 = vld [vmem:[#allocation7 + $0xc70] sm:$0xff]
    %v1144 = vld [vmem:[#allocation7 + $0xc78] sm:$0xff]
    %v1145 = vld [vmem:[#allocation7 + $0xc80] sm:$0xff]
    %v1146 = vld [vmem:[#allocation7 + $0xc88] sm:$0xff]
    %v1147 = vld [vmem:[#allocation7 + $0xc90] sm:$0xff]
    %v1148 = vld [vmem:[#allocation7 + $0xc98] sm:$0xff]
    %v1149 = vld [vmem:[#allocation7 + $0xca0] sm:$0xff]
    %v1150 = vld [vmem:[#allocation7 + $0xca8] sm:$0xff]
    %v1151 = vld [vmem:[#allocation7 + $0xcb0] sm:$0xff]
    %v1152 = vld [vmem:[#allocation7 + $0xcb8] sm:$0xff]
    %v1153 = vld [vmem:[#allocation7 + $0xcc0] sm:$0xff]
    %v1154 = vld [vmem:[#allocation7 + $0xcc8] sm:$0xff]
    %v1155 = vld [vmem:[#allocation7 + $0xcd0] sm:$0xff]
    %v1156 = vld [vmem:[#allocation7 + $0xcd8] sm:$0xff]
    %v1157 = vld [vmem:[#allocation7 + $0xce0] sm:$0xff]
    %v1158 = vld [vmem:[#allocation7 + $0xce8] sm:$0xff]
    %v1159 = vld [vmem:[#allocation7 + $0xcf0] sm:$0xff]
    %v1160 = vld [vmem:[#allocation7 + $0xcf8] sm:$0xff]
    %v1161 = vld [vmem:[#allocation7 + $0xd00] sm:$0xff]
    %v1162 = vld [vmem:[#allocation7 + $0xd08] sm:$0xff]
    %v1163 = vld [vmem:[#allocation7 + $0xd10] sm:$0xff]
    %v1164 = vld [vmem:[#allocation7 + $0xd18] sm:$0xff]
    %v1165 = vld [vmem:[#allocation7 + $0xd20] sm:$0xff]
    %v1166 = vld [vmem:[#allocation7 + $0xd28] sm:$0xff]
    %v1167 = vld [vmem:[#allocation7 + $0xd30] sm:$0xff]
    %v1168 = vld [vmem:[#allocation7 + $0xd38] sm:$0xff]
    %v1169 = vld [vmem:[#allocation7 + $0xd40] sm:$0xff]
    %v1170 = vld [vmem:[#allocation7 + $0xd48] sm:$0xff]
    %v1171 = vld [vmem:[#allocation7 + $0xd50] sm:$0xff]
    %v1172 = vld [vmem:[#allocation7 + $0xd58] sm:$0xff]
    %v1173 = vld [vmem:[#allocation7 + $0xd60] sm:$0xff]
    %v1174 = vld [vmem:[#allocation7 + $0xd68] sm:$0xff]
    %v1175 = vld [vmem:[#allocation7 + $0xd70] sm:$0xff]
    %v1176 = vld [vmem:[#allocation7 + $0xd78] sm:$0xff]
    %v1177 = vld [vmem:[#allocation7 + $0xd80] sm:$0xff]
    %v1178 = vld [vmem:[#allocation7 + $0xd88] sm:$0xff]
    %v1179 = vld [vmem:[#allocation7 + $0xd90] sm:$0xff]
    %v1180 = vld [vmem:[#allocation7 + $0xd98] sm:$0xff]
    %v1181 = vld [vmem:[#allocation7 + $0xda0] sm:$0xff]
    %v1182 = vld [vmem:[#allocation7 + $0xda8] sm:$0xff]
    %v1183 = vld [vmem:[#allocation7 + $0xdb0] sm:$0xff]
    %v1184 = vld [vmem:[#allocation7 + $0xdb8] sm:$0xff]
    %v1185 = vld [vmem:[#allocation7 + $0xdc0] sm:$0xff]
    %v1186 = vld [vmem:[#allocation7 + $0xdc8] sm:$0xff]
    %v1187 = vld [vmem:[#allocation7 + $0xdd0] sm:$0xff]
    %v1188 = vld [vmem:[#allocation7 + $0xdd8] sm:$0xff]
    %v1189 = vld [vmem:[#allocation7 + $0xde0] sm:$0xff]
    %v1190 = vld [vmem:[#allocation7 + $0xde8] sm:$0xff]
    %v1191 = vld [vmem:[#allocation7 + $0xdf0] sm:$0xff]
    %v1192 = vld [vmem:[#allocation7 + $0xdf8] sm:$0xff]
    %v1193 = vld [vmem:[#allocation7 + $0xe00] sm:$0xff]
    %v1194 = vld [vmem:[#allocation7 + $0xe08] sm:$0xff]
    %v1195 = vld [vmem:[#allocation7 + $0xe10] sm:$0xff]
    %v1196 = vld [vmem:[#allocation7 + $0xe18] sm:$0xff]
    %v1197 = vld [vmem:[#allocation7 + $0xe20] sm:$0xff]
    %v1198 = vld [vmem:[#allocation7 + $0xe28] sm:$0xff]
    %v1199 = vld [vmem:[#allocation7 + $0xe30] sm:$0xff]
    %v1200 = vld [vmem:[#allocation7 + $0xe38] sm:$0xff]
    %v1201 = vld [vmem:[#allocation7 + $0xe40] sm:$0xff]
    %v1202 = vld [vmem:[#allocation7 + $0xe48] sm:$0xff]
    %v1203 = vld [vmem:[#allocation7 + $0xe50] sm:$0xff]
    %v1204 = vld [vmem:[#allocation7 + $0xe58] sm:$0xff]
    %v1205 = vld [vmem:[#allocation7 + $0xe60] sm:$0xff]
    %v1206 = vld [vmem:[#allocation7 + $0xe68] sm:$0xff]
    %v1207 = vld [vmem:[#allocation7 + $0xe70] sm:$0xff]
    %v1208 = vld [vmem:[#allocation7 + $0xe78] sm:$0xff]
    %v1209 = vld [vmem:[#allocation7 + $0xe80] sm:$0xff]
    %v1210 = vld [vmem:[#allocation7 + $0xe88] sm:$0xff]
    %v1211 = vld [vmem:[#allocation7 + $0xe90] sm:$0xff]
    %v1212 = vld [vmem:[#allocation7 + $0xe98] sm:$0xff]
    %v1213 = vld [vmem:[#allocation7 + $0xea0] sm:$0xff]
    %v1214 = vld [vmem:[#allocation7 + $0xea8] sm:$0xff]
    %v1215 = vld [vmem:[#allocation7 + $0xeb0] sm:$0xff]
    %v1216 = vld [vmem:[#allocation7 + $0xeb8] sm:$0xff]
    %v1217 = vld [vmem:[#allocation7 + $0xec0] sm:$0xff]
    %v1218 = vld [vmem:[#allocation7 + $0xec8] sm:$0xff]
    %v1219 = vld [vmem:[#allocation7 + $0xed0] sm:$0xff]
    %v1220 = vld [vmem:[#allocation7 + $0xed8] sm:$0xff]
    %v1221 = vld [vmem:[#allocation7 + $0xee0] sm:$0xff]
    %v1222 = vld [vmem:[#allocation7 + $0xee8] sm:$0xff]
    %v1223 = vld [vmem:[#allocation7 + $0xef0] sm:$0xff]
    %v1224 = vld [vmem:[#allocation7 + $0xef8] sm:$0xff]
    %v1225 = vld [vmem:[#allocation7 + $0xf00] sm:$0xff]
    %v1226 = vld [vmem:[#allocation7 + $0xf08] sm:$0xff]
    %v1227 = vld [vmem:[#allocation7 + $0xf10] sm:$0xff]
    %v1228 = vld [vmem:[#allocation7 + $0xf18] sm:$0xff]
    %v1229 = vld [vmem:[#allocation7 + $0xf20] sm:$0xff]
    %v1230 = vld [vmem:[#allocation7 + $0xf28] sm:$0xff]
    %v1231 = vld [vmem:[#allocation7 + $0xf30] sm:$0xff]
    %v1232 = vld [vmem:[#allocation7 + $0xf38] sm:$0xff]
    %v1233 = vld [vmem:[#allocation7 + $0xf40] sm:$0xff]
    %v1234 = vld [vmem:[#allocation7 + $0xf48] sm:$0xff]
    %v1235 = vld [vmem:[#allocation7 + $0xf50] sm:$0xff]
    %v1236 = vld [vmem:[#allocation7 + $0xf58] sm:$0xff]
    %v1237 = vld [vmem:[#allocation7 + $0xf60] sm:$0xff]
    %v1238 = vld [vmem:[#allocation7 + $0xf68] sm:$0xff]
    %v1239 = vld [vmem:[#allocation7 + $0xf70] sm:$0xff]
    %v1240 = vld [vmem:[#allocation7 + $0xf78] sm:$0xff]
    %v1241 = vld [vmem:[#allocation7 + $0xf80] sm:$0xff]
    %v1242 = vld [vmem:[#allocation7 + $0xf88] sm:$0xff]
    %v1243 = vld [vmem:[#allocation7 + $0xf90] sm:$0xff]
    %v1244 = vld [vmem:[#allocation7 + $0xf98] sm:$0xff]
    %v1245 = vld [vmem:[#allocation7 + $0xfa0] sm:$0xff]
    %v1246 = vld [vmem:[#allocation7 + $0xfa8] sm:$0xff]
    %v1247 = vld [vmem:[#allocation7 + $0xfb0] sm:$0xff]
    %v1248 = vld [vmem:[#allocation7 + $0xfb8] sm:$0xff]
    %v1249 = vld [vmem:[#allocation7 + $0xfc0] sm:$0xff]
    %v1250 = vld [vmem:[#allocation7 + $0xfc8] sm:$0xff]
    %v1251 = vld [vmem:[#allocation7 + $0xfd0] sm:$0xff]
    %v1252 = vld [vmem:[#allocation7 + $0xfd8] sm:$0xff]
    %v1253 = vld [vmem:[#allocation7 + $0xfe0] sm:$0xff]
    %v1254 = vld [vmem:[#allocation7 + $0xfe8] sm:$0xff]
    %v1255 = vld [vmem:[#allocation7 + $0xff0] sm:$0xff]
    %v1256 = vld [vmem:[#allocation7 + $0xff8] sm:$0xff]
    %v1257 = vld [vmem:[#allocation7 + $0x1000] sm:$0xff]
    %v1258 = vld [vmem:[#allocation7 + $0x1008] sm:$0xff]
    %v1259 = vld [vmem:[#allocation7 + $0x1010] sm:$0xff]
    %v1260 = vld [vmem:[#allocation7 + $0x1018] sm:$0xff]
    %v1261 = vld [vmem:[#allocation7 + $0x1020] sm:$0xff]
    %v1262 = vld [vmem:[#allocation7 + $0x1028] sm:$0xff]
    %v1263 = vld [vmem:[#allocation7 + $0x1030] sm:$0xff]
    %v1264 = vld [vmem:[#allocation7 + $0x1038] sm:$0xff]
    %v1265 = vld [vmem:[#allocation7 + $0x1040] sm:$0xff]
    %v1266 = vld [vmem:[#allocation7 + $0x1048] sm:$0xff]
    %v1267 = vld [vmem:[#allocation7 + $0x1050] sm:$0xff]
    %v1268 = vld [vmem:[#allocation7 + $0x1058] sm:$0xff]
    %v1269 = vld [vmem:[#allocation7 + $0x1060] sm:$0xff]
    %v1270 = vld [vmem:[#allocation7 + $0x1068] sm:$0xff]
    %v1271 = vld [vmem:[#allocation7 + $0x1070] sm:$0xff]
    %v1272 = vld [vmem:[#allocation7 + $0x1078] sm:$0xff]
    %v1273 = vld [vmem:[#allocation7 + $0x1080] sm:$0xff]
    %v1274 = vld [vmem:[#allocation7 + $0x1088] sm:$0xff]
    %v1275 = vld [vmem:[#allocation7 + $0x1090] sm:$0xff]
    %v1276 = vld [vmem:[#allocation7 + $0x1098] sm:$0xff]
    %v1277 = vld [vmem:[#allocation7 + $0x10a0] sm:$0xff]
    %v1278 = vld [vmem:[#allocation7 + $0x10a8] sm:$0xff]
    %v1279 = vld [vmem:[#allocation7 + $0x10b0] sm:$0xff]
    %v1280 = vld [vmem:[#allocation7 + $0x10b8] sm:$0xff]
    %v1281 = vld [vmem:[#allocation7 + $0x10c0] sm:$0xff]
    %v1282 = vld [vmem:[#allocation7 + $0x10c8] sm:$0xff]
    %v1283 = vld [vmem:[#allocation7 + $0x10d0] sm:$0xff]
    %v1284 = vld [vmem:[#allocation7 + $0x10d8] sm:$0xff]
    %v1285 = vld [vmem:[#allocation7 + $0x10e0] sm:$0xff]
    %v1286 = vld [vmem:[#allocation7 + $0x10e8] sm:$0xff]
    %v1287 = vld [vmem:[#allocation7 + $0x10f0] sm:$0xff]
    %v1288 = vld [vmem:[#allocation7 + $0x10f8] sm:$0xff]
    %v1289 = vld [vmem:[#allocation7 + $0x1100] sm:$0xff]
    %v1290 = vld [vmem:[#allocation7 + $0x1108] sm:$0xff]
    %v1291 = vld [vmem:[#allocation7 + $0x1110] sm:$0xff]
    %v1292 = vld [vmem:[#allocation7 + $0x1118] sm:$0xff]
    %v1293 = vld [vmem:[#allocation7 + $0x1120] sm:$0xff]
    %v1294 = vld [vmem:[#allocation7 + $0x1128] sm:$0xff]
    %v1295 = vld [vmem:[#allocation7 + $0x1130] sm:$0xff]
    %v1296 = vld [vmem:[#allocation7 + $0x1138] sm:$0xff]
    %v1297 = vld [vmem:[#allocation7 + $0x1140] sm:$0xff]
    %v1298 = vld [vmem:[#allocation7 + $0x1148] sm:$0xff]
    %v1299 = vld [vmem:[#allocation7 + $0x1150] sm:$0xff]
    %v1300 = vld [vmem:[#allocation7 + $0x1158] sm:$0xff]
    %v1301 = vld [vmem:[#allocation7 + $0x1160] sm:$0xff]
    %v1302 = vld [vmem:[#allocation7 + $0x1168] sm:$0xff]
    %v1303 = vld [vmem:[#allocation7 + $0x1170] sm:$0xff]
    %v1304 = vld [vmem:[#allocation7 + $0x1178] sm:$0xff]
    %v1305 = vld [vmem:[#allocation7 + $0x1180] sm:$0xff]
    %v1306 = vld [vmem:[#allocation7 + $0x1188] sm:$0xff]
    %v1307 = vld [vmem:[#allocation7 + $0x1190] sm:$0xff]
    %v1308 = vld [vmem:[#allocation7 + $0x1198] sm:$0xff]
    %v1309 = vld [vmem:[#allocation7 + $0x11a0] sm:$0xff]
    %v1310 = vld [vmem:[#allocation7 + $0x11a8] sm:$0xff]
    %v1311 = vld [vmem:[#allocation7 + $0x11b0] sm:$0xff]
    %v1312 = vld [vmem:[#allocation7 + $0x11b8] sm:$0xff]
    %v1313 = vld [vmem:[#allocation7 + $0x11c0] sm:$0xff]
    %v1314 = vld [vmem:[#allocation7 + $0x11c8] sm:$0xff]
    %v1315 = vld [vmem:[#allocation7 + $0x11d0] sm:$0xff]
    %v1316 = vld [vmem:[#allocation7 + $0x11d8] sm:$0xff]
    %v1317 = vld [vmem:[#allocation7 + $0x11e0] sm:$0xff]
    %v1318 = vld [vmem:[#allocation7 + $0x11e8] sm:$0xff]
    %v1319 = vld [vmem:[#allocation7 + $0x11f0] sm:$0xff]
    %v1320 = vld [vmem:[#allocation7 + $0x11f8] sm:$0xff]
    %v1321 = vld [vmem:[#allocation7 + $0x1200] sm:$0xff]
    %v1322 = vld [vmem:[#allocation7 + $0x1208] sm:$0xff]
    %v1323 = vld [vmem:[#allocation7 + $0x1210] sm:$0xff]
    %v1324 = vld [vmem:[#allocation7 + $0x1218] sm:$0xff]
    %v1325 = vld [vmem:[#allocation7 + $0x1220] sm:$0xff]
    %v1326 = vld [vmem:[#allocation7 + $0x1228] sm:$0xff]
    %v1327 = vld [vmem:[#allocation7 + $0x1230] sm:$0xff]
    %v1328 = vld [vmem:[#allocation7 + $0x1238] sm:$0xff]
    %v1329 = vld [vmem:[#allocation7 + $0x1240] sm:$0xff]
    %v1330 = vld [vmem:[#allocation7 + $0x1248] sm:$0xff]
    %v1331 = vld [vmem:[#allocation7 + $0x1250] sm:$0xff]
    %v1332 = vld [vmem:[#allocation7 + $0x1258] sm:$0xff]
    %v1333 = vld [vmem:[#allocation7 + $0x1260] sm:$0xff]
    %v1334 = vld [vmem:[#allocation7 + $0x1268] sm:$0xff]
    %v1335 = vld [vmem:[#allocation7 + $0x1270] sm:$0xff]
    %v1336 = vld [vmem:[#allocation7 + $0x1278] sm:$0xff]
    %v1337 = vld [vmem:[#allocation7 + $0x1280] sm:$0xff]
    %v1338 = vld [vmem:[#allocation7 + $0x1288] sm:$0xff]
    %v1339 = vld [vmem:[#allocation7 + $0x1290] sm:$0xff]
    %v1340 = vld [vmem:[#allocation7 + $0x1298] sm:$0xff]
    %v1341 = vld [vmem:[#allocation7 + $0x12a0] sm:$0xff]
    %v1342 = vld [vmem:[#allocation7 + $0x12a8] sm:$0xff]
    %v1343 = vld [vmem:[#allocation7 + $0x12b0] sm:$0xff]
    %v1344 = vld [vmem:[#allocation7 + $0x12b8] sm:$0xff]
    %v1345 = vld [vmem:[#allocation7 + $0x12c0] sm:$0xff]
    %v1346 = vld [vmem:[#allocation7 + $0x12c8] sm:$0xff]
    %v1347 = vld [vmem:[#allocation7 + $0x12d0] sm:$0xff]
    %v1348 = vld [vmem:[#allocation7 + $0x12d8] sm:$0xff]
    %v1349 = vld [vmem:[#allocation7 + $0x12e0] sm:$0xff]
    %v1350 = vld [vmem:[#allocation7 + $0x12e8] sm:$0xff]
    %v1351 = vld [vmem:[#allocation7 + $0x12f0] sm:$0xff]
    %v1352 = vld [vmem:[#allocation7 + $0x12f8] sm:$0xff]
    %v1353 = vld [vmem:[#allocation7 + $0x1300] sm:$0xff]
    %v1354 = vld [vmem:[#allocation7 + $0x1308] sm:$0xff]
    %v1355 = vld [vmem:[#allocation7 + $0x1310] sm:$0xff]
    %v1356 = vld [vmem:[#allocation7 + $0x1318] sm:$0xff]
    %v1357 = vld [vmem:[#allocation7 + $0x1320] sm:$0xff]
    %v1358 = vld [vmem:[#allocation7 + $0x1328] sm:$0xff]
    %v1359 = vld [vmem:[#allocation7 + $0x1330] sm:$0xff]
    %v1360 = vld [vmem:[#allocation7 + $0x1338] sm:$0xff]
    %v1361 = vld [vmem:[#allocation7 + $0x1340] sm:$0xff]
    %v1362 = vld [vmem:[#allocation7 + $0x1348] sm:$0xff]
    %v1363 = vld [vmem:[#allocation7 + $0x1350] sm:$0xff]
    %v1364 = vld [vmem:[#allocation7 + $0x1358] sm:$0xff]
    %v1365 = vld [vmem:[#allocation7 + $0x1360] sm:$0xff]
    %v1366 = vld [vmem:[#allocation7 + $0x1368] sm:$0xff]
    %v1367 = vld [vmem:[#allocation7 + $0x1370] sm:$0xff]
    %v1368 = vld [vmem:[#allocation7 + $0x1378] sm:$0xff]
    %v1369 = vld [vmem:[#allocation7 + $0x1380] sm:$0xff]
    %v1370 = vld [vmem:[#allocation7 + $0x1388] sm:$0xff]
    %v1371 = vld [vmem:[#allocation7 + $0x1390] sm:$0xff]
    %v1372 = vld [vmem:[#allocation7 + $0x1398] sm:$0xff]
    %v1373 = vld [vmem:[#allocation7 + $0x13a0] sm:$0xff]
    %v1374 = vld [vmem:[#allocation7 + $0x13a8] sm:$0xff]
    %v1375 = vld [vmem:[#allocation7 + $0x13b0] sm:$0xff]
    %v1376 = vld [vmem:[#allocation7 + $0x13b8] sm:$0xff]
    %v1377 = vld [vmem:[#allocation7 + $0x13c0] sm:$0xff]
    %v1378 = vld [vmem:[#allocation7 + $0x13c8] sm:$0xff]
    %v1379 = vld [vmem:[#allocation7 + $0x13d0] sm:$0xff]
    %v1380 = vld [vmem:[#allocation7 + $0x13d8] sm:$0xff]
    %v1381 = vld [vmem:[#allocation7 + $0x13e0] sm:$0xff]
    %v1382 = vld [vmem:[#allocation7 + $0x13e8] sm:$0xff]
    %v1383 = vld [vmem:[#allocation7 + $0x13f0] sm:$0xff]
    %v1384 = vld [vmem:[#allocation7 + $0x13f8] sm:$0xff]
    %v1385 = vld [vmem:[#allocation7 + $0x1400] sm:$0xff]
    %v1386 = vld [vmem:[#allocation7 + $0x1408] sm:$0xff]
    %v1387 = vld [vmem:[#allocation7 + $0x1410] sm:$0xff]
    %v1388 = vld [vmem:[#allocation7 + $0x1418] sm:$0xff]
    %v1389 = vld [vmem:[#allocation7 + $0x1420] sm:$0xff]
    %v1390 = vld [vmem:[#allocation7 + $0x1428] sm:$0xff]
    %v1391 = vld [vmem:[#allocation7 + $0x1430] sm:$0xff]
    %v1392 = vld [vmem:[#allocation7 + $0x1438] sm:$0xff]
    %v1393 = vld [vmem:[#allocation7 + $0x1440] sm:$0xff]
    %v1394 = vld [vmem:[#allocation7 + $0x1448] sm:$0xff]
    %v1395 = vld [vmem:[#allocation7 + $0x1450] sm:$0xff]
    %v1396 = vld [vmem:[#allocation7 + $0x1458] sm:$0xff]
    %v1397 = vld [vmem:[#allocation7 + $0x1460] sm:$0xff]
    %v1398 = vld [vmem:[#allocation7 + $0x1468] sm:$0xff]
    %v1399 = vld [vmem:[#allocation7 + $0x1470] sm:$0xff]
    %v1400 = vld [vmem:[#allocation7 + $0x1478] sm:$0xff]
    %v1401 = vld [vmem:[#allocation7 + $0x1480] sm:$0xff]
    %v1402 = vld [vmem:[#allocation7 + $0x1488] sm:$0xff]
    %v1403 = vld [vmem:[#allocation7 + $0x1490] sm:$0xff]
    %v1404 = vld [vmem:[#allocation7 + $0x1498] sm:$0xff]
    %v1405 = vld [vmem:[#allocation7 + $0x14a0] sm:$0xff]
    %v1406 = vld [vmem:[#allocation7 + $0x14a8] sm:$0xff]
    %v1407 = vld [vmem:[#allocation7 + $0x14b0] sm:$0xff]
    %v1408 = vld [vmem:[#allocation7 + $0x14b8] sm:$0xff]
    %v1409 = vld [vmem:[#allocation7 + $0x14c0] sm:$0xff]
    %v1410 = vld [vmem:[#allocation7 + $0x14c8] sm:$0xff]
    %v1411 = vld [vmem:[#allocation7 + $0x14d0] sm:$0xff]
    %v1412 = vld [vmem:[#allocation7 + $0x14d8] sm:$0xff]
    %v1413 = vld [vmem:[#allocation7 + $0x14e0] sm:$0xff]
    %v1414 = vld [vmem:[#allocation7 + $0x14e8] sm:$0xff]
    %v1415 = vld [vmem:[#allocation7 + $0x14f0] sm:$0xff]
    %v1416 = vld [vmem:[#allocation7 + $0x14f8] sm:$0xff]
    %v1417 = vld [vmem:[#allocation7 + $0x1500] sm:$0xff]
    %v1418 = vld [vmem:[#allocation7 + $0x1508] sm:$0xff]
    %v1419 = vld [vmem:[#allocation7 + $0x1510] sm:$0xff]
    %v1420 = vld [vmem:[#allocation7 + $0x1518] sm:$0xff]
    %v1421 = vld [vmem:[#allocation7 + $0x1520] sm:$0xff]
    %v1422 = vld [vmem:[#allocation7 + $0x1528] sm:$0xff]
    %v1423 = vld [vmem:[#allocation7 + $0x1530] sm:$0xff]
    %v1424 = vld [vmem:[#allocation7 + $0x1538] sm:$0xff]
    %v1425 = vld [vmem:[#allocation7 + $0x1540] sm:$0xff]
    %v1426 = vld [vmem:[#allocation7 + $0x1548] sm:$0xff]
    %v1427 = vld [vmem:[#allocation7 + $0x1550] sm:$0xff]
    %v1428 = vld [vmem:[#allocation7 + $0x1558] sm:$0xff]
    %v1429 = vld [vmem:[#allocation7 + $0x1560] sm:$0xff]
    %v1430 = vld [vmem:[#allocation7 + $0x1568] sm:$0xff]
    %v1431 = vld [vmem:[#allocation7 + $0x1570] sm:$0xff]
    %v1432 = vld [vmem:[#allocation7 + $0x1578] sm:$0xff]
    %v1433 = vld [vmem:[#allocation7 + $0x1580] sm:$0xff]
    %v1434 = vld [vmem:[#allocation7 + $0x1588] sm:$0xff]
    %v1435 = vld [vmem:[#allocation7 + $0x1590] sm:$0xff]
    %v1436 = vld [vmem:[#allocation7 + $0x1598] sm:$0xff]
    %v1437 = vld [vmem:[#allocation7 + $0x15a0] sm:$0xff]
    %v1438 = vld [vmem:[#allocation7 + $0x15a8] sm:$0xff]
    %v1439 = vld [vmem:[#allocation7 + $0x15b0] sm:$0xff]
    %v1440 = vld [vmem:[#allocation7 + $0x15b8] sm:$0xff]
    %v1441 = vld [vmem:[#allocation7 + $0x15c0] sm:$0xff]
    %v1442 = vld [vmem:[#allocation7 + $0x15c8] sm:$0xff]
    %v1443 = vld [vmem:[#allocation7 + $0x15d0] sm:$0xff]
    %v1444 = vld [vmem:[#allocation7 + $0x15d8] sm:$0xff]
    %v1445 = vld [vmem:[#allocation7 + $0x15e0] sm:$0xff]
    %v1446 = vld [vmem:[#allocation7 + $0x15e8] sm:$0xff]
    %v1447 = vld [vmem:[#allocation7 + $0x15f0] sm:$0xff]
    %v1448 = vld [vmem:[#allocation7 + $0x15f8] sm:$0xff]
    %v1449 = vld [vmem:[#allocation7 + $0x1600] sm:$0xff]
    %v1450 = vld [vmem:[#allocation7 + $0x1608] sm:$0xff]
    %v1451 = vld [vmem:[#allocation7 + $0x1610] sm:$0xff]
    %v1452 = vld [vmem:[#allocation7 + $0x1618] sm:$0xff]
    %v1453 = vld [vmem:[#allocation7 + $0x1620] sm:$0xff]
    %v1454 = vld [vmem:[#allocation7 + $0x1628] sm:$0xff]
    %v1455 = vld [vmem:[#allocation7 + $0x1630] sm:$0xff]
    %v1456 = vld [vmem:[#allocation7 + $0x1638] sm:$0xff]
    %v1457 = vld [vmem:[#allocation7 + $0x1640] sm:$0xff]
    %v1458 = vld [vmem:[#allocation7 + $0x1648] sm:$0xff]
    %v1459 = vld [vmem:[#allocation7 + $0x1650] sm:$0xff]
    %v1460 = vld [vmem:[#allocation7 + $0x1658] sm:$0xff]
    %v1461 = vld [vmem:[#allocation7 + $0x1660] sm:$0xff]
    %v1462 = vld [vmem:[#allocation7 + $0x1668] sm:$0xff]
    %v1463 = vld [vmem:[#allocation7 + $0x1670] sm:$0xff]
    %v1464 = vld [vmem:[#allocation7 + $0x1678] sm:$0xff]
    %v1465 = vld [vmem:[#allocation7 + $0x1680] sm:$0xff]
    %v1466 = vld [vmem:[#allocation7 + $0x1688] sm:$0xff]
    %v1467 = vld [vmem:[#allocation7 + $0x1690] sm:$0xff]
    %v1468 = vld [vmem:[#allocation7 + $0x1698] sm:$0xff]
    %v1469 = vld [vmem:[#allocation7 + $0x16a0] sm:$0xff]
    %v1470 = vld [vmem:[#allocation7 + $0x16a8] sm:$0xff]
    %v1471 = vld [vmem:[#allocation7 + $0x16b0] sm:$0xff]
    %v1472 = vld [vmem:[#allocation7 + $0x16b8] sm:$0xff]
    %v1473 = vld [vmem:[#allocation7 + $0x16c0] sm:$0xff]
    %v1474 = vld [vmem:[#allocation7 + $0x16c8] sm:$0xff]
    %v1475 = vld [vmem:[#allocation7 + $0x16d0] sm:$0xff]
    %v1476 = vld [vmem:[#allocation7 + $0x16d8] sm:$0xff]
    %v1477 = vld [vmem:[#allocation7 + $0x16e0] sm:$0xff]
    %v1478 = vld [vmem:[#allocation7 + $0x16e8] sm:$0xff]
    %v1479 = vld [vmem:[#allocation7 + $0x16f0] sm:$0xff]
    %v1480 = vld [vmem:[#allocation7 + $0x16f8] sm:$0xff]
    %v1481 = vld [vmem:[#allocation7 + $0x1700] sm:$0xff]
    %v1482 = vld [vmem:[#allocation7 + $0x1708] sm:$0xff]
    %v1483 = vld [vmem:[#allocation7 + $0x1710] sm:$0xff]
    %v1484 = vld [vmem:[#allocation7 + $0x1718] sm:$0xff]
    %v1485 = vld [vmem:[#allocation7 + $0x1720] sm:$0xff]
    %v1486 = vld [vmem:[#allocation7 + $0x1728] sm:$0xff]
    %v1487 = vld [vmem:[#allocation7 + $0x1730] sm:$0xff]
    %v1488 = vld [vmem:[#allocation7 + $0x1738] sm:$0xff]
    %v1489 = vld [vmem:[#allocation7 + $0x1740] sm:$0xff]
    %v1490 = vld [vmem:[#allocation7 + $0x1748] sm:$0xff]
    %v1491 = vld [vmem:[#allocation7 + $0x1750] sm:$0xff]
    %v1492 = vld [vmem:[#allocation7 + $0x1758] sm:$0xff]
    %v1493 = vld [vmem:[#allocation7 + $0x1760] sm:$0xff]
    %v1494 = vld [vmem:[#allocation7 + $0x1768] sm:$0xff]
    %v1495 = vld [vmem:[#allocation7 + $0x1770] sm:$0xff]
    %v1496 = vld [vmem:[#allocation7 + $0x1778] sm:$0xff]
    %v1497 = vld [vmem:[#allocation7 + $0x1780] sm:$0xff]
    %v1498 = vld [vmem:[#allocation7 + $0x1788] sm:$0xff]
    %v1499 = vld [vmem:[#allocation7 + $0x1790] sm:$0xff]
    %v1500 = vld [vmem:[#allocation7 + $0x1798] sm:$0xff]
    %v1501 = vld [vmem:[#allocation7 + $0x17a0] sm:$0xff]
    %v1502 = vld [vmem:[#allocation7 + $0x17a8] sm:$0xff]
    %v1503 = vld [vmem:[#allocation7 + $0x17b0] sm:$0xff]
    %v1504 = vld [vmem:[#allocation7 + $0x17b8] sm:$0xff]
    %v1505 = vld [vmem:[#allocation7 + $0x17c0] sm:$0xff]
    %v1506 = vld [vmem:[#allocation7 + $0x17c8] sm:$0xff]
    %v1507 = vld [vmem:[#allocation7 + $0x17d0] sm:$0xff]
    %v1508 = vld [vmem:[#allocation7 + $0x17d8] sm:$0xff]
    %v1509 = vld [vmem:[#allocation7 + $0x17e0] sm:$0xff]
    %v1510 = vld [vmem:[#allocation7 + $0x17e8] sm:$0xff]
    %v1511 = vld [vmem:[#allocation7 + $0x17f0] sm:$0xff]
    %v1512 = vld [vmem:[#allocation7 + $0x17f8] sm:$0xff]
    %v1513 = vld [vmem:[#allocation7 + $0x1800] sm:$0xff]
    %v1514 = vld [vmem:[#allocation7 + $0x1808] sm:$0xff]
    %v1515 = vld [vmem:[#allocation7 + $0x1810] sm:$0xff]
    %v1516 = vld [vmem:[#allocation7 + $0x1818] sm:$0xff]
    %v1517 = vld [vmem:[#allocation7 + $0x1820] sm:$0xff]
    %v1518 = vld [vmem:[#allocation7 + $0x1828] sm:$0xff]
    %v1519 = vld [vmem:[#allocation7 + $0x1830] sm:$0xff]
    %v1520 = vld [vmem:[#allocation7 + $0x1838] sm:$0xff]
    %v1521 = vld [vmem:[#allocation7 + $0x1840] sm:$0xff]
    %v1522 = vld [vmem:[#allocation7 + $0x1848] sm:$0xff]
    %v1523 = vld [vmem:[#allocation7 + $0x1850] sm:$0xff]
    %v1524 = vld [vmem:[#allocation7 + $0x1858] sm:$0xff]
    %v1525 = vld [vmem:[#allocation7 + $0x1860] sm:$0xff]
    %v1526 = vld [vmem:[#allocation7 + $0x1868] sm:$0xff]
    %v1527 = vld [vmem:[#allocation7 + $0x1870] sm:$0xff]
    %v1528 = vld [vmem:[#allocation7 + $0x1878] sm:$0xff]
    %v1529 = vld [vmem:[#allocation7 + $0x1880] sm:$0xff]
    %v1530 = vld [vmem:[#allocation7 + $0x1888] sm:$0xff]
    %v1531 = vld [vmem:[#allocation7 + $0x1890] sm:$0xff]
    %v1532 = vld [vmem:[#allocation7 + $0x1898] sm:$0xff]
    %v1533 = vld [vmem:[#allocation7 + $0x18a0] sm:$0xff]
    %v1534 = vld [vmem:[#allocation7 + $0x18a8] sm:$0xff]
    %v1535 = vld [vmem:[#allocation7 + $0x18b0] sm:$0xff]
    %v1536 = vld [vmem:[#allocation7 + $0x18b8] sm:$0xff]
    %v1537 = vld [vmem:[#allocation7 + $0x18c0] sm:$0xff]
    %v1538 = vld [vmem:[#allocation7 + $0x18c8] sm:$0xff]
    %v1539 = vld [vmem:[#allocation7 + $0x18d0] sm:$0xff]
    %v1540 = vld [vmem:[#allocation7 + $0x18d8] sm:$0xff]
    %v1541 = vld [vmem:[#allocation7 + $0x18e0] sm:$0xff]
    %v1542 = vld [vmem:[#allocation7 + $0x18e8] sm:$0xff]
    %v1543 = vld [vmem:[#allocation7 + $0x18f0] sm:$0xff]
    %v1544 = vld [vmem:[#allocation7 + $0x18f8] sm:$0xff]
    %v1545 = vld [vmem:[#allocation7 + $0x1900] sm:$0xff]
    %v1546 = vld [vmem:[#allocation7 + $0x1908] sm:$0xff]
    %v1547 = vld [vmem:[#allocation7 + $0x1910] sm:$0xff]
    %v1548 = vld [vmem:[#allocation7 + $0x1918] sm:$0xff]
    %v1549 = vld [vmem:[#allocation7 + $0x1920] sm:$0xff]
    %v1550 = vld [vmem:[#allocation7 + $0x1928] sm:$0xff]
    %v1551 = vld [vmem:[#allocation7 + $0x1930] sm:$0xff]
    %v1552 = vld [vmem:[#allocation7 + $0x1938] sm:$0xff]
    %v1553 = vld [vmem:[#allocation7 + $0x1940] sm:$0xff]
    %v1554 = vld [vmem:[#allocation7 + $0x1948] sm:$0xff]
    %v1555 = vld [vmem:[#allocation7 + $0x1950] sm:$0xff]
    %v1556 = vld [vmem:[#allocation7 + $0x1958] sm:$0xff]
    %v1557 = vld [vmem:[#allocation7 + $0x1960] sm:$0xff]
    %v1558 = vld [vmem:[#allocation7 + $0x1968] sm:$0xff]
    %v1559 = vld [vmem:[#allocation7 + $0x1970] sm:$0xff]
    %v1560 = vld [vmem:[#allocation7 + $0x1978] sm:$0xff]
    %v1561 = vld [vmem:[#allocation7 + $0x1980] sm:$0xff]
    %v1562 = vld [vmem:[#allocation7 + $0x1988] sm:$0xff]
    %v1563 = vld [vmem:[#allocation7 + $0x1990] sm:$0xff]
    %v1564 = vld [vmem:[#allocation7 + $0x1998] sm:$0xff]
    %v1565 = vld [vmem:[#allocation7 + $0x19a0] sm:$0xff]
    %v1566 = vld [vmem:[#allocation7 + $0x19a8] sm:$0xff]
    %v1567 = vld [vmem:[#allocation7 + $0x19b0] sm:$0xff]
    %v1568 = vld [vmem:[#allocation7 + $0x19b8] sm:$0xff]
    %v1569 = vld [vmem:[#allocation7 + $0x19c0] sm:$0xff]
    %v1570 = vld [vmem:[#allocation7 + $0x19c8] sm:$0xff]
    %v1571 = vld [vmem:[#allocation7 + $0x19d0] sm:$0xff]
    %v1572 = vld [vmem:[#allocation7 + $0x19d8] sm:$0xff]
    %v1573 = vld [vmem:[#allocation7 + $0x19e0] sm:$0xff]
    %v1574 = vld [vmem:[#allocation7 + $0x19e8] sm:$0xff]
    %v1575 = vld [vmem:[#allocation7 + $0x19f0] sm:$0xff]
    %v1576 = vld [vmem:[#allocation7 + $0x19f8] sm:$0xff]
    %v1577 = vld [vmem:[#allocation7 + $0x1a00] sm:$0xff]
    %v1578 = vld [vmem:[#allocation7 + $0x1a08] sm:$0xff]
    %v1579 = vld [vmem:[#allocation7 + $0x1a10] sm:$0xff]
    %v1580 = vld [vmem:[#allocation7 + $0x1a18] sm:$0xff]
    %v1581 = vld [vmem:[#allocation7 + $0x1a20] sm:$0xff]
    %v1582 = vld [vmem:[#allocation7 + $0x1a28] sm:$0xff]
    %v1583 = vld [vmem:[#allocation7 + $0x1a30] sm:$0xff]
    %v1584 = vld [vmem:[#allocation7 + $0x1a38] sm:$0xff]
    %v1585 = vld [vmem:[#allocation7 + $0x1a40] sm:$0xff]
    %v1586 = vld [vmem:[#allocation7 + $0x1a48] sm:$0xff]
    %v1587 = vld [vmem:[#allocation7 + $0x1a50] sm:$0xff]
    %v1588 = vld [vmem:[#allocation7 + $0x1a58] sm:$0xff]
    %v1589 = vld [vmem:[#allocation7 + $0x1a60] sm:$0xff]
    %v1590 = vld [vmem:[#allocation7 + $0x1a68] sm:$0xff]
    %v1591 = vld [vmem:[#allocation7 + $0x1a70] sm:$0xff]
    %v1592 = vld [vmem:[#allocation7 + $0x1a78] sm:$0xff]
    %v1593 = vld [vmem:[#allocation7 + $0x1a80] sm:$0xff]
    %v1594 = vld [vmem:[#allocation7 + $0x1a88] sm:$0xff]
    %v1595 = vld [vmem:[#allocation7 + $0x1a90] sm:$0xff]
    %v1596 = vld [vmem:[#allocation7 + $0x1a98] sm:$0xff]
    %v1597 = vld [vmem:[#allocation7 + $0x1aa0] sm:$0xff]
    %v1598 = vld [vmem:[#allocation7 + $0x1aa8] sm:$0xff]
    %v1599 = vld [vmem:[#allocation7 + $0x1ab0] sm:$0xff]
    %v1600 = vld [vmem:[#allocation7 + $0x1ab8] sm:$0xff]
    %v1601 = vld [vmem:[#allocation7 + $0x1ac0] sm:$0xff]
    %v1602 = vld [vmem:[#allocation7 + $0x1ac8] sm:$0xff]
    %v1603 = vld [vmem:[#allocation7 + $0x1ad0] sm:$0xff]
    %v1604 = vld [vmem:[#allocation7 + $0x1ad8] sm:$0xff]
    %v1605 = vld [vmem:[#allocation7 + $0x1ae0] sm:$0xff]
    %v1606 = vld [vmem:[#allocation7 + $0x1ae8] sm:$0xff]
    %v1607 = vld [vmem:[#allocation7 + $0x1af0] sm:$0xff]
    %v1608 = vld [vmem:[#allocation7 + $0x1af8] sm:$0xff]
    %v1609 = vld [vmem:[#allocation7 + $0x1b00] sm:$0xff]
    %v1610 = vld [vmem:[#allocation7 + $0x1b08] sm:$0xff]
    %v1611 = vld [vmem:[#allocation7 + $0x1b10] sm:$0xff]
    %v1612 = vld [vmem:[#allocation7 + $0x1b18] sm:$0xff]
    %v1613 = vld [vmem:[#allocation7 + $0x1b20] sm:$0xff]
    %v1614 = vld [vmem:[#allocation7 + $0x1b28] sm:$0xff]
    %v1615 = vld [vmem:[#allocation7 + $0x1b30] sm:$0xff]
    %v1616 = vld [vmem:[#allocation7 + $0x1b38] sm:$0xff]
    %v1617 = vld [vmem:[#allocation7 + $0x1b40] sm:$0xff]
    %v1618 = vld [vmem:[#allocation7 + $0x1b48] sm:$0xff]
    %v1619 = vld [vmem:[#allocation7 + $0x1b50] sm:$0xff]
    %v1620 = vld [vmem:[#allocation7 + $0x1b58] sm:$0xff]
    %v1621 = vld [vmem:[#allocation7 + $0x1b60] sm:$0xff]
    %v1622 = vld [vmem:[#allocation7 + $0x1b68] sm:$0xff]
    %v1623 = vld [vmem:[#allocation7 + $0x1b70] sm:$0xff]
    %v1624 = vld [vmem:[#allocation7 + $0x1b78] sm:$0xff]
    %v1625 = vld [vmem:[#allocation7 + $0x1b80] sm:$0xff]
    %v1626 = vld [vmem:[#allocation7 + $0x1b88] sm:$0xff]
    %v1627 = vld [vmem:[#allocation7 + $0x1b90] sm:$0xff]
    %v1628 = vld [vmem:[#allocation7 + $0x1b98] sm:$0xff]
    %v1629 = vld [vmem:[#allocation7 + $0x1ba0] sm:$0xff]
    %v1630 = vld [vmem:[#allocation7 + $0x1ba8] sm:$0xff]
    %v1631 = vld [vmem:[#allocation7 + $0x1bb0] sm:$0xff]
    %v1632 = vld [vmem:[#allocation7 + $0x1bb8] sm:$0xff]
    %v1633 = vld [vmem:[#allocation7 + $0x1bc0] sm:$0xff]
    %v1634 = vld [vmem:[#allocation7 + $0x1bc8] sm:$0xff]
    %v1635 = vld [vmem:[#allocation7 + $0x1bd0] sm:$0xff]
    %v1636 = vld [vmem:[#allocation7 + $0x1bd8] sm:$0xff]
    %v1637 = vld [vmem:[#allocation7 + $0x1be0] sm:$0xff]
    %v1638 = vld [vmem:[#allocation7 + $0x1be8] sm:$0xff]
    %v1639 = vld [vmem:[#allocation7 + $0x1bf0] sm:$0xff]
    %v1640 = vld [vmem:[#allocation7 + $0x1bf8] sm:$0xff]
    %v1641 = vld [vmem:[#allocation7 + $0x1c00] sm:$0xff]
    %v1642 = vld [vmem:[#allocation7 + $0x1c08] sm:$0xff]
    %v1643 = vld [vmem:[#allocation7 + $0x1c10] sm:$0xff]
    %v1644 = vld [vmem:[#allocation7 + $0x1c18] sm:$0xff]
    %v1645 = vld [vmem:[#allocation7 + $0x1c20] sm:$0xff]
    %v1646 = vld [vmem:[#allocation7 + $0x1c28] sm:$0xff]
    %v1647 = vld [vmem:[#allocation7 + $0x1c30] sm:$0xff]
    %v1648 = vld [vmem:[#allocation7 + $0x1c38] sm:$0xff]
    %v1649 = vld [vmem:[#allocation7 + $0x1c40] sm:$0xff]
    %v1650 = vld [vmem:[#allocation7 + $0x1c48] sm:$0xff]
    %v1651 = vld [vmem:[#allocation7 + $0x1c50] sm:$0xff]
    %v1652 = vld [vmem:[#allocation7 + $0x1c58] sm:$0xff]
    %v1653 = vld [vmem:[#allocation7 + $0x1c60] sm:$0xff]
    %v1654 = vld [vmem:[#allocation7 + $0x1c68] sm:$0xff]
    %v1655 = vld [vmem:[#allocation7 + $0x1c70] sm:$0xff]
    %v1656 = vld [vmem:[#allocation7 + $0x1c78] sm:$0xff]
    %v1657 = vld [vmem:[#allocation7 + $0x1c80] sm:$0xff]
    %v1658 = vld [vmem:[#allocation7 + $0x1c88] sm:$0xff]
    %v1659 = vld [vmem:[#allocation7 + $0x1c90] sm:$0xff]
    %v1660 = vld [vmem:[#allocation7 + $0x1c98] sm:$0xff]
    %v1661 = vld [vmem:[#allocation7 + $0x1ca0] sm:$0xff]
    %v1662 = vld [vmem:[#allocation7 + $0x1ca8] sm:$0xff]
    %v1663 = vld [vmem:[#allocation7 + $0x1cb0] sm:$0xff]
    %v1664 = vld [vmem:[#allocation7 + $0x1cb8] sm:$0xff]
    %v1665 = vld [vmem:[#allocation7 + $0x1cc0] sm:$0xff]
    %v1666 = vld [vmem:[#allocation7 + $0x1cc8] sm:$0xff]
    %v1667 = vld [vmem:[#allocation7 + $0x1cd0] sm:$0xff]
    %v1668 = vld [vmem:[#allocation7 + $0x1cd8] sm:$0xff]
    %v1669 = vld [vmem:[#allocation7 + $0x1ce0] sm:$0xff]
    %v1670 = vld [vmem:[#allocation7 + $0x1ce8] sm:$0xff]
    %v1671 = vld [vmem:[#allocation7 + $0x1cf0] sm:$0xff]
    %v1672 = vld [vmem:[#allocation7 + $0x1cf8] sm:$0xff]
    %v1673 = vld [vmem:[#allocation7 + $0x1d00] sm:$0xff]
    %v1674 = vld [vmem:[#allocation7 + $0x1d08] sm:$0xff]
    %v1675 = vld [vmem:[#allocation7 + $0x1d10] sm:$0xff]
    %v1676 = vld [vmem:[#allocation7 + $0x1d18] sm:$0xff]
    %v1677 = vld [vmem:[#allocation7 + $0x1d20] sm:$0xff]
    %v1678 = vld [vmem:[#allocation7 + $0x1d28] sm:$0xff]
    %v1679 = vld [vmem:[#allocation7 + $0x1d30] sm:$0xff]
    %v1680 = vld [vmem:[#allocation7 + $0x1d38] sm:$0xff]
    %v1681 = vld [vmem:[#allocation7 + $0x1d40] sm:$0xff]
    %v1682 = vld [vmem:[#allocation7 + $0x1d48] sm:$0xff]
    %v1683 = vld [vmem:[#allocation7 + $0x1d50] sm:$0xff]
    %v1684 = vld [vmem:[#allocation7 + $0x1d58] sm:$0xff]
    %v1685 = vld [vmem:[#allocation7 + $0x1d60] sm:$0xff]
    %v1686 = vld [vmem:[#allocation7 + $0x1d68] sm:$0xff]
    %v1687 = vld [vmem:[#allocation7 + $0x1d70] sm:$0xff]
    %v1688 = vld [vmem:[#allocation7 + $0x1d78] sm:$0xff]
    %v1689 = vld [vmem:[#allocation7 + $0x1d80] sm:$0xff]
    %v1690 = vld [vmem:[#allocation7 + $0x1d88] sm:$0xff]
    %v1691 = vld [vmem:[#allocation7 + $0x1d90] sm:$0xff]
    %v1692 = vld [vmem:[#allocation7 + $0x1d98] sm:$0xff]
    %v1693 = vld [vmem:[#allocation7 + $0x1da0] sm:$0xff]
    %v1694 = vld [vmem:[#allocation7 + $0x1da8] sm:$0xff]
    %v1695 = vld [vmem:[#allocation7 + $0x1db0] sm:$0xff]
    %v1696 = vld [vmem:[#allocation7 + $0x1db8] sm:$0xff]
    %v1697 = vld [vmem:[#allocation7 + $0x1dc0] sm:$0xff]
    %v1698 = vld [vmem:[#allocation7 + $0x1dc8] sm:$0xff]
    %v1699 = vld [vmem:[#allocation7 + $0x1dd0] sm:$0xff]
    %v1700 = vld [vmem:[#allocation7 + $0x1dd8] sm:$0xff]
    %v1701 = vld [vmem:[#allocation7 + $0x1de0] sm:$0xff]
    %v1702 = vld [vmem:[#allocation7 + $0x1de8] sm:$0xff]
    %v1703 = vld [vmem:[#allocation7 + $0x1df0] sm:$0xff]
    %v1704 = vld [vmem:[#allocation7 + $0x1df8] sm:$0xff]
    %v1705 = vld [vmem:[#allocation7 + $0x1e00] sm:$0xff]
    %v1706 = vld [vmem:[#allocation7 + $0x1e08] sm:$0xff]
    %v1707 = vld [vmem:[#allocation7 + $0x1e10] sm:$0xff]
    %v1708 = vld [vmem:[#allocation7 + $0x1e18] sm:$0xff]
    %v1709 = vld [vmem:[#allocation7 + $0x1e20] sm:$0xff]
    %v1710 = vld [vmem:[#allocation7 + $0x1e28] sm:$0xff]
    %v1711 = vld [vmem:[#allocation7 + $0x1e30] sm:$0xff]
    %v1712 = vld [vmem:[#allocation7 + $0x1e38] sm:$0xff]
    %v1713 = vld [vmem:[#allocation7 + $0x1e40] sm:$0xff]
    %v1714 = vld [vmem:[#allocation7 + $0x1e48] sm:$0xff]
    %v1715 = vld [vmem:[#allocation7 + $0x1e50] sm:$0xff]
    %v1716 = vld [vmem:[#allocation7 + $0x1e58] sm:$0xff]
    %v1717 = vld [vmem:[#allocation7 + $0x1e60] sm:$0xff]
    %v1718 = vld [vmem:[#allocation7 + $0x1e68] sm:$0xff]
    %v1719 = vld [vmem:[#allocation7 + $0x1e70] sm:$0xff]
    %v1720 = vld [vmem:[#allocation7 + $0x1e78] sm:$0xff]
    %v1721 = vld [vmem:[#allocation7 + $0x1e80] sm:$0xff]
    %v1722 = vld [vmem:[#allocation7 + $0x1e88] sm:$0xff]
    %v1723 = vld [vmem:[#allocation7 + $0x1e90] sm:$0xff]
    %v1724 = vld [vmem:[#allocation7 + $0x1e98] sm:$0xff]
    %v1725 = vld [vmem:[#allocation7 + $0x1ea0] sm:$0xff]
    %v1726 = vld [vmem:[#allocation7 + $0x1ea8] sm:$0xff]
    %v1727 = vld [vmem:[#allocation7 + $0x1eb0] sm:$0xff]
    %v1728 = vld [vmem:[#allocation7 + $0x1eb8] sm:$0xff]
    %v1729 = vld [vmem:[#allocation7 + $0x1ec0] sm:$0xff]
    %v1730 = vld [vmem:[#allocation7 + $0x1ec8] sm:$0xff]
    %v1731 = vld [vmem:[#allocation7 + $0x1ed0] sm:$0xff]
    %v1732 = vld [vmem:[#allocation7 + $0x1ed8] sm:$0xff]
    %v1733 = vld [vmem:[#allocation7 + $0x1ee0] sm:$0xff]
    %v1734 = vld [vmem:[#allocation7 + $0x1ee8] sm:$0xff]
    %v1735 = vld [vmem:[#allocation7 + $0x1ef0] sm:$0xff]
    %v1736 = vld [vmem:[#allocation7 + $0x1ef8] sm:$0xff]
    %v1737 = vld [vmem:[#allocation7 + $0x1f00] sm:$0xff]
    %v1738 = vld [vmem:[#allocation7 + $0x1f08] sm:$0xff]
    %v1739 = vld [vmem:[#allocation7 + $0x1f10] sm:$0xff]
    %v1740 = vld [vmem:[#allocation7 + $0x1f18] sm:$0xff]
    %v1741 = vld [vmem:[#allocation7 + $0x1f20] sm:$0xff]
    %v1742 = vld [vmem:[#allocation7 + $0x1f28] sm:$0xff]
    %v1743 = vld [vmem:[#allocation7 + $0x1f30] sm:$0xff]
    %v1744 = vld [vmem:[#allocation7 + $0x1f38] sm:$0xff]
    %v1745 = vld [vmem:[#allocation7 + $0x1f40] sm:$0xff]
    %v1746 = vld [vmem:[#allocation7 + $0x1f48] sm:$0xff]
    %v1747 = vld [vmem:[#allocation7 + $0x1f50] sm:$0xff]
    %v1748 = vld [vmem:[#allocation7 + $0x1f58] sm:$0xff]
    %v1749 = vld [vmem:[#allocation7 + $0x1f60] sm:$0xff]
    %v1750 = vld [vmem:[#allocation7 + $0x1f68] sm:$0xff]
    %v1751 = vld [vmem:[#allocation7 + $0x1f70] sm:$0xff]
    %v1752 = vld [vmem:[#allocation7 + $0x1f78] sm:$0xff]
    %v1753 = vld [vmem:[#allocation8] sm:$0x7]
    %v1755 = vlaneseq
    %v1756 = vshrl.u32 %v1755, 7
    %v1757 = vsub.s32 0, %v1756
    %v1758 = vrot.slane %v1753, %v1757
    %v1759 = vlaneseq
    %v1760 = vshrl.u32 %v1759, 7
    %v1761 = vsub.s32 1, %v1760
    %v1762 = vrot.slane %v1753, %v1761
    %v1763 = vlaneseq
    %v1764 = vshrl.u32 %v1763, 7
    %v1765 = vsub.s32 2, %v1764
    %v1766 = vrot.slane %v1753, %v1765
    %1770 = vmatprep.subr.mxu0 %v746
    %1771 = vmatpush1.msra.mxu0 %v745
    %1772 = vmatprep.subr.mxu0 %v749
    %1773 = vmatpush1.msra.mxu0 %v748
    %1774 = vmatprep.subr.mxu0 %v752
    %1775 = vmatpush1.msra.mxu0 %v751
    %1776 = vmatprep.subr.mxu0 %v755
    %1777 = vmatpush1.msra.mxu0 %v754
    %1778 = vmatprep.subr.mxu0 %v758
    %1779 = vmatpush1.msra.mxu0 %v757
    %1780 = vmatprep.subr.mxu0 %v761
    %1781 = vmatpush1.msra.mxu0 %v760
    %1782 = vmatprep.subr.mxu0 %v764
    %1783 = vmatpush1.msra.mxu0 %v763
    %1784 = vmatprep.subr.mxu0 %v767
    %1785 = vmatpush1.msra.mxu0 %v766
    %1786 = vmatprep.subr.mxu0 %v770
    %1787 = vmatpush1.msra.mxu0 %v769
    %1788 = vmatprep.subr.mxu0 %v773
    %1789 = vmatpush1.msra.mxu0 %v772
    %1790 = vmatprep.subr.mxu0 %v776
    %1791 = vmatpush1.msra.mxu0 %v775
    %1792 = vmatprep.subr.mxu0 %v779
    %1793 = vmatpush1.msra.mxu0 %v778
    %1794 = vmatprep.subr.mxu0 %v782
    %1795 = vmatpush1.msra.mxu0 %v781
    %1796 = vmatprep.subr.mxu0 %v785
    %1797 = vmatpush1.msra.mxu0 %v784
    %1798 = vmatprep.subr.mxu0 %v788
    %1799 = vmatpush1.msra.mxu0 %v787
    %1800 = vmatprep.subr.mxu0 %v791
    %1801 = vmatpush1.msra.mxu0 %v790
    %1802 = vmatprep.subr.mxu0 %v794
    %1803 = vmatpush1.msra.mxu0 %v793
    %1804 = vmatprep.subr.mxu0 %v797
    %1805 = vmatpush1.msra.mxu0 %v796
    %1806 = vmatprep.subr.mxu0 %v800
    %1807 = vmatpush1.msra.mxu0 %v799
    %1808 = vmatprep.subr.mxu0 %v803
    %1809 = vmatpush1.msra.mxu0 %v802
    %1810 = vmatprep.subr.mxu0 %v806
    %1811 = vmatpush1.msra.mxu0 %v805
    %1812 = vmatprep.subr.mxu0 %v809
    %1813 = vmatpush1.msra.mxu0 %v808
    %1814 = vmatprep.subr.mxu0 %v812
    %1815 = vmatpush1.msra.mxu0 %v811
    %1816 = vmatprep.subr.mxu0 %v815
    %1817 = vmatpush1.msra.mxu0 %v814
    %1818 = vmatprep.subr.mxu0 %v818
    %1819 = vmatpush1.msra.mxu0 %v817
    %1820 = vmatprep.subr.mxu0 %v821
    %1821 = vmatpush1.msra.mxu0 %v820
    %1822 = vmatprep.subr.mxu0 %v824
    %1823 = vmatpush1.msra.mxu0 %v823
    %1824 = vmatprep.subr.mxu0 %v827
    %1825 = vmatpush1.msra.mxu0 %v826
    %1826 = vmatprep.subr.mxu0 %v830
    %1827 = vmatpush1.msra.mxu0 %v829
    %1828 = vmatprep.subr.mxu0 %v833
    %1829 = vmatpush1.msra.mxu0 %v832
    %1830 = vmatprep.subr.mxu0 %v836
    %1831 = vmatpush1.msra.mxu0 %v835
    %1832 = vmatprep.subr.mxu0 %v839
    %1833 = vmatpush1.msra.mxu0 %v838
    %1834 = vmatprep.mubr.f32.mxu0 %v521
    %1835 = vmatmul.mubr.f32.gmra.mrb[0].mxu0 %v520
    %v1836 = vpop.f32.mrb[0].mxu0
    %v1837 = vadd.f32 %v1758, %v1836
    %v1838 = vpop.f32.mrb[0].mxu0
    %v1839 = vadd.f32 %v1762, %v1838
    %1840 = vmatprep.mubr.f32.mxu0 %v524
    %1841 = vmatmul.mubr.f32.gmra.mrb[0].mxu0 %v523
    %v1842 = vpop.f32.mrb[0].mxu0
    %v1843 = vadd.f32 %v1758, %v1842
    %v1844 = vpop.f32.mrb[0].mxu0
    %v1845 = vadd.f32 %v1762, %v1844
    %1846 = vdwg.mxu0
    %1847 = vmatprep.subr.mxu0 %v842
    %1848 = vmatpush1.msra.mxu0 %v841
    %1849 = vmatprep.subr.mxu0 %v845
    %1850 = vmatpush1.msra.mxu0 %v844
    %1851 = vmatprep.subr.mxu0 %v848
    %1852 = vmatpush1.msra.mxu0 %v847
    %1853 = vmatprep.subr.mxu0 %v851
    %1854 = vmatpush1.msra.mxu0 %v850
    %1855 = vmatprep.subr.mxu0 %v854
    %1856 = vmatpush1.msra.mxu0 %v853
    %1857 = vmatprep.subr.mxu0 %v857
    %1858 = vmatpush1.msra.mxu0 %v856
    %1859 = vmatprep.subr.mxu0 %v860
    %1860 = vmatpush1.msra.mxu0 %v859
    %1861 = vmatprep.subr.mxu0 %v863
    %1862 = vmatpush1.msra.mxu0 %v862
    %1863 = vmatprep.subr.mxu0 %v866
    %1864 = vmatpush1.msra.mxu0 %v865
    %1865 = vmatprep.subr.mxu0 %v869
    %1866 = vmatpush1.msra.mxu0 %v868
    %1867 = vmatprep.subr.mxu0 %v872
    %1868 = vmatpush1.msra.mxu0 %v871
    %1869 = vmatprep.subr.mxu0 %v875
    %1870 = vmatpush1.msra.mxu0 %v874
    %1871 = vmatprep.subr.mxu0 %v878
    %1872 = vmatpush1.msra.mxu0 %v877
    %1873 = vmatprep.subr.mxu0 %v881
    %1874 = vmatpush1.msra.mxu0 %v880
    %1875 = vmatprep.subr.mxu0 %v884
    %1876 = vmatpush1.msra.mxu0 %v883
    %1877 = vmatprep.subr.mxu0 %v887
    %1878 = vmatpush1.msra.mxu0 %v886
    %1879 = vmatprep.subr.mxu0 %v890
    %1880 = vmatpush1.msra.mxu0 %v889
    %1881 = vmatprep.subr.mxu0 %v893
    %1882 = vmatpush1.msra.mxu0 %v892
    %1883 = vmatprep.subr.mxu0 %v896
    %1884 = vmatpush1.msra.mxu0 %v895
    %1885 = vmatprep.subr.mxu0 %v899
    %1886 = vmatpush1.msra.mxu0 %v898
    %1887 = vmatprep.subr.mxu0 %v902
    %1888 = vmatpush1.msra.mxu0 %v901
    %1889 = vmatprep.subr.mxu0 %v905
    %1890 = vmatpush1.msra.mxu0 %v904
    %1891 = vmatprep.subr.mxu0 %v908
    %1892 = vmatpush1.msra.mxu0 %v907
    %1893 = vmatprep.subr.mxu0 %v911
    %1894 = vmatpush1.msra.mxu0 %v910
    %1895 = vmatprep.subr.mxu0 %v914
    %1896 = vmatpush1.msra.mxu0 %v913
    %1897 = vmatprep.subr.mxu0 %v917
    %1898 = vmatpush1.msra.mxu0 %v916
    %1899 = vmatprep.subr.mxu0 %v920
    %1900 = vmatpush1.msra.mxu0 %v919
    %1901 = vmatprep.subr.mxu0 %v923
    %1902 = vmatpush1.msra.mxu0 %v922
    %1903 = vmatprep.subr.mxu0 %v926
    %1904 = vmatpush1.msra.mxu0 %v925
    %1905 = vmatprep.subr.mxu0 %v929
    %1906 = vmatpush1.msra.mxu0 %v928
    %1907 = vmatprep.subr.mxu0 %v932
    %1908 = vmatpush1.msra.mxu0 %v931
    %1909 = vmatprep.subr.mxu0 %v935
    %1910 = vmatpush1.msra.mxu0 %v934
    %1911 = vmatprep.mubr.f32.mxu0 %v562
    %1912 = vmatmul.mubr.f32.gmra.mrb[0].mxu0 %v522
    %v1913 = vpop.f32.mrb[0].mxu0
    %v1914 = vadd.f32 %v1837, %v1913
    %v1915 = vpop.f32.mrb[0].mxu0
    %v1916 = vadd.f32 %v1839, %v1915
    %1917 = vmatprep.mubr.f32.mxu0 %v565
    %1918 = vmatmul.mubr.f32.gmra.mrb[0].mxu0 %v525
    %v1919 = vpop.f32.mrb[0].mxu0
    %v1920 = vadd.f32 %v1843, %v1919
    %v1921 = vpop.f32.mrb[0].mxu0
    %v1922 = vadd.f32 %v1845, %v1921
    %1923 = vdwg.mxu0
    %1924 = vmatprep.subr.mxu0 %v938
    %1925 = vmatpush1.msra.mxu0 %v937
    %1926 = vmatprep.subr.mxu0 %v941
    %1927 = vmatpush1.msra.mxu0 %v940
    %1928 = vmatprep.subr.mxu0 %v944
    %1929 = vmatpush1.msra.mxu0 %v943
    %1930 = vmatprep.subr.mxu0 %v947
    %1931 = vmatpush1.msra.mxu0 %v946
    %1932 = vmatprep.subr.mxu0 %v950
    %1933 = vmatpush1.msra.mxu0 %v949
    %1934 = vmatprep.subr.mxu0 %v953
    %1935 = vmatpush1.msra.mxu0 %v952
    %1936 = vmatprep.subr.mxu0 %v956
    %1937 = vmatpush1.msra.mxu0 %v955
    %1938 = vmatprep.subr.mxu0 %v959
    %1939 = vmatpush1.msra.mxu0 %v958
    %1940 = vmatprep.subr.mxu0 %v962
    %1941 = vmatpush1.msra.mxu0 %v961
    %1942 = vmatprep.subr.mxu0 %v965
    %1943 = vmatpush1.msra.mxu0 %v964
    %1944 = vmatprep.subr.mxu0 %v968
    %1945 = vmatpush1.msra.mxu0 %v967
    %1946 = vmatprep.subr.mxu0 %v971
    %1947 = vmatpush1.msra.mxu0 %v970
    %1948 = vmatprep.subr.mxu0 %v974
    %1949 = vmatpush1.msra.mxu0 %v973
    %1950 = vmatprep.subr.mxu0 %v977
    %1951 = vmatpush1.msra.mxu0 %v976
    %1952 = vmatprep.subr.mxu0 %v980
    %1953 = vmatpush1.msra.mxu0 %v979
    %1954 = vmatprep.subr.mxu0 %v983
    %1955 = vmatpush1.msra.mxu0 %v982
    %1956 = vmatprep.subr.mxu0 %v986
    %1957 = vmatpush1.msra.mxu0 %v985
    %1958 = vmatprep.subr.mxu0 %v989
    %1959 = vmatpush1.msra.mxu0 %v988
    %1960 = vmatprep.subr.mxu0 %v992
    %1961 = vmatpush1.msra.mxu0 %v991
    %1962 = vmatprep.subr.mxu0 %v995
    %1963 = vmatpush1.msra.mxu0 %v994
    %1964 = vmatprep.subr.mxu0 %v998
    %1965 = vmatpush1.msra.mxu0 %v997
    %1966 = vmatprep.subr.mxu0 %v1001
    %1967 = vmatpush1.msra.mxu0 %v1000
    %1968 = vmatprep.subr.mxu0 %v1004
    %1969 = vmatpush1.msra.mxu0 %v1003
    %1970 = vmatprep.subr.mxu0 %v1007
    %1971 = vmatpush1.msra.mxu0 %v1006
    %1972 = vmatprep.subr.mxu0 %v1010
    %1973 = vmatpush1.msra.mxu0 %v1009
    %1974 = vmatprep.subr.mxu0 %v1013
    %1975 = vmatpush1.msra.mxu0 %v1012
    %1976 = vmatprep.subr.mxu0 %v1016
    %1977 = vmatpush1.msra.mxu0 %v1015
    %1978 = vmatprep.subr.mxu0 %v1019
    %1979 = vmatpush1.msra.mxu0 %v1018
    %1980 = vmatprep.subr.mxu0 %v1022
    %1981 = vmatpush1.msra.mxu0 %v1021
    %1982 = vmatprep.subr.mxu0 %v1025
    %1983 = vmatpush1.msra.mxu0 %v1024
    %1984 = vmatprep.subr.mxu0 %v1028
    %1985 = vmatpush1.msra.mxu0 %v1027
    %1986 = vmatprep.subr.mxu0 %v1031
    %1987 = vmatpush1.msra.mxu0 %v1030
    %1988 = vmatprep.mubr.f32.mxu0 %v564
    %1989 = vmatmul.mubr.f32.gmra.mrb[0].mxu0 %v563
    %v1990 = vpop.f32.mrb[0].mxu0
    %v1991 = vadd.f32 %v1914, %v1990
    %v1992 = vpop.f32.mrb[0].mxu0
    %v1993 = vadd.f32 %v1916, %v1992
    %1994 = vmatprep.mubr.f32.mxu0 %v567
    %1995 = vmatmul.mubr.f32.gmra.mrb[0].mxu0 %v566
    %v1996 = vpop.f32.mrb[0].mxu0
    %v1997 = vadd.f32 %v1920, %v1996
    %v1998 = vpop.f32.mrb[0].mxu0
    %v1999 = vadd.f32 %v1922, %v1998
    %2000 = vdwg.mxu0
    %2001 = vmatprep.subr.mxu0 %v1034
    %2002 = vmatpush1.msra.mxu0 %v1033
    %2003 = vmatprep.subr.mxu0 %v1037
    %2004 = vmatpush1.msra.mxu0 %v1036
    %2005 = vmatprep.subr.mxu0 %v1040
    %2006 = vmatpush1.msra.mxu0 %v1039
    %2007 = vmatprep.subr.mxu0 %v1043
    %2008 = vmatpush1.msra.mxu0 %v1042
    %2009 = vmatprep.subr.mxu0 %v1046
    %2010 = vmatpush1.msra.mxu0 %v1045
    %2011 = vmatprep.subr.mxu0 %v1049
    %2012 = vmatpush1.msra.mxu0 %v1048
    %2013 = vmatprep.subr.mxu0 %v1052
    %2014 = vmatpush1.msra.mxu0 %v1051
    %2015 = vmatprep.subr.mxu0 %v1055
    %2016 = vmatpush1.msra.mxu0 %v1054
    %2017 = vmatprep.subr.mxu0 %v1058
    %2018 = vmatpush1.msra.mxu0 %v1057
    %2019 = vmatprep.subr.mxu0 %v1061
    %2020 = vmatpush1.msra.mxu0 %v1060
    %2021 = vmatprep.subr.mxu0 %v1064
    %2022 = vmatpush1.msra.mxu0 %v1063
    %2023 = vmatprep.subr.mxu0 %v1067
    %2024 = vmatpush1.msra.mxu0 %v1066
    %2025 = vmatprep.subr.mxu0 %v1070
    %2026 = vmatpush1.msra.mxu0 %v1069
    %2027 = vmatprep.subr.mxu0 %v1073
    %2028 = vmatpush1.msra.mxu0 %v1072
    %2029 = vmatprep.subr.mxu0 %v1076
    %2030 = vmatpush1.msra.mxu0 %v1075
    %2031 = vmatprep.subr.mxu0 %v1079
    %2032 = vmatpush1.msra.mxu0 %v1078
    %2033 = vmatprep.subr.mxu0 %v1082
    %2034 = vmatpush1.msra.mxu0 %v1081
    %2035 = vmatprep.subr.mxu0 %v1085
    %2036 = vmatpush1.msra.mxu0 %v1084
    %2037 = vmatprep.subr.mxu0 %v1088
    %2038 = vmatpush1.msra.mxu0 %v1087
    %2039 = vmatprep.subr.mxu0 %v1091
    %2040 = vmatpush1.msra.mxu0 %v1090
    %2041 = vmatprep.subr.mxu0 %v1094
    %2042 = vmatpush1.msra.mxu0 %v1093
    %2043 = vmatprep.subr.mxu0 %v1097
    %2044 = vmatpush1.msra.mxu0 %v1096
    %2045 = vmatprep.subr.mxu0 %v1100
    %2046 = vmatpush1.msra.mxu0 %v1099
    %2047 = vmatprep.subr.mxu0 %v1103
    %2048 = vmatpush1.msra.mxu0 %v1102
    %2049 = vmatprep.subr.mxu0 %v1106
    %2050 = vmatpush1.msra.mxu0 %v1105
    %2051 = vmatprep.subr.mxu0 %v1109
    %2052 = vmatpush1.msra.mxu0 %v1108
    %2053 = vmatprep.subr.mxu0 %v1112
    %2054 = vmatpush1.msra.mxu0 %v1111
    %2055 = vmatprep.subr.mxu0 %v1115
    %2056 = vmatpush1.msra.mxu0 %v1114
    %2057 = vmatprep.subr.mxu0 %v1118
    %2058 = vmatpush1.msra.mxu0 %v1117
    %2059 = vmatprep.subr.mxu0 %v1121
    %2060 = vmatpush1.msra.mxu0 %v1120
    %2061 = vmatprep.subr.mxu0 %v1124
    %2062 = vmatpush1.msra.mxu0 %v1123
    %2063 = vmatprep.subr.mxu0 %v1127
    %2064 = vmatpush1.msra.mxu0 %v1126
    %2065 = vmatprep.mubr.f32.mxu0 %v599
    %2066 = vmatmul.mubr.f32.gmra.mrb[0].mxu0 %v598
    %v2067 = vpop.f32.mrb[0].mxu0
    %v2068 = vadd.f32 %v1991, %v2067
    %v2069 = vpop.f32.mrb[0].mxu0
    %v2070 = vadd.f32 %v1993, %v2069
    %2071 = vmatprep.mubr.f32.mxu0 %v602
    %2072 = vmatmul.mubr.f32.gmra.mrb[0].mxu0 %v601
    %v2073 = vpop.f32.mrb[0].mxu0
    %v2074 = vadd.f32 %v1997, %v2073
    %v2075 = vpop.f32.mrb[0].mxu0
    %v2076 = vadd.f32 %v1999, %v2075
    %2077 = vdwg.mxu0
    %2078 = vmatprep.subr.mxu0 %v1130
    %2079 = vmatpush1.msra.mxu0 %v1129
    %2080 = vmatprep.subr.mxu0 %v1133
    %2081 = vmatpush1.msra.mxu0 %v1132
    %2082 = vmatprep.subr.mxu0 %v1136
    %2083 = vmatpush1.msra.mxu0 %v1135
    %2084 = vmatprep.subr.mxu0 %v1139
    %2085 = vmatpush1.msra.mxu0 %v1138
    %2086 = vmatprep.subr.mxu0 %v1142
    %2087 = vmatpush1.msra.mxu0 %v1141
    %2088 = vmatprep.subr.mxu0 %v1145
    %2089 = vmatpush1.msra.mxu0 %v1144
    %2090 = vmatprep.subr.mxu0 %v1148
    %2091 = vmatpush1.msra.mxu0 %v1147
    %2092 = vmatprep.subr.mxu0 %v1151
    %2093 = vmatpush1.msra.mxu0 %v1150
    %2094 = vmatprep.subr.mxu0 %v1154
    %2095 = vmatpush1.msra.mxu0 %v1153
    %2096 = vmatprep.subr.mxu0 %v1157
    %2097 = vmatpush1.msra.mxu0 %v1156
    %2098 = vmatprep.subr.mxu0 %v1160
    %2099 = vmatpush1.msra.mxu0 %v1159
    %2100 = vmatprep.subr.mxu0 %v1163
    %2101 = vmatpush1.msra.mxu0 %v1162
    %2102 = vmatprep.subr.mxu0 %v1166
    %2103 = vmatpush1.msra.mxu0 %v1165
    %2104 = vmatprep.subr.mxu0 %v1169
    %2105 = vmatpush1.msra.mxu0 %v1168
    %2106 = vmatprep.subr.mxu0 %v1172
    %2107 = vmatpush1.msra.mxu0 %v1171
    %2108 = vmatprep.subr.mxu0 %v1175
    %2109 = vmatpush1.msra.mxu0 %v1174
    %2110 = vmatprep.subr.mxu0 %v1178
    %2111 = vmatpush1.msra.mxu0 %v1177
    %2112 = vmatprep.subr.mxu0 %v1181
    %2113 = vmatpush1.msra.mxu0 %v1180
    %2114 = vmatprep.subr.mxu0 %v1184
    %2115 = vmatpush1.msra.mxu0 %v1183
    %2116 = vmatprep.subr.mxu0 %v1187
    %2117 = vmatpush1.msra.mxu0 %v1186
    %2118 = vmatprep.subr.mxu0 %v1190
    %2119 = vmatpush1.msra.mxu0 %v1189
    %2120 = vmatprep.subr.mxu0 %v1193
    %2121 = vmatpush1.msra.mxu0 %v1192
    %2122 = vmatprep.subr.mxu0 %v1196
    %2123 = vmatpush1.msra.mxu0 %v1195
    %2124 = vmatprep.subr.mxu0 %v1199
    %2125 = vmatpush1.msra.mxu0 %v1198
    %2126 = vmatprep.subr.mxu0 %v1202
    %2127 = vmatpush1.msra.mxu0 %v1201
    %2128 = vmatprep.subr.mxu0 %v1205
    %2129 = vmatpush1.msra.mxu0 %v1204
    %2130 = vmatprep.subr.mxu0 %v1208
    %2131 = vmatpush1.msra.mxu0 %v1207
    %2132 = vmatprep.subr.mxu0 %v1211
    %2133 = vmatpush1.msra.mxu0 %v1210
    %2134 = vmatprep.subr.mxu0 %v1214
    %2135 = vmatpush1.msra.mxu0 %v1213
    %2136 = vmatprep.subr.mxu0 %v1217
    %2137 = vmatpush1.msra.mxu0 %v1216
    %2138 = vmatprep.subr.mxu0 %v1220
    %2139 = vmatpush1.msra.mxu0 %v1219
    %2140 = vmatprep.subr.mxu0 %v1223
    %2141 = vmatpush1.msra.mxu0 %v1222
    %2142 = vmatprep.mubr.f32.mxu0 %v632
    %2143 = vmatmul.mubr.f32.gmra.mrb[0].mxu0 %v600
    %v2144 = vpop.f32.mrb[0].mxu0
    %v2145 = vadd.f32 %v2068, %v2144
    %v2146 = vpop.f32.mrb[0].mxu0
    %v2147 = vadd.f32 %v2070, %v2146
    %2148 = vmatprep.mubr.f32.mxu0 %v635
    %2149 = vmatmul.mubr.f32.gmra.mrb[0].mxu0 %v603
    %v2150 = vpop.f32.mrb[0].mxu0
    %v2151 = vadd.f32 %v2074, %v2150
    %v2152 = vpop.f32.mrb[0].mxu0
    %v2153 = vadd.f32 %v2076, %v2152
    %2154 = vdwg.mxu0
    %2155 = vmatprep.subr.mxu0 %v1226
    %2156 = vmatpush1.msra.mxu0 %v1225
    %2157 = vmatprep.subr.mxu0 %v1229
    %2158 = vmatpush1.msra.mxu0 %v1228
    %2159 = vmatprep.subr.mxu0 %v1232
    %2160 = vmatpush1.msra.mxu0 %v1231
    %2161 = vmatprep.subr.mxu0 %v1235
    %2162 = vmatpush1.msra.mxu0 %v1234
    %2163 = vmatprep.subr.mxu0 %v1238
    %2164 = vmatpush1.msra.mxu0 %v1237
    %2165 = vmatprep.subr.mxu0 %v1241
    %2166 = vmatpush1.msra.mxu0 %v1240
    %2167 = vmatprep.subr.mxu0 %v1244
    %2168 = vmatpush1.msra.mxu0 %v1243
    %2169 = vmatprep.subr.mxu0 %v1247
    %2170 = vmatpush1.msra.mxu0 %v1246
    %2171 = vmatprep.subr.mxu0 %v1250
    %2172 = vmatpush1.msra.mxu0 %v1249
    %2173 = vmatprep.subr.mxu0 %v1253
    %2174 = vmatpush1.msra.mxu0 %v1252
    %2175 = vmatprep.subr.mxu0 %v1256
    %2176 = vmatpush1.msra.mxu0 %v1255
    %2177 = vmatprep.subr.mxu0 %v1259
    %2178 = vmatpush1.msra.mxu0 %v1258
    %2179 = vmatprep.subr.mxu0 %v1262
    %2180 = vmatpush1.msra.mxu0 %v1261
    %2181 = vmatprep.subr.mxu0 %v1265
    %2182 = vmatpush1.msra.mxu0 %v1264
    %2183 = vmatprep.subr.mxu0 %v1268
    %2184 = vmatpush1.msra.mxu0 %v1267
    %2185 = vmatprep.subr.mxu0 %v1271
    %2186 = vmatpush1.msra.mxu0 %v1270
    %2187 = vmatprep.subr.mxu0 %v1274
    %2188 = vmatpush1.msra.mxu0 %v1273
    %2189 = vmatprep.subr.mxu0 %v1277
    %2190 = vmatpush1.msra.mxu0 %v1276
    %2191 = vmatprep.subr.mxu0 %v1280
    %2192 = vmatpush1.msra.mxu0 %v1279
    %2193 = vmatprep.subr.mxu0 %v1283
    %2194 = vmatpush1.msra.mxu0 %v1282
    %2195 = vmatprep.subr.mxu0 %v1286
    %2196 = vmatpush1.msra.mxu0 %v1285
    %2197 = vmatprep.subr.mxu0 %v1289
    %2198 = vmatpush1.msra.mxu0 %v1288
    %2199 = vmatprep.subr.mxu0 %v1292
    %2200 = vmatpush1.msra.mxu0 %v1291
    %2201 = vmatprep.subr.mxu0 %v1295
    %2202 = vmatpush1.msra.mxu0 %v1294
    %2203 = vmatprep.subr.mxu0 %v1298
    %2204 = vmatpush1.msra.mxu0 %v1297
    %2205 = vmatprep.subr.mxu0 %v1301
    %2206 = vmatpush1.msra.mxu0 %v1300
    %2207 = vmatprep.subr.mxu0 %v1304
    %2208 = vmatpush1.msra.mxu0 %v1303
    %2209 = vmatprep.subr.mxu0 %v1307
    %2210 = vmatpush1.msra.mxu0 %v1306
    %2211 = vmatprep.subr.mxu0 %v1310
    %2212 = vmatpush1.msra.mxu0 %v1309
    %2213 = vmatprep.subr.mxu0 %v1313
    %2214 = vmatpush1.msra.mxu0 %v1312
    %2215 = vmatprep.subr.mxu0 %v1316
    %2216 = vmatpush1.msra.mxu0 %v1315
    %2217 = vmatprep.subr.mxu0 %v1319
    %2218 = vmatpush1.msra.mxu0 %v1318
    %2219 = vmatprep.mubr.f32.mxu0 %v634
    %2220 = vmatmul.mubr.f32.gmra.mrb[0].mxu0 %v633
    %v2221 = vpop.f32.mrb[0].mxu0
    %v2222 = vadd.f32 %v2145, %v2221
    %v2223 = vpop.f32.mrb[0].mxu0
    %v2224 = vadd.f32 %v2147, %v2223
    %2225 = vmatprep.mubr.f32.mxu0 %v637
    %2226 = vmatmul.mubr.f32.gmra.mrb[0].mxu0 %v636
    %v2227 = vpop.f32.mrb[0].mxu0
    %v2228 = vadd.f32 %v2151, %v2227
    %v2229 = vpop.f32.mrb[0].mxu0
    %v2230 = vadd.f32 %v2153, %v2229
    %2231 = vdwg.mxu0
    %2232 = vmatprep.subr.mxu0 %v1322
    %2233 = vmatpush1.msra.mxu0 %v1321
    %2234 = vmatprep.subr.mxu0 %v1325
    %2235 = vmatpush1.msra.mxu0 %v1324
    %2236 = vmatprep.subr.mxu0 %v1328
    %2237 = vmatpush1.msra.mxu0 %v1327
    %2238 = vmatprep.subr.mxu0 %v1331
    %2239 = vmatpush1.msra.mxu0 %v1330
    %2240 = vmatprep.subr.mxu0 %v1334
    %2241 = vmatpush1.msra.mxu0 %v1333
    %2242 = vmatprep.subr.mxu0 %v1337
    %2243 = vmatpush1.msra.mxu0 %v1336
    %2244 = vmatprep.subr.mxu0 %v1340
    %2245 = vmatpush1.msra.mxu0 %v1339
    %2246 = vmatprep.subr.mxu0 %v1343
    %2247 = vmatpush1.msra.mxu0 %v1342
    %2248 = vmatprep.subr.mxu0 %v1346
    %2249 = vmatpush1.msra.mxu0 %v1345
    %2250 = vmatprep.subr.mxu0 %v1349
    %2251 = vmatpush1.msra.mxu0 %v1348
    %2252 = vmatprep.subr.mxu0 %v1352
    %2253 = vmatpush1.msra.mxu0 %v1351
    %2254 = vmatprep.subr.mxu0 %v1355
    %2255 = vmatpush1.msra.mxu0 %v1354
    %2256 = vmatprep.subr.mxu0 %v1358
    %2257 = vmatpush1.msra.mxu0 %v1357
    %2258 = vmatprep.subr.mxu0 %v1361
    %2259 = vmatpush1.msra.mxu0 %v1360
    %2260 = vmatprep.subr.mxu0 %v1364
    %2261 = vmatpush1.msra.mxu0 %v1363
    %2262 = vmatprep.subr.mxu0 %v1367
    %2263 = vmatpush1.msra.mxu0 %v1366
    %2264 = vmatprep.subr.mxu0 %v1370
    %2265 = vmatpush1.msra.mxu0 %v1369
    %2266 = vmatprep.subr.mxu0 %v1373
    %2267 = vmatpush1.msra.mxu0 %v1372
    %2268 = vmatprep.subr.mxu0 %v1376
    %2269 = vmatpush1.msra.mxu0 %v1375
    %2270 = vmatprep.subr.mxu0 %v1379
    %2271 = vmatpush1.msra.mxu0 %v1378
    %2272 = vmatprep.subr.mxu0 %v1382
    %2273 = vmatpush1.msra.mxu0 %v1381
    %2274 = vmatprep.subr.mxu0 %v1385
    %2275 = vmatpush1.msra.mxu0 %v1384
    %2276 = vmatprep.subr.mxu0 %v1388
    %2277 = vmatpush1.msra.mxu0 %v1387
    %2278 = vmatprep.subr.mxu0 %v1391
    %2279 = vmatpush1.msra.mxu0 %v1390
    %2280 = vmatprep.subr.mxu0 %v1394
    %2281 = vmatpush1.msra.mxu0 %v1393
    %2282 = vmatprep.subr.mxu0 %v1397
    %2283 = vmatpush1.msra.mxu0 %v1396
    %2284 = vmatprep.subr.mxu0 %v1400
    %2285 = vmatpush1.msra.mxu0 %v1399
    %2286 = vmatprep.subr.mxu0 %v1403
    %2287 = vmatpush1.msra.mxu0 %v1402
    %2288 = vmatprep.subr.mxu0 %v1406
    %2289 = vmatpush1.msra.mxu0 %v1405
    %2290 = vmatprep.subr.mxu0 %v1409
    %2291 = vmatpush1.msra.mxu0 %v1408
    %2292 = vmatprep.subr.mxu0 %v1412
    %2293 = vmatpush1.msra.mxu0 %v1411
    %2294 = vmatprep.subr.mxu0 %v1415
    %2295 = vmatpush1.msra.mxu0 %v1414
    %2296 = vmatprep.mubr.f32.mxu0 %v669
    %2297 = vmatmul.mubr.f32.gmra.mrb[0].mxu0 %v668
    %v2298 = vpop.f32.mrb[0].mxu0
    %v2299 = vadd.f32 %v2222, %v2298
    %v2300 = vpop.f32.mrb[0].mxu0
    %v2301 = vadd.f32 %v2224, %v2300
    %2302 = vmatprep.mubr.f32.mxu0 %v672
    %2303 = vmatmul.mubr.f32.gmra.mrb[0].mxu0 %v671
    %v2304 = vpop.f32.mrb[0].mxu0
    %v2305 = vadd.f32 %v2228, %v2304
    %v2306 = vpop.f32.mrb[0].mxu0
    %v2307 = vadd.f32 %v2230, %v2306
    %2308 = vdwg.mxu0
    %2309 = vmatprep.subr.mxu0 %v1418
    %2310 = vmatpush1.msra.mxu0 %v1417
    %2311 = vmatprep.subr.mxu0 %v1421
    %2312 = vmatpush1.msra.mxu0 %v1420
    %2313 = vmatprep.subr.mxu0 %v1424
    %2314 = vmatpush1.msra.mxu0 %v1423
    %2315 = vmatprep.subr.mxu0 %v1427
    %2316 = vmatpush1.msra.mxu0 %v1426
    %2317 = vmatprep.subr.mxu0 %v1430
    %2318 = vmatpush1.msra.mxu0 %v1429
    %2319 = vmatprep.subr.mxu0 %v1433
    %2320 = vmatpush1.msra.mxu0 %v1432
    %2321 = vmatprep.subr.mxu0 %v1436
    %2322 = vmatpush1.msra.mxu0 %v1435
    %2323 = vmatprep.subr.mxu0 %v1439
    %2324 = vmatpush1.msra.mxu0 %v1438
    %2325 = vmatprep.subr.mxu0 %v1442
    %2326 = vmatpush1.msra.mxu0 %v1441
    %2327 = vmatprep.subr.mxu0 %v1445
    %2328 = vmatpush1.msra.mxu0 %v1444
    %2329 = vmatprep.subr.mxu0 %v1448
    %2330 = vmatpush1.msra.mxu0 %v1447
    %2331 = vmatprep.subr.mxu0 %v1451
    %2332 = vmatpush1.msra.mxu0 %v1450
    %2333 = vmatprep.subr.mxu0 %v1454
    %2334 = vmatpush1.msra.mxu0 %v1453
    %2335 = vmatprep.subr.mxu0 %v1457
    %2336 = vmatpush1.msra.mxu0 %v1456
    %2337 = vmatprep.subr.mxu0 %v1460
    %2338 = vmatpush1.msra.mxu0 %v1459
    %2339 = vmatprep.subr.mxu0 %v1463
    %2340 = vmatpush1.msra.mxu0 %v1462
    %2341 = vmatprep.subr.mxu0 %v1466
    %2342 = vmatpush1.msra.mxu0 %v1465
    %2343 = vmatprep.subr.mxu0 %v1469
    %2344 = vmatpush1.msra.mxu0 %v1468
    %2345 = vmatprep.subr.mxu0 %v1472
    %2346 = vmatpush1.msra.mxu0 %v1471
    %2347 = vmatprep.subr.mxu0 %v1475
    %2348 = vmatpush1.msra.mxu0 %v1474
    %2349 = vmatprep.subr.mxu0 %v1478
    %2350 = vmatpush1.msra.mxu0 %v1477
    %2351 = vmatprep.subr.mxu0 %v1481
    %2352 = vmatpush1.msra.mxu0 %v1480
    %2353 = vmatprep.subr.mxu0 %v1484
    %2354 = vmatpush1.msra.mxu0 %v1483
    %2355 = vmatprep.subr.mxu0 %v1487
    %2356 = vmatpush1.msra.mxu0 %v1486
    %2357 = vmatprep.subr.mxu0 %v1490
    %2358 = vmatpush1.msra.mxu0 %v1489
    %2359 = vmatprep.subr.mxu0 %v1493
    %2360 = vmatpush1.msra.mxu0 %v1492
    %2361 = vmatprep.subr.mxu0 %v1496
    %2362 = vmatpush1.msra.mxu0 %v1495
    %2363 = vmatprep.subr.mxu0 %v1499
    %2364 = vmatpush1.msra.mxu0 %v1498
    %2365 = vmatprep.subr.mxu0 %v1502
    %2366 = vmatpush1.msra.mxu0 %v1501
    %2367 = vmatprep.subr.mxu0 %v1505
    %2368 = vmatpush1.msra.mxu0 %v1504
    %2369 = vmatprep.subr.mxu0 %v1508
    %2370 = vmatpush1.msra.mxu0 %v1507
    %2371 = vmatprep.subr.mxu0 %v1511
    %2372 = vmatpush1.msra.mxu0 %v1510
    %2373 = vmatprep.mubr.f32.mxu0 %v703
    %2374 = vmatmul.mubr.f32.gmra.mrb[0].mxu0 %v670
    %v2375 = vpop.f32.mrb[0].mxu0
    %v2376 = vadd.f32 %v2299, %v2375
    %v2377 = vpop.f32.mrb[0].mxu0
    %v2378 = vadd.f32 %v2301, %v2377
    %2379 = vmatprep.mubr.f32.mxu0 %v706
    %2380 = vmatmul.mubr.f32.gmra.mrb[0].mxu0 %v673
    %v2381 = vpop.f32.mrb[0].mxu0
    %v2382 = vadd.f32 %v2305, %v2381
    %v2383 = vpop.f32.mrb[0].mxu0
    %v2384 = vadd.f32 %v2307, %v2383
    %2385 = vdwg.mxu0
    %2386 = vmatprep.subr.mxu0 %v1514
    %2387 = vmatpush1.msra.mxu0 %v1513
    %2388 = vmatprep.subr.mxu0 %v1517
    %2389 = vmatpush1.msra.mxu0 %v1516
    %2390 = vmatprep.subr.mxu0 %v1520
    %2391 = vmatpush1.msra.mxu0 %v1519
    %2392 = vmatprep.subr.mxu0 %v1523
    %2393 = vmatpush1.msra.mxu0 %v1522
    %2394 = vmatprep.subr.mxu0 %v1526
    %2395 = vmatpush1.msra.mxu0 %v1525
    %2396 = vmatprep.subr.mxu0 %v1529
    %2397 = vmatpush1.msra.mxu0 %v1528
    %2398 = vmatprep.subr.mxu0 %v1532
    %2399 = vmatpush1.msra.mxu0 %v1531
    %2400 = vmatprep.subr.mxu0 %v1535
    %2401 = vmatpush1.msra.mxu0 %v1534
    %2402 = vmatprep.subr.mxu0 %v1538
    %2403 = vmatpush1.msra.mxu0 %v1537
    %2404 = vmatprep.subr.mxu0 %v1541
    %2405 = vmatpush1.msra.mxu0 %v1540
    %2406 = vmatprep.subr.mxu0 %v1544
    %2407 = vmatpush1.msra.mxu0 %v1543
    %2408 = vmatprep.subr.mxu0 %v1547
    %2409 = vmatpush1.msra.mxu0 %v1546
    %2410 = vmatprep.subr.mxu0 %v1550
    %2411 = vmatpush1.msra.mxu0 %v1549
    %2412 = vmatprep.subr.mxu0 %v1553
    %2413 = vmatpush1.msra.mxu0 %v1552
    %2414 = vmatprep.subr.mxu0 %v1556
    %2415 = vmatpush1.msra.mxu0 %v1555
    %2416 = vmatprep.subr.mxu0 %v1559
    %2417 = vmatpush1.msra.mxu0 %v1558
    %2418 = vmatprep.subr.mxu0 %v1562
    %2419 = vmatpush1.msra.mxu0 %v1561
    %2420 = vmatprep.subr.mxu0 %v1565
    %2421 = vmatpush1.msra.mxu0 %v1564
    %2422 = vmatprep.subr.mxu0 %v1568
    %2423 = vmatpush1.msra.mxu0 %v1567
    %2424 = vmatprep.subr.mxu0 %v1571
    %2425 = vmatpush1.msra.mxu0 %v1570
    %2426 = vmatprep.subr.mxu0 %v1574
    %2427 = vmatpush1.msra.mxu0 %v1573
    %2428 = vmatprep.subr.mxu0 %v1577
    %2429 = vmatpush1.msra.mxu0 %v1576
    %2430 = vmatprep.subr.mxu0 %v1580
    %2431 = vmatpush1.msra.mxu0 %v1579
    %2432 = vmatprep.subr.mxu0 %v1583
    %2433 = vmatpush1.msra.mxu0 %v1582
    %2434 = vmatprep.subr.mxu0 %v1586
    %2435 = vmatpush1.msra.mxu0 %v1585
    %2436 = vmatprep.subr.mxu0 %v1589
    %2437 = vmatpush1.msra.mxu0 %v1588
    %2438 = vmatprep.subr.mxu0 %v1592
    %2439 = vmatpush1.msra.mxu0 %v1591
    %2440 = vmatprep.subr.mxu0 %v1595
    %2441 = vmatpush1.msra.mxu0 %v1594
    %2442 = vmatprep.subr.mxu0 %v1598
    %2443 = vmatpush1.msra.mxu0 %v1597
    %2444 = vmatprep.subr.mxu0 %v1601
    %2445 = vmatpush1.msra.mxu0 %v1600
    %2446 = vmatprep.subr.mxu0 %v1604
    %2447 = vmatpush1.msra.mxu0 %v1603
    %2448 = vmatprep.subr.mxu0 %v1607
    %2449 = vmatpush1.msra.mxu0 %v1606
    %2450 = vmatprep.mubr.f32.mxu0 %v705
    %2451 = vmatmul.mubr.f32.gmra.mrb[0].mxu0 %v704
    %v2452 = vpop.f32.mrb[0].mxu0
    %v2453 = vadd.f32 %v2376, %v2452
    %v2454 = vpop.f32.mrb[0].mxu0
    %v2455 = vadd.f32 %v2378, %v2454
    %2456 = vmatprep.mubr.f32.mxu0 %v708
    %2457 = vmatmul.mubr.f32.gmra.mrb[0].mxu0 %v707
    %v2458 = vpop.f32.mrb[0].mxu0
    %v2459 = vadd.f32 %v2382, %v2458
    %v2460 = vpop.f32.mrb[0].mxu0
    %v2461 = vadd.f32 %v2384, %v2460
    %2462 = vdwg.mxu0
    %2463 = vmatprep.subr.mxu0 %v1610
    %2464 = vmatpush1.msra.mxu0 %v1609
    %2465 = vmatprep.subr.mxu0 %v1613
    %2466 = vmatpush1.msra.mxu0 %v1612
    %2467 = vmatprep.subr.mxu0 %v1616
    %2468 = vmatpush1.msra.mxu0 %v1615
    %2469 = vmatprep.subr.mxu0 %v1619
    %2470 = vmatpush1.msra.mxu0 %v1618
    %2471 = vmatprep.subr.mxu0 %v1622
    %2472 = vmatpush1.msra.mxu0 %v1621
    %2473 = vmatprep.subr.mxu0 %v1625
    %2474 = vmatpush1.msra.mxu0 %v1624
    %2475 = vmatprep.subr.mxu0 %v1628
    %2476 = vmatpush1.msra.mxu0 %v1627
    %2477 = vmatprep.subr.mxu0 %v1631
    %2478 = vmatpush1.msra.mxu0 %v1630
    %2479 = vmatprep.subr.mxu0 %v1634
    %2480 = vmatpush1.msra.mxu0 %v1633
    %2481 = vmatprep.subr.mxu0 %v1637
    %2482 = vmatpush1.msra.mxu0 %v1636
    %2483 = vmatprep.subr.mxu0 %v1640
    %2484 = vmatpush1.msra.mxu0 %v1639
    %2485 = vmatprep.subr.mxu0 %v1643
    %2486 = vmatpush1.msra.mxu0 %v1642
    %2487 = vmatprep.subr.mxu0 %v1646
    %2488 = vmatpush1.msra.mxu0 %v1645
    %2489 = vmatprep.subr.mxu0 %v1649
    %2490 = vmatpush1.msra.mxu0 %v1648
    %2491 = vmatprep.subr.mxu0 %v1652
    %2492 = vmatpush1.msra.mxu0 %v1651
    %2493 = vmatprep.subr.mxu0 %v1655
    %2494 = vmatpush1.msra.mxu0 %v1654
    %2495 = vmatprep.subr.mxu0 %v1658
    %2496 = vmatpush1.msra.mxu0 %v1657
    %2497 = vmatprep.subr.mxu0 %v1661
    %2498 = vmatpush1.msra.mxu0 %v1660
    %2499 = vmatprep.subr.mxu0 %v1664
    %2500 = vmatpush1.msra.mxu0 %v1663
    %2501 = vmatprep.subr.mxu0 %v1667
    %2502 = vmatpush1.msra.mxu0 %v1666
    %2503 = vmatprep.subr.mxu0 %v1670
    %2504 = vmatpush1.msra.mxu0 %v1669
    %2505 = vmatprep.subr.mxu0 %v1673
    %2506 = vmatpush1.msra.mxu0 %v1672
    %2507 = vmatprep.subr.mxu0 %v1676
    %2508 = vmatpush1.msra.mxu0 %v1675
    %2509 = vmatprep.subr.mxu0 %v1679
    %2510 = vmatpush1.msra.mxu0 %v1678
    %2511 = vmatprep.subr.mxu0 %v1682
    %2512 = vmatpush1.msra.mxu0 %v1681
    %2513 = vmatprep.subr.mxu0 %v1685
    %2514 = vmatpush1.msra.mxu0 %v1684
    %2515 = vmatprep.subr.mxu0 %v1688
    %2516 = vmatpush1.msra.mxu0 %v1687
    %2517 = vmatprep.subr.mxu0 %v1691
    %2518 = vmatpush1.msra.mxu0 %v1690
    %2519 = vmatprep.subr.mxu0 %v1694
    %2520 = vmatpush1.msra.mxu0 %v1693
    %2521 = vmatprep.subr.mxu0 %v1697
    %2522 = vmatpush1.msra.mxu0 %v1696
    %2523 = vmatprep.subr.mxu0 %v1700
    %2524 = vmatpush1.msra.mxu0 %v1699
    %2525 = vmatprep.subr.mxu0 %v1703
    %2526 = vmatpush1.msra.mxu0 %v1702
    %2527 = vmatprep.mubr.f32.mxu0 %v740
    %2528 = vmatmul.mubr.f32.gmra.mrb[0].mxu0 %v739
    %v2529 = vpop.f32.mrb[0].mxu0
    %v2530 = vadd.f32 %v2453, %v2529
    %v2531 = vpop.f32.mrb[0].mxu0
    %v2532 = vadd.f32 %v2455, %v2531
    %2533 = vmatprep.mubr.f32.mxu0 %v743
    %2534 = vmatmul.mubr.f32.gmra.mrb[0].mxu0 %v742
    %v2535 = vpop.f32.mrb[0].mxu0
    %v2536 = vadd.f32 %v2459, %v2535
    %v2537 = vpop.f32.mrb[0].mxu0
    %v2538 = vadd.f32 %v2461, %v2537
    %2539 = vdwg.mxu0
    %2540 = vmatprep.subr.mxu0 %v1706
    %2541 = vmatpush1.msra.mxu0 %v1705
    %2542 = vmatprep.subr.mxu0 %v1709
    %2543 = vmatpush1.msra.mxu0 %v1708
    %2544 = vmatprep.subr.mxu0 %v1712
    %2545 = vmatpush1.msra.mxu0 %v1711
    %2546 = vmatprep.subr.mxu0 %v1715
    %2547 = vmatpush1.msra.mxu0 %v1714
    %2548 = vmatprep.subr.mxu0 %v1718
    %2549 = vmatpush1.msra.mxu0 %v1717
    %2550 = vmatprep.subr.mxu0 %v1721
    %2551 = vmatpush1.msra.mxu0 %v1720
    %2552 = vmatprep.subr.mxu0 %v1724
    %2553 = vmatpush1.msra.mxu0 %v1723
    %2554 = vmatprep.subr.mxu0 %v1727
    %2555 = vmatpush1.msra.mxu0 %v1726
    %2556 = vmatprep.subr.mxu0 %v1730
    %2557 = vmatpush1.msra.mxu0 %v1729
    %2558 = vmatprep.subr.mxu0 %v1733
    %2559 = vmatpush1.msra.mxu0 %v1732
    %2560 = vmatprep.subr.mxu0 %v1736
    %2561 = vmatpush1.msra.mxu0 %v1735
    %2562 = vmatprep.subr.mxu0 %v1739
    %2563 = vmatpush1.msra.mxu0 %v1738
    %2564 = vmatprep.subr.mxu0 %v1742
    %2565 = vmatpush1.msra.mxu0 %v1741
    %2566 = vmatprep.subr.mxu0 %v1745
    %2567 = vmatpush1.msra.mxu0 %v1744
    %2568 = vmatprep.subr.mxu0 %v1748
    %2569 = vmatpush1.msra.mxu0 %v1747
    %2570 = vmatprep.subr.mxu0 %v1751
    %2571 = vmatpush1.msra.mxu0 %v1750
    %2572 = vmatprep.subr.mxu0 0.0
    %2573 = vmatpush1.msra.mxu0 0.0
    %2574 = vmatprep.subr.mxu0 0.0
    %2575 = vmatpush1.msra.mxu0 0.0
    %2576 = vmatprep.subr.mxu0 0.0
    %2577 = vmatpush1.msra.mxu0 0.0
    %2578 = vmatprep.subr.mxu0 0.0
    %2579 = vmatpush1.msra.mxu0 0.0
    %2580 = vmatprep.subr.mxu0 0.0
    %2581 = vmatpush1.msra.mxu0 0.0
    %2582 = vmatprep.subr.mxu0 0.0
    %2583 = vmatpush1.msra.mxu0 0.0
    %2584 = vmatprep.subr.mxu0 0.0
    %2585 = vmatpush1.msra.mxu0 0.0
    %2586 = vmatprep.subr.mxu0 0.0
    %2587 = vmatpush1.msra.mxu0 0.0
    %2588 = vmatprep.subr.mxu0 0.0
    %2589 = vmatpush1.msra.mxu0 0.0
    %2590 = vmatprep.subr.mxu0 0.0
    %2591 = vmatpush1.msra.mxu0 0.0
    %2592 = vmatprep.subr.mxu0 0.0
    %2593 = vmatpush1.msra.mxu0 0.0
    %2594 = vmatprep.subr.mxu0 0.0
    %2595 = vmatpush1.msra.mxu0 0.0
    %2596 = vmatprep.subr.mxu0 0.0
    %2597 = vmatpush1.msra.mxu0 0.0
    %2598 = vmatprep.subr.mxu0 0.0
    %2599 = vmatpush1.msra.mxu0 0.0
    %2600 = vmatprep.subr.mxu0 0.0
    %2601 = vmatpush1.msra.mxu0 0.0
    %2602 = vmatprep.subr.mxu0 0.0
    %2603 = vmatpush1.msra.mxu0 0.0
    %2604 = vmatprep.mubr.f32.mxu0 0.0
    %2605 = vmatmul.mubr.f32.gmra.mrb[0].mxu0 %v741
    %v2606 = vpop.f32.mrb[0].mxu0
    %v2607 = vadd.f32 %v2530, %v2606
    %v2608 = vpop.f32.mrb[0].mxu0
    %v2609 = vadd.f32 %v2532, %v2608
    %2610 = vmatprep.mubr.f32.mxu0 0.0
    %2611 = vmatmul.mubr.f32.gmra.mrb[0].mxu0 %v744
    %v2612 = vpop.f32.mrb[0].mxu0
    %v2613 = vadd.f32 %v2536, %v2612
    %v2614 = vpop.f32.mrb[0].mxu0
    %v2615 = vadd.f32 %v2538, %v2614
    %2616 = vdwg.mxu0
    %2617 = vmatprep.subr.mxu0 0.0
    %2618 = vmatpush1.msra.mxu0 %v747
    %2619 = vmatprep.subr.mxu0 0.0
    %2620 = vmatpush1.msra.mxu0 %v750
    %2621 = vmatprep.subr.mxu0 0.0
    %2622 = vmatpush1.msra.mxu0 %v753
    %2623 = vmatprep.subr.mxu0 0.0
    %2624 = vmatpush1.msra.mxu0 %v756
    %2625 = vmatprep.subr.mxu0 0.0
    %2626 = vmatpush1.msra.mxu0 %v759
    %2627 = vmatprep.subr.mxu0 0.0
    %2628 = vmatpush1.msra.mxu0 %v762
    %2629 = vmatprep.subr.mxu0 0.0
    %2630 = vmatpush1.msra.mxu0 %v765
    %2631 = vmatprep.subr.mxu0 0.0
    %2632 = vmatpush1.msra.mxu0 %v768
    %2633 = vmatprep.subr.mxu0 0.0
    %2634 = vmatpush1.msra.mxu0 %v771
    %2635 = vmatprep.subr.mxu0 0.0
    %2636 = vmatpush1.msra.mxu0 %v774
    %2637 = vmatprep.subr.mxu0 0.0
    %2638 = vmatpush1.msra.mxu0 %v777
    %2639 = vmatprep.subr.mxu0 0.0
    %2640 = vmatpush1.msra.mxu0 %v780
    %2641 = vmatprep.subr.mxu0 0.0
    %2642 = vmatpush1.msra.mxu0 %v783
    %2643 = vmatprep.subr.mxu0 0.0
    %2644 = vmatpush1.msra.mxu0 %v786
    %2645 = vmatprep.subr.mxu0 0.0
    %2646 = vmatpush1.msra.mxu0 %v789
    %2647 = vmatprep.subr.mxu0 0.0
    %2648 = vmatpush1.msra.mxu0 %v792
    %2649 = vmatprep.subr.mxu0 0.0
    %2650 = vmatpush1.msra.mxu0 %v795
    %2651 = vmatprep.subr.mxu0 0.0
    %2652 = vmatpush1.msra.mxu0 %v798
    %2653 = vmatprep.subr.mxu0 0.0
    %2654 = vmatpush1.msra.mxu0 %v801
    %2655 = vmatprep.subr.mxu0 0.0
    %2656 = vmatpush1.msra.mxu0 %v804
    %2657 = vmatprep.subr.mxu0 0.0
    %2658 = vmatpush1.msra.mxu0 %v807
    %2659 = vmatprep.subr.mxu0 0.0
    %2660 = vmatpush1.msra.mxu0 %v810
    %2661 = vmatprep.subr.mxu0 0.0
    %2662 = vmatpush1.msra.mxu0 %v813
    %2663 = vmatprep.subr.mxu0 0.0
    %2664 = vmatpush1.msra.mxu0 %v816
    %2665 = vmatprep.subr.mxu0 0.0
    %2666 = vmatpush1.msra.mxu0 %v819
    %2667 = vmatprep.subr.mxu0 0.0
    %2668 = vmatpush1.msra.mxu0 %v822
    %2669 = vmatprep.subr.mxu0 0.0
    %2670 = vmatpush1.msra.mxu0 %v825
    %2671 = vmatprep.subr.mxu0 0.0
    %2672 = vmatpush1.msra.mxu0 %v828
    %2673 = vmatprep.subr.mxu0 0.0
    %2674 = vmatpush1.msra.mxu0 %v831
    %2675 = vmatprep.subr.mxu0 0.0
    %2676 = vmatpush1.msra.mxu0 %v834
    %2677 = vmatprep.subr.mxu0 0.0
    %2678 = vmatpush1.msra.mxu0 %v837
    %2679 = vmatprep.subr.mxu0 0.0
    %2680 = vmatpush1.msra.mxu0 %v840
    %2681 = vmatprep.mubr.f32.mxu0 %v521
    %2682 = vmatmul.mubr.f32.gmra.mrb[0].mxu0 %v520
    %v2683 = vpop.f32.mrb[0].mxu0
    %v2684 = vadd.f32 %v1766, %v2683
    %v2685 = vpop.f32.mrb[0].mxu0
    %2686 = vmatprep.mubr.f32.mxu0 %v524
    %2687 = vmatmul.mubr.f32.gmra.mrb[0].mxu0 %v523
    %v2688 = vpop.f32.mrb[0].mxu0
    %v2689 = vadd.f32 %v1766, %v2688
    %v2690 = vpop.f32.mrb[0].mxu0
    %2691 = vdwg.mxu0
    %2692 = vmatprep.subr.mxu0 0.0
    %2693 = vmatpush1.msra.mxu0 %v843
    %2694 = vmatprep.subr.mxu0 0.0
    %2695 = vmatpush1.msra.mxu0 %v846
    %2696 = vmatprep.subr.mxu0 0.0
    %2697 = vmatpush1.msra.mxu0 %v849
    %2698 = vmatprep.subr.mxu0 0.0
    %2699 = vmatpush1.msra.mxu0 %v852
    %2700 = vmatprep.subr.mxu0 0.0
    %2701 = vmatpush1.msra.mxu0 %v855
    %2702 = vmatprep.subr.mxu0 0.0
    %2703 = vmatpush1.msra.mxu0 %v858
    %2704 = vmatprep.subr.mxu0 0.0
    %2705 = vmatpush1.msra.mxu0 %v861
    %2706 = vmatprep.subr.mxu0 0.0
    %2707 = vmatpush1.msra.mxu0 %v864
    %2708 = vmatprep.subr.mxu0 0.0
    %2709 = vmatpush1.msra.mxu0 %v867
    %2710 = vmatprep.subr.mxu0 0.0
    %2711 = vmatpush1.msra.mxu0 %v870
    %2712 = vmatprep.subr.mxu0 0.0
    %2713 = vmatpush1.msra.mxu0 %v873
    %2714 = vmatprep.subr.mxu0 0.0
    %2715 = vmatpush1.msra.mxu0 %v876
    %2716 = vmatprep.subr.mxu0 0.0
    %2717 = vmatpush1.msra.mxu0 %v879
    %2718 = vmatprep.subr.mxu0 0.0
    %2719 = vmatpush1.msra.mxu0 %v882
    %2720 = vmatprep.subr.mxu0 0.0
    %2721 = vmatpush1.msra.mxu0 %v885
    %2722 = vmatprep.subr.mxu0 0.0
    %2723 = vmatpush1.msra.mxu0 %v888
    %2724 = vmatprep.subr.mxu0 0.0
    %2725 = vmatpush1.msra.mxu0 %v891
    %2726 = vmatprep.subr.mxu0 0.0
    %2727 = vmatpush1.msra.mxu0 %v894
    %2728 = vmatprep.subr.mxu0 0.0
    %2729 = vmatpush1.msra.mxu0 %v897
    %2730 = vmatprep.subr.mxu0 0.0
    %2731 = vmatpush1.msra.mxu0 %v900
    %2732 = vmatprep.subr.mxu0 0.0
    %2733 = vmatpush1.msra.mxu0 %v903
    %2734 = vmatprep.subr.mxu0 0.0
    %2735 = vmatpush1.msra.mxu0 %v906
    %2736 = vmatprep.subr.mxu0 0.0
    %2737 = vmatpush1.msra.mxu0 %v909
    %2738 = vmatprep.subr.mxu0 0.0
    %2739 = vmatpush1.msra.mxu0 %v912
    %2740 = vmatprep.subr.mxu0 0.0
    %2741 = vmatpush1.msra.mxu0 %v915
    %2742 = vmatprep.subr.mxu0 0.0
    %2743 = vmatpush1.msra.mxu0 %v918
    %2744 = vmatprep.subr.mxu0 0.0
    %2745 = vmatpush1.msra.mxu0 %v921
    %2746 = vmatprep.subr.mxu0 0.0
    %2747 = vmatpush1.msra.mxu0 %v924
    %2748 = vmatprep.subr.mxu0 0.0
    %2749 = vmatpush1.msra.mxu0 %v927
    %2750 = vmatprep.subr.mxu0 0.0
    %2751 = vmatpush1.msra.mxu0 %v930
    %2752 = vmatprep.subr.mxu0 0.0
    %2753 = vmatpush1.msra.mxu0 %v933
    %2754 = vmatprep.subr.mxu0 0.0
    %2755 = vmatpush1.msra.mxu0 %v936
    %2756 = vmatprep.mubr.f32.mxu0 %v562
    %2757 = vmatmul.mubr.f32.gmra.mrb[0].mxu0 %v522
    %v2758 = vpop.f32.mrb[0].mxu0
    %v2759 = vadd.f32 %v2684, %v2758
    %v2760 = vpop.f32.mrb[0].mxu0
    %2761 = vmatprep.mubr.f32.mxu0 %v565
    %2762 = vmatmul.mubr.f32.gmra.mrb[0].mxu0 %v525
    %v2763 = vpop.f32.mrb[0].mxu0
    %v2764 = vadd.f32 %v2689, %v2763
    %v2765 = vpop.f32.mrb[0].mxu0
    %2766 = vdwg.mxu0
    %2767 = vmatprep.subr.mxu0 0.0
    %2768 = vmatpush1.msra.mxu0 %v939
    %2769 = vmatprep.subr.mxu0 0.0
    %2770 = vmatpush1.msra.mxu0 %v942
    %2771 = vmatprep.subr.mxu0 0.0
    %2772 = vmatpush1.msra.mxu0 %v945
    %2773 = vmatprep.subr.mxu0 0.0
    %2774 = vmatpush1.msra.mxu0 %v948
    %2775 = vmatprep.subr.mxu0 0.0
    %2776 = vmatpush1.msra.mxu0 %v951
    %2777 = vmatprep.subr.mxu0 0.0
    %2778 = vmatpush1.msra.mxu0 %v954
    %2779 = vmatprep.subr.mxu0 0.0
    %2780 = vmatpush1.msra.mxu0 %v957
    %2781 = vmatprep.subr.mxu0 0.0
    %2782 = vmatpush1.msra.mxu0 %v960
    %2783 = vmatprep.subr.mxu0 0.0
    %2784 = vmatpush1.msra.mxu0 %v963
    %2785 = vmatprep.subr.mxu0 0.0
    %2786 = vmatpush1.msra.mxu0 %v966
    %2787 = vmatprep.subr.mxu0 0.0
    %2788 = vmatpush1.msra.mxu0 %v969
    %2789 = vmatprep.subr.mxu0 0.0
    %2790 = vmatpush1.msra.mxu0 %v972
    %2791 = vmatprep.subr.mxu0 0.0
    %2792 = vmatpush1.msra.mxu0 %v975
    %2793 = vmatprep.subr.mxu0 0.0
    %2794 = vmatpush1.msra.mxu0 %v978
    %2795 = vmatprep.subr.mxu0 0.0
    %2796 = vmatpush1.msra.mxu0 %v981
    %2797 = vmatprep.subr.mxu0 0.0
    %2798 = vmatpush1.msra.mxu0 %v984
    %2799 = vmatprep.subr.mxu0 0.0
    %2800 = vmatpush1.msra.mxu0 %v987
    %2801 = vmatprep.subr.mxu0 0.0
    %2802 = vmatpush1.msra.mxu0 %v990
    %2803 = vmatprep.subr.mxu0 0.0
    %2804 = vmatpush1.msra.mxu0 %v993
    %2805 = vmatprep.subr.mxu0 0.0
    %2806 = vmatpush1.msra.mxu0 %v996
    %2807 = vmatprep.subr.mxu0 0.0
    %2808 = vmatpush1.msra.mxu0 %v999
    %2809 = vmatprep.subr.mxu0 0.0
    %2810 = vmatpush1.msra.mxu0 %v1002
    %2811 = vmatprep.subr.mxu0 0.0
    %2812 = vmatpush1.msra.mxu0 %v1005
    %2813 = vmatprep.subr.mxu0 0.0
    %2814 = vmatpush1.msra.mxu0 %v1008
    %2815 = vmatprep.subr.mxu0 0.0
    %2816 = vmatpush1.msra.mxu0 %v1011
    %2817 = vmatprep.subr.mxu0 0.0
    %2818 = vmatpush1.msra.mxu0 %v1014
    %2819 = vmatprep.subr.mxu0 0.0
    %2820 = vmatpush1.msra.mxu0 %v1017
    %2821 = vmatprep.subr.mxu0 0.0
    %2822 = vmatpush1.msra.mxu0 %v1020
    %2823 = vmatprep.subr.mxu0 0.0
    %2824 = vmatpush1.msra.mxu0 %v1023
    %2825 = vmatprep.subr.mxu0 0.0
    %2826 = vmatpush1.msra.mxu0 %v1026
    %2827 = vmatprep.subr.mxu0 0.0
    %2828 = vmatpush1.msra.mxu0 %v1029
    %2829 = vmatprep.subr.mxu0 0.0
    %2830 = vmatpush1.msra.mxu0 %v1032
    %2831 = vmatprep.mubr.f32.mxu0 %v564
    %2832 = vmatmul.mubr.f32.gmra.mrb[0].mxu0 %v563
    %v2833 = vpop.f32.mrb[0].mxu0
    %v2834 = vadd.f32 %v2759, %v2833
    %v2835 = vpop.f32.mrb[0].mxu0
    %2836 = vmatprep.mubr.f32.mxu0 %v567
    %2837 = vmatmul.mubr.f32.gmra.mrb[0].mxu0 %v566
    %v2838 = vpop.f32.mrb[0].mxu0
    %v2839 = vadd.f32 %v2764, %v2838
    %v2840 = vpop.f32.mrb[0].mxu0
    %2841 = vdwg.mxu0
    %2842 = vmatprep.subr.mxu0 0.0
    %2843 = vmatpush1.msra.mxu0 %v1035
    %2844 = vmatprep.subr.mxu0 0.0
    %2845 = vmatpush1.msra.mxu0 %v1038
    %2846 = vmatprep.subr.mxu0 0.0
    %2847 = vmatpush1.msra.mxu0 %v1041
    %2848 = vmatprep.subr.mxu0 0.0
    %2849 = vmatpush1.msra.mxu0 %v1044
    %2850 = vmatprep.subr.mxu0 0.0
    %2851 = vmatpush1.msra.mxu0 %v1047
    %2852 = vmatprep.subr.mxu0 0.0
    %2853 = vmatpush1.msra.mxu0 %v1050
    %2854 = vmatprep.subr.mxu0 0.0
    %2855 = vmatpush1.msra.mxu0 %v1053
    %2856 = vmatprep.subr.mxu0 0.0
    %2857 = vmatpush1.msra.mxu0 %v1056
    %2858 = vmatprep.subr.mxu0 0.0
    %2859 = vmatpush1.msra.mxu0 %v1059
    %2860 = vmatprep.subr.mxu0 0.0
    %2861 = vmatpush1.msra.mxu0 %v1062
    %2862 = vmatprep.subr.mxu0 0.0
    %2863 = vmatpush1.msra.mxu0 %v1065
    %2864 = vmatprep.subr.mxu0 0.0
    %2865 = vmatpush1.msra.mxu0 %v1068
    %2866 = vmatprep.subr.mxu0 0.0
    %2867 = vmatpush1.msra.mxu0 %v1071
    %2868 = vmatprep.subr.mxu0 0.0
    %2869 = vmatpush1.msra.mxu0 %v1074
    %2870 = vmatprep.subr.mxu0 0.0
    %2871 = vmatpush1.msra.mxu0 %v1077
    %2872 = vmatprep.subr.mxu0 0.0
    %2873 = vmatpush1.msra.mxu0 %v1080
    %2874 = vmatprep.subr.mxu0 0.0
    %2875 = vmatpush1.msra.mxu0 %v1083
    %2876 = vmatprep.subr.mxu0 0.0
    %2877 = vmatpush1.msra.mxu0 %v1086
    %2878 = vmatprep.subr.mxu0 0.0
    %2879 = vmatpush1.msra.mxu0 %v1089
    %2880 = vmatprep.subr.mxu0 0.0
    %2881 = vmatpush1.msra.mxu0 %v1092
    %2882 = vmatprep.subr.mxu0 0.0
    %2883 = vmatpush1.msra.mxu0 %v1095
    %2884 = vmatprep.subr.mxu0 0.0
    %2885 = vmatpush1.msra.mxu0 %v1098
    %2886 = vmatprep.subr.mxu0 0.0
    %2887 = vmatpush1.msra.mxu0 %v1101
    %2888 = vmatprep.subr.mxu0 0.0
    %2889 = vmatpush1.msra.mxu0 %v1104
    %2890 = vmatprep.subr.mxu0 0.0
    %2891 = vmatpush1.msra.mxu0 %v1107
    %2892 = vmatprep.subr.mxu0 0.0
    %2893 = vmatpush1.msra.mxu0 %v1110
    %2894 = vmatprep.subr.mxu0 0.0
    %2895 = vmatpush1.msra.mxu0 %v1113
    %2896 = vmatprep.subr.mxu0 0.0
    %2897 = vmatpush1.msra.mxu0 %v1116
    %2898 = vmatprep.subr.mxu0 0.0
    %2899 = vmatpush1.msra.mxu0 %v1119
    %2900 = vmatprep.subr.mxu0 0.0
    %2901 = vmatpush1.msra.mxu0 %v1122
    %2902 = vmatprep.subr.mxu0 0.0
    %2903 = vmatpush1.msra.mxu0 %v1125
    %2904 = vmatprep.subr.mxu0 0.0
    %2905 = vmatpush1.msra.mxu0 %v1128
    %2906 = vmatprep.mubr.f32.mxu0 %v599
    %2907 = vmatmul.mubr.f32.gmra.mrb[0].mxu0 %v598
    %v2908 = vpop.f32.mrb[0].mxu0
    %v2909 = vadd.f32 %v2834, %v2908
    %v2910 = vpop.f32.mrb[0].mxu0
    %2911 = vmatprep.mubr.f32.mxu0 %v602
    %2912 = vmatmul.mubr.f32.gmra.mrb[0].mxu0 %v601
    %v2913 = vpop.f32.mrb[0].mxu0
    %v2914 = vadd.f32 %v2839, %v2913
    %v2915 = vpop.f32.mrb[0].mxu0
    %2916 = vdwg.mxu0
    %2917 = vmatprep.subr.mxu0 0.0
    %2918 = vmatpush1.msra.mxu0 %v1131
    %2919 = vmatprep.subr.mxu0 0.0
    %2920 = vmatpush1.msra.mxu0 %v1134
    %2921 = vmatprep.subr.mxu0 0.0
    %2922 = vmatpush1.msra.mxu0 %v1137
    %2923 = vmatprep.subr.mxu0 0.0
    %2924 = vmatpush1.msra.mxu0 %v1140
    %2925 = vmatprep.subr.mxu0 0.0
    %2926 = vmatpush1.msra.mxu0 %v1143
    %2927 = vmatprep.subr.mxu0 0.0
    %2928 = vmatpush1.msra.mxu0 %v1146
    %2929 = vmatprep.subr.mxu0 0.0
    %2930 = vmatpush1.msra.mxu0 %v1149
    %2931 = vmatprep.subr.mxu0 0.0
    %2932 = vmatpush1.msra.mxu0 %v1152
    %2933 = vmatprep.subr.mxu0 0.0
    %2934 = vmatpush1.msra.mxu0 %v1155
    %2935 = vmatprep.subr.mxu0 0.0
    %2936 = vmatpush1.msra.mxu0 %v1158
    %2937 = vmatprep.subr.mxu0 0.0
    %2938 = vmatpush1.msra.mxu0 %v1161
    %2939 = vmatprep.subr.mxu0 0.0
    %2940 = vmatpush1.msra.mxu0 %v1164
    %2941 = vmatprep.subr.mxu0 0.0
    %2942 = vmatpush1.msra.mxu0 %v1167
    %2943 = vmatprep.subr.mxu0 0.0
    %2944 = vmatpush1.msra.mxu0 %v1170
    %2945 = vmatprep.subr.mxu0 0.0
    %2946 = vmatpush1.msra.mxu0 %v1173
    %2947 = vmatprep.subr.mxu0 0.0
    %2948 = vmatpush1.msra.mxu0 %v1176
    %2949 = vmatprep.subr.mxu0 0.0
    %2950 = vmatpush1.msra.mxu0 %v1179
    %2951 = vmatprep.subr.mxu0 0.0
    %2952 = vmatpush1.msra.mxu0 %v1182
    %2953 = vmatprep.subr.mxu0 0.0
    %2954 = vmatpush1.msra.mxu0 %v1185
    %2955 = vmatprep.subr.mxu0 0.0
    %2956 = vmatpush1.msra.mxu0 %v1188
    %2957 = vmatprep.subr.mxu0 0.0
    %2958 = vmatpush1.msra.mxu0 %v1191
    %2959 = vmatprep.subr.mxu0 0.0
    %2960 = vmatpush1.msra.mxu0 %v1194
    %2961 = vmatprep.subr.mxu0 0.0
    %2962 = vmatpush1.msra.mxu0 %v1197
    %2963 = vmatprep.subr.mxu0 0.0
    %2964 = vmatpush1.msra.mxu0 %v1200
    %2965 = vmatprep.subr.mxu0 0.0
    %2966 = vmatpush1.msra.mxu0 %v1203
    %2967 = vmatprep.subr.mxu0 0.0
    %2968 = vmatpush1.msra.mxu0 %v1206
    %2969 = vmatprep.subr.mxu0 0.0
    %2970 = vmatpush1.msra.mxu0 %v1209
    %2971 = vmatprep.subr.mxu0 0.0
    %2972 = vmatpush1.msra.mxu0 %v1212
    %2973 = vmatprep.subr.mxu0 0.0
    %2974 = vmatpush1.msra.mxu0 %v1215
    %2975 = vmatprep.subr.mxu0 0.0
    %2976 = vmatpush1.msra.mxu0 %v1218
    %2977 = vmatprep.subr.mxu0 0.0
    %2978 = vmatpush1.msra.mxu0 %v1221
    %2979 = vmatprep.subr.mxu0 0.0
    %2980 = vmatpush1.msra.mxu0 %v1224
    %2981 = vmatprep.mubr.f32.mxu0 %v632
    %2982 = vmatmul.mubr.f32.gmra.mrb[0].mxu0 %v600
    %v2983 = vpop.f32.mrb[0].mxu0
    %v2984 = vadd.f32 %v2909, %v2983
    %v2985 = vpop.f32.mrb[0].mxu0
    %2986 = vmatprep.mubr.f32.mxu0 %v635
    %2987 = vmatmul.mubr.f32.gmra.mrb[0].mxu0 %v603
    %v2988 = vpop.f32.mrb[0].mxu0
    %v2989 = vadd.f32 %v2914, %v2988
    %v2990 = vpop.f32.mrb[0].mxu0
    %2991 = vdwg.mxu0
    %2992 = vmatprep.subr.mxu0 0.0
    %2993 = vmatpush1.msra.mxu0 %v1227
    %2994 = vmatprep.subr.mxu0 0.0
    %2995 = vmatpush1.msra.mxu0 %v1230
    %2996 = vmatprep.subr.mxu0 0.0
    %2997 = vmatpush1.msra.mxu0 %v1233
    %2998 = vmatprep.subr.mxu0 0.0
    %2999 = vmatpush1.msra.mxu0 %v1236
    %3000 = vmatprep.subr.mxu0 0.0
    %3001 = vmatpush1.msra.mxu0 %v1239
    %3002 = vmatprep.subr.mxu0 0.0
    %3003 = vmatpush1.msra.mxu0 %v1242
    %3004 = vmatprep.subr.mxu0 0.0
    %3005 = vmatpush1.msra.mxu0 %v1245
    %3006 = vmatprep.subr.mxu0 0.0
    %3007 = vmatpush1.msra.mxu0 %v1248
    %3008 = vmatprep.subr.mxu0 0.0
    %3009 = vmatpush1.msra.mxu0 %v1251
    %3010 = vmatprep.subr.mxu0 0.0
    %3011 = vmatpush1.msra.mxu0 %v1254
    %3012 = vmatprep.subr.mxu0 0.0
    %3013 = vmatpush1.msra.mxu0 %v1257
    %3014 = vmatprep.subr.mxu0 0.0
    %3015 = vmatpush1.msra.mxu0 %v1260
    %3016 = vmatprep.subr.mxu0 0.0
    %3017 = vmatpush1.msra.mxu0 %v1263
    %3018 = vmatprep.subr.mxu0 0.0
    %3019 = vmatpush1.msra.mxu0 %v1266
    %3020 = vmatprep.subr.mxu0 0.0
    %3021 = vmatpush1.msra.mxu0 %v1269
    %3022 = vmatprep.subr.mxu0 0.0
    %3023 = vmatpush1.msra.mxu0 %v1272
    %3024 = vmatprep.subr.mxu0 0.0
    %3025 = vmatpush1.msra.mxu0 %v1275
    %3026 = vmatprep.subr.mxu0 0.0
    %3027 = vmatpush1.msra.mxu0 %v1278
    %3028 = vmatprep.subr.mxu0 0.0
    %3029 = vmatpush1.msra.mxu0 %v1281
    %3030 = vmatprep.subr.mxu0 0.0
    %3031 = vmatpush1.msra.mxu0 %v1284
    %3032 = vmatprep.subr.mxu0 0.0
    %3033 = vmatpush1.msra.mxu0 %v1287
    %3034 = vmatprep.subr.mxu0 0.0
    %3035 = vmatpush1.msra.mxu0 %v1290
    %3036 = vmatprep.subr.mxu0 0.0
    %3037 = vmatpush1.msra.mxu0 %v1293
    %3038 = vmatprep.subr.mxu0 0.0
    %3039 = vmatpush1.msra.mxu0 %v1296
    %3040 = vmatprep.subr.mxu0 0.0
    %3041 = vmatpush1.msra.mxu0 %v1299
    %3042 = vmatprep.subr.mxu0 0.0
    %3043 = vmatpush1.msra.mxu0 %v1302
    %3044 = vmatprep.subr.mxu0 0.0
    %3045 = vmatpush1.msra.mxu0 %v1305
    %3046 = vmatprep.subr.mxu0 0.0
    %3047 = vmatpush1.msra.mxu0 %v1308
    %3048 = vmatprep.subr.mxu0 0.0
    %3049 = vmatpush1.msra.mxu0 %v1311
    %3050 = vmatprep.subr.mxu0 0.0
    %3051 = vmatpush1.msra.mxu0 %v1314
    %3052 = vmatprep.subr.mxu0 0.0
    %3053 = vmatpush1.msra.mxu0 %v1317
    %3054 = vmatprep.subr.mxu0 0.0
    %3055 = vmatpush1.msra.mxu0 %v1320
    %3056 = vmatprep.mubr.f32.mxu0 %v634
    %3057 = vmatmul.mubr.f32.gmra.mrb[0].mxu0 %v633
    %v3058 = vpop.f32.mrb[0].mxu0
    %v3059 = vadd.f32 %v2984, %v3058
    %v3060 = vpop.f32.mrb[0].mxu0
    %3061 = vmatprep.mubr.f32.mxu0 %v637
    %3062 = vmatmul.mubr.f32.gmra.mrb[0].mxu0 %v636
    %v3063 = vpop.f32.mrb[0].mxu0
    %v3064 = vadd.f32 %v2989, %v3063
    %v3065 = vpop.f32.mrb[0].mxu0
    %3066 = vdwg.mxu0
    %3067 = vmatprep.subr.mxu0 0.0
    %3068 = vmatpush1.msra.mxu0 %v1323
    %3069 = vmatprep.subr.mxu0 0.0
    %3070 = vmatpush1.msra.mxu0 %v1326
    %3071 = vmatprep.subr.mxu0 0.0
    %3072 = vmatpush1.msra.mxu0 %v1329
    %3073 = vmatprep.subr.mxu0 0.0
    %3074 = vmatpush1.msra.mxu0 %v1332
    %3075 = vmatprep.subr.mxu0 0.0
    %3076 = vmatpush1.msra.mxu0 %v1335
    %3077 = vmatprep.subr.mxu0 0.0
    %3078 = vmatpush1.msra.mxu0 %v1338
    %3079 = vmatprep.subr.mxu0 0.0
    %3080 = vmatpush1.msra.mxu0 %v1341
    %3081 = vmatprep.subr.mxu0 0.0
    %3082 = vmatpush1.msra.mxu0 %v1344
    %3083 = vmatprep.subr.mxu0 0.0
    %3084 = vmatpush1.msra.mxu0 %v1347
    %3085 = vmatprep.subr.mxu0 0.0
    %3086 = vmatpush1.msra.mxu0 %v1350
    %3087 = vmatprep.subr.mxu0 0.0
    %3088 = vmatpush1.msra.mxu0 %v1353
    %3089 = vmatprep.subr.mxu0 0.0
    %3090 = vmatpush1.msra.mxu0 %v1356
    %3091 = vmatprep.subr.mxu0 0.0
    %3092 = vmatpush1.msra.mxu0 %v1359
    %3093 = vmatprep.subr.mxu0 0.0
    %3094 = vmatpush1.msra.mxu0 %v1362
    %3095 = vmatprep.subr.mxu0 0.0
    %3096 = vmatpush1.msra.mxu0 %v1365
    %3097 = vmatprep.subr.mxu0 0.0
    %3098 = vmatpush1.msra.mxu0 %v1368
    %3099 = vmatprep.subr.mxu0 0.0
    %3100 = vmatpush1.msra.mxu0 %v1371
    %3101 = vmatprep.subr.mxu0 0.0
    %3102 = vmatpush1.msra.mxu0 %v1374
    %3103 = vmatprep.subr.mxu0 0.0
    %3104 = vmatpush1.msra.mxu0 %v1377
    %3105 = vmatprep.subr.mxu0 0.0
    %3106 = vmatpush1.msra.mxu0 %v1380
    %3107 = vmatprep.subr.mxu0 0.0
    %3108 = vmatpush1.msra.mxu0 %v1383
    %3109 = vmatprep.subr.mxu0 0.0
    %3110 = vmatpush1.msra.mxu0 %v1386
    %3111 = vmatprep.subr.mxu0 0.0
    %3112 = vmatpush1.msra.mxu0 %v1389
    %3113 = vmatprep.subr.mxu0 0.0
    %3114 = vmatpush1.msra.mxu0 %v1392
    %3115 = vmatprep.subr.mxu0 0.0
    %3116 = vmatpush1.msra.mxu0 %v1395
    %3117 = vmatprep.subr.mxu0 0.0
    %3118 = vmatpush1.msra.mxu0 %v1398
    %3119 = vmatprep.subr.mxu0 0.0
    %3120 = vmatpush1.msra.mxu0 %v1401
    %3121 = vmatprep.subr.mxu0 0.0
    %3122 = vmatpush1.msra.mxu0 %v1404
    %3123 = vmatprep.subr.mxu0 0.0
    %3124 = vmatpush1.msra.mxu0 %v1407
    %3125 = vmatprep.subr.mxu0 0.0
    %3126 = vmatpush1.msra.mxu0 %v1410
    %3127 = vmatprep.subr.mxu0 0.0
    %3128 = vmatpush1.msra.mxu0 %v1413
    %3129 = vmatprep.subr.mxu0 0.0
    %3130 = vmatpush1.msra.mxu0 %v1416
    %3131 = vmatprep.mubr.f32.mxu0 %v669
    %3132 = vmatmul.mubr.f32.gmra.mrb[0].mxu0 %v668
    %v3133 = vpop.f32.mrb[0].mxu0
    %v3134 = vadd.f32 %v3059, %v3133
    %v3135 = vpop.f32.mrb[0].mxu0
    %3136 = vmatprep.mubr.f32.mxu0 %v672
    %3137 = vmatmul.mubr.f32.gmra.mrb[0].mxu0 %v671
    %v3138 = vpop.f32.mrb[0].mxu0
    %v3139 = vadd.f32 %v3064, %v3138
    %v3140 = vpop.f32.mrb[0].mxu0
    %3141 = vdwg.mxu0
    %3142 = vmatprep.subr.mxu0 0.0
    %3143 = vmatpush1.msra.mxu0 %v1419
    %3144 = vmatprep.subr.mxu0 0.0
    %3145 = vmatpush1.msra.mxu0 %v1422
    %3146 = vmatprep.subr.mxu0 0.0
    %3147 = vmatpush1.msra.mxu0 %v1425
    %3148 = vmatprep.subr.mxu0 0.0
    %3149 = vmatpush1.msra.mxu0 %v1428
    %3150 = vmatprep.subr.mxu0 0.0
    %3151 = vmatpush1.msra.mxu0 %v1431
    %3152 = vmatprep.subr.mxu0 0.0
    %3153 = vmatpush1.msra.mxu0 %v1434
    %3154 = vmatprep.subr.mxu0 0.0
    %3155 = vmatpush1.msra.mxu0 %v1437
    %3156 = vmatprep.subr.mxu0 0.0
    %3157 = vmatpush1.msra.mxu0 %v1440
    %3158 = vmatprep.subr.mxu0 0.0
    %3159 = vmatpush1.msra.mxu0 %v1443
    %3160 = vmatprep.subr.mxu0 0.0
    %3161 = vmatpush1.msra.mxu0 %v1446
    %3162 = vmatprep.subr.mxu0 0.0
    %3163 = vmatpush1.msra.mxu0 %v1449
    %3164 = vmatprep.subr.mxu0 0.0
    %3165 = vmatpush1.msra.mxu0 %v1452
    %3166 = vmatprep.subr.mxu0 0.0
    %3167 = vmatpush1.msra.mxu0 %v1455
    %3168 = vmatprep.subr.mxu0 0.0
    %3169 = vmatpush1.msra.mxu0 %v1458
    %3170 = vmatprep.subr.mxu0 0.0
    %3171 = vmatpush1.msra.mxu0 %v1461
    %3172 = vmatprep.subr.mxu0 0.0
    %3173 = vmatpush1.msra.mxu0 %v1464
    %3174 = vmatprep.subr.mxu0 0.0
    %3175 = vmatpush1.msra.mxu0 %v1467
    %3176 = vmatprep.subr.mxu0 0.0
    %3177 = vmatpush1.msra.mxu0 %v1470
    %3178 = vmatprep.subr.mxu0 0.0
    %3179 = vmatpush1.msra.mxu0 %v1473
    %3180 = vmatprep.subr.mxu0 0.0
    %3181 = vmatpush1.msra.mxu0 %v1476
    %3182 = vmatprep.subr.mxu0 0.0
    %3183 = vmatpush1.msra.mxu0 %v1479
    %3184 = vmatprep.subr.mxu0 0.0
    %3185 = vmatpush1.msra.mxu0 %v1482
    %3186 = vmatprep.subr.mxu0 0.0
    %3187 = vmatpush1.msra.mxu0 %v1485
    %3188 = vmatprep.subr.mxu0 0.0
    %3189 = vmatpush1.msra.mxu0 %v1488
    %3190 = vmatprep.subr.mxu0 0.0
    %3191 = vmatpush1.msra.mxu0 %v1491
    %3192 = vmatprep.subr.mxu0 0.0
    %3193 = vmatpush1.msra.mxu0 %v1494
    %3194 = vmatprep.subr.mxu0 0.0
    %3195 = vmatpush1.msra.mxu0 %v1497
    %3196 = vmatprep.subr.mxu0 0.0
    %3197 = vmatpush1.msra.mxu0 %v1500
    %3198 = vmatprep.subr.mxu0 0.0
    %3199 = vmatpush1.msra.mxu0 %v1503
    %3200 = vmatprep.subr.mxu0 0.0
    %3201 = vmatpush1.msra.mxu0 %v1506
    %3202 = vmatprep.subr.mxu0 0.0
    %3203 = vmatpush1.msra.mxu0 %v1509
    %3204 = vmatprep.subr.mxu0 0.0
    %3205 = vmatpush1.msra.mxu0 %v1512
    %3206 = vmatprep.mubr.f32.mxu0 %v703
    %3207 = vmatmul.mubr.f32.gmra.mrb[0].mxu0 %v670
    %v3208 = vpop.f32.mrb[0].mxu0
    %v3209 = vadd.f32 %v3134, %v3208
    %v3210 = vpop.f32.mrb[0].mxu0
    %3211 = vmatprep.mubr.f32.mxu0 %v706
    %3212 = vmatmul.mubr.f32.gmra.mrb[0].mxu0 %v673
    %v3213 = vpop.f32.mrb[0].mxu0
    %v3214 = vadd.f32 %v3139, %v3213
    %v3215 = vpop.f32.mrb[0].mxu0
    %3216 = vdwg.mxu0
    %3217 = vmatprep.subr.mxu0 0.0
    %3218 = vmatpush1.msra.mxu0 %v1515
    %3219 = vmatprep.subr.mxu0 0.0
    %3220 = vmatpush1.msra.mxu0 %v1518
    %3221 = vmatprep.subr.mxu0 0.0
    %3222 = vmatpush1.msra.mxu0 %v1521
    %3223 = vmatprep.subr.mxu0 0.0
    %3224 = vmatpush1.msra.mxu0 %v1524
    %3225 = vmatprep.subr.mxu0 0.0
    %3226 = vmatpush1.msra.mxu0 %v1527
    %3227 = vmatprep.subr.mxu0 0.0
    %3228 = vmatpush1.msra.mxu0 %v1530
    %3229 = vmatprep.subr.mxu0 0.0
    %3230 = vmatpush1.msra.mxu0 %v1533
    %3231 = vmatprep.subr.mxu0 0.0
    %3232 = vmatpush1.msra.mxu0 %v1536
    %3233 = vmatprep.subr.mxu0 0.0
    %3234 = vmatpush1.msra.mxu0 %v1539
    %3235 = vmatprep.subr.mxu0 0.0
    %3236 = vmatpush1.msra.mxu0 %v1542
    %3237 = vmatprep.subr.mxu0 0.0
    %3238 = vmatpush1.msra.mxu0 %v1545
    %3239 = vmatprep.subr.mxu0 0.0
    %3240 = vmatpush1.msra.mxu0 %v1548
    %3241 = vmatprep.subr.mxu0 0.0
    %3242 = vmatpush1.msra.mxu0 %v1551
    %3243 = vmatprep.subr.mxu0 0.0
    %3244 = vmatpush1.msra.mxu0 %v1554
    %3245 = vmatprep.subr.mxu0 0.0
    %3246 = vmatpush1.msra.mxu0 %v1557
    %3247 = vmatprep.subr.mxu0 0.0
    %3248 = vmatpush1.msra.mxu0 %v1560
    %3249 = vmatprep.subr.mxu0 0.0
    %3250 = vmatpush1.msra.mxu0 %v1563
    %3251 = vmatprep.subr.mxu0 0.0
    %3252 = vmatpush1.msra.mxu0 %v1566
    %3253 = vmatprep.subr.mxu0 0.0
    %3254 = vmatpush1.msra.mxu0 %v1569
    %3255 = vmatprep.subr.mxu0 0.0
    %3256 = vmatpush1.msra.mxu0 %v1572
    %3257 = vmatprep.subr.mxu0 0.0
    %3258 = vmatpush1.msra.mxu0 %v1575
    %3259 = vmatprep.subr.mxu0 0.0
    %3260 = vmatpush1.msra.mxu0 %v1578
    %3261 = vmatprep.subr.mxu0 0.0
    %3262 = vmatpush1.msra.mxu0 %v1581
    %3263 = vmatprep.subr.mxu0 0.0
    %3264 = vmatpush1.msra.mxu0 %v1584
    %3265 = vmatprep.subr.mxu0 0.0
    %3266 = vmatpush1.msra.mxu0 %v1587
    %3267 = vmatprep.subr.mxu0 0.0
    %3268 = vmatpush1.msra.mxu0 %v1590
    %3269 = vmatprep.subr.mxu0 0.0
    %3270 = vmatpush1.msra.mxu0 %v1593
    %3271 = vmatprep.subr.mxu0 0.0
    %3272 = vmatpush1.msra.mxu0 %v1596
    %3273 = vmatprep.subr.mxu0 0.0
    %3274 = vmatpush1.msra.mxu0 %v1599
    %3275 = vmatprep.subr.mxu0 0.0
    %3276 = vmatpush1.msra.mxu0 %v1602
    %3277 = vmatprep.subr.mxu0 0.0
    %3278 = vmatpush1.msra.mxu0 %v1605
    %3279 = vmatprep.subr.mxu0 0.0
    %3280 = vmatpush1.msra.mxu0 %v1608
    %3281 = vmatprep.mubr.f32.mxu0 %v705
    %3282 = vmatmul.mubr.f32.gmra.mrb[0].mxu0 %v704
    %v3283 = vpop.f32.mrb[0].mxu0
    %v3284 = vadd.f32 %v3209, %v3283
    %v3285 = vpop.f32.mrb[0].mxu0
    %3286 = vmatprep.mubr.f32.mxu0 %v708
    %3287 = vmatmul.mubr.f32.gmra.mrb[0].mxu0 %v707
    %v3288 = vpop.f32.mrb[0].mxu0
    %v3289 = vadd.f32 %v3214, %v3288
    %v3290 = vpop.f32.mrb[0].mxu0
    %3291 = vdwg.mxu0
    %3292 = vmatprep.subr.mxu0 0.0
    %3293 = vmatpush1.msra.mxu0 %v1611
    %3294 = vmatprep.subr.mxu0 0.0
    %3295 = vmatpush1.msra.mxu0 %v1614
    %3296 = vmatprep.subr.mxu0 0.0
    %3297 = vmatpush1.msra.mxu0 %v1617
    %3298 = vmatprep.subr.mxu0 0.0
    %3299 = vmatpush1.msra.mxu0 %v1620
    %3300 = vmatprep.subr.mxu0 0.0
    %3301 = vmatpush1.msra.mxu0 %v1623
    %3302 = vmatprep.subr.mxu0 0.0
    %3303 = vmatpush1.msra.mxu0 %v1626
    %3304 = vmatprep.subr.mxu0 0.0
    %3305 = vmatpush1.msra.mxu0 %v1629
    %3306 = vmatprep.subr.mxu0 0.0
    %3307 = vmatpush1.msra.mxu0 %v1632
    %3308 = vmatprep.subr.mxu0 0.0
    %3309 = vmatpush1.msra.mxu0 %v1635
    %3310 = vmatprep.subr.mxu0 0.0
    %3311 = vmatpush1.msra.mxu0 %v1638
    %3312 = vmatprep.subr.mxu0 0.0
    %3313 = vmatpush1.msra.mxu0 %v1641
    %3314 = vmatprep.subr.mxu0 0.0
    %3315 = vmatpush1.msra.mxu0 %v1644
    %3316 = vmatprep.subr.mxu0 0.0
    %3317 = vmatpush1.msra.mxu0 %v1647
    %3318 = vmatprep.subr.mxu0 0.0
    %3319 = vmatpush1.msra.mxu0 %v1650
    %3320 = vmatprep.subr.mxu0 0.0
    %3321 = vmatpush1.msra.mxu0 %v1653
    %3322 = vmatprep.subr.mxu0 0.0
    %3323 = vmatpush1.msra.mxu0 %v1656
    %3324 = vmatprep.subr.mxu0 0.0
    %3325 = vmatpush1.msra.mxu0 %v1659
    %3326 = vmatprep.subr.mxu0 0.0
    %3327 = vmatpush1.msra.mxu0 %v1662
    %3328 = vmatprep.subr.mxu0 0.0
    %3329 = vmatpush1.msra.mxu0 %v1665
    %3330 = vmatprep.subr.mxu0 0.0
    %3331 = vmatpush1.msra.mxu0 %v1668
    %3332 = vmatprep.subr.mxu0 0.0
    %3333 = vmatpush1.msra.mxu0 %v1671
    %3334 = vmatprep.subr.mxu0 0.0
    %3335 = vmatpush1.msra.mxu0 %v1674
    %3336 = vmatprep.subr.mxu0 0.0
    %3337 = vmatpush1.msra.mxu0 %v1677
    %3338 = vmatprep.subr.mxu0 0.0
    %3339 = vmatpush1.msra.mxu0 %v1680
    %3340 = vmatprep.subr.mxu0 0.0
    %3341 = vmatpush1.msra.mxu0 %v1683
    %3342 = vmatprep.subr.mxu0 0.0
    %3343 = vmatpush1.msra.mxu0 %v1686
    %3344 = vmatprep.subr.mxu0 0.0
    %3345 = vmatpush1.msra.mxu0 %v1689
    %3346 = vmatprep.subr.mxu0 0.0
    %3347 = vmatpush1.msra.mxu0 %v1692
    %3348 = vmatprep.subr.mxu0 0.0
    %3349 = vmatpush1.msra.mxu0 %v1695
    %3350 = vmatprep.subr.mxu0 0.0
    %3351 = vmatpush1.msra.mxu0 %v1698
    %3352 = vmatprep.subr.mxu0 0.0
    %3353 = vmatpush1.msra.mxu0 %v1701
    %3354 = vmatprep.subr.mxu0 0.0
    %3355 = vmatpush1.msra.mxu0 %v1704
    %3356 = vmatprep.mubr.f32.mxu0 %v740
    %3357 = vmatmul.mubr.f32.gmra.mrb[0].mxu0 %v739
    %v3358 = vpop.f32.mrb[0].mxu0
    %v3359 = vadd.f32 %v3284, %v3358
    %v3360 = vpop.f32.mrb[0].mxu0
    %3361 = vmatprep.mubr.f32.mxu0 %v743
    %3362 = vmatmul.mubr.f32.gmra.mrb[0].mxu0 %v742
    %v3363 = vpop.f32.mrb[0].mxu0
    %v3364 = vadd.f32 %v3289, %v3363
    %v3365 = vpop.f32.mrb[0].mxu0
    %3366 = vdwg.mxu0
    %3367 = vmatprep.subr.mxu0 0.0
    %3368 = vmatpush1.msra.mxu0 %v1707
    %3369 = vmatprep.subr.mxu0 0.0
    %3370 = vmatpush1.msra.mxu0 %v1710
    %3371 = vmatprep.subr.mxu0 0.0
    %3372 = vmatpush1.msra.mxu0 %v1713
    %3373 = vmatprep.subr.mxu0 0.0
    %3374 = vmatpush1.msra.mxu0 %v1716
    %3375 = vmatprep.subr.mxu0 0.0
    %3376 = vmatpush1.msra.mxu0 %v1719
    %3377 = vmatprep.subr.mxu0 0.0
    %3378 = vmatpush1.msra.mxu0 %v1722
    %3379 = vmatprep.subr.mxu0 0.0
    %3380 = vmatpush1.msra.mxu0 %v1725
    %3381 = vmatprep.subr.mxu0 0.0
    %3382 = vmatpush1.msra.mxu0 %v1728
    %3383 = vmatprep.subr.mxu0 0.0
    %3384 = vmatpush1.msra.mxu0 %v1731
    %3385 = vmatprep.subr.mxu0 0.0
    %3386 = vmatpush1.msra.mxu0 %v1734
    %3387 = vmatprep.subr.mxu0 0.0
    %3388 = vmatpush1.msra.mxu0 %v1737
    %3389 = vmatprep.subr.mxu0 0.0
    %3390 = vmatpush1.msra.mxu0 %v1740
    %3391 = vmatprep.subr.mxu0 0.0
    %3392 = vmatpush1.msra.mxu0 %v1743
    %3393 = vmatprep.subr.mxu0 0.0
    %3394 = vmatpush1.msra.mxu0 %v1746
    %3395 = vmatprep.subr.mxu0 0.0
    %3396 = vmatpush1.msra.mxu0 %v1749
    %3397 = vmatprep.subr.mxu0 0.0
    %3398 = vmatpush1.msra.mxu0 %v1752
    %3399 = vmatprep.subr.mxu0 0.0
    %3400 = vmatpush1.msra.mxu0 0.0
    %3401 = vmatprep.subr.mxu0 0.0
    %3402 = vmatpush1.msra.mxu0 0.0
    %3403 = vmatprep.subr.mxu0 0.0
    %3404 = vmatpush1.msra.mxu0 0.0
    %3405 = vmatprep.subr.mxu0 0.0
    %3406 = vmatpush1.msra.mxu0 0.0
    %3407 = vmatprep.subr.mxu0 0.0
    %3408 = vmatpush1.msra.mxu0 0.0
    %3409 = vmatprep.subr.mxu0 0.0
    %3410 = vmatpush1.msra.mxu0 0.0
    %3411 = vmatprep.subr.mxu0 0.0
    %3412 = vmatpush1.msra.mxu0 0.0
    %3413 = vmatprep.subr.mxu0 0.0
    %3414 = vmatpush1.msra.mxu0 0.0
    %3415 = vmatprep.subr.mxu0 0.0
    %3416 = vmatpush1.msra.mxu0 0.0
    %3417 = vmatprep.subr.mxu0 0.0
    %3418 = vmatpush1.msra.mxu0 0.0
    %3419 = vmatprep.subr.mxu0 0.0
    %3420 = vmatpush1.msra.mxu0 0.0
    %3421 = vmatprep.subr.mxu0 0.0
    %3422 = vmatpush1.msra.mxu0 0.0
    %3423 = vmatprep.subr.mxu0 0.0
    %3424 = vmatpush1.msra.mxu0 0.0
    %3425 = vmatprep.subr.mxu0 0.0
    %3426 = vmatpush1.msra.mxu0 0.0
    %3427 = vmatprep.subr.mxu0 0.0
    %3428 = vmatpush1.msra.mxu0 0.0
    %3429 = vmatprep.subr.mxu0 0.0
    %3430 = vmatpush1.msra.mxu0 0.0
    %3431 = vmatprep.mubr.f32.mxu0 0.0
    %3432 = vmatmul.mubr.f32.gmra.mrb[0].mxu0 %v741
    %v3433 = vpop.f32.mrb[0].mxu0
    %v3434 = vadd.f32 %v3359, %v3433
    %v3435 = vpop.f32.mrb[0].mxu0
    %3436 = vmatprep.mubr.f32.mxu0 0.0
    %3437 = vmatmul.mubr.f32.gmra.mrb[0].mxu0 %v744
    %v3438 = vpop.f32.mrb[0].mxu0
    %v3439 = vadd.f32 %v3364, %v3438
    %v3440 = vpop.f32.mrb[0].mxu0
    %3441 = vdwg.mxu0
    %v3442 = vmax.f32 %v2607, 0.0
    %v3443 = vmax.f32 %v2609, 0.0
    %v3444 = vmax.f32 %v3434, 0.0
    %v3445 = vmax.f32 %v2613, 0.0
    %v3446 = vmax.f32 %v2615, 0.0
    %v3447 = vmax.f32 %v3439, 0.0
    %v3448 = vmin.f32 %v3442, 6.0
    %v3449 = vmin.f32 %v3443, 6.0
    %v3450 = vmin.f32 %v3444, 6.0
    %v3451 = vmin.f32 %v3445, 6.0
    %v3452 = vmin.f32 %v3446, 6.0
    %v3453 = vmin.f32 %v3447, 6.0
    %v3454 = vrot.slane %v3448, 4
    %v3455 = vmax.f32 %v3448, %v3454
    %v3456 = vrot.slane %v3455, 2
    %v3457 = vmax.f32 %v3455, %v3456
    %v3458 = vrot.slane %v3457, 1
    %v3459 = vmax.f32 %v3457, %v3458
    %v3460 = vrot.slane %v3449, 4
    %v3461 = vmax.f32 %v3449, %v3460
    %v3462 = vrot.slane %v3461, 2
    %v3463 = vmax.f32 %v3461, %v3462
    %v3464 = vrot.slane %v3463, 1
    %v3465 = vmax.f32 %v3463, %v3464
    %v3466 = vrot.slane %v3450, 4
    %v3467 = vmax.f32 %v3450, %v3466
    %v3468 = vrot.slane %v3467, 2
    %v3469 = vmax.f32 %v3467, %v3468
    %v3470 = vrot.slane %v3469, 1
    %v3471 = vmax.f32 %v3469, %v3470
    %v3472 = vrot.slane %v3451, 4
    %v3473 = vmax.f32 %v3451, %v3472
    %v3474 = vrot.slane %v3473, 2
    %v3475 = vmax.f32 %v3473, %v3474
    %v3476 = vrot.slane %v3475, 1
    %v3477 = vmax.f32 %v3475, %v3476
    %v3478 = vrot.slane %v3452, 4
    %v3479 = vmax.f32 %v3452, %v3478
    %v3480 = vrot.slane %v3479, 2
    %v3481 = vmax.f32 %v3479, %v3480
    %v3482 = vrot.slane %v3481, 1
    %v3483 = vmax.f32 %v3481, %v3482
    %v3484 = vrot.slane %v3453, 4
    %v3485 = vmax.f32 %v3453, %v3484
    %v3486 = vrot.slane %v3485, 2
    %v3487 = vmax.f32 %v3485, %v3486
    %v3488 = vrot.slane %v3487, 1
    %v3489 = vmax.f32 %v3487, %v3488
    %vm3490 = vcmask 1040384
    %v3491 = vsel %vm3490, %v3459, %v3477
    %v3492 = vsel %vm3490, %v3465, %v3483
    %v3493 = vsel %vm3490, %v3471, %v3489
    %v3494 = vld [vmem:[#allocation10] sm:$0xff]
    %v3495 = vld [vmem:[#allocation10 + $0x8] sm:$0xff]
    %v3496 = vld [vmem:[#allocation10 + $0x10] sm:$0xff]
    %v3497 = vld [vmem:[#allocation10 + $0x18] sm:$0xff]
    %v3498 = vld [vmem:[#allocation10 + $0x20] sm:$0xff]
    %v3499 = vld [vmem:[#allocation10 + $0x28] sm:$0xff]
    %v3500 = vld [vmem:[#allocation10 + $0x30] sm:$0xff]
    %v3501 = vld [vmem:[#allocation10 + $0x38] sm:$0xff]
    %v3502 = vld [vmem:[#allocation10 + $0x40] sm:$0xff]
    %v3503 = vld [vmem:[#allocation10 + $0x48] sm:$0xff]
    %v3504 = vld [vmem:[#allocation10 + $0x50] sm:$0xff]
    %v3505 = vld [vmem:[#allocation10 + $0x58] sm:$0xff]
    %v3506 = vld [vmem:[#allocation10 + $0x60] sm:$0xff]
    %v3507 = vld [vmem:[#allocation10 + $0x68] sm:$0xff]
    %v3508 = vld [vmem:[#allocation10 + $0x70] sm:$0xff]
    %v3509 = vld [vmem:[#allocation10 + $0x78] sm:$0xff]
    %v3510 = vld [vmem:[#allocation10 + $0x80] sm:$0xff]
    %v3511 = vld [vmem:[#allocation10 + $0x88] sm:$0xff]
    %v3512 = vld [vmem:[#allocation10 + $0x90] sm:$0xff]
    %v3513 = vld [vmem:[#allocation10 + $0x98] sm:$0xff]
    %v3514 = vld [vmem:[#allocation10 + $0xa0] sm:$0xff]
    %v3515 = vld [vmem:[#allocation10 + $0xa8] sm:$0xff]
    %v3516 = vld [vmem:[#allocation10 + $0xb0] sm:$0xff]
    %v3517 = vld [vmem:[#allocation10 + $0xb8] sm:$0xff]
    %v3518 = vld [vmem:[#allocation10 + $0xc0] sm:$0xff]
    %v3519 = vld [vmem:[#allocation10 + $0xc8] sm:$0xff]
    %v3520 = vld [vmem:[#allocation10 + $0xd0] sm:$0xff]
    %v3521 = vld [vmem:[#allocation10 + $0xd8] sm:$0xff]
    %v3522 = vld [vmem:[#allocation10 + $0xe0] sm:$0xff]
    %v3523 = vld [vmem:[#allocation10 + $0xe8] sm:$0xff]
    %v3524 = vld [vmem:[#allocation10 + $0xf0] sm:$0xff]
    %v3525 = vld [vmem:[#allocation10 + $0xf8] sm:$0xff]
    %v3526 = vld [vmem:[#allocation10 + $0x100] sm:$0xff]
    %v3527 = vld [vmem:[#allocation10 + $0x108] sm:$0xff]
    %v3528 = vld [vmem:[#allocation10 + $0x110] sm:$0xff]
    %v3529 = vld [vmem:[#allocation10 + $0x118] sm:$0xff]
    %v3530 = vld [vmem:[#allocation10 + $0x120] sm:$0xff]
    %v3531 = vld [vmem:[#allocation10 + $0x128] sm:$0xff]
    %v3532 = vld [vmem:[#allocation10 + $0x130] sm:$0xff]
    %v3533 = vld [vmem:[#allocation10 + $0x138] sm:$0xff]
    %v3534 = vld [vmem:[#allocation10 + $0x140] sm:$0xff]
    %v3535 = vld [vmem:[#allocation10 + $0x148] sm:$0xff]
    %v3536 = vld [vmem:[#allocation10 + $0x150] sm:$0xff]
    %v3537 = vld [vmem:[#allocation10 + $0x158] sm:$0xff]
    %v3538 = vld [vmem:[#allocation10 + $0x160] sm:$0xff]
    %v3539 = vld [vmem:[#allocation10 + $0x168] sm:$0xff]
    %v3540 = vld [vmem:[#allocation10 + $0x170] sm:$0xff]
    %v3541 = vld [vmem:[#allocation10 + $0x178] sm:$0xff]
    %v3542 = vld [vmem:[#allocation10 + $0x180] sm:$0xff]
    %v3543 = vld [vmem:[#allocation10 + $0x188] sm:$0xff]
    %v3544 = vld [vmem:[#allocation10 + $0x190] sm:$0xff]
    %v3545 = vld [vmem:[#allocation10 + $0x198] sm:$0xff]
    %v3546 = vld [vmem:[#allocation10 + $0x1a0] sm:$0xff]
    %v3547 = vld [vmem:[#allocation10 + $0x1a8] sm:$0xff]
    %v3548 = vld [vmem:[#allocation10 + $0x1b0] sm:$0xff]
    %v3549 = vld [vmem:[#allocation10 + $0x1b8] sm:$0xff]
    %v3550 = vld [vmem:[#allocation10 + $0x1c0] sm:$0xff]
    %v3551 = vld [vmem:[#allocation10 + $0x1c8] sm:$0xff]
    %v3552 = vld [vmem:[#allocation10 + $0x1d0] sm:$0xff]
    %v3553 = vld [vmem:[#allocation10 + $0x1d8] sm:$0xff]
    %v3554 = vld [vmem:[#allocation10 + $0x1e0] sm:$0xff]
    %v3555 = vld [vmem:[#allocation10 + $0x1e8] sm:$0xff]
    %v3556 = vld [vmem:[#allocation10 + $0x1f0] sm:$0xff]
    %v3557 = vld [vmem:[#allocation10 + $0x1f8] sm:$0xff]
    %v3558 = vld [vmem:[#allocation10 + $0x200] sm:$0xff]
    %v3559 = vld [vmem:[#allocation10 + $0x208] sm:$0xff]
    %v3560 = vld [vmem:[#allocation10 + $0x210] sm:$0xff]
    %v3561 = vld [vmem:[#allocation10 + $0x218] sm:$0xff]
    %v3562 = vld [vmem:[#allocation10 + $0x220] sm:$0xff]
    %v3563 = vld [vmem:[#allocation10 + $0x228] sm:$0xff]
    %v3564 = vld [vmem:[#allocation10 + $0x230] sm:$0xff]
    %v3565 = vld [vmem:[#allocation10 + $0x238] sm:$0xff]
    %v3566 = vld [vmem:[#allocation10 + $0x240] sm:$0xff]
    %v3567 = vld [vmem:[#allocation10 + $0x248] sm:$0xff]
    %v3568 = vld [vmem:[#allocation10 + $0x250] sm:$0xff]
    %v3569 = vld [vmem:[#allocation10 + $0x258] sm:$0xff]
    %v3570 = vld [vmem:[#allocation10 + $0x260] sm:$0xff]
    %v3571 = vld [vmem:[#allocation10 + $0x268] sm:$0xff]
    %v3572 = vld [vmem:[#allocation10 + $0x270] sm:$0xff]
    %v3573 = vld [vmem:[#allocation10 + $0x278] sm:$0xff]
    %v3574 = vld [vmem:[#allocation10 + $0x280] sm:$0xff]
    %v3575 = vld [vmem:[#allocation10 + $0x288] sm:$0xff]
    %v3576 = vld [vmem:[#allocation10 + $0x290] sm:$0xff]
    %v3577 = vld [vmem:[#allocation10 + $0x298] sm:$0xff]
    %v3578 = vld [vmem:[#allocation10 + $0x2a0] sm:$0xff]
    %v3579 = vld [vmem:[#allocation10 + $0x2a8] sm:$0xff]
    %v3580 = vld [vmem:[#allocation10 + $0x2b0] sm:$0xff]
    %v3581 = vld [vmem:[#allocation10 + $0x2b8] sm:$0xff]
    %v3582 = vld [vmem:[#allocation10 + $0x2c0] sm:$0xff]
    %v3583 = vld [vmem:[#allocation10 + $0x2c8] sm:$0xff]
    %v3584 = vld [vmem:[#allocation10 + $0x2d0] sm:$0xff]
    %v3585 = vld [vmem:[#allocation10 + $0x2d8] sm:$0xff]
    %v3586 = vld [vmem:[#allocation10 + $0x2e0] sm:$0xff]
    %v3587 = vld [vmem:[#allocation10 + $0x2e8] sm:$0xff]
    %v3588 = vld [vmem:[#allocation10 + $0x2f0] sm:$0xff]
    %v3589 = vld [vmem:[#allocation10 + $0x2f8] sm:$0xff]
    %v3590 = vld [vmem:[#allocation11] sm:$0x3]
    %v3592 = vlaneseq
    %v3593 = vshrl.u32 %v3592, 7
    %v3594 = vsub.s32 0, %v3593
    %v3595 = vrot.slane %v3590, %v3594
    %v3596 = vlaneseq
    %v3597 = vshrl.u32 %v3596, 7
    %v3598 = vsub.s32 1, %v3597
    %v3599 = vrot.slane %v3590, %v3598
    %3602 = vmatprep.subr.mxu0 %v3495
    %3603 = vmatpush1.msra.mxu0 %v3494
    %3604 = vmatprep.subr.mxu0 %v3497
    %3605 = vmatpush1.msra.mxu0 %v3496
    %3606 = vmatprep.subr.mxu0 %v3499
    %3607 = vmatpush1.msra.mxu0 %v3498
    %3608 = vmatprep.subr.mxu0 %v3501
    %3609 = vmatpush1.msra.mxu0 %v3500
    %3610 = vmatprep.subr.mxu0 %v3503
    %3611 = vmatpush1.msra.mxu0 %v3502
    %3612 = vmatprep.subr.mxu0 %v3505
    %3613 = vmatpush1.msra.mxu0 %v3504
    %3614 = vmatprep.subr.mxu0 %v3507
    %3615 = vmatpush1.msra.mxu0 %v3506
    %3616 = vmatprep.subr.mxu0 %v3509
    %3617 = vmatpush1.msra.mxu0 %v3508
    %3618 = vmatprep.subr.mxu0 %v3511
    %3619 = vmatpush1.msra.mxu0 %v3510
    %3620 = vmatprep.subr.mxu0 %v3513
    %3621 = vmatpush1.msra.mxu0 %v3512
    %3622 = vmatprep.subr.mxu0 %v3515
    %3623 = vmatpush1.msra.mxu0 %v3514
    %3624 = vmatprep.subr.mxu0 %v3517
    %3625 = vmatpush1.msra.mxu0 %v3516
    %3626 = vmatprep.subr.mxu0 %v3519
    %3627 = vmatpush1.msra.mxu0 %v3518
    %3628 = vmatprep.subr.mxu0 %v3521
    %3629 = vmatpush1.msra.mxu0 %v3520
    %3630 = vmatprep.subr.mxu0 %v3523
    %3631 = vmatpush1.msra.mxu0 %v3522
    %3632 = vmatprep.subr.mxu0 %v3525
    %3633 = vmatpush1.msra.mxu0 %v3524
    %3634 = vmatprep.subr.mxu0 %v3527
    %3635 = vmatpush1.msra.mxu0 %v3526
    %3636 = vmatprep.subr.mxu0 %v3529
    %3637 = vmatpush1.msra.mxu0 %v3528
    %3638 = vmatprep.subr.mxu0 %v3531
    %3639 = vmatpush1.msra.mxu0 %v3530
    %3640 = vmatprep.subr.mxu0 %v3533
    %3641 = vmatpush1.msra.mxu0 %v3532
    %3642 = vmatprep.subr.mxu0 %v3535
    %3643 = vmatpush1.msra.mxu0 %v3534
    %3644 = vmatprep.subr.mxu0 %v3537
    %3645 = vmatpush1.msra.mxu0 %v3536
    %3646 = vmatprep.subr.mxu0 %v3539
    %3647 = vmatpush1.msra.mxu0 %v3538
    %3648 = vmatprep.subr.mxu0 %v3541
    %3649 = vmatpush1.msra.mxu0 %v3540
    %3650 = vmatprep.subr.mxu0 %v3543
    %3651 = vmatpush1.msra.mxu0 %v3542
    %3652 = vmatprep.subr.mxu0 %v3545
    %3653 = vmatpush1.msra.mxu0 %v3544
    %3654 = vmatprep.subr.mxu0 %v3547
    %3655 = vmatpush1.msra.mxu0 %v3546
    %3656 = vmatprep.subr.mxu0 %v3549
    %3657 = vmatpush1.msra.mxu0 %v3548
    %3658 = vmatprep.subr.mxu0 %v3551
    %3659 = vmatpush1.msra.mxu0 %v3550
    %3660 = vmatprep.subr.mxu0 %v3553
    %3661 = vmatpush1.msra.mxu0 %v3552
    %3662 = vmatprep.subr.mxu0 %v3555
    %3663 = vmatpush1.msra.mxu0 %v3554
    %3664 = vmatprep.subr.mxu0 %v3557
    %3665 = vmatpush1.msra.mxu0 %v3556
    %3666 = vmatprep.mubr.f32.mxu0 %v3492
    %3667 = vmatmul.mubr.f32.gmra.mrb[0].mxu0 %v3491
    %v3668 = vpop.f32.mrb[0].mxu0
    %v3669 = vadd.f32 %v3595, %v3668
    %v3670 = vpop.f32.mrb[0].mxu0
    %v3671 = vadd.f32 %v3599, %v3670
    %3672 = vdwg.mxu0
    %3673 = vmatprep.subr.mxu0 %v3559
    %3674 = vmatpush1.msra.mxu0 %v3558
    %3675 = vmatprep.subr.mxu0 %v3561
    %3676 = vmatpush1.msra.mxu0 %v3560
    %3677 = vmatprep.subr.mxu0 %v3563
    %3678 = vmatpush1.msra.mxu0 %v3562
    %3679 = vmatprep.subr.mxu0 %v3565
    %3680 = vmatpush1.msra.mxu0 %v3564
    %3681 = vmatprep.subr.mxu0 %v3567
    %3682 = vmatpush1.msra.mxu0 %v3566
    %3683 = vmatprep.subr.mxu0 %v3569
    %3684 = vmatpush1.msra.mxu0 %v3568
    %3685 = vmatprep.subr.mxu0 %v3571
    %3686 = vmatpush1.msra.mxu0 %v3570
    %3687 = vmatprep.subr.mxu0 %v3573
    %3688 = vmatpush1.msra.mxu0 %v3572
    %3689 = vmatprep.subr.mxu0 %v3575
    %3690 = vmatpush1.msra.mxu0 %v3574
    %3691 = vmatprep.subr.mxu0 %v3577
    %3692 = vmatpush1.msra.mxu0 %v3576
    %3693 = vmatprep.subr.mxu0 %v3579
    %3694 = vmatpush1.msra.mxu0 %v3578
    %3695 = vmatprep.subr.mxu0 %v3581
    %3696 = vmatpush1.msra.mxu0 %v3580
    %3697 = vmatprep.subr.mxu0 %v3583
    %3698 = vmatpush1.msra.mxu0 %v3582
    %3699 = vmatprep.subr.mxu0 %v3585
    %3700 = vmatpush1.msra.mxu0 %v3584
    %3701 = vmatprep.subr.mxu0 %v3587
    %3702 = vmatpush1.msra.mxu0 %v3586
    %3703 = vmatprep.subr.mxu0 %v3589
    %3704 = vmatpush1.msra.mxu0 %v3588
    %3705 = vmatprep.subr.mxu0 0.0
    %3706 = vmatpush1.msra.mxu0 0.0
    %3707 = vmatprep.subr.mxu0 0.0
    %3708 = vmatpush1.msra.mxu0 0.0
    %3709 = vmatprep.subr.mxu0 0.0
    %3710 = vmatpush1.msra.mxu0 0.0
    %3711 = vmatprep.subr.mxu0 0.0
    %3712 = vmatpush1.msra.mxu0 0.0
    %3713 = vmatprep.subr.mxu0 0.0
    %3714 = vmatpush1.msra.mxu0 0.0
    %3715 = vmatprep.subr.mxu0 0.0
    %3716 = vmatpush1.msra.mxu0 0.0
    %3717 = vmatprep.subr.mxu0 0.0
    %3718 = vmatpush1.msra.mxu0 0.0
    %3719 = vmatprep.subr.mxu0 0.0
    %3720 = vmatpush1.msra.mxu0 0.0
    %3721 = vmatprep.subr.mxu0 0.0
    %3722 = vmatpush1.msra.mxu0 0.0
    %3723 = vmatprep.subr.mxu0 0.0
    %3724 = vmatpush1.msra.mxu0 0.0
    %3725 = vmatprep.subr.mxu0 0.0
    %3726 = vmatpush1.msra.mxu0 0.0
    %3727 = vmatprep.subr.mxu0 0.0
    %3728 = vmatpush1.msra.mxu0 0.0
    %3729 = vmatprep.subr.mxu0 0.0
    %3730 = vmatpush1.msra.mxu0 0.0
    %3731 = vmatprep.subr.mxu0 0.0
    %3732 = vmatpush1.msra.mxu0 0.0
    %3733 = vmatprep.subr.mxu0 0.0
    %3734 = vmatpush1.msra.mxu0 0.0
    %3735 = vmatprep.subr.mxu0 0.0
    %3736 = vmatpush1.msra.mxu0 0.0
    %3737 = vmatprep.mubr.f32.mxu0 0.0
    %3738 = vmatmul.mubr.f32.gmra.mrb[0].mxu0 %v3493
    %v3739 = vpop.f32.mrb[0].mxu0
    %v3740 = vadd.f32 %v3669, %v3739
    %v3741 = vpop.f32.mrb[0].mxu0
    %v3742 = vadd.f32 %v3671, %v3741
    %3743 = vdwg.mxu0
    %v3744 = vmax.f32 %v3740, 0.0
    %v3745 = vmax.f32 %v3742, 0.0
    %v3746 = vmin.f32 %v3744, 6.0
    %v3747 = vmin.f32 %v3745, 6.0
    %v3748 = vld [vmem:[%s1] sm:$0xff]
    %v3749 = vld [vmem:[%s1 + $0x8] sm:$0xff]
    %v3750 = vld [vmem:[#allocation13] sm:$0xff]
    %v3751 = vld [vmem:[#allocation13 + $0x8] sm:$0xff]
    %v3752 = vld [vmem:[#allocation13 + $0x10] sm:$0xff]
    %v3753 = vld [vmem:[#allocation13 + $0x18] sm:$0xff]
    %v3754 = vld [vmem:[#allocation13 + $0x20] sm:$0xff]
    %v3755 = vld [vmem:[#allocation13 + $0x28] sm:$0xff]
    %v3756 = vld [vmem:[#allocation13 + $0x30] sm:$0xff]
    %v3757 = vld [vmem:[#allocation13 + $0x38] sm:$0xff]
    %v3758 = vld [vmem:[#allocation13 + $0x40] sm:$0xff]
    %v3759 = vld [vmem:[#allocation13 + $0x48] sm:$0xff]
    %v3760 = vld [vmem:[#allocation13 + $0x50] sm:$0xff]
    %v3761 = vld [vmem:[#allocation13 + $0x58] sm:$0xff]
    %v3762 = vld [vmem:[#allocation13 + $0x60] sm:$0xff]
    %v3763 = vld [vmem:[#allocation13 + $0x68] sm:$0xff]
    %v3764 = vld [vmem:[#allocation13 + $0x70] sm:$0xff]
    %v3765 = vld [vmem:[#allocation13 + $0x78] sm:$0xff]
    %v3766 = vld [vmem:[#allocation16] sm:$0xff]
    %v3768 = vlaneseq
    %v3769 = vshrl.u32 %v3768, 7
    %v3770 = vsub.s32 0, %v3769
    %v3771 = vrot.slane %v3766, %v3770
    %v3772 = vlaneseq
    %v3773 = vshrl.u32 %v3772, 7
    %v3774 = vsub.s32 1, %v3773
    %v3775 = vrot.slane %v3766, %v3774
    %v3776 = vlaneseq
    %v3777 = vshrl.u32 %v3776, 7
    %v3778 = vsub.s32 2, %v3777
    %v3779 = vrot.slane %v3766, %v3778
    %v3780 = vlaneseq
    %v3781 = vshrl.u32 %v3780, 7
    %v3782 = vsub.s32 3, %v3781
    %v3783 = vrot.slane %v3766, %v3782
    %v3784 = vlaneseq
    %v3785 = vshrl.u32 %v3784, 7
    %v3786 = vsub.s32 4, %v3785
    %v3787 = vrot.slane %v3766, %v3786
    %v3788 = vlaneseq
    %v3789 = vshrl.u32 %v3788, 7
    %v3790 = vsub.s32 5, %v3789
    %v3791 = vrot.slane %v3766, %v3790
    %v3792 = vlaneseq
    %v3793 = vshrl.u32 %v3792, 7
    %v3794 = vsub.s32 6, %v3793
    %v3795 = vrot.slane %v3766, %v3794
    %v3796 = vlaneseq
    %v3797 = vshrl.u32 %v3796, 7
    %v3798 = vsub.s32 7, %v3797
    %v3799 = vrot.slane %v3766, %v3798
    %vm3808 = vcmask 130048
    %v3810 = vsel %vm3808, %v3748, 0
    %v3813 = vsel %vm3808, %v3749, 0
    %3815 = vmatprep.subr.mxu0 %v3751
    %3816 = vmatpush1.msra.mxu0 %v3750
    %3817 = vmatprep.subr.mxu0 %v3759
    %3818 = vmatpush1.msra.mxu0 %v3758
    %3819 = vmatprep.subr.mxu0 0.0
    %3820 = vmatpush1.msra.mxu0 0.0
    %3821 = vmatprep.subr.mxu0 0.0
    %3822 = vmatpush1.msra.mxu0 0.0
    %3823 = vmatprep.subr.mxu0 0.0
    %3824 = vmatpush1.msra.mxu0 0.0
    %3825 = vmatprep.subr.mxu0 0.0
    %3826 = vmatpush1.msra.mxu0 0.0
    %3827 = vmatprep.subr.mxu0 0.0
    %3828 = vmatpush1.msra.mxu0 0.0
    %3829 = vmatprep.subr.mxu0 0.0
    %3830 = vmatpush1.msra.mxu0 0.0
    %3831 = vmatprep.subr.mxu0 0.0
    %3832 = vmatpush1.msra.mxu0 0.0
    %3833 = vmatprep.subr.mxu0 0.0
    %3834 = vmatpush1.msra.mxu0 0.0
    %3835 = vmatprep.subr.mxu0 0.0
    %3836 = vmatpush1.msra.mxu0 0.0
    %3837 = vmatprep.subr.mxu0 0.0
    %3838 = vmatpush1.msra.mxu0 0.0
    %3839 = vmatprep.subr.mxu0 0.0
    %3840 = vmatpush1.msra.mxu0 0.0
    %3841 = vmatprep.subr.mxu0 0.0
    %3842 = vmatpush1.msra.mxu0 0.0
    %3843 = vmatprep.subr.mxu0 0.0
    %3844 = vmatpush1.msra.mxu0 0.0
    %3845 = vmatprep.subr.mxu0 0.0
    %3846 = vmatpush1.msra.mxu0 0.0
    %3847 = vmatprep.subr.mxu0 0.0
    %3848 = vmatpush1.msra.mxu0 0.0
    %3849 = vmatprep.subr.mxu0 0.0
    %3850 = vmatpush1.msra.mxu0 0.0
    %3851 = vmatprep.subr.mxu0 0.0
    %3852 = vmatpush1.msra.mxu0 0.0
    %3853 = vmatprep.subr.mxu0 0.0
    %3854 = vmatpush1.msra.mxu0 0.0
    %3855 = vmatprep.subr.mxu0 0.0
    %3856 = vmatpush1.msra.mxu0 0.0
    %3857 = vmatprep.subr.mxu0 0.0
    %3858 = vmatpush1.msra.mxu0 0.0
    %3859 = vmatprep.subr.mxu0 0.0
    %3860 = vmatpush1.msra.mxu0 0.0
    %3861 = vmatprep.subr.mxu0 0.0
    %3862 = vmatpush1.msra.mxu0 0.0
    %3863 = vmatprep.subr.mxu0 0.0
    %3864 = vmatpush1.msra.mxu0 0.0
    %3865 = vmatprep.subr.mxu0 0.0
    %3866 = vmatpush1.msra.mxu0 0.0
    %3867 = vmatprep.subr.mxu0 0.0
    %3868 = vmatpush1.msra.mxu0 0.0
    %3869 = vmatprep.subr.mxu0 0.0
    %3870 = vmatpush1.msra.mxu0 0.0
    %3871 = vmatprep.subr.mxu0 0.0
    %3872 = vmatpush1.msra.mxu0 0.0
    %3873 = vmatprep.subr.mxu0 0.0
    %3874 = vmatpush1.msra.mxu0 0.0
    %3875 = vmatprep.subr.mxu0 0.0
    %3876 = vmatpush1.msra.mxu0 0.0
    %3877 = vmatprep.subr.mxu0 0.0
    %3878 = vmatpush1.msra.mxu0 0.0
    %3879 = vmatprep.mubr.f32.mxu0 0.0
    %3880 = vmatmul.mubr.f32.gmra.mrb[0].mxu0 %v3810
    %v3881 = vpop.f32.mrb[0].mxu0
    %v3882 = vadd.f32 %v3771, %v3881
    %v3883 = vpop.f32.mrb[0].mxu0
    %v3884 = vadd.f32 %v3775, %v3883
    %3885 = vmatprep.mubr.f32.mxu0 0.0
    %3886 = vmatmul.mubr.f32.gmra.mrb[0].mxu0 %v3813
    %v3887 = vpop.f32.mrb[0].mxu0
    %v3888 = vadd.f32 %v3771, %v3887
    %v3889 = vpop.f32.mrb[0].mxu0
    %v3890 = vadd.f32 %v3775, %v3889
    %3891 = vdwg.mxu0
    %3892 = vmatprep.subr.mxu0 %v3753
    %3893 = vmatpush1.msra.mxu0 %v3752
    %3894 = vmatprep.subr.mxu0 %v3761
    %3895 = vmatpush1.msra.mxu0 %v3760
    %3896 = vmatprep.subr.mxu0 0.0
    %3897 = vmatpush1.msra.mxu0 0.0
    %3898 = vmatprep.subr.mxu0 0.0
    %3899 = vmatpush1.msra.mxu0 0.0
    %3900 = vmatprep.subr.mxu0 0.0
    %3901 = vmatpush1.msra.mxu0 0.0
    %3902 = vmatprep.subr.mxu0 0.0
    %3903 = vmatpush1.msra.mxu0 0.0
    %3904 = vmatprep.subr.mxu0 0.0
    %3905 = vmatpush1.msra.mxu0 0.0
    %3906 = vmatprep.subr.mxu0 0.0
    %3907 = vmatpush1.msra.mxu0 0.0
    %3908 = vmatprep.subr.mxu0 0.0
    %3909 = vmatpush1.msra.mxu0 0.0
    %3910 = vmatprep.subr.mxu0 0.0
    %3911 = vmatpush1.msra.mxu0 0.0
    %3912 = vmatprep.subr.mxu0 0.0
    %3913 = vmatpush1.msra.mxu0 0.0
    %3914 = vmatprep.subr.mxu0 0.0
    %3915 = vmatpush1.msra.mxu0 0.0
    %3916 = vmatprep.subr.mxu0 0.0
    %3917 = vmatpush1.msra.mxu0 0.0
    %3918 = vmatprep.subr.mxu0 0.0
    %3919 = vmatpush1.msra.mxu0 0.0
    %3920 = vmatprep.subr.mxu0 0.0
    %3921 = vmatpush1.msra.mxu0 0.0
    %3922 = vmatprep.subr.mxu0 0.0
    %3923 = vmatpush1.msra.mxu0 0.0
    %3924 = vmatprep.subr.mxu0 0.0
    %3925 = vmatpush1.msra.mxu0 0.0
    %3926 = vmatprep.subr.mxu0 0.0
    %3927 = vmatpush1.msra.mxu0 0.0
    %3928 = vmatprep.subr.mxu0 0.0
    %3929 = vmatpush1.msra.mxu0 0.0
    %3930 = vmatprep.subr.mxu0 0.0
    %3931 = vmatpush1.msra.mxu0 0.0
    %3932 = vmatprep.subr.mxu0 0.0
    %3933 = vmatpush1.msra.mxu0 0.0
    %3934 = vmatprep.subr.mxu0 0.0
    %3935 = vmatpush1.msra.mxu0 0.0
    %3936 = vmatprep.subr.mxu0 0.0
    %3937 = vmatpush1.msra.mxu0 0.0
    %3938 = vmatprep.subr.mxu0 0.0
    %3939 = vmatpush1.msra.mxu0 0.0
    %3940 = vmatprep.subr.mxu0 0.0
    %3941 = vmatpush1.msra.mxu0 0.0
    %3942 = vmatprep.subr.mxu0 0.0
    %3943 = vmatpush1.msra.mxu0 0.0
    %3944 = vmatprep.subr.mxu0 0.0
    %3945 = vmatpush1.msra.mxu0 0.0
    %3946 = vmatprep.subr.mxu0 0.0
    %3947 = vmatpush1.msra.mxu0 0.0
    %3948 = vmatprep.subr.mxu0 0.0
    %3949 = vmatpush1.msra.mxu0 0.0
    %3950 = vmatprep.subr.mxu0 0.0
    %3951 = vmatpush1.msra.mxu0 0.0
    %3952 = vmatprep.subr.mxu0 0.0
    %3953 = vmatpush1.msra.mxu0 0.0
    %3954 = vmatprep.subr.mxu0 0.0
    %3955 = vmatpush1.msra.mxu0 0.0
    %3956 = vmatprep.mubr.f32.mxu0 0.0
    %3957 = vmatmul.mubr.f32.gmra.mrb[0].mxu0 %v3810
    %v3958 = vpop.f32.mrb[0].mxu0
    %v3959 = vadd.f32 %v3779, %v3958
    %v3960 = vpop.f32.mrb[0].mxu0
    %v3961 = vadd.f32 %v3783, %v3960
    %3962 = vmatprep.mubr.f32.mxu0 0.0
    %3963 = vmatmul.mubr.f32.gmra.mrb[0].mxu0 %v3813
    %v3964 = vpop.f32.mrb[0].mxu0
    %v3965 = vadd.f32 %v3779, %v3964
    %v3966 = vpop.f32.mrb[0].mxu0
    %v3967 = vadd.f32 %v3783, %v3966
    %3968 = vdwg.mxu0
    %3969 = vmatprep.subr.mxu0 %v3755
    %3970 = vmatpush1.msra.mxu0 %v3754
    %3971 = vmatprep.subr.mxu0 %v3763
    %3972 = vmatpush1.msra.mxu0 %v3762
    %3973 = vmatprep.subr.mxu0 0.0
    %3974 = vmatpush1.msra.mxu0 0.0
    %3975 = vmatprep.subr.mxu0 0.0
    %3976 = vmatpush1.msra.mxu0 0.0
    %3977 = vmatprep.subr.mxu0 0.0
    %3978 = vmatpush1.msra.mxu0 0.0
    %3979 = vmatprep.subr.mxu0 0.0
    %3980 = vmatpush1.msra.mxu0 0.0
    %3981 = vmatprep.subr.mxu0 0.0
    %3982 = vmatpush1.msra.mxu0 0.0
    %3983 = vmatprep.subr.mxu0 0.0
    %3984 = vmatpush1.msra.mxu0 0.0
    %3985 = vmatprep.subr.mxu0 0.0
    %3986 = vmatpush1.msra.mxu0 0.0
    %3987 = vmatprep.subr.mxu0 0.0
    %3988 = vmatpush1.msra.mxu0 0.0
    %3989 = vmatprep.subr.mxu0 0.0
    %3990 = vmatpush1.msra.mxu0 0.0
    %3991 = vmatprep.subr.mxu0 0.0
    %3992 = vmatpush1.msra.mxu0 0.0
    %3993 = vmatprep.subr.mxu0 0.0
    %3994 = vmatpush1.msra.mxu0 0.0
    %3995 = vmatprep.subr.mxu0 0.0
    %3996 = vmatpush1.msra.mxu0 0.0
    %3997 = vmatprep.subr.mxu0 0.0
    %3998 = vmatpush1.msra.mxu0 0.0
    %3999 = vmatprep.subr.mxu0 0.0
    %4000 = vmatpush1.msra.mxu0 0.0
    %4001 = vmatprep.subr.mxu0 0.0
    %4002 = vmatpush1.msra.mxu0 0.0
    %4003 = vmatprep.subr.mxu0 0.0
    %4004 = vmatpush1.msra.mxu0 0.0
    %4005 = vmatprep.subr.mxu0 0.0
    %4006 = vmatpush1.msra.mxu0 0.0
    %4007 = vmatprep.subr.mxu0 0.0
    %4008 = vmatpush1.msra.mxu0 0.0
    %4009 = vmatprep.subr.mxu0 0.0
    %4010 = vmatpush1.msra.mxu0 0.0
    %4011 = vmatprep.subr.mxu0 0.0
    %4012 = vmatpush1.msra.mxu0 0.0
    %4013 = vmatprep.subr.mxu0 0.0
    %4014 = vmatpush1.msra.mxu0 0.0
    %4015 = vmatprep.subr.mxu0 0.0
    %4016 = vmatpush1.msra.mxu0 0.0
    %4017 = vmatprep.subr.mxu0 0.0
    %4018 = vmatpush1.msra.mxu0 0.0
    %4019 = vmatprep.subr.mxu0 0.0
    %4020 = vmatpush1.msra.mxu0 0.0
    %4021 = vmatprep.subr.mxu0 0.0
    %4022 = vmatpush1.msra.mxu0 0.0
    %4023 = vmatprep.subr.mxu0 0.0
    %4024 = vmatpush1.msra.mxu0 0.0
    %4025 = vmatprep.subr.mxu0 0.0
    %4026 = vmatpush1.msra.mxu0 0.0
    %4027 = vmatprep.subr.mxu0 0.0
    %4028 = vmatpush1.msra.mxu0 0.0
    %4029 = vmatprep.subr.mxu0 0.0
    %4030 = vmatpush1.msra.mxu0 0.0
    %4031 = vmatprep.subr.mxu0 0.0
    %4032 = vmatpush1.msra.mxu0 0.0
    %4033 = vmatprep.mubr.f32.mxu0 0.0
    %4034 = vmatmul.mubr.f32.gmra.mrb[0].mxu0 %v3810
    %v4035 = vpop.f32.mrb[0].mxu0
    %v4036 = vadd.f32 %v3787, %v4035
    %v4037 = vpop.f32.mrb[0].mxu0
    %v4038 = vadd.f32 %v3791, %v4037
    %4039 = vmatprep.mubr.f32.mxu0 0.0
    %4040 = vmatmul.mubr.f32.gmra.mrb[0].mxu0 %v3813
    %v4041 = vpop.f32.mrb[0].mxu0
    %v4042 = vadd.f32 %v3787, %v4041
    %v4043 = vpop.f32.mrb[0].mxu0
    %v4044 = vadd.f32 %v3791, %v4043
    %4045 = vdwg.mxu0
    %4046 = vmatprep.subr.mxu0 %v3757
    %4047 = vmatpush1.msra.mxu0 %v3756
    %4048 = vmatprep.subr.mxu0 %v3765
    %4049 = vmatpush1.msra.mxu0 %v3764
    %4050 = vmatprep.subr.mxu0 0.0
    %4051 = vmatpush1.msra.mxu0 0.0
    %4052 = vmatprep.subr.mxu0 0.0
    %4053 = vmatpush1.msra.mxu0 0.0
    %4054 = vmatprep.subr.mxu0 0.0
    %4055 = vmatpush1.msra.mxu0 0.0
    %4056 = vmatprep.subr.mxu0 0.0
    %4057 = vmatpush1.msra.mxu0 0.0
    %4058 = vmatprep.subr.mxu0 0.0
    %4059 = vmatpush1.msra.mxu0 0.0
    %4060 = vmatprep.subr.mxu0 0.0
    %4061 = vmatpush1.msra.mxu0 0.0
    %4062 = vmatprep.subr.mxu0 0.0
    %4063 = vmatpush1.msra.mxu0 0.0
    %4064 = vmatprep.subr.mxu0 0.0
    %4065 = vmatpush1.msra.mxu0 0.0
    %4066 = vmatprep.subr.mxu0 0.0
    %4067 = vmatpush1.msra.mxu0 0.0
    %4068 = vmatprep.subr.mxu0 0.0
    %4069 = vmatpush1.msra.mxu0 0.0
    %4070 = vmatprep.subr.mxu0 0.0
    %4071 = vmatpush1.msra.mxu0 0.0
    %4072 = vmatprep.subr.mxu0 0.0
    %4073 = vmatpush1.msra.mxu0 0.0
    %4074 = vmatprep.subr.mxu0 0.0
    %4075 = vmatpush1.msra.mxu0 0.0
    %4076 = vmatprep.subr.mxu0 0.0
    %4077 = vmatpush1.msra.mxu0 0.0
    %4078 = vmatprep.subr.mxu0 0.0
    %4079 = vmatpush1.msra.mxu0 0.0
    %4080 = vmatprep.subr.mxu0 0.0
    %4081 = vmatpush1.msra.mxu0 0.0
    %4082 = vmatprep.subr.mxu0 0.0
    %4083 = vmatpush1.msra.mxu0 0.0
    %4084 = vmatprep.subr.mxu0 0.0
    %4085 = vmatpush1.msra.mxu0 0.0
    %4086 = vmatprep.subr.mxu0 0.0
    %4087 = vmatpush1.msra.mxu0 0.0
    %4088 = vmatprep.subr.mxu0 0.0
    %4089 = vmatpush1.msra.mxu0 0.0
    %4090 = vmatprep.subr.mxu0 0.0
    %4091 = vmatpush1.msra.mxu0 0.0
    %4092 = vmatprep.subr.mxu0 0.0
    %4093 = vmatpush1.msra.mxu0 0.0
    %4094 = vmatprep.subr.mxu0 0.0
    %4095 = vmatpush1.msra.mxu0 0.0
    %4096 = vmatprep.subr.mxu0 0.0
    %4097 = vmatpush1.msra.mxu0 0.0
    %4098 = vmatprep.subr.mxu0 0.0
    %4099 = vmatpush1.msra.mxu0 0.0
    %4100 = vmatprep.subr.mxu0 0.0
    %4101 = vmatpush1.msra.mxu0 0.0
    %4102 = vmatprep.subr.mxu0 0.0
    %4103 = vmatpush1.msra.mxu0 0.0
    %4104 = vmatprep.subr.mxu0 0.0
    %4105 = vmatpush1.msra.mxu0 0.0
    %4106 = vmatprep.subr.mxu0 0.0
    %4107 = vmatpush1.msra.mxu0 0.0
    %4108 = vmatprep.subr.mxu0 0.0
    %4109 = vmatpush1.msra.mxu0 0.0
    %4110 = vmatprep.mubr.f32.mxu0 0.0
    %4111 = vmatmul.mubr.f32.gmra.mrb[0].mxu0 %v3810
    %v4112 = vpop.f32.mrb[0].mxu0
    %v4113 = vadd.f32 %v3795, %v4112
    %v4114 = vpop.f32.mrb[0].mxu0
    %v4115 = vadd.f32 %v3799, %v4114
    %4116 = vmatprep.mubr.f32.mxu0 0.0
    %4117 = vmatmul.mubr.f32.gmra.mrb[0].mxu0 %v3813
    %v4118 = vpop.f32.mrb[0].mxu0
    %v4119 = vadd.f32 %v3795, %v4118
    %v4120 = vpop.f32.mrb[0].mxu0
    %v4121 = vadd.f32 %v3799, %v4120
    %4122 = vdwg.mxu0
    %v4123 = vld [vmem:[#allocation14] sm:$0xff]
    %v4124 = vld [vmem:[#allocation14 + $0x8] sm:$0xff]
    %v4125 = vld [vmem:[#allocation14 + $0x10] sm:$0xff]
    %v4126 = vld [vmem:[#allocation14 + $0x18] sm:$0xff]
    %v4127 = vld [vmem:[#allocation14 + $0x20] sm:$0xff]
    %v4128 = vld [vmem:[#allocation14 + $0x28] sm:$0xff]
    %v4129 = vld [vmem:[#allocation14 + $0x30] sm:$0xff]
    %v4130 = vld [vmem:[#allocation14 + $0x38] sm:$0xff]
    %v4131 = vld [vmem:[#allocation14 + $0x40] sm:$0xff]
    %v4132 = vld [vmem:[#allocation14 + $0x48] sm:$0xff]
    %v4133 = vld [vmem:[#allocation14 + $0x50] sm:$0xff]
    %v4134 = vld [vmem:[#allocation14 + $0x58] sm:$0xff]
    %v4135 = vld [vmem:[#allocation14 + $0x60] sm:$0xff]
    %v4136 = vld [vmem:[#allocation14 + $0x68] sm:$0xff]
    %v4137 = vld [vmem:[#allocation14 + $0x70] sm:$0xff]
    %v4138 = vld [vmem:[#allocation14 + $0x78] sm:$0xff]
    %v4139 = vld [vmem:[#allocation14 + $0x80] sm:$0xff]
    %v4140 = vld [vmem:[#allocation14 + $0x88] sm:$0xff]
    %v4141 = vld [vmem:[#allocation14 + $0x90] sm:$0xff]
    %v4142 = vld [vmem:[#allocation14 + $0x98] sm:$0xff]
    %v4143 = vld [vmem:[#allocation14 + $0xa0] sm:$0xff]
    %v4144 = vld [vmem:[#allocation14 + $0xa8] sm:$0xff]
    %v4145 = vld [vmem:[#allocation14 + $0xb0] sm:$0xff]
    %v4146 = vld [vmem:[#allocation14 + $0xb8] sm:$0xff]
    %v4147 = vld [vmem:[#allocation14 + $0xc0] sm:$0xff]
    %v4148 = vld [vmem:[#allocation14 + $0xc8] sm:$0xff]
    %v4149 = vld [vmem:[#allocation14 + $0xd0] sm:$0xff]
    %v4150 = vld [vmem:[#allocation14 + $0xd8] sm:$0xff]
    %v4151 = vld [vmem:[#allocation14 + $0xe0] sm:$0xff]
    %v4152 = vld [vmem:[#allocation14 + $0xe8] sm:$0xff]
    %v4153 = vld [vmem:[#allocation14 + $0xf0] sm:$0xff]
    %v4154 = vld [vmem:[#allocation14 + $0xf8] sm:$0xff]
    %v4155 = vld [vmem:[#allocation14 + $0x100] sm:$0xff]
    %v4156 = vld [vmem:[#allocation14 + $0x108] sm:$0xff]
    %v4157 = vld [vmem:[#allocation14 + $0x110] sm:$0xff]
    %v4158 = vld [vmem:[#allocation14 + $0x118] sm:$0xff]
    %v4159 = vld [vmem:[#allocation14 + $0x120] sm:$0xff]
    %v4160 = vld [vmem:[#allocation14 + $0x128] sm:$0xff]
    %v4161 = vld [vmem:[#allocation14 + $0x130] sm:$0xff]
    %v4162 = vld [vmem:[#allocation14 + $0x138] sm:$0xff]
    %v4163 = vld [vmem:[#allocation14 + $0x140] sm:$0xff]
    %v4164 = vld [vmem:[#allocation14 + $0x148] sm:$0xff]
    %v4165 = vld [vmem:[#allocation14 + $0x150] sm:$0xff]
    %v4166 = vld [vmem:[#allocation14 + $0x158] sm:$0xff]
    %v4167 = vld [vmem:[#allocation14 + $0x160] sm:$0xff]
    %v4168 = vld [vmem:[#allocation14 + $0x168] sm:$0xff]
    %v4169 = vld [vmem:[#allocation14 + $0x170] sm:$0xff]
    %v4170 = vld [vmem:[#allocation14 + $0x178] sm:$0xff]
    %v4171 = vld [vmem:[#allocation14 + $0x180] sm:$0xff]
    %v4172 = vld [vmem:[#allocation14 + $0x188] sm:$0xff]
    %v4173 = vld [vmem:[#allocation14 + $0x190] sm:$0xff]
    %v4174 = vld [vmem:[#allocation14 + $0x198] sm:$0xff]
    %v4175 = vld [vmem:[#allocation14 + $0x1a0] sm:$0xff]
    %v4176 = vld [vmem:[#allocation14 + $0x1a8] sm:$0xff]
    %v4177 = vld [vmem:[#allocation14 + $0x1b0] sm:$0xff]
    %v4178 = vld [vmem:[#allocation14 + $0x1b8] sm:$0xff]
    %v4179 = vld [vmem:[#allocation14 + $0x1c0] sm:$0xff]
    %v4180 = vld [vmem:[#allocation14 + $0x1c8] sm:$0xff]
    %v4181 = vld [vmem:[#allocation14 + $0x1d0] sm:$0xff]
    %v4182 = vld [vmem:[#allocation14 + $0x1d8] sm:$0xff]
    %v4183 = vld [vmem:[#allocation14 + $0x1e0] sm:$0xff]
    %v4184 = vld [vmem:[#allocation14 + $0x1e8] sm:$0xff]
    %v4185 = vld [vmem:[#allocation14 + $0x1f0] sm:$0xff]
    %v4186 = vld [vmem:[#allocation14 + $0x1f8] sm:$0xff]
    %v4187 = vld [vmem:[#allocation14 + $0x200] sm:$0xff]
    %v4188 = vld [vmem:[#allocation14 + $0x208] sm:$0xff]
    %v4189 = vld [vmem:[#allocation14 + $0x210] sm:$0xff]
    %v4190 = vld [vmem:[#allocation14 + $0x218] sm:$0xff]
    %v4191 = vld [vmem:[#allocation14 + $0x220] sm:$0xff]
    %v4192 = vld [vmem:[#allocation14 + $0x228] sm:$0xff]
    %v4193 = vld [vmem:[#allocation14 + $0x230] sm:$0xff]
    %v4194 = vld [vmem:[#allocation14 + $0x238] sm:$0xff]
    %v4195 = vld [vmem:[#allocation14 + $0x240] sm:$0xff]
    %v4196 = vld [vmem:[#allocation14 + $0x248] sm:$0xff]
    %v4197 = vld [vmem:[#allocation14 + $0x250] sm:$0xff]
    %v4198 = vld [vmem:[#allocation14 + $0x258] sm:$0xff]
    %v4199 = vld [vmem:[#allocation14 + $0x260] sm:$0xff]
    %v4200 = vld [vmem:[#allocation14 + $0x268] sm:$0xff]
    %v4201 = vld [vmem:[#allocation14 + $0x270] sm:$0xff]
    %v4202 = vld [vmem:[#allocation14 + $0x278] sm:$0xff]
    %v4203 = vld [vmem:[#allocation14 + $0x280] sm:$0xff]
    %v4204 = vld [vmem:[#allocation14 + $0x288] sm:$0xff]
    %v4205 = vld [vmem:[#allocation14 + $0x290] sm:$0xff]
    %v4206 = vld [vmem:[#allocation14 + $0x298] sm:$0xff]
    %v4207 = vld [vmem:[#allocation14 + $0x2a0] sm:$0xff]
    %v4208 = vld [vmem:[#allocation14 + $0x2a8] sm:$0xff]
    %v4209 = vld [vmem:[#allocation14 + $0x2b0] sm:$0xff]
    %v4210 = vld [vmem:[#allocation14 + $0x2b8] sm:$0xff]
    %v4211 = vld [vmem:[#allocation14 + $0x2c0] sm:$0xff]
    %v4212 = vld [vmem:[#allocation14 + $0x2c8] sm:$0xff]
    %v4213 = vld [vmem:[#allocation14 + $0x2d0] sm:$0xff]
    %v4214 = vld [vmem:[#allocation14 + $0x2d8] sm:$0xff]
    %v4215 = vld [vmem:[#allocation14 + $0x2e0] sm:$0xff]
    %v4216 = vld [vmem:[#allocation14 + $0x2e8] sm:$0xff]
    %v4217 = vld [vmem:[#allocation14 + $0x2f0] sm:$0xff]
    %v4218 = vld [vmem:[#allocation14 + $0x2f8] sm:$0xff]
    %v4219 = vld [vmem:[#allocation14 + $0x300] sm:$0xff]
    %v4220 = vld [vmem:[#allocation14 + $0x308] sm:$0xff]
    %v4221 = vld [vmem:[#allocation14 + $0x310] sm:$0xff]
    %v4222 = vld [vmem:[#allocation14 + $0x318] sm:$0xff]
    %v4223 = vld [vmem:[#allocation14 + $0x320] sm:$0xff]
    %v4224 = vld [vmem:[#allocation14 + $0x328] sm:$0xff]
    %v4225 = vld [vmem:[#allocation14 + $0x330] sm:$0xff]
    %v4226 = vld [vmem:[#allocation14 + $0x338] sm:$0xff]
    %v4227 = vld [vmem:[#allocation14 + $0x340] sm:$0xff]
    %v4228 = vld [vmem:[#allocation14 + $0x348] sm:$0xff]
    %v4229 = vld [vmem:[#allocation14 + $0x350] sm:$0xff]
    %v4230 = vld [vmem:[#allocation14 + $0x358] sm:$0xff]
    %v4231 = vld [vmem:[#allocation14 + $0x360] sm:$0xff]
    %v4232 = vld [vmem:[#allocation14 + $0x368] sm:$0xff]
    %v4233 = vld [vmem:[#allocation14 + $0x370] sm:$0xff]
    %v4234 = vld [vmem:[#allocation14 + $0x378] sm:$0xff]
    %v4235 = vld [vmem:[#allocation14 + $0x380] sm:$0xff]
    %v4236 = vld [vmem:[#allocation14 + $0x388] sm:$0xff]
    %v4237 = vld [vmem:[#allocation14 + $0x390] sm:$0xff]
    %v4238 = vld [vmem:[#allocation14 + $0x398] sm:$0xff]
    %v4239 = vld [vmem:[#allocation14 + $0x3a0] sm:$0xff]
    %v4240 = vld [vmem:[#allocation14 + $0x3a8] sm:$0xff]
    %v4241 = vld [vmem:[#allocation14 + $0x3b0] sm:$0xff]
    %v4242 = vld [vmem:[#allocation14 + $0x3b8] sm:$0xff]
    %v4243 = vld [vmem:[#allocation14 + $0x3c0] sm:$0xff]
    %v4244 = vld [vmem:[#allocation14 + $0x3c8] sm:$0xff]
    %v4245 = vld [vmem:[#allocation14 + $0x3d0] sm:$0xff]
    %v4246 = vld [vmem:[#allocation14 + $0x3d8] sm:$0xff]
    %v4247 = vld [vmem:[#allocation14 + $0x3e0] sm:$0xff]
    %v4248 = vld [vmem:[#allocation14 + $0x3e8] sm:$0xff]
    %v4249 = vld [vmem:[#allocation14 + $0x3f0] sm:$0xff]
    %v4250 = vld [vmem:[#allocation14 + $0x3f8] sm:$0xff]
    %v4251 = vld [vmem:[#allocation14 + $0x400] sm:$0xff]
    %v4252 = vld [vmem:[#allocation14 + $0x408] sm:$0xff]
    %v4253 = vld [vmem:[#allocation14 + $0x410] sm:$0xff]
    %v4254 = vld [vmem:[#allocation14 + $0x418] sm:$0xff]
    %v4255 = vld [vmem:[#allocation14 + $0x420] sm:$0xff]
    %v4256 = vld [vmem:[#allocation14 + $0x428] sm:$0xff]
    %v4257 = vld [vmem:[#allocation14 + $0x430] sm:$0xff]
    %v4258 = vld [vmem:[#allocation14 + $0x438] sm:$0xff]
    %v4259 = vld [vmem:[#allocation14 + $0x440] sm:$0xff]
    %v4260 = vld [vmem:[#allocation14 + $0x448] sm:$0xff]
    %v4261 = vld [vmem:[#allocation14 + $0x450] sm:$0xff]
    %v4262 = vld [vmem:[#allocation14 + $0x458] sm:$0xff]
    %v4263 = vld [vmem:[#allocation14 + $0x460] sm:$0xff]
    %v4264 = vld [vmem:[#allocation14 + $0x468] sm:$0xff]
    %v4265 = vld [vmem:[#allocation14 + $0x470] sm:$0xff]
    %v4266 = vld [vmem:[#allocation14 + $0x478] sm:$0xff]
    %v4267 = vld [vmem:[#allocation14 + $0x480] sm:$0xff]
    %v4268 = vld [vmem:[#allocation14 + $0x488] sm:$0xff]
    %v4269 = vld [vmem:[#allocation14 + $0x490] sm:$0xff]
    %v4270 = vld [vmem:[#allocation14 + $0x498] sm:$0xff]
    %v4271 = vld [vmem:[#allocation14 + $0x4a0] sm:$0xff]
    %v4272 = vld [vmem:[#allocation14 + $0x4a8] sm:$0xff]
    %v4273 = vld [vmem:[#allocation14 + $0x4b0] sm:$0xff]
    %v4274 = vld [vmem:[#allocation14 + $0x4b8] sm:$0xff]
    %v4275 = vld [vmem:[#allocation14 + $0x4c0] sm:$0xff]
    %v4276 = vld [vmem:[#allocation14 + $0x4c8] sm:$0xff]
    %v4277 = vld [vmem:[#allocation14 + $0x4d0] sm:$0xff]
    %v4278 = vld [vmem:[#allocation14 + $0x4d8] sm:$0xff]
    %v4279 = vld [vmem:[#allocation14 + $0x4e0] sm:$0xff]
    %v4280 = vld [vmem:[#allocation14 + $0x4e8] sm:$0xff]
    %v4281 = vld [vmem:[#allocation14 + $0x4f0] sm:$0xff]
    %v4282 = vld [vmem:[#allocation14 + $0x4f8] sm:$0xff]
    %v4283 = vld [vmem:[#allocation14 + $0x500] sm:$0xff]
    %v4284 = vld [vmem:[#allocation14 + $0x508] sm:$0xff]
    %v4285 = vld [vmem:[#allocation14 + $0x510] sm:$0xff]
    %v4286 = vld [vmem:[#allocation14 + $0x518] sm:$0xff]
    %v4287 = vld [vmem:[#allocation14 + $0x520] sm:$0xff]
    %v4288 = vld [vmem:[#allocation14 + $0x528] sm:$0xff]
    %v4289 = vld [vmem:[#allocation14 + $0x530] sm:$0xff]
    %v4290 = vld [vmem:[#allocation14 + $0x538] sm:$0xff]
    %v4291 = vld [vmem:[#allocation14 + $0x540] sm:$0xff]
    %v4292 = vld [vmem:[#allocation14 + $0x548] sm:$0xff]
    %v4293 = vld [vmem:[#allocation14 + $0x550] sm:$0xff]
    %v4294 = vld [vmem:[#allocation14 + $0x558] sm:$0xff]
    %v4295 = vld [vmem:[#allocation14 + $0x560] sm:$0xff]
    %v4296 = vld [vmem:[#allocation14 + $0x568] sm:$0xff]
    %v4297 = vld [vmem:[#allocation14 + $0x570] sm:$0xff]
    %v4298 = vld [vmem:[#allocation14 + $0x578] sm:$0xff]
    %v4299 = vld [vmem:[#allocation14 + $0x580] sm:$0xff]
    %v4300 = vld [vmem:[#allocation14 + $0x588] sm:$0xff]
    %v4301 = vld [vmem:[#allocation14 + $0x590] sm:$0xff]
    %v4302 = vld [vmem:[#allocation14 + $0x598] sm:$0xff]
    %v4303 = vld [vmem:[#allocation14 + $0x5a0] sm:$0xff]
    %v4304 = vld [vmem:[#allocation14 + $0x5a8] sm:$0xff]
    %v4305 = vld [vmem:[#allocation14 + $0x5b0] sm:$0xff]
    %v4306 = vld [vmem:[#allocation14 + $0x5b8] sm:$0xff]
    %v4307 = vld [vmem:[#allocation14 + $0x5c0] sm:$0xff]
    %v4308 = vld [vmem:[#allocation14 + $0x5c8] sm:$0xff]
    %v4309 = vld [vmem:[#allocation14 + $0x5d0] sm:$0xff]
    %v4310 = vld [vmem:[#allocation14 + $0x5d8] sm:$0xff]
    %v4311 = vld [vmem:[#allocation14 + $0x5e0] sm:$0xff]
    %v4312 = vld [vmem:[#allocation14 + $0x5e8] sm:$0xff]
    %v4313 = vld [vmem:[#allocation14 + $0x5f0] sm:$0xff]
    %v4314 = vld [vmem:[#allocation14 + $0x5f8] sm:$0xff]
    %v4315 = vld [vmem:[#allocation14 + $0x600] sm:$0xff]
    %v4316 = vld [vmem:[#allocation14 + $0x608] sm:$0xff]
    %v4317 = vld [vmem:[#allocation14 + $0x610] sm:$0xff]
    %v4318 = vld [vmem:[#allocation14 + $0x618] sm:$0xff]
    %v4319 = vld [vmem:[#allocation14 + $0x620] sm:$0xff]
    %v4320 = vld [vmem:[#allocation14 + $0x628] sm:$0xff]
    %v4321 = vld [vmem:[#allocation14 + $0x630] sm:$0xff]
    %v4322 = vld [vmem:[#allocation14 + $0x638] sm:$0xff]
    %v4323 = vld [vmem:[#allocation14 + $0x640] sm:$0xff]
    %v4324 = vld [vmem:[#allocation14 + $0x648] sm:$0xff]
    %v4325 = vld [vmem:[#allocation14 + $0x650] sm:$0xff]
    %v4326 = vld [vmem:[#allocation14 + $0x658] sm:$0xff]
    %v4327 = vld [vmem:[#allocation14 + $0x660] sm:$0xff]
    %v4328 = vld [vmem:[#allocation14 + $0x668] sm:$0xff]
    %v4329 = vld [vmem:[#allocation14 + $0x670] sm:$0xff]
    %v4330 = vld [vmem:[#allocation14 + $0x678] sm:$0xff]
    %v4331 = vld [vmem:[#allocation14 + $0x680] sm:$0xff]
    %v4332 = vld [vmem:[#allocation14 + $0x688] sm:$0xff]
    %v4333 = vld [vmem:[#allocation14 + $0x690] sm:$0xff]
    %v4334 = vld [vmem:[#allocation14 + $0x698] sm:$0xff]
    %v4335 = vld [vmem:[#allocation14 + $0x6a0] sm:$0xff]
    %v4336 = vld [vmem:[#allocation14 + $0x6a8] sm:$0xff]
    %v4337 = vld [vmem:[#allocation14 + $0x6b0] sm:$0xff]
    %v4338 = vld [vmem:[#allocation14 + $0x6b8] sm:$0xff]
    %v4339 = vld [vmem:[#allocation14 + $0x6c0] sm:$0xff]
    %v4340 = vld [vmem:[#allocation14 + $0x6c8] sm:$0xff]
    %v4341 = vld [vmem:[#allocation14 + $0x6d0] sm:$0xff]
    %v4342 = vld [vmem:[#allocation14 + $0x6d8] sm:$0xff]
    %v4343 = vld [vmem:[#allocation14 + $0x6e0] sm:$0xff]
    %v4344 = vld [vmem:[#allocation14 + $0x6e8] sm:$0xff]
    %v4345 = vld [vmem:[#allocation14 + $0x6f0] sm:$0xff]
    %v4346 = vld [vmem:[#allocation14 + $0x6f8] sm:$0xff]
    %v4347 = vld [vmem:[#allocation14 + $0x700] sm:$0xff]
    %v4348 = vld [vmem:[#allocation14 + $0x708] sm:$0xff]
    %v4349 = vld [vmem:[#allocation14 + $0x710] sm:$0xff]
    %v4350 = vld [vmem:[#allocation14 + $0x718] sm:$0xff]
    %v4351 = vld [vmem:[#allocation14 + $0x720] sm:$0xff]
    %v4352 = vld [vmem:[#allocation14 + $0x728] sm:$0xff]
    %v4353 = vld [vmem:[#allocation14 + $0x730] sm:$0xff]
    %v4354 = vld [vmem:[#allocation14 + $0x738] sm:$0xff]
    %v4355 = vld [vmem:[#allocation14 + $0x740] sm:$0xff]
    %v4356 = vld [vmem:[#allocation14 + $0x748] sm:$0xff]
    %v4357 = vld [vmem:[#allocation14 + $0x750] sm:$0xff]
    %v4358 = vld [vmem:[#allocation14 + $0x758] sm:$0xff]
    %v4359 = vld [vmem:[#allocation14 + $0x760] sm:$0xff]
    %v4360 = vld [vmem:[#allocation14 + $0x768] sm:$0xff]
    %v4361 = vld [vmem:[#allocation14 + $0x770] sm:$0xff]
    %v4362 = vld [vmem:[#allocation14 + $0x778] sm:$0xff]
    %v4363 = vld [vmem:[#allocation14 + $0x780] sm:$0xff]
    %v4364 = vld [vmem:[#allocation14 + $0x788] sm:$0xff]
    %v4365 = vld [vmem:[#allocation14 + $0x790] sm:$0xff]
    %v4366 = vld [vmem:[#allocation14 + $0x798] sm:$0xff]
    %v4367 = vld [vmem:[#allocation14 + $0x7a0] sm:$0xff]
    %v4368 = vld [vmem:[#allocation14 + $0x7a8] sm:$0xff]
    %v4369 = vld [vmem:[#allocation14 + $0x7b0] sm:$0xff]
    %v4370 = vld [vmem:[#allocation14 + $0x7b8] sm:$0xff]
    %v4371 = vld [vmem:[#allocation14 + $0x7c0] sm:$0xff]
    %v4372 = vld [vmem:[#allocation14 + $0x7c8] sm:$0xff]
    %v4373 = vld [vmem:[#allocation14 + $0x7d0] sm:$0xff]
    %v4374 = vld [vmem:[#allocation14 + $0x7d8] sm:$0xff]
    %v4375 = vld [vmem:[#allocation14 + $0x7e0] sm:$0xff]
    %v4376 = vld [vmem:[#allocation14 + $0x7e8] sm:$0xff]
    %v4377 = vld [vmem:[#allocation14 + $0x7f0] sm:$0xff]
    %v4378 = vld [vmem:[#allocation14 + $0x7f8] sm:$0xff]
    %4379 = vmatprep.subr.mxu0 %v4124
    %4380 = vmatpush1.msra.mxu0 %v4123
    %4381 = vmatprep.subr.mxu0 %v4132
    %4382 = vmatpush1.msra.mxu0 %v4131
    %4383 = vmatprep.subr.mxu0 %v4140
    %4384 = vmatpush1.msra.mxu0 %v4139
    %4385 = vmatprep.subr.mxu0 %v4148
    %4386 = vmatpush1.msra.mxu0 %v4147
    %4387 = vmatprep.subr.mxu0 %v4156
    %4388 = vmatpush1.msra.mxu0 %v4155
    %4389 = vmatprep.subr.mxu0 %v4164
    %4390 = vmatpush1.msra.mxu0 %v4163
    %4391 = vmatprep.subr.mxu0 %v4172
    %4392 = vmatpush1.msra.mxu0 %v4171
    %4393 = vmatprep.subr.mxu0 %v4180
    %4394 = vmatpush1.msra.mxu0 %v4179
    %4395 = vmatprep.subr.mxu0 %v4188
    %4396 = vmatpush1.msra.mxu0 %v4187
    %4397 = vmatprep.subr.mxu0 %v4196
    %4398 = vmatpush1.msra.mxu0 %v4195
    %4399 = vmatprep.subr.mxu0 %v4204
    %4400 = vmatpush1.msra.mxu0 %v4203
    %4401 = vmatprep.subr.mxu0 %v4212
    %4402 = vmatpush1.msra.mxu0 %v4211
    %4403 = vmatprep.subr.mxu0 %v4220
    %4404 = vmatpush1.msra.mxu0 %v4219
    %4405 = vmatprep.subr.mxu0 %v4228
    %4406 = vmatpush1.msra.mxu0 %v4227
    %4407 = vmatprep.subr.mxu0 %v4236
    %4408 = vmatpush1.msra.mxu0 %v4235
    %4409 = vmatprep.subr.mxu0 %v4244
    %4410 = vmatpush1.msra.mxu0 %v4243
    %4411 = vmatprep.subr.mxu0 %v4252
    %4412 = vmatpush1.msra.mxu0 %v4251
    %4413 = vmatprep.subr.mxu0 %v4260
    %4414 = vmatpush1.msra.mxu0 %v4259
    %4415 = vmatprep.subr.mxu0 %v4268
    %4416 = vmatpush1.msra.mxu0 %v4267
    %4417 = vmatprep.subr.mxu0 %v4276
    %4418 = vmatpush1.msra.mxu0 %v4275
    %4419 = vmatprep.subr.mxu0 %v4284
    %4420 = vmatpush1.msra.mxu0 %v4283
    %4421 = vmatprep.subr.mxu0 %v4292
    %4422 = vmatpush1.msra.mxu0 %v4291
    %4423 = vmatprep.subr.mxu0 %v4300
    %4424 = vmatpush1.msra.mxu0 %v4299
    %4425 = vmatprep.subr.mxu0 %v4308
    %4426 = vmatpush1.msra.mxu0 %v4307
    %4427 = vmatprep.subr.mxu0 %v4316
    %4428 = vmatpush1.msra.mxu0 %v4315
    %4429 = vmatprep.subr.mxu0 %v4324
    %4430 = vmatpush1.msra.mxu0 %v4323
    %4431 = vmatprep.subr.mxu0 %v4332
    %4432 = vmatpush1.msra.mxu0 %v4331
    %4433 = vmatprep.subr.mxu0 %v4340
    %4434 = vmatpush1.msra.mxu0 %v4339
    %4435 = vmatprep.subr.mxu0 %v4348
    %4436 = vmatpush1.msra.mxu0 %v4347
    %4437 = vmatprep.subr.mxu0 %v4356
    %4438 = vmatpush1.msra.mxu0 %v4355
    %4439 = vmatprep.subr.mxu0 %v4364
    %4440 = vmatpush1.msra.mxu0 %v4363
    %4441 = vmatprep.subr.mxu0 %v4372
    %4442 = vmatpush1.msra.mxu0 %v4371
    %4443 = vmatprep.mubr.f32.mxu0 0.0
    %4444 = vmatmul.mubr.f32.gmra.mrb[0].mxu0 0.0
    %v4445 = vpop.f32.mrb[0].mxu0
    %v4446 = vadd.f32 0.0, %v4445
    %v4447 = vpop.f32.mrb[0].mxu0
    %v4448 = vadd.f32 0.0, %v4447
    %4449 = vdwg.mxu0
    %4450 = vmatprep.subr.mxu0 %v4126
    %4451 = vmatpush1.msra.mxu0 %v4125
    %4452 = vmatprep.subr.mxu0 %v4134
    %4453 = vmatpush1.msra.mxu0 %v4133
    %4454 = vmatprep.subr.mxu0 %v4142
    %4455 = vmatpush1.msra.mxu0 %v4141
    %4456 = vmatprep.subr.mxu0 %v4150
    %4457 = vmatpush1.msra.mxu0 %v4149
    %4458 = vmatprep.subr.mxu0 %v4158
    %4459 = vmatpush1.msra.mxu0 %v4157
    %4460 = vmatprep.subr.mxu0 %v4166
    %4461 = vmatpush1.msra.mxu0 %v4165
    %4462 = vmatprep.subr.mxu0 %v4174
    %4463 = vmatpush1.msra.mxu0 %v4173
    %4464 = vmatprep.subr.mxu0 %v4182
    %4465 = vmatpush1.msra.mxu0 %v4181
    %4466 = vmatprep.subr.mxu0 %v4190
    %4467 = vmatpush1.msra.mxu0 %v4189
    %4468 = vmatprep.subr.mxu0 %v4198
    %4469 = vmatpush1.msra.mxu0 %v4197
    %4470 = vmatprep.subr.mxu0 %v4206
    %4471 = vmatpush1.msra.mxu0 %v4205
    %4472 = vmatprep.subr.mxu0 %v4214
    %4473 = vmatpush1.msra.mxu0 %v4213
    %4474 = vmatprep.subr.mxu0 %v4222
    %4475 = vmatpush1.msra.mxu0 %v4221
    %4476 = vmatprep.subr.mxu0 %v4230
    %4477 = vmatpush1.msra.mxu0 %v4229
    %4478 = vmatprep.subr.mxu0 %v4238
    %4479 = vmatpush1.msra.mxu0 %v4237
    %4480 = vmatprep.subr.mxu0 %v4246
    %4481 = vmatpush1.msra.mxu0 %v4245
    %4482 = vmatprep.subr.mxu0 %v4254
    %4483 = vmatpush1.msra.mxu0 %v4253
    %4484 = vmatprep.subr.mxu0 %v4262
    %4485 = vmatpush1.msra.mxu0 %v4261
    %4486 = vmatprep.subr.mxu0 %v4270
    %4487 = vmatpush1.msra.mxu0 %v4269
    %4488 = vmatprep.subr.mxu0 %v4278
    %4489 = vmatpush1.msra.mxu0 %v4277
    %4490 = vmatprep.subr.mxu0 %v4286
    %4491 = vmatpush1.msra.mxu0 %v4285
    %4492 = vmatprep.subr.mxu0 %v4294
    %4493 = vmatpush1.msra.mxu0 %v4293
    %4494 = vmatprep.subr.mxu0 %v4302
    %4495 = vmatpush1.msra.mxu0 %v4301
    %4496 = vmatprep.subr.mxu0 %v4310
    %4497 = vmatpush1.msra.mxu0 %v4309
    %4498 = vmatprep.subr.mxu0 %v4318
    %4499 = vmatpush1.msra.mxu0 %v4317
    %4500 = vmatprep.subr.mxu0 %v4326
    %4501 = vmatpush1.msra.mxu0 %v4325
    %4502 = vmatprep.subr.mxu0 %v4334
    %4503 = vmatpush1.msra.mxu0 %v4333
    %4504 = vmatprep.subr.mxu0 %v4342
    %4505 = vmatpush1.msra.mxu0 %v4341
    %4506 = vmatprep.subr.mxu0 %v4350
    %4507 = vmatpush1.msra.mxu0 %v4349
    %4508 = vmatprep.subr.mxu0 %v4358
    %4509 = vmatpush1.msra.mxu0 %v4357
    %4510 = vmatprep.subr.mxu0 %v4366
    %4511 = vmatpush1.msra.mxu0 %v4365
    %4512 = vmatprep.subr.mxu0 %v4374
    %4513 = vmatpush1.msra.mxu0 %v4373
    %4514 = vmatprep.mubr.f32.mxu0 0.0
    %4515 = vmatmul.mubr.f32.gmra.mrb[0].mxu0 0.0
    %v4516 = vpop.f32.mrb[0].mxu0
    %v4517 = vadd.f32 0.0, %v4516
    %v4518 = vpop.f32.mrb[0].mxu0
    %v4519 = vadd.f32 0.0, %v4518
    %4520 = vdwg.mxu0
    %4521 = vmatprep.subr.mxu0 %v4128
    %4522 = vmatpush1.msra.mxu0 %v4127
    %4523 = vmatprep.subr.mxu0 %v4136
    %4524 = vmatpush1.msra.mxu0 %v4135
    %4525 = vmatprep.subr.mxu0 %v4144
    %4526 = vmatpush1.msra.mxu0 %v4143
    %4527 = vmatprep.subr.mxu0 %v4152
    %4528 = vmatpush1.msra.mxu0 %v4151
    %4529 = vmatprep.subr.mxu0 %v4160
    %4530 = vmatpush1.msra.mxu0 %v4159
    %4531 = vmatprep.subr.mxu0 %v4168
    %4532 = vmatpush1.msra.mxu0 %v4167
    %4533 = vmatprep.subr.mxu0 %v4176
    %4534 = vmatpush1.msra.mxu0 %v4175
    %4535 = vmatprep.subr.mxu0 %v4184
    %4536 = vmatpush1.msra.mxu0 %v4183
    %4537 = vmatprep.subr.mxu0 %v4192
    %4538 = vmatpush1.msra.mxu0 %v4191
    %4539 = vmatprep.subr.mxu0 %v4200
    %4540 = vmatpush1.msra.mxu0 %v4199
    %4541 = vmatprep.subr.mxu0 %v4208
    %4542 = vmatpush1.msra.mxu0 %v4207
    %4543 = vmatprep.subr.mxu0 %v4216
    %4544 = vmatpush1.msra.mxu0 %v4215
    %4545 = vmatprep.subr.mxu0 %v4224
    %4546 = vmatpush1.msra.mxu0 %v4223
    %4547 = vmatprep.subr.mxu0 %v4232
    %4548 = vmatpush1.msra.mxu0 %v4231
    %4549 = vmatprep.subr.mxu0 %v4240
    %4550 = vmatpush1.msra.mxu0 %v4239
    %4551 = vmatprep.subr.mxu0 %v4248
    %4552 = vmatpush1.msra.mxu0 %v4247
    %4553 = vmatprep.subr.mxu0 %v4256
    %4554 = vmatpush1.msra.mxu0 %v4255
    %4555 = vmatprep.subr.mxu0 %v4264
    %4556 = vmatpush1.msra.mxu0 %v4263
    %4557 = vmatprep.subr.mxu0 %v4272
    %4558 = vmatpush1.msra.mxu0 %v4271
    %4559 = vmatprep.subr.mxu0 %v4280
    %4560 = vmatpush1.msra.mxu0 %v4279
    %4561 = vmatprep.subr.mxu0 %v4288
    %4562 = vmatpush1.msra.mxu0 %v4287
    %4563 = vmatprep.subr.mxu0 %v4296
    %4564 = vmatpush1.msra.mxu0 %v4295
    %4565 = vmatprep.subr.mxu0 %v4304
    %4566 = vmatpush1.msra.mxu0 %v4303
    %4567 = vmatprep.subr.mxu0 %v4312
    %4568 = vmatpush1.msra.mxu0 %v4311
    %4569 = vmatprep.subr.mxu0 %v4320
    %4570 = vmatpush1.msra.mxu0 %v4319
    %4571 = vmatprep.subr.mxu0 %v4328
    %4572 = vmatpush1.msra.mxu0 %v4327
    %4573 = vmatprep.subr.mxu0 %v4336
    %4574 = vmatpush1.msra.mxu0 %v4335
    %4575 = vmatprep.subr.mxu0 %v4344
    %4576 = vmatpush1.msra.mxu0 %v4343
    %4577 = vmatprep.subr.mxu0 %v4352
    %4578 = vmatpush1.msra.mxu0 %v4351
    %4579 = vmatprep.subr.mxu0 %v4360
    %4580 = vmatpush1.msra.mxu0 %v4359
    %4581 = vmatprep.subr.mxu0 %v4368
    %4582 = vmatpush1.msra.mxu0 %v4367
    %4583 = vmatprep.subr.mxu0 %v4376
    %4584 = vmatpush1.msra.mxu0 %v4375
    %4585 = vmatprep.mubr.f32.mxu0 0.0
    %4586 = vmatmul.mubr.f32.gmra.mrb[0].mxu0 0.0
    %v4587 = vpop.f32.mrb[0].mxu0
    %v4588 = vadd.f32 0.0, %v4587
    %v4589 = vpop.f32.mrb[0].mxu0
    %v4590 = vadd.f32 0.0, %v4589
    %4591 = vdwg.mxu0
    %4592 = vmatprep.subr.mxu0 %v4130
    %4593 = vmatpush1.msra.mxu0 %v4129
    %4594 = vmatprep.subr.mxu0 %v4138
    %4595 = vmatpush1.msra.mxu0 %v4137
    %4596 = vmatprep.subr.mxu0 %v4146
    %4597 = vmatpush1.msra.mxu0 %v4145
    %4598 = vmatprep.subr.mxu0 %v4154
    %4599 = vmatpush1.msra.mxu0 %v4153
    %4600 = vmatprep.subr.mxu0 %v4162
    %4601 = vmatpush1.msra.mxu0 %v4161
    %4602 = vmatprep.subr.mxu0 %v4170
    %4603 = vmatpush1.msra.mxu0 %v4169
    %4604 = vmatprep.subr.mxu0 %v4178
    %4605 = vmatpush1.msra.mxu0 %v4177
    %4606 = vmatprep.subr.mxu0 %v4186
    %4607 = vmatpush1.msra.mxu0 %v4185
    %4608 = vmatprep.subr.mxu0 %v4194
    %4609 = vmatpush1.msra.mxu0 %v4193
    %4610 = vmatprep.subr.mxu0 %v4202
    %4611 = vmatpush1.msra.mxu0 %v4201
    %4612 = vmatprep.subr.mxu0 %v4210
    %4613 = vmatpush1.msra.mxu0 %v4209
    %4614 = vmatprep.subr.mxu0 %v4218
    %4615 = vmatpush1.msra.mxu0 %v4217
    %4616 = vmatprep.subr.mxu0 %v4226
    %4617 = vmatpush1.msra.mxu0 %v4225
    %4618 = vmatprep.subr.mxu0 %v4234
    %4619 = vmatpush1.msra.mxu0 %v4233
    %4620 = vmatprep.subr.mxu0 %v4242
    %4621 = vmatpush1.msra.mxu0 %v4241
    %4622 = vmatprep.subr.mxu0 %v4250
    %4623 = vmatpush1.msra.mxu0 %v4249
    %4624 = vmatprep.subr.mxu0 %v4258
    %4625 = vmatpush1.msra.mxu0 %v4257
    %4626 = vmatprep.subr.mxu0 %v4266
    %4627 = vmatpush1.msra.mxu0 %v4265
    %4628 = vmatprep.subr.mxu0 %v4274
    %4629 = vmatpush1.msra.mxu0 %v4273
    %4630 = vmatprep.subr.mxu0 %v4282
    %4631 = vmatpush1.msra.mxu0 %v4281
    %4632 = vmatprep.subr.mxu0 %v4290
    %4633 = vmatpush1.msra.mxu0 %v4289
    %4634 = vmatprep.subr.mxu0 %v4298
    %4635 = vmatpush1.msra.mxu0 %v4297
    %4636 = vmatprep.subr.mxu0 %v4306
    %4637 = vmatpush1.msra.mxu0 %v4305
    %4638 = vmatprep.subr.mxu0 %v4314
    %4639 = vmatpush1.msra.mxu0 %v4313
    %4640 = vmatprep.subr.mxu0 %v4322
    %4641 = vmatpush1.msra.mxu0 %v4321
    %4642 = vmatprep.subr.mxu0 %v4330
    %4643 = vmatpush1.msra.mxu0 %v4329
    %4644 = vmatprep.subr.mxu0 %v4338
    %4645 = vmatpush1.msra.mxu0 %v4337
    %4646 = vmatprep.subr.mxu0 %v4346
    %4647 = vmatpush1.msra.mxu0 %v4345
    %4648 = vmatprep.subr.mxu0 %v4354
    %4649 = vmatpush1.msra.mxu0 %v4353
    %4650 = vmatprep.subr.mxu0 %v4362
    %4651 = vmatpush1.msra.mxu0 %v4361
    %4652 = vmatprep.subr.mxu0 %v4370
    %4653 = vmatpush1.msra.mxu0 %v4369
    %4654 = vmatprep.subr.mxu0 %v4378
    %4655 = vmatpush1.msra.mxu0 %v4377
    %4656 = vmatprep.mubr.f32.mxu0 0.0
    %4657 = vmatmul.mubr.f32.gmra.mrb[0].mxu0 0.0
    %v4658 = vpop.f32.mrb[0].mxu0
    %v4659 = vadd.f32 0.0, %v4658
    %v4660 = vpop.f32.mrb[0].mxu0
    %v4661 = vadd.f32 0.0, %v4660
    %4662 = vdwg.mxu0
    %v4663 = vadd.f32 %v3882, %v4446
    %v4664 = vadd.f32 %v3884, %v4448
    %v4665 = vadd.f32 %v3959, %v4517
    %v4666 = vadd.f32 %v3961, %v4519
    %v4667 = vadd.f32 %v4036, %v4588
    %v4668 = vadd.f32 %v4038, %v4590
    %v4669 = vadd.f32 %v4113, %v4659
    %v4670 = vadd.f32 %v4115, %v4661
    %v4671 = vmul.f32 %v4663, 0.5
    %v4672 = vmul.f32 %v4664, 0.5
    %v4673 = vtanh.pop %v4671
    %v4674 = vtanh.pop %v4672
    %v4675 = vmul.f32 %v4673, 0.5
    %v4676 = vmul.f32 %v4674, 0.5
    %v4677 = vadd.f32 %v4675, 0.5
    %v4678 = vadd.f32 %v4676, 0.5
    %v4679 = vmul.f32 %v4665, 0.5
    %v4680 = vmul.f32 %v4666, 0.5
    %v4681 = vtanh.pop %v4679
    %v4682 = vtanh.pop %v4680
    %v4683 = vmul.f32 %v4681, 0.5
    %v4684 = vmul.f32 %v4682, 0.5
    %v4685 = vadd.f32 %v4683, 0.5
    %v4686 = vadd.f32 %v4684, 0.5
    %v4687 = vtanh.pop %v4667
    %v4688 = vtanh.pop %v4668
    %v4689 = vmul.f32 %v4669, 0.5
    %v4690 = vmul.f32 %v4670, 0.5
    %v4691 = vtanh.pop %v4689
    %v4692 = vtanh.pop %v4690
    %v4693 = vmul.f32 %v4691, 0.5
    %v4694 = vmul.f32 %v4692, 0.5
    %v4695 = vadd.f32 %v4693, 0.5
    %v4696 = vadd.f32 %v4694, 0.5
    %v4697 = vmul.f32 %v4685, 0.0
    %v4698 = vmul.f32 %v4686, 0.0
    %v4699 = vmul.f32 %v4677, %v4687
    %v4700 = vmul.f32 %v4678, %v4688
    %v4701 = vadd.f32 %v4697, %v4699
    %v4702 = vadd.f32 %v4698, %v4700
    %v4703 = vtanh.pop %v4701
    %v4704 = vtanh.pop %v4702
    %v4705 = vmul.f32 %v4695, %v4703
    %v4706 = vmul.f32 %v4696, %v4704
    %4707 = vmatprep.subr.mxu0 %v4124
    %4708 = vmatpush1.msra.mxu0 %v4123
    %4709 = vmatprep.subr.mxu0 %v4132
    %4710 = vmatpush1.msra.mxu0 %v4131
    %4711 = vmatprep.subr.mxu0 %v4140
    %4712 = vmatpush1.msra.mxu0 %v4139
    %4713 = vmatprep.subr.mxu0 %v4148
    %4714 = vmatpush1.msra.mxu0 %v4147
    %4715 = vmatprep.subr.mxu0 %v4156
    %4716 = vmatpush1.msra.mxu0 %v4155
    %4717 = vmatprep.subr.mxu0 %v4164
    %4718 = vmatpush1.msra.mxu0 %v4163
    %4719 = vmatprep.subr.mxu0 %v4172
    %4720 = vmatpush1.msra.mxu0 %v4171
    %4721 = vmatprep.subr.mxu0 %v4180
    %4722 = vmatpush1.msra.mxu0 %v4179
    %4723 = vmatprep.subr.mxu0 %v4188
    %4724 = vmatpush1.msra.mxu0 %v4187
    %4725 = vmatprep.subr.mxu0 %v4196
    %4726 = vmatpush1.msra.mxu0 %v4195
    %4727 = vmatprep.subr.mxu0 %v4204
    %4728 = vmatpush1.msra.mxu0 %v4203
    %4729 = vmatprep.subr.mxu0 %v4212
    %4730 = vmatpush1.msra.mxu0 %v4211
    %4731 = vmatprep.subr.mxu0 %v4220
    %4732 = vmatpush1.msra.mxu0 %v4219
    %4733 = vmatprep.subr.mxu0 %v4228
    %4734 = vmatpush1.msra.mxu0 %v4227
    %4735 = vmatprep.subr.mxu0 %v4236
    %4736 = vmatpush1.msra.mxu0 %v4235
    %4737 = vmatprep.subr.mxu0 %v4244
    %4738 = vmatpush1.msra.mxu0 %v4243
    %4739 = vmatprep.subr.mxu0 %v4252
    %4740 = vmatpush1.msra.mxu0 %v4251
    %4741 = vmatprep.subr.mxu0 %v4260
    %4742 = vmatpush1.msra.mxu0 %v4259
    %4743 = vmatprep.subr.mxu0 %v4268
    %4744 = vmatpush1.msra.mxu0 %v4267
    %4745 = vmatprep.subr.mxu0 %v4276
    %4746 = vmatpush1.msra.mxu0 %v4275
    %4747 = vmatprep.subr.mxu0 %v4284
    %4748 = vmatpush1.msra.mxu0 %v4283
    %4749 = vmatprep.subr.mxu0 %v4292
    %4750 = vmatpush1.msra.mxu0 %v4291
    %4751 = vmatprep.subr.mxu0 %v4300
    %4752 = vmatpush1.msra.mxu0 %v4299
    %4753 = vmatprep.subr.mxu0 %v4308
    %4754 = vmatpush1.msra.mxu0 %v4307
    %4755 = vmatprep.subr.mxu0 %v4316
    %4756 = vmatpush1.msra.mxu0 %v4315
    %4757 = vmatprep.subr.mxu0 %v4324
    %4758 = vmatpush1.msra.mxu0 %v4323
    %4759 = vmatprep.subr.mxu0 %v4332
    %4760 = vmatpush1.msra.mxu0 %v4331
    %4761 = vmatprep.subr.mxu0 %v4340
    %4762 = vmatpush1.msra.mxu0 %v4339
    %4763 = vmatprep.subr.mxu0 %v4348
    %4764 = vmatpush1.msra.mxu0 %v4347
    %4765 = vmatprep.subr.mxu0 %v4356
    %4766 = vmatpush1.msra.mxu0 %v4355
    %4767 = vmatprep.subr.mxu0 %v4364
    %4768 = vmatpush1.msra.mxu0 %v4363
    %4769 = vmatprep.subr.mxu0 %v4372
    %4770 = vmatpush1.msra.mxu0 %v4371
    %4771 = vmatprep.mubr.f32.mxu0 %v4706
    %4772 = vmatmul.mubr.f32.gmra.mrb[0].mxu0 %v4705
    %v4773 = vpop.f32.mrb[0].mxu0
    %v4774 = vadd.f32 0.0, %v4773
    %v4775 = vpop.f32.mrb[0].mxu0
    %v4776 = vadd.f32 0.0, %v4775
    %4777 = vdwg.mxu0
    %4778 = vmatprep.subr.mxu0 %v4126
    %4779 = vmatpush1.msra.mxu0 %v4125
    %4780 = vmatprep.subr.mxu0 %v4134
    %4781 = vmatpush1.msra.mxu0 %v4133
    %4782 = vmatprep.subr.mxu0 %v4142
    %4783 = vmatpush1.msra.mxu0 %v4141
    %4784 = vmatprep.subr.mxu0 %v4150
    %4785 = vmatpush1.msra.mxu0 %v4149
    %4786 = vmatprep.subr.mxu0 %v4158
    %4787 = vmatpush1.msra.mxu0 %v4157
    %4788 = vmatprep.subr.mxu0 %v4166
    %4789 = vmatpush1.msra.mxu0 %v4165
    %4790 = vmatprep.subr.mxu0 %v4174
    %4791 = vmatpush1.msra.mxu0 %v4173
    %4792 = vmatprep.subr.mxu0 %v4182
    %4793 = vmatpush1.msra.mxu0 %v4181
    %4794 = vmatprep.subr.mxu0 %v4190
    %4795 = vmatpush1.msra.mxu0 %v4189
    %4796 = vmatprep.subr.mxu0 %v4198
    %4797 = vmatpush1.msra.mxu0 %v4197
    %4798 = vmatprep.subr.mxu0 %v4206
    %4799 = vmatpush1.msra.mxu0 %v4205
    %4800 = vmatprep.subr.mxu0 %v4214
    %4801 = vmatpush1.msra.mxu0 %v4213
    %4802 = vmatprep.subr.mxu0 %v4222
    %4803 = vmatpush1.msra.mxu0 %v4221
    %4804 = vmatprep.subr.mxu0 %v4230
    %4805 = vmatpush1.msra.mxu0 %v4229
    %4806 = vmatprep.subr.mxu0 %v4238
    %4807 = vmatpush1.msra.mxu0 %v4237
    %4808 = vmatprep.subr.mxu0 %v4246
    %4809 = vmatpush1.msra.mxu0 %v4245
    %4810 = vmatprep.subr.mxu0 %v4254
    %4811 = vmatpush1.msra.mxu0 %v4253
    %4812 = vmatprep.subr.mxu0 %v4262
    %4813 = vmatpush1.msra.mxu0 %v4261
    %4814 = vmatprep.subr.mxu0 %v4270
    %4815 = vmatpush1.msra.mxu0 %v4269
    %4816 = vmatprep.subr.mxu0 %v4278
    %4817 = vmatpush1.msra.mxu0 %v4277
    %4818 = vmatprep.subr.mxu0 %v4286
    %4819 = vmatpush1.msra.mxu0 %v4285
    %4820 = vmatprep.subr.mxu0 %v4294
    %4821 = vmatpush1.msra.mxu0 %v4293
    %4822 = vmatprep.subr.mxu0 %v4302
    %4823 = vmatpush1.msra.mxu0 %v4301
    %4824 = vmatprep.subr.mxu0 %v4310
    %4825 = vmatpush1.msra.mxu0 %v4309
    %4826 = vmatprep.subr.mxu0 %v4318
    %4827 = vmatpush1.msra.mxu0 %v4317
    %4828 = vmatprep.subr.mxu0 %v4326
    %4829 = vmatpush1.msra.mxu0 %v4325
    %4830 = vmatprep.subr.mxu0 %v4334
    %4831 = vmatpush1.msra.mxu0 %v4333
    %4832 = vmatprep.subr.mxu0 %v4342
    %4833 = vmatpush1.msra.mxu0 %v4341
    %4834 = vmatprep.subr.mxu0 %v4350
    %4835 = vmatpush1.msra.mxu0 %v4349
    %4836 = vmatprep.subr.mxu0 %v4358
    %4837 = vmatpush1.msra.mxu0 %v4357
    %4838 = vmatprep.subr.mxu0 %v4366
    %4839 = vmatpush1.msra.mxu0 %v4365
    %4840 = vmatprep.subr.mxu0 %v4374
    %4841 = vmatpush1.msra.mxu0 %v4373
    %4842 = vmatprep.mubr.f32.mxu0 %v4706
    %4843 = vmatmul.mubr.f32.gmra.mrb[0].mxu0 %v4705
    %v4844 = vpop.f32.mrb[0].mxu0
    %v4845 = vadd.f32 0.0, %v4844
    %v4846 = vpop.f32.mrb[0].mxu0
    %v4847 = vadd.f32 0.0, %v4846
    %4848 = vdwg.mxu0
    %4849 = vmatprep.subr.mxu0 %v4128
    %4850 = vmatpush1.msra.mxu0 %v4127
    %4851 = vmatprep.subr.mxu0 %v4136
    %4852 = vmatpush1.msra.mxu0 %v4135
    %4853 = vmatprep.subr.mxu0 %v4144
    %4854 = vmatpush1.msra.mxu0 %v4143
    %4855 = vmatprep.subr.mxu0 %v4152
    %4856 = vmatpush1.msra.mxu0 %v4151
    %4857 = vmatprep.subr.mxu0 %v4160
    %4858 = vmatpush1.msra.mxu0 %v4159
    %4859 = vmatprep.subr.mxu0 %v4168
    %4860 = vmatpush1.msra.mxu0 %v4167
    %4861 = vmatprep.subr.mxu0 %v4176
    %4862 = vmatpush1.msra.mxu0 %v4175
    %4863 = vmatprep.subr.mxu0 %v4184
    %4864 = vmatpush1.msra.mxu0 %v4183
    %4865 = vmatprep.subr.mxu0 %v4192
    %4866 = vmatpush1.msra.mxu0 %v4191
    %4867 = vmatprep.subr.mxu0 %v4200
    %4868 = vmatpush1.msra.mxu0 %v4199
    %4869 = vmatprep.subr.mxu0 %v4208
    %4870 = vmatpush1.msra.mxu0 %v4207
    %4871 = vmatprep.subr.mxu0 %v4216
    %4872 = vmatpush1.msra.mxu0 %v4215
    %4873 = vmatprep.subr.mxu0 %v4224
    %4874 = vmatpush1.msra.mxu0 %v4223
    %4875 = vmatprep.subr.mxu0 %v4232
    %4876 = vmatpush1.msra.mxu0 %v4231
    %4877 = vmatprep.subr.mxu0 %v4240
    %4878 = vmatpush1.msra.mxu0 %v4239
    %4879 = vmatprep.subr.mxu0 %v4248
    %4880 = vmatpush1.msra.mxu0 %v4247
    %4881 = vmatprep.subr.mxu0 %v4256
    %4882 = vmatpush1.msra.mxu0 %v4255
    %4883 = vmatprep.subr.mxu0 %v4264
    %4884 = vmatpush1.msra.mxu0 %v4263
    %4885 = vmatprep.subr.mxu0 %v4272
    %4886 = vmatpush1.msra.mxu0 %v4271
    %4887 = vmatprep.subr.mxu0 %v4280
    %4888 = vmatpush1.msra.mxu0 %v4279
    %4889 = vmatprep.subr.mxu0 %v4288
    %4890 = vmatpush1.msra.mxu0 %v4287
    %4891 = vmatprep.subr.mxu0 %v4296
    %4892 = vmatpush1.msra.mxu0 %v4295
    %4893 = vmatprep.subr.mxu0 %v4304
    %4894 = vmatpush1.msra.mxu0 %v4303
    %4895 = vmatprep.subr.mxu0 %v4312
    %4896 = vmatpush1.msra.mxu0 %v4311
    %4897 = vmatprep.subr.mxu0 %v4320
    %4898 = vmatpush1.msra.mxu0 %v4319
    %4899 = vmatprep.subr.mxu0 %v4328
    %4900 = vmatpush1.msra.mxu0 %v4327
    %4901 = vmatprep.subr.mxu0 %v4336
    %4902 = vmatpush1.msra.mxu0 %v4335
    %4903 = vmatprep.subr.mxu0 %v4344
    %4904 = vmatpush1.msra.mxu0 %v4343
    %4905 = vmatprep.subr.mxu0 %v4352
    %4906 = vmatpush1.msra.mxu0 %v4351
    %4907 = vmatprep.subr.mxu0 %v4360
    %4908 = vmatpush1.msra.mxu0 %v4359
    %4909 = vmatprep.subr.mxu0 %v4368
    %4910 = vmatpush1.msra.mxu0 %v4367
    %4911 = vmatprep.subr.mxu0 %v4376
    %4912 = vmatpush1.msra.mxu0 %v4375
    %4913 = vmatprep.mubr.f32.mxu0 %v4706
    %4914 = vmatmul.mubr.f32.gmra.mrb[0].mxu0 %v4705
    %v4915 = vpop.f32.mrb[0].mxu0
    %v4916 = vadd.f32 0.0, %v4915
    %v4917 = vpop.f32.mrb[0].mxu0
    %v4918 = vadd.f32 0.0, %v4917
    %4919 = vdwg.mxu0
    %4920 = vmatprep.subr.mxu0 %v4130
    %4921 = vmatpush1.msra.mxu0 %v4129
    %4922 = vmatprep.subr.mxu0 %v4138
    %4923 = vmatpush1.msra.mxu0 %v4137
    %4924 = vmatprep.subr.mxu0 %v4146
    %4925 = vmatpush1.msra.mxu0 %v4145
    %4926 = vmatprep.subr.mxu0 %v4154
    %4927 = vmatpush1.msra.mxu0 %v4153
    %4928 = vmatprep.subr.mxu0 %v4162
    %4929 = vmatpush1.msra.mxu0 %v4161
    %4930 = vmatprep.subr.mxu0 %v4170
    %4931 = vmatpush1.msra.mxu0 %v4169
    %4932 = vmatprep.subr.mxu0 %v4178
    %4933 = vmatpush1.msra.mxu0 %v4177
    %4934 = vmatprep.subr.mxu0 %v4186
    %4935 = vmatpush1.msra.mxu0 %v4185
    %4936 = vmatprep.subr.mxu0 %v4194
    %4937 = vmatpush1.msra.mxu0 %v4193
    %4938 = vmatprep.subr.mxu0 %v4202
    %4939 = vmatpush1.msra.mxu0 %v4201
    %4940 = vmatprep.subr.mxu0 %v4210
    %4941 = vmatpush1.msra.mxu0 %v4209
    %4942 = vmatprep.subr.mxu0 %v4218
    %4943 = vmatpush1.msra.mxu0 %v4217
    %4944 = vmatprep.subr.mxu0 %v4226
    %4945 = vmatpush1.msra.mxu0 %v4225
    %4946 = vmatprep.subr.mxu0 %v4234
    %4947 = vmatpush1.msra.mxu0 %v4233
    %4948 = vmatprep.subr.mxu0 %v4242
    %4949 = vmatpush1.msra.mxu0 %v4241
    %4950 = vmatprep.subr.mxu0 %v4250
    %4951 = vmatpush1.msra.mxu0 %v4249
    %4952 = vmatprep.subr.mxu0 %v4258
    %4953 = vmatpush1.msra.mxu0 %v4257
    %4954 = vmatprep.subr.mxu0 %v4266
    %4955 = vmatpush1.msra.mxu0 %v4265
    %4956 = vmatprep.subr.mxu0 %v4274
    %4957 = vmatpush1.msra.mxu0 %v4273
    %4958 = vmatprep.subr.mxu0 %v4282
    %4959 = vmatpush1.msra.mxu0 %v4281
    %4960 = vmatprep.subr.mxu0 %v4290
    %4961 = vmatpush1.msra.mxu0 %v4289
    %4962 = vmatprep.subr.mxu0 %v4298
    %4963 = vmatpush1.msra.mxu0 %v4297
    %4964 = vmatprep.subr.mxu0 %v4306
    %4965 = vmatpush1.msra.mxu0 %v4305
    %4966 = vmatprep.subr.mxu0 %v4314
    %4967 = vmatpush1.msra.mxu0 %v4313
    %4968 = vmatprep.subr.mxu0 %v4322
    %4969 = vmatpush1.msra.mxu0 %v4321
    %4970 = vmatprep.subr.mxu0 %v4330
    %4971 = vmatpush1.msra.mxu0 %v4329
    %4972 = vmatprep.subr.mxu0 %v4338
    %4973 = vmatpush1.msra.mxu0 %v4337
    %4974 = vmatprep.subr.mxu0 %v4346
    %4975 = vmatpush1.msra.mxu0 %v4345
    %4976 = vmatprep.subr.mxu0 %v4354
    %4977 = vmatpush1.msra.mxu0 %v4353
    %4978 = vmatprep.subr.mxu0 %v4362
    %4979 = vmatpush1.msra.mxu0 %v4361
    %4980 = vmatprep.subr.mxu0 %v4370
    %4981 = vmatpush1.msra.mxu0 %v4369
    %4982 = vmatprep.subr.mxu0 %v4378
    %4983 = vmatpush1.msra.mxu0 %v4377
    %4984 = vmatprep.mubr.f32.mxu0 %v4706
    %4985 = vmatmul.mubr.f32.gmra.mrb[0].mxu0 %v4705
    %v4986 = vpop.f32.mrb[0].mxu0
    %v4987 = vadd.f32 0.0, %v4986
    %v4988 = vpop.f32.mrb[0].mxu0
    %v4989 = vadd.f32 0.0, %v4988
    %4990 = vdwg.mxu0
    %v4999 = vrot.slane %v4774, 6
    %v5000 = vrot.slane %v4776, 6
    %v5001 = vrot.slane %v4845, 6
    %v5002 = vrot.slane %v4847, 6
    %v5003 = vrot.slane %v4916, 6
    %v5004 = vrot.slane %v4918, 6
    %v5005 = vrot.slane %v4987, 6
    %v5006 = vrot.slane %v4989, 6
    %v5015 = vadd.f32 %v3882, %v4999
    %v5016 = vadd.f32 %v3884, %v5000
    %v5017 = vadd.f32 %v3959, %v5001
    %v5018 = vadd.f32 %v3961, %v5002
    %v5019 = vadd.f32 %v4036, %v5003
    %v5020 = vadd.f32 %v4038, %v5004
    %v5021 = vadd.f32 %v4113, %v5005
    %v5022 = vadd.f32 %v4115, %v5006
    %v5023 = vmul.f32 %v5015, 0.5
    %v5024 = vmul.f32 %v5016, 0.5
    %v5025 = vtanh.pop %v5023
    %v5026 = vtanh.pop %v5024
    %v5027 = vmul.f32 %v5025, 0.5
    %v5028 = vmul.f32 %v5026, 0.5
    %v5029 = vadd.f32 %v5027, 0.5
    %v5030 = vadd.f32 %v5028, 0.5
    %v5031 = vmul.f32 %v5017, 0.5
    %v5032 = vmul.f32 %v5018, 0.5
    %v5033 = vtanh.pop %v5031
    %v5034 = vtanh.pop %v5032
    %v5035 = vmul.f32 %v5033, 0.5
    %v5036 = vmul.f32 %v5034, 0.5
    %v5037 = vadd.f32 %v5035, 0.5
    %v5038 = vadd.f32 %v5036, 0.5
    %v5039 = vtanh.pop %v5019
    %v5040 = vtanh.pop %v5020
    %v5041 = vmul.f32 %v5021, 0.5
    %v5042 = vmul.f32 %v5022, 0.5
    %v5043 = vtanh.pop %v5041
    %v5044 = vtanh.pop %v5042
    %v5045 = vmul.f32 %v5043, 0.5
    %v5046 = vmul.f32 %v5044, 0.5
    %v5047 = vadd.f32 %v5045, 0.5
    %v5048 = vadd.f32 %v5046, 0.5
    %v5051 = vrot.slane %v4701, 6
    %v5052 = vrot.slane %v4702, 6
    %v5055 = vmul.f32 %v5037, %v5051
    %v5056 = vmul.f32 %v5038, %v5052
    %v5057 = vmul.f32 %v5029, %v5039
    %v5058 = vmul.f32 %v5030, %v5040
    %v5059 = vadd.f32 %v5055, %v5057
    %v5060 = vadd.f32 %v5056, %v5058
    %v5061 = vtanh.pop %v5059
    %v5062 = vtanh.pop %v5060
    %v5063 = vmul.f32 %v5047, %v5061
    %v5064 = vmul.f32 %v5048, %v5062
    %v5067 = vrot.slane %v5063, 2
    %v5068 = vrot.slane %v5064, 2
    %5071 = vmatprep.subr.mxu0 %v4124
    %5072 = vmatpush1.msra.mxu0 %v4123
    %5073 = vmatprep.subr.mxu0 %v4132
    %5074 = vmatpush1.msra.mxu0 %v4131
    %5075 = vmatprep.subr.mxu0 %v4140
    %5076 = vmatpush1.msra.mxu0 %v4139
    %5077 = vmatprep.subr.mxu0 %v4148
    %5078 = vmatpush1.msra.mxu0 %v4147
    %5079 = vmatprep.subr.mxu0 %v4156
    %5080 = vmatpush1.msra.mxu0 %v4155
    %5081 = vmatprep.subr.mxu0 %v4164
    %5082 = vmatpush1.msra.mxu0 %v4163
    %5083 = vmatprep.subr.mxu0 %v4172
    %5084 = vmatpush1.msra.mxu0 %v4171
    %5085 = vmatprep.subr.mxu0 %v4180
    %5086 = vmatpush1.msra.mxu0 %v4179
    %5087 = vmatprep.subr.mxu0 %v4188
    %5088 = vmatpush1.msra.mxu0 %v4187
    %5089 = vmatprep.subr.mxu0 %v4196
    %5090 = vmatpush1.msra.mxu0 %v4195
    %5091 = vmatprep.subr.mxu0 %v4204
    %5092 = vmatpush1.msra.mxu0 %v4203
    %5093 = vmatprep.subr.mxu0 %v4212
    %5094 = vmatpush1.msra.mxu0 %v4211
    %5095 = vmatprep.subr.mxu0 %v4220
    %5096 = vmatpush1.msra.mxu0 %v4219
    %5097 = vmatprep.subr.mxu0 %v4228
    %5098 = vmatpush1.msra.mxu0 %v4227
    %5099 = vmatprep.subr.mxu0 %v4236
    %5100 = vmatpush1.msra.mxu0 %v4235
    %5101 = vmatprep.subr.mxu0 %v4244
    %5102 = vmatpush1.msra.mxu0 %v4243
    %5103 = vmatprep.subr.mxu0 %v4252
    %5104 = vmatpush1.msra.mxu0 %v4251
    %5105 = vmatprep.subr.mxu0 %v4260
    %5106 = vmatpush1.msra.mxu0 %v4259
    %5107 = vmatprep.subr.mxu0 %v4268
    %5108 = vmatpush1.msra.mxu0 %v4267
    %5109 = vmatprep.subr.mxu0 %v4276
    %5110 = vmatpush1.msra.mxu0 %v4275
    %5111 = vmatprep.subr.mxu0 %v4284
    %5112 = vmatpush1.msra.mxu0 %v4283
    %5113 = vmatprep.subr.mxu0 %v4292
    %5114 = vmatpush1.msra.mxu0 %v4291
    %5115 = vmatprep.subr.mxu0 %v4300
    %5116 = vmatpush1.msra.mxu0 %v4299
    %5117 = vmatprep.subr.mxu0 %v4308
    %5118 = vmatpush1.msra.mxu0 %v4307
    %5119 = vmatprep.subr.mxu0 %v4316
    %5120 = vmatpush1.msra.mxu0 %v4315
    %5121 = vmatprep.subr.mxu0 %v4324
    %5122 = vmatpush1.msra.mxu0 %v4323
    %5123 = vmatprep.subr.mxu0 %v4332
    %5124 = vmatpush1.msra.mxu0 %v4331
    %5125 = vmatprep.subr.mxu0 %v4340
    %5126 = vmatpush1.msra.mxu0 %v4339
    %5127 = vmatprep.subr.mxu0 %v4348
    %5128 = vmatpush1.msra.mxu0 %v4347
    %5129 = vmatprep.subr.mxu0 %v4356
    %5130 = vmatpush1.msra.mxu0 %v4355
    %5131 = vmatprep.subr.mxu0 %v4364
    %5132 = vmatpush1.msra.mxu0 %v4363
    %5133 = vmatprep.subr.mxu0 %v4372
    %5134 = vmatpush1.msra.mxu0 %v4371
    %5135 = vmatprep.mubr.f32.mxu0 %v5068
    %5136 = vmatmul.mubr.f32.gmra.mrb[0].mxu0 %v5067
    %v5137 = vpop.f32.mrb[0].mxu0
    %v5138 = vadd.f32 0.0, %v5137
    %v5139 = vpop.f32.mrb[0].mxu0
    %v5140 = vadd.f32 0.0, %v5139
    %5141 = vdwg.mxu0
    %5142 = vmatprep.subr.mxu0 %v4126
    %5143 = vmatpush1.msra.mxu0 %v4125
    %5144 = vmatprep.subr.mxu0 %v4134
    %5145 = vmatpush1.msra.mxu0 %v4133
    %5146 = vmatprep.subr.mxu0 %v4142
    %5147 = vmatpush1.msra.mxu0 %v4141
    %5148 = vmatprep.subr.mxu0 %v4150
    %5149 = vmatpush1.msra.mxu0 %v4149
    %5150 = vmatprep.subr.mxu0 %v4158
    %5151 = vmatpush1.msra.mxu0 %v4157
    %5152 = vmatprep.subr.mxu0 %v4166
    %5153 = vmatpush1.msra.mxu0 %v4165
    %5154 = vmatprep.subr.mxu0 %v4174
    %5155 = vmatpush1.msra.mxu0 %v4173
    %5156 = vmatprep.subr.mxu0 %v4182
    %5157 = vmatpush1.msra.mxu0 %v4181
    %5158 = vmatprep.subr.mxu0 %v4190
    %5159 = vmatpush1.msra.mxu0 %v4189
    %5160 = vmatprep.subr.mxu0 %v4198
    %5161 = vmatpush1.msra.mxu0 %v4197
    %5162 = vmatprep.subr.mxu0 %v4206
    %5163 = vmatpush1.msra.mxu0 %v4205
    %5164 = vmatprep.subr.mxu0 %v4214
    %5165 = vmatpush1.msra.mxu0 %v4213
    %5166 = vmatprep.subr.mxu0 %v4222
    %5167 = vmatpush1.msra.mxu0 %v4221
    %5168 = vmatprep.subr.mxu0 %v4230
    %5169 = vmatpush1.msra.mxu0 %v4229
    %5170 = vmatprep.subr.mxu0 %v4238
    %5171 = vmatpush1.msra.mxu0 %v4237
    %5172 = vmatprep.subr.mxu0 %v4246
    %5173 = vmatpush1.msra.mxu0 %v4245
    %5174 = vmatprep.subr.mxu0 %v4254
    %5175 = vmatpush1.msra.mxu0 %v4253
    %5176 = vmatprep.subr.mxu0 %v4262
    %5177 = vmatpush1.msra.mxu0 %v4261
    %5178 = vmatprep.subr.mxu0 %v4270
    %5179 = vmatpush1.msra.mxu0 %v4269
    %5180 = vmatprep.subr.mxu0 %v4278
    %5181 = vmatpush1.msra.mxu0 %v4277
    %5182 = vmatprep.subr.mxu0 %v4286
    %5183 = vmatpush1.msra.mxu0 %v4285
    %5184 = vmatprep.subr.mxu0 %v4294
    %5185 = vmatpush1.msra.mxu0 %v4293
    %5186 = vmatprep.subr.mxu0 %v4302
    %5187 = vmatpush1.msra.mxu0 %v4301
    %5188 = vmatprep.subr.mxu0 %v4310
    %5189 = vmatpush1.msra.mxu0 %v4309
    %5190 = vmatprep.subr.mxu0 %v4318
    %5191 = vmatpush1.msra.mxu0 %v4317
    %5192 = vmatprep.subr.mxu0 %v4326
    %5193 = vmatpush1.msra.mxu0 %v4325
    %5194 = vmatprep.subr.mxu0 %v4334
    %5195 = vmatpush1.msra.mxu0 %v4333
    %5196 = vmatprep.subr.mxu0 %v4342
    %5197 = vmatpush1.msra.mxu0 %v4341
    %5198 = vmatprep.subr.mxu0 %v4350
    %5199 = vmatpush1.msra.mxu0 %v4349
    %5200 = vmatprep.subr.mxu0 %v4358
    %5201 = vmatpush1.msra.mxu0 %v4357
    %5202 = vmatprep.subr.mxu0 %v4366
    %5203 = vmatpush1.msra.mxu0 %v4365
    %5204 = vmatprep.subr.mxu0 %v4374
    %5205 = vmatpush1.msra.mxu0 %v4373
    %5206 = vmatprep.mubr.f32.mxu0 %v5068
    %5207 = vmatmul.mubr.f32.gmra.mrb[0].mxu0 %v5067
    %v5208 = vpop.f32.mrb[0].mxu0
    %v5209 = vadd.f32 0.0, %v5208
    %v5210 = vpop.f32.mrb[0].mxu0
    %v5211 = vadd.f32 0.0, %v5210
    %5212 = vdwg.mxu0
    %5213 = vmatprep.subr.mxu0 %v4128
    %5214 = vmatpush1.msra.mxu0 %v4127
    %5215 = vmatprep.subr.mxu0 %v4136
    %5216 = vmatpush1.msra.mxu0 %v4135
    %5217 = vmatprep.subr.mxu0 %v4144
    %5218 = vmatpush1.msra.mxu0 %v4143
    %5219 = vmatprep.subr.mxu0 %v4152
    %5220 = vmatpush1.msra.mxu0 %v4151
    %5221 = vmatprep.subr.mxu0 %v4160
    %5222 = vmatpush1.msra.mxu0 %v4159
    %5223 = vmatprep.subr.mxu0 %v4168
    %5224 = vmatpush1.msra.mxu0 %v4167
    %5225 = vmatprep.subr.mxu0 %v4176
    %5226 = vmatpush1.msra.mxu0 %v4175
    %5227 = vmatprep.subr.mxu0 %v4184
    %5228 = vmatpush1.msra.mxu0 %v4183
    %5229 = vmatprep.subr.mxu0 %v4192
    %5230 = vmatpush1.msra.mxu0 %v4191
    %5231 = vmatprep.subr.mxu0 %v4200
    %5232 = vmatpush1.msra.mxu0 %v4199
    %5233 = vmatprep.subr.mxu0 %v4208
    %5234 = vmatpush1.msra.mxu0 %v4207
    %5235 = vmatprep.subr.mxu0 %v4216
    %5236 = vmatpush1.msra.mxu0 %v4215
    %5237 = vmatprep.subr.mxu0 %v4224
    %5238 = vmatpush1.msra.mxu0 %v4223
    %5239 = vmatprep.subr.mxu0 %v4232
    %5240 = vmatpush1.msra.mxu0 %v4231
    %5241 = vmatprep.subr.mxu0 %v4240
    %5242 = vmatpush1.msra.mxu0 %v4239
    %5243 = vmatprep.subr.mxu0 %v4248
    %5244 = vmatpush1.msra.mxu0 %v4247
    %5245 = vmatprep.subr.mxu0 %v4256
    %5246 = vmatpush1.msra.mxu0 %v4255
    %5247 = vmatprep.subr.mxu0 %v4264
    %5248 = vmatpush1.msra.mxu0 %v4263
    %5249 = vmatprep.subr.mxu0 %v4272
    %5250 = vmatpush1.msra.mxu0 %v4271
    %5251 = vmatprep.subr.mxu0 %v4280
    %5252 = vmatpush1.msra.mxu0 %v4279
    %5253 = vmatprep.subr.mxu0 %v4288
    %5254 = vmatpush1.msra.mxu0 %v4287
    %5255 = vmatprep.subr.mxu0 %v4296
    %5256 = vmatpush1.msra.mxu0 %v4295
    %5257 = vmatprep.subr.mxu0 %v4304
    %5258 = vmatpush1.msra.mxu0 %v4303
    %5259 = vmatprep.subr.mxu0 %v4312
    %5260 = vmatpush1.msra.mxu0 %v4311
    %5261 = vmatprep.subr.mxu0 %v4320
    %5262 = vmatpush1.msra.mxu0 %v4319
    %5263 = vmatprep.subr.mxu0 %v4328
    %5264 = vmatpush1.msra.mxu0 %v4327
    %5265 = vmatprep.subr.mxu0 %v4336
    %5266 = vmatpush1.msra.mxu0 %v4335
    %5267 = vmatprep.subr.mxu0 %v4344
    %5268 = vmatpush1.msra.mxu0 %v4343
    %5269 = vmatprep.subr.mxu0 %v4352
    %5270 = vmatpush1.msra.mxu0 %v4351
    %5271 = vmatprep.subr.mxu0 %v4360
    %5272 = vmatpush1.msra.mxu0 %v4359
    %5273 = vmatprep.subr.mxu0 %v4368
    %5274 = vmatpush1.msra.mxu0 %v4367
    %5275 = vmatprep.subr.mxu0 %v4376
    %5276 = vmatpush1.msra.mxu0 %v4375
    %5277 = vmatprep.mubr.f32.mxu0 %v5068
    %5278 = vmatmul.mubr.f32.gmra.mrb[0].mxu0 %v5067
    %v5279 = vpop.f32.mrb[0].mxu0
    %v5280 = vadd.f32 0.0, %v5279
    %v5281 = vpop.f32.mrb[0].mxu0
    %v5282 = vadd.f32 0.0, %v5281
    %5283 = vdwg.mxu0
    %5284 = vmatprep.subr.mxu0 %v4130
    %5285 = vmatpush1.msra.mxu0 %v4129
    %5286 = vmatprep.subr.mxu0 %v4138
    %5287 = vmatpush1.msra.mxu0 %v4137
    %5288 = vmatprep.subr.mxu0 %v4146
    %5289 = vmatpush1.msra.mxu0 %v4145
    %5290 = vmatprep.subr.mxu0 %v4154
    %5291 = vmatpush1.msra.mxu0 %v4153
    %5292 = vmatprep.subr.mxu0 %v4162
    %5293 = vmatpush1.msra.mxu0 %v4161
    %5294 = vmatprep.subr.mxu0 %v4170
    %5295 = vmatpush1.msra.mxu0 %v4169
    %5296 = vmatprep.subr.mxu0 %v4178
    %5297 = vmatpush1.msra.mxu0 %v4177
    %5298 = vmatprep.subr.mxu0 %v4186
    %5299 = vmatpush1.msra.mxu0 %v4185
    %5300 = vmatprep.subr.mxu0 %v4194
    %5301 = vmatpush1.msra.mxu0 %v4193
    %5302 = vmatprep.subr.mxu0 %v4202
    %5303 = vmatpush1.msra.mxu0 %v4201
    %5304 = vmatprep.subr.mxu0 %v4210
    %5305 = vmatpush1.msra.mxu0 %v4209
    %5306 = vmatprep.subr.mxu0 %v4218
    %5307 = vmatpush1.msra.mxu0 %v4217
    %5308 = vmatprep.subr.mxu0 %v4226
    %5309 = vmatpush1.msra.mxu0 %v4225
    %5310 = vmatprep.subr.mxu0 %v4234
    %5311 = vmatpush1.msra.mxu0 %v4233
    %5312 = vmatprep.subr.mxu0 %v4242
    %5313 = vmatpush1.msra.mxu0 %v4241
    %5314 = vmatprep.subr.mxu0 %v4250
    %5315 = vmatpush1.msra.mxu0 %v4249
    %5316 = vmatprep.subr.mxu0 %v4258
    %5317 = vmatpush1.msra.mxu0 %v4257
    %5318 = vmatprep.subr.mxu0 %v4266
    %5319 = vmatpush1.msra.mxu0 %v4265
    %5320 = vmatprep.subr.mxu0 %v4274
    %5321 = vmatpush1.msra.mxu0 %v4273
    %5322 = vmatprep.subr.mxu0 %v4282
    %5323 = vmatpush1.msra.mxu0 %v4281
    %5324 = vmatprep.subr.mxu0 %v4290
    %5325 = vmatpush1.msra.mxu0 %v4289
    %5326 = vmatprep.subr.mxu0 %v4298
    %5327 = vmatpush1.msra.mxu0 %v4297
    %5328 = vmatprep.subr.mxu0 %v4306
    %5329 = vmatpush1.msra.mxu0 %v4305
    %5330 = vmatprep.subr.mxu0 %v4314
    %5331 = vmatpush1.msra.mxu0 %v4313
    %5332 = vmatprep.subr.mxu0 %v4322
    %5333 = vmatpush1.msra.mxu0 %v4321
    %5334 = vmatprep.subr.mxu0 %v4330
    %5335 = vmatpush1.msra.mxu0 %v4329
    %5336 = vmatprep.subr.mxu0 %v4338
    %5337 = vmatpush1.msra.mxu0 %v4337
    %5338 = vmatprep.subr.mxu0 %v4346
    %5339 = vmatpush1.msra.mxu0 %v4345
    %5340 = vmatprep.subr.mxu0 %v4354
    %5341 = vmatpush1.msra.mxu0 %v4353
    %5342 = vmatprep.subr.mxu0 %v4362
    %5343 = vmatpush1.msra.mxu0 %v4361
    %5344 = vmatprep.subr.mxu0 %v4370
    %5345 = vmatpush1.msra.mxu0 %v4369
    %5346 = vmatprep.subr.mxu0 %v4378
    %5347 = vmatpush1.msra.mxu0 %v4377
    %5348 = vmatprep.mubr.f32.mxu0 %v5068
    %5349 = vmatmul.mubr.f32.gmra.mrb[0].mxu0 %v5067
    %v5350 = vpop.f32.mrb[0].mxu0
    %v5351 = vadd.f32 0.0, %v5350
    %v5352 = vpop.f32.mrb[0].mxu0
    %v5353 = vadd.f32 0.0, %v5352
    %5354 = vdwg.mxu0
    %v5363 = vrot.slane %v5138, 4
    %v5364 = vrot.slane %v5140, 4
    %v5365 = vrot.slane %v5209, 4
    %v5366 = vrot.slane %v5211, 4
    %v5367 = vrot.slane %v5280, 4
    %v5368 = vrot.slane %v5282, 4
    %v5369 = vrot.slane %v5351, 4
    %v5370 = vrot.slane %v5353, 4
    %v5379 = vadd.f32 %v3882, %v5363
    %v5380 = vadd.f32 %v3884, %v5364
    %v5381 = vadd.f32 %v3959, %v5365
    %v5382 = vadd.f32 %v3961, %v5366
    %v5383 = vadd.f32 %v4036, %v5367
    %v5384 = vadd.f32 %v4038, %v5368
    %v5385 = vadd.f32 %v4113, %v5369
    %v5386 = vadd.f32 %v4115, %v5370
    %v5387 = vmul.f32 %v5379, 0.5
    %v5388 = vmul.f32 %v5380, 0.5
    %v5389 = vtanh.pop %v5387
    %v5390 = vtanh.pop %v5388
    %v5391 = vmul.f32 %v5389, 0.5
    %v5392 = vmul.f32 %v5390, 0.5
    %v5393 = vadd.f32 %v5391, 0.5
    %v5394 = vadd.f32 %v5392, 0.5
    %v5395 = vmul.f32 %v5381, 0.5
    %v5396 = vmul.f32 %v5382, 0.5
    %v5397 = vtanh.pop %v5395
    %v5398 = vtanh.pop %v5396
    %v5399 = vmul.f32 %v5397, 0.5
    %v5400 = vmul.f32 %v5398, 0.5
    %v5401 = vadd.f32 %v5399, 0.5
    %v5402 = vadd.f32 %v5400, 0.5
    %v5403 = vtanh.pop %v5383
    %v5404 = vtanh.pop %v5384
    %v5405 = vmul.f32 %v5385, 0.5
    %v5406 = vmul.f32 %v5386, 0.5
    %v5407 = vtanh.pop %v5405
    %v5408 = vtanh.pop %v5406
    %v5409 = vmul.f32 %v5407, 0.5
    %v5410 = vmul.f32 %v5408, 0.5
    %v5411 = vadd.f32 %v5409, 0.5
    %v5412 = vadd.f32 %v5410, 0.5
    %v5415 = vrot.slane %v5059, 6
    %v5416 = vrot.slane %v5060, 6
    %v5419 = vmul.f32 %v5401, %v5415
    %v5420 = vmul.f32 %v5402, %v5416
    %v5421 = vmul.f32 %v5393, %v5403
    %v5422 = vmul.f32 %v5394, %v5404
    %v5423 = vadd.f32 %v5419, %v5421
    %v5424 = vadd.f32 %v5420, %v5422
    %v5425 = vtanh.pop %v5423
    %v5426 = vtanh.pop %v5424
    %v5427 = vmul.f32 %v5411, %v5425
    %v5428 = vmul.f32 %v5412, %v5426
    %v5431 = vrot.slane %v5427, 4
    %v5432 = vrot.slane %v5428, 4
    %5435 = vmatprep.subr.mxu0 %v4124
    %5436 = vmatpush1.msra.mxu0 %v4123
    %5437 = vmatprep.subr.mxu0 %v4132
    %5438 = vmatpush1.msra.mxu0 %v4131
    %5439 = vmatprep.subr.mxu0 %v4140
    %5440 = vmatpush1.msra.mxu0 %v4139
    %5441 = vmatprep.subr.mxu0 %v4148
    %5442 = vmatpush1.msra.mxu0 %v4147
    %5443 = vmatprep.subr.mxu0 %v4156
    %5444 = vmatpush1.msra.mxu0 %v4155
    %5445 = vmatprep.subr.mxu0 %v4164
    %5446 = vmatpush1.msra.mxu0 %v4163
    %5447 = vmatprep.subr.mxu0 %v4172
    %5448 = vmatpush1.msra.mxu0 %v4171
    %5449 = vmatprep.subr.mxu0 %v4180
    %5450 = vmatpush1.msra.mxu0 %v4179
    %5451 = vmatprep.subr.mxu0 %v4188
    %5452 = vmatpush1.msra.mxu0 %v4187
    %5453 = vmatprep.subr.mxu0 %v4196
    %5454 = vmatpush1.msra.mxu0 %v4195
    %5455 = vmatprep.subr.mxu0 %v4204
    %5456 = vmatpush1.msra.mxu0 %v4203
    %5457 = vmatprep.subr.mxu0 %v4212
    %5458 = vmatpush1.msra.mxu0 %v4211
    %5459 = vmatprep.subr.mxu0 %v4220
    %5460 = vmatpush1.msra.mxu0 %v4219
    %5461 = vmatprep.subr.mxu0 %v4228
    %5462 = vmatpush1.msra.mxu0 %v4227
    %5463 = vmatprep.subr.mxu0 %v4236
    %5464 = vmatpush1.msra.mxu0 %v4235
    %5465 = vmatprep.subr.mxu0 %v4244
    %5466 = vmatpush1.msra.mxu0 %v4243
    %5467 = vmatprep.subr.mxu0 %v4252
    %5468 = vmatpush1.msra.mxu0 %v4251
    %5469 = vmatprep.subr.mxu0 %v4260
    %5470 = vmatpush1.msra.mxu0 %v4259
    %5471 = vmatprep.subr.mxu0 %v4268
    %5472 = vmatpush1.msra.mxu0 %v4267
    %5473 = vmatprep.subr.mxu0 %v4276
    %5474 = vmatpush1.msra.mxu0 %v4275
    %5475 = vmatprep.subr.mxu0 %v4284
    %5476 = vmatpush1.msra.mxu0 %v4283
    %5477 = vmatprep.subr.mxu0 %v4292
    %5478 = vmatpush1.msra.mxu0 %v4291
    %5479 = vmatprep.subr.mxu0 %v4300
    %5480 = vmatpush1.msra.mxu0 %v4299
    %5481 = vmatprep.subr.mxu0 %v4308
    %5482 = vmatpush1.msra.mxu0 %v4307
    %5483 = vmatprep.subr.mxu0 %v4316
    %5484 = vmatpush1.msra.mxu0 %v4315
    %5485 = vmatprep.subr.mxu0 %v4324
    %5486 = vmatpush1.msra.mxu0 %v4323
    %5487 = vmatprep.subr.mxu0 %v4332
    %5488 = vmatpush1.msra.mxu0 %v4331
    %5489 = vmatprep.subr.mxu0 %v4340
    %5490 = vmatpush1.msra.mxu0 %v4339
    %5491 = vmatprep.subr.mxu0 %v4348
    %5492 = vmatpush1.msra.mxu0 %v4347
    %5493 = vmatprep.subr.mxu0 %v4356
    %5494 = vmatpush1.msra.mxu0 %v4355
    %5495 = vmatprep.subr.mxu0 %v4364
    %5496 = vmatpush1.msra.mxu0 %v4363
    %5497 = vmatprep.subr.mxu0 %v4372
    %5498 = vmatpush1.msra.mxu0 %v4371
    %5499 = vmatprep.mubr.f32.mxu0 %v5432
    %5500 = vmatmul.mubr.f32.gmra.mrb[0].mxu0 %v5431
    %v5501 = vpop.f32.mrb[0].mxu0
    %v5502 = vadd.f32 0.0, %v5501
    %v5503 = vpop.f32.mrb[0].mxu0
    %v5504 = vadd.f32 0.0, %v5503
    %5505 = vdwg.mxu0
    %5506 = vmatprep.subr.mxu0 %v4126
    %5507 = vmatpush1.msra.mxu0 %v4125
    %5508 = vmatprep.subr.mxu0 %v4134
    %5509 = vmatpush1.msra.mxu0 %v4133
    %5510 = vmatprep.subr.mxu0 %v4142
    %5511 = vmatpush1.msra.mxu0 %v4141
    %5512 = vmatprep.subr.mxu0 %v4150
    %5513 = vmatpush1.msra.mxu0 %v4149
    %5514 = vmatprep.subr.mxu0 %v4158
    %5515 = vmatpush1.msra.mxu0 %v4157
    %5516 = vmatprep.subr.mxu0 %v4166
    %5517 = vmatpush1.msra.mxu0 %v4165
    %5518 = vmatprep.subr.mxu0 %v4174
    %5519 = vmatpush1.msra.mxu0 %v4173
    %5520 = vmatprep.subr.mxu0 %v4182
    %5521 = vmatpush1.msra.mxu0 %v4181
    %5522 = vmatprep.subr.mxu0 %v4190
    %5523 = vmatpush1.msra.mxu0 %v4189
    %5524 = vmatprep.subr.mxu0 %v4198
    %5525 = vmatpush1.msra.mxu0 %v4197
    %5526 = vmatprep.subr.mxu0 %v4206
    %5527 = vmatpush1.msra.mxu0 %v4205
    %5528 = vmatprep.subr.mxu0 %v4214
    %5529 = vmatpush1.msra.mxu0 %v4213
    %5530 = vmatprep.subr.mxu0 %v4222
    %5531 = vmatpush1.msra.mxu0 %v4221
    %5532 = vmatprep.subr.mxu0 %v4230
    %5533 = vmatpush1.msra.mxu0 %v4229
    %5534 = vmatprep.subr.mxu0 %v4238
    %5535 = vmatpush1.msra.mxu0 %v4237
    %5536 = vmatprep.subr.mxu0 %v4246
    %5537 = vmatpush1.msra.mxu0 %v4245
    %5538 = vmatprep.subr.mxu0 %v4254
    %5539 = vmatpush1.msra.mxu0 %v4253
    %5540 = vmatprep.subr.mxu0 %v4262
    %5541 = vmatpush1.msra.mxu0 %v4261
    %5542 = vmatprep.subr.mxu0 %v4270
    %5543 = vmatpush1.msra.mxu0 %v4269
    %5544 = vmatprep.subr.mxu0 %v4278
    %5545 = vmatpush1.msra.mxu0 %v4277
    %5546 = vmatprep.subr.mxu0 %v4286
    %5547 = vmatpush1.msra.mxu0 %v4285
    %5548 = vmatprep.subr.mxu0 %v4294
    %5549 = vmatpush1.msra.mxu0 %v4293
    %5550 = vmatprep.subr.mxu0 %v4302
    %5551 = vmatpush1.msra.mxu0 %v4301
    %5552 = vmatprep.subr.mxu0 %v4310
    %5553 = vmatpush1.msra.mxu0 %v4309
    %5554 = vmatprep.subr.mxu0 %v4318
    %5555 = vmatpush1.msra.mxu0 %v4317
    %5556 = vmatprep.subr.mxu0 %v4326
    %5557 = vmatpush1.msra.mxu0 %v4325
    %5558 = vmatprep.subr.mxu0 %v4334
    %5559 = vmatpush1.msra.mxu0 %v4333
    %5560 = vmatprep.subr.mxu0 %v4342
    %5561 = vmatpush1.msra.mxu0 %v4341
    %5562 = vmatprep.subr.mxu0 %v4350
    %5563 = vmatpush1.msra.mxu0 %v4349
    %5564 = vmatprep.subr.mxu0 %v4358
    %5565 = vmatpush1.msra.mxu0 %v4357
    %5566 = vmatprep.subr.mxu0 %v4366
    %5567 = vmatpush1.msra.mxu0 %v4365
    %5568 = vmatprep.subr.mxu0 %v4374
    %5569 = vmatpush1.msra.mxu0 %v4373
    %5570 = vmatprep.mubr.f32.mxu0 %v5432
    %5571 = vmatmul.mubr.f32.gmra.mrb[0].mxu0 %v5431
    %v5572 = vpop.f32.mrb[0].mxu0
    %v5573 = vadd.f32 0.0, %v5572
    %v5574 = vpop.f32.mrb[0].mxu0
    %v5575 = vadd.f32 0.0, %v5574
    %5576 = vdwg.mxu0
    %5577 = vmatprep.subr.mxu0 %v4128
    %5578 = vmatpush1.msra.mxu0 %v4127
    %5579 = vmatprep.subr.mxu0 %v4136
    %5580 = vmatpush1.msra.mxu0 %v4135
    %5581 = vmatprep.subr.mxu0 %v4144
    %5582 = vmatpush1.msra.mxu0 %v4143
    %5583 = vmatprep.subr.mxu0 %v4152
    %5584 = vmatpush1.msra.mxu0 %v4151
    %5585 = vmatprep.subr.mxu0 %v4160
    %5586 = vmatpush1.msra.mxu0 %v4159
    %5587 = vmatprep.subr.mxu0 %v4168
    %5588 = vmatpush1.msra.mxu0 %v4167
    %5589 = vmatprep.subr.mxu0 %v4176
    %5590 = vmatpush1.msra.mxu0 %v4175
    %5591 = vmatprep.subr.mxu0 %v4184
    %5592 = vmatpush1.msra.mxu0 %v4183
    %5593 = vmatprep.subr.mxu0 %v4192
    %5594 = vmatpush1.msra.mxu0 %v4191
    %5595 = vmatprep.subr.mxu0 %v4200
    %5596 = vmatpush1.msra.mxu0 %v4199
    %5597 = vmatprep.subr.mxu0 %v4208
    %5598 = vmatpush1.msra.mxu0 %v4207
    %5599 = vmatprep.subr.mxu0 %v4216
    %5600 = vmatpush1.msra.mxu0 %v4215
    %5601 = vmatprep.subr.mxu0 %v4224
    %5602 = vmatpush1.msra.mxu0 %v4223
    %5603 = vmatprep.subr.mxu0 %v4232
    %5604 = vmatpush1.msra.mxu0 %v4231
    %5605 = vmatprep.subr.mxu0 %v4240
    %5606 = vmatpush1.msra.mxu0 %v4239
    %5607 = vmatprep.subr.mxu0 %v4248
    %5608 = vmatpush1.msra.mxu0 %v4247
    %5609 = vmatprep.subr.mxu0 %v4256
    %5610 = vmatpush1.msra.mxu0 %v4255
    %5611 = vmatprep.subr.mxu0 %v4264
    %5612 = vmatpush1.msra.mxu0 %v4263
    %5613 = vmatprep.subr.mxu0 %v4272
    %5614 = vmatpush1.msra.mxu0 %v4271
    %5615 = vmatprep.subr.mxu0 %v4280
    %5616 = vmatpush1.msra.mxu0 %v4279
    %5617 = vmatprep.subr.mxu0 %v4288
    %5618 = vmatpush1.msra.mxu0 %v4287
    %5619 = vmatprep.subr.mxu0 %v4296
    %5620 = vmatpush1.msra.mxu0 %v4295
    %5621 = vmatprep.subr.mxu0 %v4304
    %5622 = vmatpush1.msra.mxu0 %v4303
    %5623 = vmatprep.subr.mxu0 %v4312
    %5624 = vmatpush1.msra.mxu0 %v4311
    %5625 = vmatprep.subr.mxu0 %v4320
    %5626 = vmatpush1.msra.mxu0 %v4319
    %5627 = vmatprep.subr.mxu0 %v4328
    %5628 = vmatpush1.msra.mxu0 %v4327
    %5629 = vmatprep.subr.mxu0 %v4336
    %5630 = vmatpush1.msra.mxu0 %v4335
    %5631 = vmatprep.subr.mxu0 %v4344
    %5632 = vmatpush1.msra.mxu0 %v4343
    %5633 = vmatprep.subr.mxu0 %v4352
    %5634 = vmatpush1.msra.mxu0 %v4351
    %5635 = vmatprep.subr.mxu0 %v4360
    %5636 = vmatpush1.msra.mxu0 %v4359
    %5637 = vmatprep.subr.mxu0 %v4368
    %5638 = vmatpush1.msra.mxu0 %v4367
    %5639 = vmatprep.subr.mxu0 %v4376
    %5640 = vmatpush1.msra.mxu0 %v4375
    %5641 = vmatprep.mubr.f32.mxu0 %v5432
    %5642 = vmatmul.mubr.f32.gmra.mrb[0].mxu0 %v5431
    %v5643 = vpop.f32.mrb[0].mxu0
    %v5644 = vadd.f32 0.0, %v5643
    %v5645 = vpop.f32.mrb[0].mxu0
    %v5646 = vadd.f32 0.0, %v5645
    %5647 = vdwg.mxu0
    %5648 = vmatprep.subr.mxu0 %v4130
    %5649 = vmatpush1.msra.mxu0 %v4129
    %5650 = vmatprep.subr.mxu0 %v4138
    %5651 = vmatpush1.msra.mxu0 %v4137
    %5652 = vmatprep.subr.mxu0 %v4146
    %5653 = vmatpush1.msra.mxu0 %v4145
    %5654 = vmatprep.subr.mxu0 %v4154
    %5655 = vmatpush1.msra.mxu0 %v4153
    %5656 = vmatprep.subr.mxu0 %v4162
    %5657 = vmatpush1.msra.mxu0 %v4161
    %5658 = vmatprep.subr.mxu0 %v4170
    %5659 = vmatpush1.msra.mxu0 %v4169
    %5660 = vmatprep.subr.mxu0 %v4178
    %5661 = vmatpush1.msra.mxu0 %v4177
    %5662 = vmatprep.subr.mxu0 %v4186
    %5663 = vmatpush1.msra.mxu0 %v4185
    %5664 = vmatprep.subr.mxu0 %v4194
    %5665 = vmatpush1.msra.mxu0 %v4193
    %5666 = vmatprep.subr.mxu0 %v4202
    %5667 = vmatpush1.msra.mxu0 %v4201
    %5668 = vmatprep.subr.mxu0 %v4210
    %5669 = vmatpush1.msra.mxu0 %v4209
    %5670 = vmatprep.subr.mxu0 %v4218
    %5671 = vmatpush1.msra.mxu0 %v4217
    %5672 = vmatprep.subr.mxu0 %v4226
    %5673 = vmatpush1.msra.mxu0 %v4225
    %5674 = vmatprep.subr.mxu0 %v4234
    %5675 = vmatpush1.msra.mxu0 %v4233
    %5676 = vmatprep.subr.mxu0 %v4242
    %5677 = vmatpush1.msra.mxu0 %v4241
    %5678 = vmatprep.subr.mxu0 %v4250
    %5679 = vmatpush1.msra.mxu0 %v4249
    %5680 = vmatprep.subr.mxu0 %v4258
    %5681 = vmatpush1.msra.mxu0 %v4257
    %5682 = vmatprep.subr.mxu0 %v4266
    %5683 = vmatpush1.msra.mxu0 %v4265
    %5684 = vmatprep.subr.mxu0 %v4274
    %5685 = vmatpush1.msra.mxu0 %v4273
    %5686 = vmatprep.subr.mxu0 %v4282
    %5687 = vmatpush1.msra.mxu0 %v4281
    %5688 = vmatprep.subr.mxu0 %v4290
    %5689 = vmatpush1.msra.mxu0 %v4289
    %5690 = vmatprep.subr.mxu0 %v4298
    %5691 = vmatpush1.msra.mxu0 %v4297
    %5692 = vmatprep.subr.mxu0 %v4306
    %5693 = vmatpush1.msra.mxu0 %v4305
    %5694 = vmatprep.subr.mxu0 %v4314
    %5695 = vmatpush1.msra.mxu0 %v4313
    %5696 = vmatprep.subr.mxu0 %v4322
    %5697 = vmatpush1.msra.mxu0 %v4321
    %5698 = vmatprep.subr.mxu0 %v4330
    %5699 = vmatpush1.msra.mxu0 %v4329
    %5700 = vmatprep.subr.mxu0 %v4338
    %5701 = vmatpush1.msra.mxu0 %v4337
    %5702 = vmatprep.subr.mxu0 %v4346
    %5703 = vmatpush1.msra.mxu0 %v4345
    %5704 = vmatprep.subr.mxu0 %v4354
    %5705 = vmatpush1.msra.mxu0 %v4353
    %5706 = vmatprep.subr.mxu0 %v4362
    %5707 = vmatpush1.msra.mxu0 %v4361
    %5708 = vmatprep.subr.mxu0 %v4370
    %5709 = vmatpush1.msra.mxu0 %v4369
    %5710 = vmatprep.subr.mxu0 %v4378
    %5711 = vmatpush1.msra.mxu0 %v4377
    %5712 = vmatprep.mubr.f32.mxu0 %v5432
    %5713 = vmatmul.mubr.f32.gmra.mrb[0].mxu0 %v5431
    %v5714 = vpop.f32.mrb[0].mxu0
    %v5715 = vadd.f32 0.0, %v5714
    %v5716 = vpop.f32.mrb[0].mxu0
    %v5717 = vadd.f32 0.0, %v5716
    %5718 = vdwg.mxu0
    %v5727 = vrot.slane %v5502, 2
    %v5728 = vrot.slane %v5504, 2
    %v5729 = vrot.slane %v5573, 2
    %v5730 = vrot.slane %v5575, 2
    %v5731 = vrot.slane %v5644, 2
    %v5732 = vrot.slane %v5646, 2
    %v5733 = vrot.slane %v5715, 2
    %v5734 = vrot.slane %v5717, 2
    %v5743 = vadd.f32 %v3882, %v5727
    %v5744 = vadd.f32 %v3884, %v5728
    %v5745 = vadd.f32 %v3959, %v5729
    %v5746 = vadd.f32 %v3961, %v5730
    %v5747 = vadd.f32 %v4036, %v5731
    %v5748 = vadd.f32 %v4038, %v5732
    %v5749 = vadd.f32 %v4113, %v5733
    %v5750 = vadd.f32 %v4115, %v5734
    %v5751 = vmul.f32 %v5743, 0.5
    %v5752 = vmul.f32 %v5744, 0.5
    %v5753 = vtanh.pop %v5751
    %v5754 = vtanh.pop %v5752
    %v5755 = vmul.f32 %v5753, 0.5
    %v5756 = vmul.f32 %v5754, 0.5
    %v5757 = vadd.f32 %v5755, 0.5
    %v5758 = vadd.f32 %v5756, 0.5
    %v5759 = vmul.f32 %v5745, 0.5
    %v5760 = vmul.f32 %v5746, 0.5
    %v5761 = vtanh.pop %v5759
    %v5762 = vtanh.pop %v5760
    %v5763 = vmul.f32 %v5761, 0.5
    %v5764 = vmul.f32 %v5762, 0.5
    %v5765 = vadd.f32 %v5763, 0.5
    %v5766 = vadd.f32 %v5764, 0.5
    %v5767 = vtanh.pop %v5747
    %v5768 = vtanh.pop %v5748
    %v5769 = vmul.f32 %v5749, 0.5
    %v5770 = vmul.f32 %v5750, 0.5
    %v5771 = vtanh.pop %v5769
    %v5772 = vtanh.pop %v5770
    %v5773 = vmul.f32 %v5771, 0.5
    %v5774 = vmul.f32 %v5772, 0.5
    %v5775 = vadd.f32 %v5773, 0.5
    %v5776 = vadd.f32 %v5774, 0.5
    %v5779 = vrot.slane %v5423, 6
    %v5780 = vrot.slane %v5424, 6
    %v5783 = vmul.f32 %v5765, %v5779
    %v5784 = vmul.f32 %v5766, %v5780
    %v5785 = vmul.f32 %v5757, %v5767
    %v5786 = vmul.f32 %v5758, %v5768
    %v5787 = vadd.f32 %v5783, %v5785
    %v5788 = vadd.f32 %v5784, %v5786
    %v5789 = vtanh.pop %v5787
    %v5790 = vtanh.pop %v5788
    %v5791 = vmul.f32 %v5775, %v5789
    %v5792 = vmul.f32 %v5776, %v5790
    %v5795 = vrot.slane %v5791, 6
    %v5796 = vrot.slane %v5792, 6
    %5799 = vmatprep.subr.mxu0 %v4124
    %5800 = vmatpush1.msra.mxu0 %v4123
    %5801 = vmatprep.subr.mxu0 %v4132
    %5802 = vmatpush1.msra.mxu0 %v4131
    %5803 = vmatprep.subr.mxu0 %v4140
    %5804 = vmatpush1.msra.mxu0 %v4139
    %5805 = vmatprep.subr.mxu0 %v4148
    %5806 = vmatpush1.msra.mxu0 %v4147
    %5807 = vmatprep.subr.mxu0 %v4156
    %5808 = vmatpush1.msra.mxu0 %v4155
    %5809 = vmatprep.subr.mxu0 %v4164
    %5810 = vmatpush1.msra.mxu0 %v4163
    %5811 = vmatprep.subr.mxu0 %v4172
    %5812 = vmatpush1.msra.mxu0 %v4171
    %5813 = vmatprep.subr.mxu0 %v4180
    %5814 = vmatpush1.msra.mxu0 %v4179
    %5815 = vmatprep.subr.mxu0 %v4188
    %5816 = vmatpush1.msra.mxu0 %v4187
    %5817 = vmatprep.subr.mxu0 %v4196
    %5818 = vmatpush1.msra.mxu0 %v4195
    %5819 = vmatprep.subr.mxu0 %v4204
    %5820 = vmatpush1.msra.mxu0 %v4203
    %5821 = vmatprep.subr.mxu0 %v4212
    %5822 = vmatpush1.msra.mxu0 %v4211
    %5823 = vmatprep.subr.mxu0 %v4220
    %5824 = vmatpush1.msra.mxu0 %v4219
    %5825 = vmatprep.subr.mxu0 %v4228
    %5826 = vmatpush1.msra.mxu0 %v4227
    %5827 = vmatprep.subr.mxu0 %v4236
    %5828 = vmatpush1.msra.mxu0 %v4235
    %5829 = vmatprep.subr.mxu0 %v4244
    %5830 = vmatpush1.msra.mxu0 %v4243
    %5831 = vmatprep.subr.mxu0 %v4252
    %5832 = vmatpush1.msra.mxu0 %v4251
    %5833 = vmatprep.subr.mxu0 %v4260
    %5834 = vmatpush1.msra.mxu0 %v4259
    %5835 = vmatprep.subr.mxu0 %v4268
    %5836 = vmatpush1.msra.mxu0 %v4267
    %5837 = vmatprep.subr.mxu0 %v4276
    %5838 = vmatpush1.msra.mxu0 %v4275
    %5839 = vmatprep.subr.mxu0 %v4284
    %5840 = vmatpush1.msra.mxu0 %v4283
    %5841 = vmatprep.subr.mxu0 %v4292
    %5842 = vmatpush1.msra.mxu0 %v4291
    %5843 = vmatprep.subr.mxu0 %v4300
    %5844 = vmatpush1.msra.mxu0 %v4299
    %5845 = vmatprep.subr.mxu0 %v4308
    %5846 = vmatpush1.msra.mxu0 %v4307
    %5847 = vmatprep.subr.mxu0 %v4316
    %5848 = vmatpush1.msra.mxu0 %v4315
    %5849 = vmatprep.subr.mxu0 %v4324
    %5850 = vmatpush1.msra.mxu0 %v4323
    %5851 = vmatprep.subr.mxu0 %v4332
    %5852 = vmatpush1.msra.mxu0 %v4331
    %5853 = vmatprep.subr.mxu0 %v4340
    %5854 = vmatpush1.msra.mxu0 %v4339
    %5855 = vmatprep.subr.mxu0 %v4348
    %5856 = vmatpush1.msra.mxu0 %v4347
    %5857 = vmatprep.subr.mxu0 %v4356
    %5858 = vmatpush1.msra.mxu0 %v4355
    %5859 = vmatprep.subr.mxu0 %v4364
    %5860 = vmatpush1.msra.mxu0 %v4363
    %5861 = vmatprep.subr.mxu0 %v4372
    %5862 = vmatpush1.msra.mxu0 %v4371
    %5863 = vmatprep.mubr.f32.mxu0 %v5796
    %5864 = vmatmul.mubr.f32.gmra.mrb[0].mxu0 %v5795
    %v5865 = vpop.f32.mrb[0].mxu0
    %v5866 = vadd.f32 0.0, %v5865
    %v5867 = vpop.f32.mrb[0].mxu0
    %v5868 = vadd.f32 0.0, %v5867
    %5869 = vdwg.mxu0
    %5870 = vmatprep.subr.mxu0 %v4126
    %5871 = vmatpush1.msra.mxu0 %v4125
    %5872 = vmatprep.subr.mxu0 %v4134
    %5873 = vmatpush1.msra.mxu0 %v4133
    %5874 = vmatprep.subr.mxu0 %v4142
    %5875 = vmatpush1.msra.mxu0 %v4141
    %5876 = vmatprep.subr.mxu0 %v4150
    %5877 = vmatpush1.msra.mxu0 %v4149
    %5878 = vmatprep.subr.mxu0 %v4158
    %5879 = vmatpush1.msra.mxu0 %v4157
    %5880 = vmatprep.subr.mxu0 %v4166
    %5881 = vmatpush1.msra.mxu0 %v4165
    %5882 = vmatprep.subr.mxu0 %v4174
    %5883 = vmatpush1.msra.mxu0 %v4173
    %5884 = vmatprep.subr.mxu0 %v4182
    %5885 = vmatpush1.msra.mxu0 %v4181
    %5886 = vmatprep.subr.mxu0 %v4190
    %5887 = vmatpush1.msra.mxu0 %v4189
    %5888 = vmatprep.subr.mxu0 %v4198
    %5889 = vmatpush1.msra.mxu0 %v4197
    %5890 = vmatprep.subr.mxu0 %v4206
    %5891 = vmatpush1.msra.mxu0 %v4205
    %5892 = vmatprep.subr.mxu0 %v4214
    %5893 = vmatpush1.msra.mxu0 %v4213
    %5894 = vmatprep.subr.mxu0 %v4222
    %5895 = vmatpush1.msra.mxu0 %v4221
    %5896 = vmatprep.subr.mxu0 %v4230
    %5897 = vmatpush1.msra.mxu0 %v4229
    %5898 = vmatprep.subr.mxu0 %v4238
    %5899 = vmatpush1.msra.mxu0 %v4237
    %5900 = vmatprep.subr.mxu0 %v4246
    %5901 = vmatpush1.msra.mxu0 %v4245
    %5902 = vmatprep.subr.mxu0 %v4254
    %5903 = vmatpush1.msra.mxu0 %v4253
    %5904 = vmatprep.subr.mxu0 %v4262
    %5905 = vmatpush1.msra.mxu0 %v4261
    %5906 = vmatprep.subr.mxu0 %v4270
    %5907 = vmatpush1.msra.mxu0 %v4269
    %5908 = vmatprep.subr.mxu0 %v4278
    %5909 = vmatpush1.msra.mxu0 %v4277
    %5910 = vmatprep.subr.mxu0 %v4286
    %5911 = vmatpush1.msra.mxu0 %v4285
    %5912 = vmatprep.subr.mxu0 %v4294
    %5913 = vmatpush1.msra.mxu0 %v4293
    %5914 = vmatprep.subr.mxu0 %v4302
    %5915 = vmatpush1.msra.mxu0 %v4301
    %5916 = vmatprep.subr.mxu0 %v4310
    %5917 = vmatpush1.msra.mxu0 %v4309
    %5918 = vmatprep.subr.mxu0 %v4318
    %5919 = vmatpush1.msra.mxu0 %v4317
    %5920 = vmatprep.subr.mxu0 %v4326
    %5921 = vmatpush1.msra.mxu0 %v4325
    %5922 = vmatprep.subr.mxu0 %v4334
    %5923 = vmatpush1.msra.mxu0 %v4333
    %5924 = vmatprep.subr.mxu0 %v4342
    %5925 = vmatpush1.msra.mxu0 %v4341
    %5926 = vmatprep.subr.mxu0 %v4350
    %5927 = vmatpush1.msra.mxu0 %v4349
    %5928 = vmatprep.subr.mxu0 %v4358
    %5929 = vmatpush1.msra.mxu0 %v4357
    %5930 = vmatprep.subr.mxu0 %v4366
    %5931 = vmatpush1.msra.mxu0 %v4365
    %5932 = vmatprep.subr.mxu0 %v4374
    %5933 = vmatpush1.msra.mxu0 %v4373
    %5934 = vmatprep.mubr.f32.mxu0 %v5796
    %5935 = vmatmul.mubr.f32.gmra.mrb[0].mxu0 %v5795
    %v5936 = vpop.f32.mrb[0].mxu0
    %v5937 = vadd.f32 0.0, %v5936
    %v5938 = vpop.f32.mrb[0].mxu0
    %v5939 = vadd.f32 0.0, %v5938
    %5940 = vdwg.mxu0
    %5941 = vmatprep.subr.mxu0 %v4128
    %5942 = vmatpush1.msra.mxu0 %v4127
    %5943 = vmatprep.subr.mxu0 %v4136
    %5944 = vmatpush1.msra.mxu0 %v4135
    %5945 = vmatprep.subr.mxu0 %v4144
    %5946 = vmatpush1.msra.mxu0 %v4143
    %5947 = vmatprep.subr.mxu0 %v4152
    %5948 = vmatpush1.msra.mxu0 %v4151
    %5949 = vmatprep.subr.mxu0 %v4160
    %5950 = vmatpush1.msra.mxu0 %v4159
    %5951 = vmatprep.subr.mxu0 %v4168
    %5952 = vmatpush1.msra.mxu0 %v4167
    %5953 = vmatprep.subr.mxu0 %v4176
    %5954 = vmatpush1.msra.mxu0 %v4175
    %5955 = vmatprep.subr.mxu0 %v4184
    %5956 = vmatpush1.msra.mxu0 %v4183
    %5957 = vmatprep.subr.mxu0 %v4192
    %5958 = vmatpush1.msra.mxu0 %v4191
    %5959 = vmatprep.subr.mxu0 %v4200
    %5960 = vmatpush1.msra.mxu0 %v4199
    %5961 = vmatprep.subr.mxu0 %v4208
    %5962 = vmatpush1.msra.mxu0 %v4207
    %5963 = vmatprep.subr.mxu0 %v4216
    %5964 = vmatpush1.msra.mxu0 %v4215
    %5965 = vmatprep.subr.mxu0 %v4224
    %5966 = vmatpush1.msra.mxu0 %v4223
    %5967 = vmatprep.subr.mxu0 %v4232
    %5968 = vmatpush1.msra.mxu0 %v4231
    %5969 = vmatprep.subr.mxu0 %v4240
    %5970 = vmatpush1.msra.mxu0 %v4239
    %5971 = vmatprep.subr.mxu0 %v4248
    %5972 = vmatpush1.msra.mxu0 %v4247
    %5973 = vmatprep.subr.mxu0 %v4256
    %5974 = vmatpush1.msra.mxu0 %v4255
    %5975 = vmatprep.subr.mxu0 %v4264
    %5976 = vmatpush1.msra.mxu0 %v4263
    %5977 = vmatprep.subr.mxu0 %v4272
    %5978 = vmatpush1.msra.mxu0 %v4271
    %5979 = vmatprep.subr.mxu0 %v4280
    %5980 = vmatpush1.msra.mxu0 %v4279
    %5981 = vmatprep.subr.mxu0 %v4288
    %5982 = vmatpush1.msra.mxu0 %v4287
    %5983 = vmatprep.subr.mxu0 %v4296
    %5984 = vmatpush1.msra.mxu0 %v4295
    %5985 = vmatprep.subr.mxu0 %v4304
    %5986 = vmatpush1.msra.mxu0 %v4303
    %5987 = vmatprep.subr.mxu0 %v4312
    %5988 = vmatpush1.msra.mxu0 %v4311
    %5989 = vmatprep.subr.mxu0 %v4320
    %5990 = vmatpush1.msra.mxu0 %v4319
    %5991 = vmatprep.subr.mxu0 %v4328
    %5992 = vmatpush1.msra.mxu0 %v4327
    %5993 = vmatprep.subr.mxu0 %v4336
    %5994 = vmatpush1.msra.mxu0 %v4335
    %5995 = vmatprep.subr.mxu0 %v4344
    %5996 = vmatpush1.msra.mxu0 %v4343
    %5997 = vmatprep.subr.mxu0 %v4352
    %5998 = vmatpush1.msra.mxu0 %v4351
    %5999 = vmatprep.subr.mxu0 %v4360
    %6000 = vmatpush1.msra.mxu0 %v4359
    %6001 = vmatprep.subr.mxu0 %v4368
    %6002 = vmatpush1.msra.mxu0 %v4367
    %6003 = vmatprep.subr.mxu0 %v4376
    %6004 = vmatpush1.msra.mxu0 %v4375
    %6005 = vmatprep.mubr.f32.mxu0 %v5796
    %6006 = vmatmul.mubr.f32.gmra.mrb[0].mxu0 %v5795
    %v6007 = vpop.f32.mrb[0].mxu0
    %v6008 = vadd.f32 0.0, %v6007
    %v6009 = vpop.f32.mrb[0].mxu0
    %v6010 = vadd.f32 0.0, %v6009
    %6011 = vdwg.mxu0
    %6012 = vmatprep.subr.mxu0 %v4130
    %6013 = vmatpush1.msra.mxu0 %v4129
    %6014 = vmatprep.subr.mxu0 %v4138
    %6015 = vmatpush1.msra.mxu0 %v4137
    %6016 = vmatprep.subr.mxu0 %v4146
    %6017 = vmatpush1.msra.mxu0 %v4145
    %6018 = vmatprep.subr.mxu0 %v4154
    %6019 = vmatpush1.msra.mxu0 %v4153
    %6020 = vmatprep.subr.mxu0 %v4162
    %6021 = vmatpush1.msra.mxu0 %v4161
    %6022 = vmatprep.subr.mxu0 %v4170
    %6023 = vmatpush1.msra.mxu0 %v4169
    %6024 = vmatprep.subr.mxu0 %v4178
    %6025 = vmatpush1.msra.mxu0 %v4177
    %6026 = vmatprep.subr.mxu0 %v4186
    %6027 = vmatpush1.msra.mxu0 %v4185
    %6028 = vmatprep.subr.mxu0 %v4194
    %6029 = vmatpush1.msra.mxu0 %v4193
    %6030 = vmatprep.subr.mxu0 %v4202
    %6031 = vmatpush1.msra.mxu0 %v4201
    %6032 = vmatprep.subr.mxu0 %v4210
    %6033 = vmatpush1.msra.mxu0 %v4209
    %6034 = vmatprep.subr.mxu0 %v4218
    %6035 = vmatpush1.msra.mxu0 %v4217
    %6036 = vmatprep.subr.mxu0 %v4226
    %6037 = vmatpush1.msra.mxu0 %v4225
    %6038 = vmatprep.subr.mxu0 %v4234
    %6039 = vmatpush1.msra.mxu0 %v4233
    %6040 = vmatprep.subr.mxu0 %v4242
    %6041 = vmatpush1.msra.mxu0 %v4241
    %6042 = vmatprep.subr.mxu0 %v4250
    %6043 = vmatpush1.msra.mxu0 %v4249
    %6044 = vmatprep.subr.mxu0 %v4258
    %6045 = vmatpush1.msra.mxu0 %v4257
    %6046 = vmatprep.subr.mxu0 %v4266
    %6047 = vmatpush1.msra.mxu0 %v4265
    %6048 = vmatprep.subr.mxu0 %v4274
    %6049 = vmatpush1.msra.mxu0 %v4273
    %6050 = vmatprep.subr.mxu0 %v4282
    %6051 = vmatpush1.msra.mxu0 %v4281
    %6052 = vmatprep.subr.mxu0 %v4290
    %6053 = vmatpush1.msra.mxu0 %v4289
    %6054 = vmatprep.subr.mxu0 %v4298
    %6055 = vmatpush1.msra.mxu0 %v4297
    %6056 = vmatprep.subr.mxu0 %v4306
    %6057 = vmatpush1.msra.mxu0 %v4305
    %6058 = vmatprep.subr.mxu0 %v4314
    %6059 = vmatpush1.msra.mxu0 %v4313
    %6060 = vmatprep.subr.mxu0 %v4322
    %6061 = vmatpush1.msra.mxu0 %v4321
    %6062 = vmatprep.subr.mxu0 %v4330
    %6063 = vmatpush1.msra.mxu0 %v4329
    %6064 = vmatprep.subr.mxu0 %v4338
    %6065 = vmatpush1.msra.mxu0 %v4337
    %6066 = vmatprep.subr.mxu0 %v4346
    %6067 = vmatpush1.msra.mxu0 %v4345
    %6068 = vmatprep.subr.mxu0 %v4354
    %6069 = vmatpush1.msra.mxu0 %v4353
    %6070 = vmatprep.subr.mxu0 %v4362
    %6071 = vmatpush1.msra.mxu0 %v4361
    %6072 = vmatprep.subr.mxu0 %v4370
    %6073 = vmatpush1.msra.mxu0 %v4369
    %6074 = vmatprep.subr.mxu0 %v4378
    %6075 = vmatpush1.msra.mxu0 %v4377
    %6076 = vmatprep.mubr.f32.mxu0 %v5796
    %6077 = vmatmul.mubr.f32.gmra.mrb[0].mxu0 %v5795
    %v6078 = vpop.f32.mrb[0].mxu0
    %v6079 = vadd.f32 0.0, %v6078
    %v6080 = vpop.f32.mrb[0].mxu0
    %v6081 = vadd.f32 0.0, %v6080
    %6082 = vdwg.mxu0
    %v6083 = vadd.f32 %v3888, %v5866
    %v6084 = vadd.f32 %v3890, %v5868
    %v6085 = vadd.f32 %v3965, %v5937
    %v6086 = vadd.f32 %v3967, %v5939
    %v6087 = vadd.f32 %v4042, %v6008
    %v6088 = vadd.f32 %v4044, %v6010
    %v6089 = vadd.f32 %v4119, %v6079
    %v6090 = vadd.f32 %v4121, %v6081
    %v6091 = vmul.f32 %v6083, 0.5
    %v6092 = vmul.f32 %v6084, 0.5
    %v6093 = vtanh.pop %v6091
    %v6094 = vtanh.pop %v6092
    %v6095 = vmul.f32 %v6093, 0.5
    %v6096 = vmul.f32 %v6094, 0.5
    %v6097 = vadd.f32 %v6095, 0.5
    %v6098 = vadd.f32 %v6096, 0.5
    %v6099 = vmul.f32 %v6085, 0.5
    %v6100 = vmul.f32 %v6086, 0.5
    %v6101 = vtanh.pop %v6099
    %v6102 = vtanh.pop %v6100
    %v6103 = vmul.f32 %v6101, 0.5
    %v6104 = vmul.f32 %v6102, 0.5
    %v6105 = vadd.f32 %v6103, 0.5
    %v6106 = vadd.f32 %v6104, 0.5
    %v6107 = vtanh.pop %v6087
    %v6108 = vtanh.pop %v6088
    %v6109 = vmul.f32 %v6089, 0.5
    %v6110 = vmul.f32 %v6090, 0.5
    %v6111 = vtanh.pop %v6109
    %v6112 = vtanh.pop %v6110
    %v6113 = vmul.f32 %v6111, 0.5
    %v6114 = vmul.f32 %v6112, 0.5
    %v6115 = vadd.f32 %v6113, 0.5
    %v6116 = vadd.f32 %v6114, 0.5
    %v6119 = vrot.slane %v5787, 6
    %v6120 = vrot.slane %v5788, 6
    %v6123 = vmul.f32 %v6105, %v6119
    %v6124 = vmul.f32 %v6106, %v6120
    %v6125 = vmul.f32 %v6097, %v6107
    %v6126 = vmul.f32 %v6098, %v6108
    %v6127 = vadd.f32 %v6123, %v6125
    %v6128 = vadd.f32 %v6124, %v6126
    %v6129 = vtanh.pop %v6127
    %v6130 = vtanh.pop %v6128
    %v6131 = vmul.f32 %v6115, %v6129
    %v6132 = vmul.f32 %v6116, %v6130
    %6133 = vmatprep.subr.mxu0 %v4124
    %6134 = vmatpush1.msra.mxu0 %v4123
    %6135 = vmatprep.subr.mxu0 %v4132
    %6136 = vmatpush1.msra.mxu0 %v4131
    %6137 = vmatprep.subr.mxu0 %v4140
    %6138 = vmatpush1.msra.mxu0 %v4139
    %6139 = vmatprep.subr.mxu0 %v4148
    %6140 = vmatpush1.msra.mxu0 %v4147
    %6141 = vmatprep.subr.mxu0 %v4156
    %6142 = vmatpush1.msra.mxu0 %v4155
    %6143 = vmatprep.subr.mxu0 %v4164
    %6144 = vmatpush1.msra.mxu0 %v4163
    %6145 = vmatprep.subr.mxu0 %v4172
    %6146 = vmatpush1.msra.mxu0 %v4171
    %6147 = vmatprep.subr.mxu0 %v4180
    %6148 = vmatpush1.msra.mxu0 %v4179
    %6149 = vmatprep.subr.mxu0 %v4188
    %6150 = vmatpush1.msra.mxu0 %v4187
    %6151 = vmatprep.subr.mxu0 %v4196
    %6152 = vmatpush1.msra.mxu0 %v4195
    %6153 = vmatprep.subr.mxu0 %v4204
    %6154 = vmatpush1.msra.mxu0 %v4203
    %6155 = vmatprep.subr.mxu0 %v4212
    %6156 = vmatpush1.msra.mxu0 %v4211
    %6157 = vmatprep.subr.mxu0 %v4220
    %6158 = vmatpush1.msra.mxu0 %v4219
    %6159 = vmatprep.subr.mxu0 %v4228
    %6160 = vmatpush1.msra.mxu0 %v4227
    %6161 = vmatprep.subr.mxu0 %v4236
    %6162 = vmatpush1.msra.mxu0 %v4235
    %6163 = vmatprep.subr.mxu0 %v4244
    %6164 = vmatpush1.msra.mxu0 %v4243
    %6165 = vmatprep.subr.mxu0 %v4252
    %6166 = vmatpush1.msra.mxu0 %v4251
    %6167 = vmatprep.subr.mxu0 %v4260
    %6168 = vmatpush1.msra.mxu0 %v4259
    %6169 = vmatprep.subr.mxu0 %v4268
    %6170 = vmatpush1.msra.mxu0 %v4267
    %6171 = vmatprep.subr.mxu0 %v4276
    %6172 = vmatpush1.msra.mxu0 %v4275
    %6173 = vmatprep.subr.mxu0 %v4284
    %6174 = vmatpush1.msra.mxu0 %v4283
    %6175 = vmatprep.subr.mxu0 %v4292
    %6176 = vmatpush1.msra.mxu0 %v4291
    %6177 = vmatprep.subr.mxu0 %v4300
    %6178 = vmatpush1.msra.mxu0 %v4299
    %6179 = vmatprep.subr.mxu0 %v4308
    %6180 = vmatpush1.msra.mxu0 %v4307
    %6181 = vmatprep.subr.mxu0 %v4316
    %6182 = vmatpush1.msra.mxu0 %v4315
    %6183 = vmatprep.subr.mxu0 %v4324
    %6184 = vmatpush1.msra.mxu0 %v4323
    %6185 = vmatprep.subr.mxu0 %v4332
    %6186 = vmatpush1.msra.mxu0 %v4331
    %6187 = vmatprep.subr.mxu0 %v4340
    %6188 = vmatpush1.msra.mxu0 %v4339
    %6189 = vmatprep.subr.mxu0 %v4348
    %6190 = vmatpush1.msra.mxu0 %v4347
    %6191 = vmatprep.subr.mxu0 %v4356
    %6192 = vmatpush1.msra.mxu0 %v4355
    %6193 = vmatprep.subr.mxu0 %v4364
    %6194 = vmatpush1.msra.mxu0 %v4363
    %6195 = vmatprep.subr.mxu0 %v4372
    %6196 = vmatpush1.msra.mxu0 %v4371
    %6197 = vmatprep.mubr.f32.mxu0 %v6132
    %6198 = vmatmul.mubr.f32.gmra.mrb[0].mxu0 %v6131
    %v6199 = vpop.f32.mrb[0].mxu0
    %v6200 = vadd.f32 0.0, %v6199
    %v6201 = vpop.f32.mrb[0].mxu0
    %v6202 = vadd.f32 0.0, %v6201
    %6203 = vdwg.mxu0
    %6204 = vmatprep.subr.mxu0 %v4126
    %6205 = vmatpush1.msra.mxu0 %v4125
    %6206 = vmatprep.subr.mxu0 %v4134
    %6207 = vmatpush1.msra.mxu0 %v4133
    %6208 = vmatprep.subr.mxu0 %v4142
    %6209 = vmatpush1.msra.mxu0 %v4141
    %6210 = vmatprep.subr.mxu0 %v4150
    %6211 = vmatpush1.msra.mxu0 %v4149
    %6212 = vmatprep.subr.mxu0 %v4158
    %6213 = vmatpush1.msra.mxu0 %v4157
    %6214 = vmatprep.subr.mxu0 %v4166
    %6215 = vmatpush1.msra.mxu0 %v4165
    %6216 = vmatprep.subr.mxu0 %v4174
    %6217 = vmatpush1.msra.mxu0 %v4173
    %6218 = vmatprep.subr.mxu0 %v4182
    %6219 = vmatpush1.msra.mxu0 %v4181
    %6220 = vmatprep.subr.mxu0 %v4190
    %6221 = vmatpush1.msra.mxu0 %v4189
    %6222 = vmatprep.subr.mxu0 %v4198
    %6223 = vmatpush1.msra.mxu0 %v4197
    %6224 = vmatprep.subr.mxu0 %v4206
    %6225 = vmatpush1.msra.mxu0 %v4205
    %6226 = vmatprep.subr.mxu0 %v4214
    %6227 = vmatpush1.msra.mxu0 %v4213
    %6228 = vmatprep.subr.mxu0 %v4222
    %6229 = vmatpush1.msra.mxu0 %v4221
    %6230 = vmatprep.subr.mxu0 %v4230
    %6231 = vmatpush1.msra.mxu0 %v4229
    %6232 = vmatprep.subr.mxu0 %v4238
    %6233 = vmatpush1.msra.mxu0 %v4237
    %6234 = vmatprep.subr.mxu0 %v4246
    %6235 = vmatpush1.msra.mxu0 %v4245
    %6236 = vmatprep.subr.mxu0 %v4254
    %6237 = vmatpush1.msra.mxu0 %v4253
    %6238 = vmatprep.subr.mxu0 %v4262
    %6239 = vmatpush1.msra.mxu0 %v4261
    %6240 = vmatprep.subr.mxu0 %v4270
    %6241 = vmatpush1.msra.mxu0 %v4269
    %6242 = vmatprep.subr.mxu0 %v4278
    %6243 = vmatpush1.msra.mxu0 %v4277
    %6244 = vmatprep.subr.mxu0 %v4286
    %6245 = vmatpush1.msra.mxu0 %v4285
    %6246 = vmatprep.subr.mxu0 %v4294
    %6247 = vmatpush1.msra.mxu0 %v4293
    %6248 = vmatprep.subr.mxu0 %v4302
    %6249 = vmatpush1.msra.mxu0 %v4301
    %6250 = vmatprep.subr.mxu0 %v4310
    %6251 = vmatpush1.msra.mxu0 %v4309
    %6252 = vmatprep.subr.mxu0 %v4318
    %6253 = vmatpush1.msra.mxu0 %v4317
    %6254 = vmatprep.subr.mxu0 %v4326
    %6255 = vmatpush1.msra.mxu0 %v4325
    %6256 = vmatprep.subr.mxu0 %v4334
    %6257 = vmatpush1.msra.mxu0 %v4333
    %6258 = vmatprep.subr.mxu0 %v4342
    %6259 = vmatpush1.msra.mxu0 %v4341
    %6260 = vmatprep.subr.mxu0 %v4350
    %6261 = vmatpush1.msra.mxu0 %v4349
    %6262 = vmatprep.subr.mxu0 %v4358
    %6263 = vmatpush1.msra.mxu0 %v4357
    %6264 = vmatprep.subr.mxu0 %v4366
    %6265 = vmatpush1.msra.mxu0 %v4365
    %6266 = vmatprep.subr.mxu0 %v4374
    %6267 = vmatpush1.msra.mxu0 %v4373
    %6268 = vmatprep.mubr.f32.mxu0 %v6132
    %6269 = vmatmul.mubr.f32.gmra.mrb[0].mxu0 %v6131
    %v6270 = vpop.f32.mrb[0].mxu0
    %v6271 = vadd.f32 0.0, %v6270
    %v6272 = vpop.f32.mrb[0].mxu0
    %v6273 = vadd.f32 0.0, %v6272
    %6274 = vdwg.mxu0
    %6275 = vmatprep.subr.mxu0 %v4128
    %6276 = vmatpush1.msra.mxu0 %v4127
    %6277 = vmatprep.subr.mxu0 %v4136
    %6278 = vmatpush1.msra.mxu0 %v4135
    %6279 = vmatprep.subr.mxu0 %v4144
    %6280 = vmatpush1.msra.mxu0 %v4143
    %6281 = vmatprep.subr.mxu0 %v4152
    %6282 = vmatpush1.msra.mxu0 %v4151
    %6283 = vmatprep.subr.mxu0 %v4160
    %6284 = vmatpush1.msra.mxu0 %v4159
    %6285 = vmatprep.subr.mxu0 %v4168
    %6286 = vmatpush1.msra.mxu0 %v4167
    %6287 = vmatprep.subr.mxu0 %v4176
    %6288 = vmatpush1.msra.mxu0 %v4175
    %6289 = vmatprep.subr.mxu0 %v4184
    %6290 = vmatpush1.msra.mxu0 %v4183
    %6291 = vmatprep.subr.mxu0 %v4192
    %6292 = vmatpush1.msra.mxu0 %v4191
    %6293 = vmatprep.subr.mxu0 %v4200
    %6294 = vmatpush1.msra.mxu0 %v4199
    %6295 = vmatprep.subr.mxu0 %v4208
    %6296 = vmatpush1.msra.mxu0 %v4207
    %6297 = vmatprep.subr.mxu0 %v4216
    %6298 = vmatpush1.msra.mxu0 %v4215
    %6299 = vmatprep.subr.mxu0 %v4224
    %6300 = vmatpush1.msra.mxu0 %v4223
    %6301 = vmatprep.subr.mxu0 %v4232
    %6302 = vmatpush1.msra.mxu0 %v4231
    %6303 = vmatprep.subr.mxu0 %v4240
    %6304 = vmatpush1.msra.mxu0 %v4239
    %6305 = vmatprep.subr.mxu0 %v4248
    %6306 = vmatpush1.msra.mxu0 %v4247
    %6307 = vmatprep.subr.mxu0 %v4256
    %6308 = vmatpush1.msra.mxu0 %v4255
    %6309 = vmatprep.subr.mxu0 %v4264
    %6310 = vmatpush1.msra.mxu0 %v4263
    %6311 = vmatprep.subr.mxu0 %v4272
    %6312 = vmatpush1.msra.mxu0 %v4271
    %6313 = vmatprep.subr.mxu0 %v4280
    %6314 = vmatpush1.msra.mxu0 %v4279
    %6315 = vmatprep.subr.mxu0 %v4288
    %6316 = vmatpush1.msra.mxu0 %v4287
    %6317 = vmatprep.subr.mxu0 %v4296
    %6318 = vmatpush1.msra.mxu0 %v4295
    %6319 = vmatprep.subr.mxu0 %v4304
    %6320 = vmatpush1.msra.mxu0 %v4303
    %6321 = vmatprep.subr.mxu0 %v4312
    %6322 = vmatpush1.msra.mxu0 %v4311
    %6323 = vmatprep.subr.mxu0 %v4320
    %6324 = vmatpush1.msra.mxu0 %v4319
    %6325 = vmatprep.subr.mxu0 %v4328
    %6326 = vmatpush1.msra.mxu0 %v4327
    %6327 = vmatprep.subr.mxu0 %v4336
    %6328 = vmatpush1.msra.mxu0 %v4335
    %6329 = vmatprep.subr.mxu0 %v4344
    %6330 = vmatpush1.msra.mxu0 %v4343
    %6331 = vmatprep.subr.mxu0 %v4352
    %6332 = vmatpush1.msra.mxu0 %v4351
    %6333 = vmatprep.subr.mxu0 %v4360
    %6334 = vmatpush1.msra.mxu0 %v4359
    %6335 = vmatprep.subr.mxu0 %v4368
    %6336 = vmatpush1.msra.mxu0 %v4367
    %6337 = vmatprep.subr.mxu0 %v4376
    %6338 = vmatpush1.msra.mxu0 %v4375
    %6339 = vmatprep.mubr.f32.mxu0 %v6132
    %6340 = vmatmul.mubr.f32.gmra.mrb[0].mxu0 %v6131
    %v6341 = vpop.f32.mrb[0].mxu0
    %v6342 = vadd.f32 0.0, %v6341
    %v6343 = vpop.f32.mrb[0].mxu0
    %v6344 = vadd.f32 0.0, %v6343
    %6345 = vdwg.mxu0
    %6346 = vmatprep.subr.mxu0 %v4130
    %6347 = vmatpush1.msra.mxu0 %v4129
    %6348 = vmatprep.subr.mxu0 %v4138
    %6349 = vmatpush1.msra.mxu0 %v4137
    %6350 = vmatprep.subr.mxu0 %v4146
    %6351 = vmatpush1.msra.mxu0 %v4145
    %6352 = vmatprep.subr.mxu0 %v4154
    %6353 = vmatpush1.msra.mxu0 %v4153
    %6354 = vmatprep.subr.mxu0 %v4162
    %6355 = vmatpush1.msra.mxu0 %v4161
    %6356 = vmatprep.subr.mxu0 %v4170
    %6357 = vmatpush1.msra.mxu0 %v4169
    %6358 = vmatprep.subr.mxu0 %v4178
    %6359 = vmatpush1.msra.mxu0 %v4177
    %6360 = vmatprep.subr.mxu0 %v4186
    %6361 = vmatpush1.msra.mxu0 %v4185
    %6362 = vmatprep.subr.mxu0 %v4194
    %6363 = vmatpush1.msra.mxu0 %v4193
    %6364 = vmatprep.subr.mxu0 %v4202
    %6365 = vmatpush1.msra.mxu0 %v4201
    %6366 = vmatprep.subr.mxu0 %v4210
    %6367 = vmatpush1.msra.mxu0 %v4209
    %6368 = vmatprep.subr.mxu0 %v4218
    %6369 = vmatpush1.msra.mxu0 %v4217
    %6370 = vmatprep.subr.mxu0 %v4226
    %6371 = vmatpush1.msra.mxu0 %v4225
    %6372 = vmatprep.subr.mxu0 %v4234
    %6373 = vmatpush1.msra.mxu0 %v4233
    %6374 = vmatprep.subr.mxu0 %v4242
    %6375 = vmatpush1.msra.mxu0 %v4241
    %6376 = vmatprep.subr.mxu0 %v4250
    %6377 = vmatpush1.msra.mxu0 %v4249
    %6378 = vmatprep.subr.mxu0 %v4258
    %6379 = vmatpush1.msra.mxu0 %v4257
    %6380 = vmatprep.subr.mxu0 %v4266
    %6381 = vmatpush1.msra.mxu0 %v4265
    %6382 = vmatprep.subr.mxu0 %v4274
    %6383 = vmatpush1.msra.mxu0 %v4273
    %6384 = vmatprep.subr.mxu0 %v4282
    %6385 = vmatpush1.msra.mxu0 %v4281
    %6386 = vmatprep.subr.mxu0 %v4290
    %6387 = vmatpush1.msra.mxu0 %v4289
    %6388 = vmatprep.subr.mxu0 %v4298
    %6389 = vmatpush1.msra.mxu0 %v4297
    %6390 = vmatprep.subr.mxu0 %v4306
    %6391 = vmatpush1.msra.mxu0 %v4305
    %6392 = vmatprep.subr.mxu0 %v4314
    %6393 = vmatpush1.msra.mxu0 %v4313
    %6394 = vmatprep.subr.mxu0 %v4322
    %6395 = vmatpush1.msra.mxu0 %v4321
    %6396 = vmatprep.subr.mxu0 %v4330
    %6397 = vmatpush1.msra.mxu0 %v4329
    %6398 = vmatprep.subr.mxu0 %v4338
    %6399 = vmatpush1.msra.mxu0 %v4337
    %6400 = vmatprep.subr.mxu0 %v4346
    %6401 = vmatpush1.msra.mxu0 %v4345
    %6402 = vmatprep.subr.mxu0 %v4354
    %6403 = vmatpush1.msra.mxu0 %v4353
    %6404 = vmatprep.subr.mxu0 %v4362
    %6405 = vmatpush1.msra.mxu0 %v4361
    %6406 = vmatprep.subr.mxu0 %v4370
    %6407 = vmatpush1.msra.mxu0 %v4369
    %6408 = vmatprep.subr.mxu0 %v4378
    %6409 = vmatpush1.msra.mxu0 %v4377
    %6410 = vmatprep.mubr.f32.mxu0 %v6132
    %6411 = vmatmul.mubr.f32.gmra.mrb[0].mxu0 %v6131
    %v6412 = vpop.f32.mrb[0].mxu0
    %v6413 = vadd.f32 0.0, %v6412
    %v6414 = vpop.f32.mrb[0].mxu0
    %v6415 = vadd.f32 0.0, %v6414
    %6416 = vdwg.mxu0
    %v6425 = vrot.slane %v6200, 6
    %v6426 = vrot.slane %v6202, 6
    %v6427 = vrot.slane %v6271, 6
    %v6428 = vrot.slane %v6273, 6
    %v6429 = vrot.slane %v6342, 6
    %v6430 = vrot.slane %v6344, 6
    %v6431 = vrot.slane %v6413, 6
    %v6432 = vrot.slane %v6415, 6
    %v6441 = vadd.f32 %v3888, %v6425
    %v6442 = vadd.f32 %v3890, %v6426
    %v6443 = vadd.f32 %v3965, %v6427
    %v6444 = vadd.f32 %v3967, %v6428
    %v6445 = vadd.f32 %v4042, %v6429
    %v6446 = vadd.f32 %v4044, %v6430
    %v6447 = vadd.f32 %v4119, %v6431
    %v6448 = vadd.f32 %v4121, %v6432
    %v6449 = vmul.f32 %v6441, 0.5
    %v6450 = vmul.f32 %v6442, 0.5
    %v6451 = vtanh.pop %v6449
    %v6452 = vtanh.pop %v6450
    %v6453 = vmul.f32 %v6451, 0.5
    %v6454 = vmul.f32 %v6452, 0.5
    %v6455 = vadd.f32 %v6453, 0.5
    %v6456 = vadd.f32 %v6454, 0.5
    %v6457 = vmul.f32 %v6443, 0.5
    %v6458 = vmul.f32 %v6444, 0.5
    %v6459 = vtanh.pop %v6457
    %v6460 = vtanh.pop %v6458
    %v6461 = vmul.f32 %v6459, 0.5
    %v6462 = vmul.f32 %v6460, 0.5
    %v6463 = vadd.f32 %v6461, 0.5
    %v6464 = vadd.f32 %v6462, 0.5
    %v6465 = vtanh.pop %v6445
    %v6466 = vtanh.pop %v6446
    %v6467 = vmul.f32 %v6447, 0.5
    %v6468 = vmul.f32 %v6448, 0.5
    %v6469 = vtanh.pop %v6467
    %v6470 = vtanh.pop %v6468
    %v6471 = vmul.f32 %v6469, 0.5
    %v6472 = vmul.f32 %v6470, 0.5
    %v6473 = vadd.f32 %v6471, 0.5
    %v6474 = vadd.f32 %v6472, 0.5
    %v6477 = vrot.slane %v6127, 6
    %v6478 = vrot.slane %v6128, 6
    %v6481 = vmul.f32 %v6463, %v6477
    %v6482 = vmul.f32 %v6464, %v6478
    %v6483 = vmul.f32 %v6455, %v6465
    %v6484 = vmul.f32 %v6456, %v6466
    %v6485 = vadd.f32 %v6481, %v6483
    %v6486 = vadd.f32 %v6482, %v6484
    %v6487 = vtanh.pop %v6485
    %v6488 = vtanh.pop %v6486
    %v6489 = vmul.f32 %v6473, %v6487
    %v6490 = vmul.f32 %v6474, %v6488
    %v6493 = vrot.slane %v6489, 2
    %v6494 = vrot.slane %v6490, 2
    %6497 = vmatprep.subr.mxu0 %v4124
    %6498 = vmatpush1.msra.mxu0 %v4123
    %6499 = vmatprep.subr.mxu0 %v4132
    %6500 = vmatpush1.msra.mxu0 %v4131
    %6501 = vmatprep.subr.mxu0 %v4140
    %6502 = vmatpush1.msra.mxu0 %v4139
    %6503 = vmatprep.subr.mxu0 %v4148
    %6504 = vmatpush1.msra.mxu0 %v4147
    %6505 = vmatprep.subr.mxu0 %v4156
    %6506 = vmatpush1.msra.mxu0 %v4155
    %6507 = vmatprep.subr.mxu0 %v4164
    %6508 = vmatpush1.msra.mxu0 %v4163
    %6509 = vmatprep.subr.mxu0 %v4172
    %6510 = vmatpush1.msra.mxu0 %v4171
    %6511 = vmatprep.subr.mxu0 %v4180
    %6512 = vmatpush1.msra.mxu0 %v4179
    %6513 = vmatprep.subr.mxu0 %v4188
    %6514 = vmatpush1.msra.mxu0 %v4187
    %6515 = vmatprep.subr.mxu0 %v4196
    %6516 = vmatpush1.msra.mxu0 %v4195
    %6517 = vmatprep.subr.mxu0 %v4204
    %6518 = vmatpush1.msra.mxu0 %v4203
    %6519 = vmatprep.subr.mxu0 %v4212
    %6520 = vmatpush1.msra.mxu0 %v4211
    %6521 = vmatprep.subr.mxu0 %v4220
    %6522 = vmatpush1.msra.mxu0 %v4219
    %6523 = vmatprep.subr.mxu0 %v4228
    %6524 = vmatpush1.msra.mxu0 %v4227
    %6525 = vmatprep.subr.mxu0 %v4236
    %6526 = vmatpush1.msra.mxu0 %v4235
    %6527 = vmatprep.subr.mxu0 %v4244
    %6528 = vmatpush1.msra.mxu0 %v4243
    %6529 = vmatprep.subr.mxu0 %v4252
    %6530 = vmatpush1.msra.mxu0 %v4251
    %6531 = vmatprep.subr.mxu0 %v4260
    %6532 = vmatpush1.msra.mxu0 %v4259
    %6533 = vmatprep.subr.mxu0 %v4268
    %6534 = vmatpush1.msra.mxu0 %v4267
    %6535 = vmatprep.subr.mxu0 %v4276
    %6536 = vmatpush1.msra.mxu0 %v4275
    %6537 = vmatprep.subr.mxu0 %v4284
    %6538 = vmatpush1.msra.mxu0 %v4283
    %6539 = vmatprep.subr.mxu0 %v4292
    %6540 = vmatpush1.msra.mxu0 %v4291
    %6541 = vmatprep.subr.mxu0 %v4300
    %6542 = vmatpush1.msra.mxu0 %v4299
    %6543 = vmatprep.subr.mxu0 %v4308
    %6544 = vmatpush1.msra.mxu0 %v4307
    %6545 = vmatprep.subr.mxu0 %v4316
    %6546 = vmatpush1.msra.mxu0 %v4315
    %6547 = vmatprep.subr.mxu0 %v4324
    %6548 = vmatpush1.msra.mxu0 %v4323
    %6549 = vmatprep.subr.mxu0 %v4332
    %6550 = vmatpush1.msra.mxu0 %v4331
    %6551 = vmatprep.subr.mxu0 %v4340
    %6552 = vmatpush1.msra.mxu0 %v4339
    %6553 = vmatprep.subr.mxu0 %v4348
    %6554 = vmatpush1.msra.mxu0 %v4347
    %6555 = vmatprep.subr.mxu0 %v4356
    %6556 = vmatpush1.msra.mxu0 %v4355
    %6557 = vmatprep.subr.mxu0 %v4364
    %6558 = vmatpush1.msra.mxu0 %v4363
    %6559 = vmatprep.subr.mxu0 %v4372
    %6560 = vmatpush1.msra.mxu0 %v4371
    %6561 = vmatprep.mubr.f32.mxu0 %v6494
    %6562 = vmatmul.mubr.f32.gmra.mrb[0].mxu0 %v6493
    %v6563 = vpop.f32.mrb[0].mxu0
    %v6564 = vadd.f32 0.0, %v6563
    %v6565 = vpop.f32.mrb[0].mxu0
    %v6566 = vadd.f32 0.0, %v6565
    %6567 = vdwg.mxu0
    %6568 = vmatprep.subr.mxu0 %v4126
    %6569 = vmatpush1.msra.mxu0 %v4125
    %6570 = vmatprep.subr.mxu0 %v4134
    %6571 = vmatpush1.msra.mxu0 %v4133
    %6572 = vmatprep.subr.mxu0 %v4142
    %6573 = vmatpush1.msra.mxu0 %v4141
    %6574 = vmatprep.subr.mxu0 %v4150
    %6575 = vmatpush1.msra.mxu0 %v4149
    %6576 = vmatprep.subr.mxu0 %v4158
    %6577 = vmatpush1.msra.mxu0 %v4157
    %6578 = vmatprep.subr.mxu0 %v4166
    %6579 = vmatpush1.msra.mxu0 %v4165
    %6580 = vmatprep.subr.mxu0 %v4174
    %6581 = vmatpush1.msra.mxu0 %v4173
    %6582 = vmatprep.subr.mxu0 %v4182
    %6583 = vmatpush1.msra.mxu0 %v4181
    %6584 = vmatprep.subr.mxu0 %v4190
    %6585 = vmatpush1.msra.mxu0 %v4189
    %6586 = vmatprep.subr.mxu0 %v4198
    %6587 = vmatpush1.msra.mxu0 %v4197
    %6588 = vmatprep.subr.mxu0 %v4206
    %6589 = vmatpush1.msra.mxu0 %v4205
    %6590 = vmatprep.subr.mxu0 %v4214
    %6591 = vmatpush1.msra.mxu0 %v4213
    %6592 = vmatprep.subr.mxu0 %v4222
    %6593 = vmatpush1.msra.mxu0 %v4221
    %6594 = vmatprep.subr.mxu0 %v4230
    %6595 = vmatpush1.msra.mxu0 %v4229
    %6596 = vmatprep.subr.mxu0 %v4238
    %6597 = vmatpush1.msra.mxu0 %v4237
    %6598 = vmatprep.subr.mxu0 %v4246
    %6599 = vmatpush1.msra.mxu0 %v4245
    %6600 = vmatprep.subr.mxu0 %v4254
    %6601 = vmatpush1.msra.mxu0 %v4253
    %6602 = vmatprep.subr.mxu0 %v4262
    %6603 = vmatpush1.msra.mxu0 %v4261
    %6604 = vmatprep.subr.mxu0 %v4270
    %6605 = vmatpush1.msra.mxu0 %v4269
    %6606 = vmatprep.subr.mxu0 %v4278
    %6607 = vmatpush1.msra.mxu0 %v4277
    %6608 = vmatprep.subr.mxu0 %v4286
    %6609 = vmatpush1.msra.mxu0 %v4285
    %6610 = vmatprep.subr.mxu0 %v4294
    %6611 = vmatpush1.msra.mxu0 %v4293
    %6612 = vmatprep.subr.mxu0 %v4302
    %6613 = vmatpush1.msra.mxu0 %v4301
    %6614 = vmatprep.subr.mxu0 %v4310
    %6615 = vmatpush1.msra.mxu0 %v4309
    %6616 = vmatprep.subr.mxu0 %v4318
    %6617 = vmatpush1.msra.mxu0 %v4317
    %6618 = vmatprep.subr.mxu0 %v4326
    %6619 = vmatpush1.msra.mxu0 %v4325
    %6620 = vmatprep.subr.mxu0 %v4334
    %6621 = vmatpush1.msra.mxu0 %v4333
    %6622 = vmatprep.subr.mxu0 %v4342
    %6623 = vmatpush1.msra.mxu0 %v4341
    %6624 = vmatprep.subr.mxu0 %v4350
    %6625 = vmatpush1.msra.mxu0 %v4349
    %6626 = vmatprep.subr.mxu0 %v4358
    %6627 = vmatpush1.msra.mxu0 %v4357
    %6628 = vmatprep.subr.mxu0 %v4366
    %6629 = vmatpush1.msra.mxu0 %v4365
    %6630 = vmatprep.subr.mxu0 %v4374
    %6631 = vmatpush1.msra.mxu0 %v4373
    %6632 = vmatprep.mubr.f32.mxu0 %v6494
    %6633 = vmatmul.mubr.f32.gmra.mrb[0].mxu0 %v6493
    %v6634 = vpop.f32.mrb[0].mxu0
    %v6635 = vadd.f32 0.0, %v6634
    %v6636 = vpop.f32.mrb[0].mxu0
    %v6637 = vadd.f32 0.0, %v6636
    %6638 = vdwg.mxu0
    %6639 = vmatprep.subr.mxu0 %v4128
    %6640 = vmatpush1.msra.mxu0 %v4127
    %6641 = vmatprep.subr.mxu0 %v4136
    %6642 = vmatpush1.msra.mxu0 %v4135
    %6643 = vmatprep.subr.mxu0 %v4144
    %6644 = vmatpush1.msra.mxu0 %v4143
    %6645 = vmatprep.subr.mxu0 %v4152
    %6646 = vmatpush1.msra.mxu0 %v4151
    %6647 = vmatprep.subr.mxu0 %v4160
    %6648 = vmatpush1.msra.mxu0 %v4159
    %6649 = vmatprep.subr.mxu0 %v4168
    %6650 = vmatpush1.msra.mxu0 %v4167
    %6651 = vmatprep.subr.mxu0 %v4176
    %6652 = vmatpush1.msra.mxu0 %v4175
    %6653 = vmatprep.subr.mxu0 %v4184
    %6654 = vmatpush1.msra.mxu0 %v4183
    %6655 = vmatprep.subr.mxu0 %v4192
    %6656 = vmatpush1.msra.mxu0 %v4191
    %6657 = vmatprep.subr.mxu0 %v4200
    %6658 = vmatpush1.msra.mxu0 %v4199
    %6659 = vmatprep.subr.mxu0 %v4208
    %6660 = vmatpush1.msra.mxu0 %v4207
    %6661 = vmatprep.subr.mxu0 %v4216
    %6662 = vmatpush1.msra.mxu0 %v4215
    %6663 = vmatprep.subr.mxu0 %v4224
    %6664 = vmatpush1.msra.mxu0 %v4223
    %6665 = vmatprep.subr.mxu0 %v4232
    %6666 = vmatpush1.msra.mxu0 %v4231
    %6667 = vmatprep.subr.mxu0 %v4240
    %6668 = vmatpush1.msra.mxu0 %v4239
    %6669 = vmatprep.subr.mxu0 %v4248
    %6670 = vmatpush1.msra.mxu0 %v4247
    %6671 = vmatprep.subr.mxu0 %v4256
    %6672 = vmatpush1.msra.mxu0 %v4255
    %6673 = vmatprep.subr.mxu0 %v4264
    %6674 = vmatpush1.msra.mxu0 %v4263
    %6675 = vmatprep.subr.mxu0 %v4272
    %6676 = vmatpush1.msra.mxu0 %v4271
    %6677 = vmatprep.subr.mxu0 %v4280
    %6678 = vmatpush1.msra.mxu0 %v4279
    %6679 = vmatprep.subr.mxu0 %v4288
    %6680 = vmatpush1.msra.mxu0 %v4287
    %6681 = vmatprep.subr.mxu0 %v4296
    %6682 = vmatpush1.msra.mxu0 %v4295
    %6683 = vmatprep.subr.mxu0 %v4304
    %6684 = vmatpush1.msra.mxu0 %v4303
    %6685 = vmatprep.subr.mxu0 %v4312
    %6686 = vmatpush1.msra.mxu0 %v4311
    %6687 = vmatprep.subr.mxu0 %v4320
    %6688 = vmatpush1.msra.mxu0 %v4319
    %6689 = vmatprep.subr.mxu0 %v4328
    %6690 = vmatpush1.msra.mxu0 %v4327
    %6691 = vmatprep.subr.mxu0 %v4336
    %6692 = vmatpush1.msra.mxu0 %v4335
    %6693 = vmatprep.subr.mxu0 %v4344
    %6694 = vmatpush1.msra.mxu0 %v4343
    %6695 = vmatprep.subr.mxu0 %v4352
    %6696 = vmatpush1.msra.mxu0 %v4351
    %6697 = vmatprep.subr.mxu0 %v4360
    %6698 = vmatpush1.msra.mxu0 %v4359
    %6699 = vmatprep.subr.mxu0 %v4368
    %6700 = vmatpush1.msra.mxu0 %v4367
    %6701 = vmatprep.subr.mxu0 %v4376
    %6702 = vmatpush1.msra.mxu0 %v4375
    %6703 = vmatprep.mubr.f32.mxu0 %v6494
    %6704 = vmatmul.mubr.f32.gmra.mrb[0].mxu0 %v6493
    %v6705 = vpop.f32.mrb[0].mxu0
    %v6706 = vadd.f32 0.0, %v6705
    %v6707 = vpop.f32.mrb[0].mxu0
    %v6708 = vadd.f32 0.0, %v6707
    %6709 = vdwg.mxu0
    %6710 = vmatprep.subr.mxu0 %v4130
    %6711 = vmatpush1.msra.mxu0 %v4129
    %6712 = vmatprep.subr.mxu0 %v4138
    %6713 = vmatpush1.msra.mxu0 %v4137
    %6714 = vmatprep.subr.mxu0 %v4146
    %6715 = vmatpush1.msra.mxu0 %v4145
    %6716 = vmatprep.subr.mxu0 %v4154
    %6717 = vmatpush1.msra.mxu0 %v4153
    %6718 = vmatprep.subr.mxu0 %v4162
    %6719 = vmatpush1.msra.mxu0 %v4161
    %6720 = vmatprep.subr.mxu0 %v4170
    %6721 = vmatpush1.msra.mxu0 %v4169
    %6722 = vmatprep.subr.mxu0 %v4178
    %6723 = vmatpush1.msra.mxu0 %v4177
    %6724 = vmatprep.subr.mxu0 %v4186
    %6725 = vmatpush1.msra.mxu0 %v4185
    %6726 = vmatprep.subr.mxu0 %v4194
    %6727 = vmatpush1.msra.mxu0 %v4193
    %6728 = vmatprep.subr.mxu0 %v4202
    %6729 = vmatpush1.msra.mxu0 %v4201
    %6730 = vmatprep.subr.mxu0 %v4210
    %6731 = vmatpush1.msra.mxu0 %v4209
    %6732 = vmatprep.subr.mxu0 %v4218
    %6733 = vmatpush1.msra.mxu0 %v4217
    %6734 = vmatprep.subr.mxu0 %v4226
    %6735 = vmatpush1.msra.mxu0 %v4225
    %6736 = vmatprep.subr.mxu0 %v4234
    %6737 = vmatpush1.msra.mxu0 %v4233
    %6738 = vmatprep.subr.mxu0 %v4242
    %6739 = vmatpush1.msra.mxu0 %v4241
    %6740 = vmatprep.subr.mxu0 %v4250
    %6741 = vmatpush1.msra.mxu0 %v4249
    %6742 = vmatprep.subr.mxu0 %v4258
    %6743 = vmatpush1.msra.mxu0 %v4257
    %6744 = vmatprep.subr.mxu0 %v4266
    %6745 = vmatpush1.msra.mxu0 %v4265
    %6746 = vmatprep.subr.mxu0 %v4274
    %6747 = vmatpush1.msra.mxu0 %v4273
    %6748 = vmatprep.subr.mxu0 %v4282
    %6749 = vmatpush1.msra.mxu0 %v4281
    %6750 = vmatprep.subr.mxu0 %v4290
    %6751 = vmatpush1.msra.mxu0 %v4289
    %6752 = vmatprep.subr.mxu0 %v4298
    %6753 = vmatpush1.msra.mxu0 %v4297
    %6754 = vmatprep.subr.mxu0 %v4306
    %6755 = vmatpush1.msra.mxu0 %v4305
    %6756 = vmatprep.subr.mxu0 %v4314
    %6757 = vmatpush1.msra.mxu0 %v4313
    %6758 = vmatprep.subr.mxu0 %v4322
    %6759 = vmatpush1.msra.mxu0 %v4321
    %6760 = vmatprep.subr.mxu0 %v4330
    %6761 = vmatpush1.msra.mxu0 %v4329
    %6762 = vmatprep.subr.mxu0 %v4338
    %6763 = vmatpush1.msra.mxu0 %v4337
    %6764 = vmatprep.subr.mxu0 %v4346
    %6765 = vmatpush1.msra.mxu0 %v4345
    %6766 = vmatprep.subr.mxu0 %v4354
    %6767 = vmatpush1.msra.mxu0 %v4353
    %6768 = vmatprep.subr.mxu0 %v4362
    %6769 = vmatpush1.msra.mxu0 %v4361
    %6770 = vmatprep.subr.mxu0 %v4370
    %6771 = vmatpush1.msra.mxu0 %v4369
    %6772 = vmatprep.subr.mxu0 %v4378
    %6773 = vmatpush1.msra.mxu0 %v4377
    %6774 = vmatprep.mubr.f32.mxu0 %v6494
    %6775 = vmatmul.mubr.f32.gmra.mrb[0].mxu0 %v6493
    %v6776 = vpop.f32.mrb[0].mxu0
    %v6777 = vadd.f32 0.0, %v6776
    %v6778 = vpop.f32.mrb[0].mxu0
    %v6779 = vadd.f32 0.0, %v6778
    %6780 = vdwg.mxu0
    %v6789 = vrot.slane %v6564, 4
    %v6790 = vrot.slane %v6566, 4
    %v6791 = vrot.slane %v6635, 4
    %v6792 = vrot.slane %v6637, 4
    %v6793 = vrot.slane %v6706, 4
    %v6794 = vrot.slane %v6708, 4
    %v6795 = vrot.slane %v6777, 4
    %v6796 = vrot.slane %v6779, 4
    %v6805 = vadd.f32 %v3888, %v6789
    %v6806 = vadd.f32 %v3890, %v6790
    %v6807 = vadd.f32 %v3965, %v6791
    %v6808 = vadd.f32 %v3967, %v6792
    %v6809 = vadd.f32 %v4042, %v6793
    %v6810 = vadd.f32 %v4044, %v6794
    %v6811 = vadd.f32 %v4119, %v6795
    %v6812 = vadd.f32 %v4121, %v6796
    %v6813 = vmul.f32 %v6805, 0.5
    %v6814 = vmul.f32 %v6806, 0.5
    %v6815 = vtanh.pop %v6813
    %v6816 = vtanh.pop %v6814
    %v6817 = vmul.f32 %v6815, 0.5
    %v6818 = vmul.f32 %v6816, 0.5
    %v6819 = vadd.f32 %v6817, 0.5
    %v6820 = vadd.f32 %v6818, 0.5
    %v6821 = vmul.f32 %v6807, 0.5
    %v6822 = vmul.f32 %v6808, 0.5
    %v6823 = vtanh.pop %v6821
    %v6824 = vtanh.pop %v6822
    %v6825 = vmul.f32 %v6823, 0.5
    %v6826 = vmul.f32 %v6824, 0.5
    %v6827 = vadd.f32 %v6825, 0.5
    %v6828 = vadd.f32 %v6826, 0.5
    %v6829 = vtanh.pop %v6809
    %v6830 = vtanh.pop %v6810
    %v6831 = vmul.f32 %v6811, 0.5
    %v6832 = vmul.f32 %v6812, 0.5
    %v6833 = vtanh.pop %v6831
    %v6834 = vtanh.pop %v6832
    %v6835 = vmul.f32 %v6833, 0.5
    %v6836 = vmul.f32 %v6834, 0.5
    %v6837 = vadd.f32 %v6835, 0.5
    %v6838 = vadd.f32 %v6836, 0.5
    %v6841 = vrot.slane %v6485, 6
    %v6842 = vrot.slane %v6486, 6
    %v6845 = vmul.f32 %v6827, %v6841
    %v6846 = vmul.f32 %v6828, %v6842
    %v6847 = vmul.f32 %v6819, %v6829
    %v6848 = vmul.f32 %v6820, %v6830
    %v6849 = vadd.f32 %v6845, %v6847
    %v6850 = vadd.f32 %v6846, %v6848
    %v6851 = vtanh.pop %v6849
    %v6852 = vtanh.pop %v6850
    %v6853 = vmul.f32 %v6837, %v6851
    %v6854 = vmul.f32 %v6838, %v6852
    %v6857 = vrot.slane %v6853, 4
    %v6858 = vrot.slane %v6854, 4
    %6861 = vmatprep.subr.mxu0 %v4124
    %6862 = vmatpush1.msra.mxu0 %v4123
    %6863 = vmatprep.subr.mxu0 %v4132
    %6864 = vmatpush1.msra.mxu0 %v4131
    %6865 = vmatprep.subr.mxu0 %v4140
    %6866 = vmatpush1.msra.mxu0 %v4139
    %6867 = vmatprep.subr.mxu0 %v4148
    %6868 = vmatpush1.msra.mxu0 %v4147
    %6869 = vmatprep.subr.mxu0 %v4156
    %6870 = vmatpush1.msra.mxu0 %v4155
    %6871 = vmatprep.subr.mxu0 %v4164
    %6872 = vmatpush1.msra.mxu0 %v4163
    %6873 = vmatprep.subr.mxu0 %v4172
    %6874 = vmatpush1.msra.mxu0 %v4171
    %6875 = vmatprep.subr.mxu0 %v4180
    %6876 = vmatpush1.msra.mxu0 %v4179
    %6877 = vmatprep.subr.mxu0 %v4188
    %6878 = vmatpush1.msra.mxu0 %v4187
    %6879 = vmatprep.subr.mxu0 %v4196
    %6880 = vmatpush1.msra.mxu0 %v4195
    %6881 = vmatprep.subr.mxu0 %v4204
    %6882 = vmatpush1.msra.mxu0 %v4203
    %6883 = vmatprep.subr.mxu0 %v4212
    %6884 = vmatpush1.msra.mxu0 %v4211
    %6885 = vmatprep.subr.mxu0 %v4220
    %6886 = vmatpush1.msra.mxu0 %v4219
    %6887 = vmatprep.subr.mxu0 %v4228
    %6888 = vmatpush1.msra.mxu0 %v4227
    %6889 = vmatprep.subr.mxu0 %v4236
    %6890 = vmatpush1.msra.mxu0 %v4235
    %6891 = vmatprep.subr.mxu0 %v4244
    %6892 = vmatpush1.msra.mxu0 %v4243
    %6893 = vmatprep.subr.mxu0 %v4252
    %6894 = vmatpush1.msra.mxu0 %v4251
    %6895 = vmatprep.subr.mxu0 %v4260
    %6896 = vmatpush1.msra.mxu0 %v4259
    %6897 = vmatprep.subr.mxu0 %v4268
    %6898 = vmatpush1.msra.mxu0 %v4267
    %6899 = vmatprep.subr.mxu0 %v4276
    %6900 = vmatpush1.msra.mxu0 %v4275
    %6901 = vmatprep.subr.mxu0 %v4284
    %6902 = vmatpush1.msra.mxu0 %v4283
    %6903 = vmatprep.subr.mxu0 %v4292
    %6904 = vmatpush1.msra.mxu0 %v4291
    %6905 = vmatprep.subr.mxu0 %v4300
    %6906 = vmatpush1.msra.mxu0 %v4299
    %6907 = vmatprep.subr.mxu0 %v4308
    %6908 = vmatpush1.msra.mxu0 %v4307
    %6909 = vmatprep.subr.mxu0 %v4316
    %6910 = vmatpush1.msra.mxu0 %v4315
    %6911 = vmatprep.subr.mxu0 %v4324
    %6912 = vmatpush1.msra.mxu0 %v4323
    %6913 = vmatprep.subr.mxu0 %v4332
    %6914 = vmatpush1.msra.mxu0 %v4331
    %6915 = vmatprep.subr.mxu0 %v4340
    %6916 = vmatpush1.msra.mxu0 %v4339
    %6917 = vmatprep.subr.mxu0 %v4348
    %6918 = vmatpush1.msra.mxu0 %v4347
    %6919 = vmatprep.subr.mxu0 %v4356
    %6920 = vmatpush1.msra.mxu0 %v4355
    %6921 = vmatprep.subr.mxu0 %v4364
    %6922 = vmatpush1.msra.mxu0 %v4363
    %6923 = vmatprep.subr.mxu0 %v4372
    %6924 = vmatpush1.msra.mxu0 %v4371
    %6925 = vmatprep.mubr.f32.mxu0 %v6858
    %6926 = vmatmul.mubr.f32.gmra.mrb[0].mxu0 %v6857
    %v6927 = vpop.f32.mrb[0].mxu0
    %v6928 = vadd.f32 0.0, %v6927
    %v6929 = vpop.f32.mrb[0].mxu0
    %v6930 = vadd.f32 0.0, %v6929
    %6931 = vdwg.mxu0
    %6932 = vmatprep.subr.mxu0 %v4126
    %6933 = vmatpush1.msra.mxu0 %v4125
    %6934 = vmatprep.subr.mxu0 %v4134
    %6935 = vmatpush1.msra.mxu0 %v4133
    %6936 = vmatprep.subr.mxu0 %v4142
    %6937 = vmatpush1.msra.mxu0 %v4141
    %6938 = vmatprep.subr.mxu0 %v4150
    %6939 = vmatpush1.msra.mxu0 %v4149
    %6940 = vmatprep.subr.mxu0 %v4158
    %6941 = vmatpush1.msra.mxu0 %v4157
    %6942 = vmatprep.subr.mxu0 %v4166
    %6943 = vmatpush1.msra.mxu0 %v4165
    %6944 = vmatprep.subr.mxu0 %v4174
    %6945 = vmatpush1.msra.mxu0 %v4173
    %6946 = vmatprep.subr.mxu0 %v4182
    %6947 = vmatpush1.msra.mxu0 %v4181
    %6948 = vmatprep.subr.mxu0 %v4190
    %6949 = vmatpush1.msra.mxu0 %v4189
    %6950 = vmatprep.subr.mxu0 %v4198
    %6951 = vmatpush1.msra.mxu0 %v4197
    %6952 = vmatprep.subr.mxu0 %v4206
    %6953 = vmatpush1.msra.mxu0 %v4205
    %6954 = vmatprep.subr.mxu0 %v4214
    %6955 = vmatpush1.msra.mxu0 %v4213
    %6956 = vmatprep.subr.mxu0 %v4222
    %6957 = vmatpush1.msra.mxu0 %v4221
    %6958 = vmatprep.subr.mxu0 %v4230
    %6959 = vmatpush1.msra.mxu0 %v4229
    %6960 = vmatprep.subr.mxu0 %v4238
    %6961 = vmatpush1.msra.mxu0 %v4237
    %6962 = vmatprep.subr.mxu0 %v4246
    %6963 = vmatpush1.msra.mxu0 %v4245
    %6964 = vmatprep.subr.mxu0 %v4254
    %6965 = vmatpush1.msra.mxu0 %v4253
    %6966 = vmatprep.subr.mxu0 %v4262
    %6967 = vmatpush1.msra.mxu0 %v4261
    %6968 = vmatprep.subr.mxu0 %v4270
    %6969 = vmatpush1.msra.mxu0 %v4269
    %6970 = vmatprep.subr.mxu0 %v4278
    %6971 = vmatpush1.msra.mxu0 %v4277
    %6972 = vmatprep.subr.mxu0 %v4286
    %6973 = vmatpush1.msra.mxu0 %v4285
    %6974 = vmatprep.subr.mxu0 %v4294
    %6975 = vmatpush1.msra.mxu0 %v4293
    %6976 = vmatprep.subr.mxu0 %v4302
    %6977 = vmatpush1.msra.mxu0 %v4301
    %6978 = vmatprep.subr.mxu0 %v4310
    %6979 = vmatpush1.msra.mxu0 %v4309
    %6980 = vmatprep.subr.mxu0 %v4318
    %6981 = vmatpush1.msra.mxu0 %v4317
    %6982 = vmatprep.subr.mxu0 %v4326
    %6983 = vmatpush1.msra.mxu0 %v4325
    %6984 = vmatprep.subr.mxu0 %v4334
    %6985 = vmatpush1.msra.mxu0 %v4333
    %6986 = vmatprep.subr.mxu0 %v4342
    %6987 = vmatpush1.msra.mxu0 %v4341
    %6988 = vmatprep.subr.mxu0 %v4350
    %6989 = vmatpush1.msra.mxu0 %v4349
    %6990 = vmatprep.subr.mxu0 %v4358
    %6991 = vmatpush1.msra.mxu0 %v4357
    %6992 = vmatprep.subr.mxu0 %v4366
    %6993 = vmatpush1.msra.mxu0 %v4365
    %6994 = vmatprep.subr.mxu0 %v4374
    %6995 = vmatpush1.msra.mxu0 %v4373
    %6996 = vmatprep.mubr.f32.mxu0 %v6858
    %6997 = vmatmul.mubr.f32.gmra.mrb[0].mxu0 %v6857
    %v6998 = vpop.f32.mrb[0].mxu0
    %v6999 = vadd.f32 0.0, %v6998
    %v7000 = vpop.f32.mrb[0].mxu0
    %v7001 = vadd.f32 0.0, %v7000
    %7002 = vdwg.mxu0
    %7003 = vmatprep.subr.mxu0 %v4128
    %7004 = vmatpush1.msra.mxu0 %v4127
    %7005 = vmatprep.subr.mxu0 %v4136
    %7006 = vmatpush1.msra.mxu0 %v4135
    %7007 = vmatprep.subr.mxu0 %v4144
    %7008 = vmatpush1.msra.mxu0 %v4143
    %7009 = vmatprep.subr.mxu0 %v4152
    %7010 = vmatpush1.msra.mxu0 %v4151
    %7011 = vmatprep.subr.mxu0 %v4160
    %7012 = vmatpush1.msra.mxu0 %v4159
    %7013 = vmatprep.subr.mxu0 %v4168
    %7014 = vmatpush1.msra.mxu0 %v4167
    %7015 = vmatprep.subr.mxu0 %v4176
    %7016 = vmatpush1.msra.mxu0 %v4175
    %7017 = vmatprep.subr.mxu0 %v4184
    %7018 = vmatpush1.msra.mxu0 %v4183
    %7019 = vmatprep.subr.mxu0 %v4192
    %7020 = vmatpush1.msra.mxu0 %v4191
    %7021 = vmatprep.subr.mxu0 %v4200
    %7022 = vmatpush1.msra.mxu0 %v4199
    %7023 = vmatprep.subr.mxu0 %v4208
    %7024 = vmatpush1.msra.mxu0 %v4207
    %7025 = vmatprep.subr.mxu0 %v4216
    %7026 = vmatpush1.msra.mxu0 %v4215
    %7027 = vmatprep.subr.mxu0 %v4224
    %7028 = vmatpush1.msra.mxu0 %v4223
    %7029 = vmatprep.subr.mxu0 %v4232
    %7030 = vmatpush1.msra.mxu0 %v4231
    %7031 = vmatprep.subr.mxu0 %v4240
    %7032 = vmatpush1.msra.mxu0 %v4239
    %7033 = vmatprep.subr.mxu0 %v4248
    %7034 = vmatpush1.msra.mxu0 %v4247
    %7035 = vmatprep.subr.mxu0 %v4256
    %7036 = vmatpush1.msra.mxu0 %v4255
    %7037 = vmatprep.subr.mxu0 %v4264
    %7038 = vmatpush1.msra.mxu0 %v4263
    %7039 = vmatprep.subr.mxu0 %v4272
    %7040 = vmatpush1.msra.mxu0 %v4271
    %7041 = vmatprep.subr.mxu0 %v4280
    %7042 = vmatpush1.msra.mxu0 %v4279
    %7043 = vmatprep.subr.mxu0 %v4288
    %7044 = vmatpush1.msra.mxu0 %v4287
    %7045 = vmatprep.subr.mxu0 %v4296
    %7046 = vmatpush1.msra.mxu0 %v4295
    %7047 = vmatprep.subr.mxu0 %v4304
    %7048 = vmatpush1.msra.mxu0 %v4303
    %7049 = vmatprep.subr.mxu0 %v4312
    %7050 = vmatpush1.msra.mxu0 %v4311
    %7051 = vmatprep.subr.mxu0 %v4320
    %7052 = vmatpush1.msra.mxu0 %v4319
    %7053 = vmatprep.subr.mxu0 %v4328
    %7054 = vmatpush1.msra.mxu0 %v4327
    %7055 = vmatprep.subr.mxu0 %v4336
    %7056 = vmatpush1.msra.mxu0 %v4335
    %7057 = vmatprep.subr.mxu0 %v4344
    %7058 = vmatpush1.msra.mxu0 %v4343
    %7059 = vmatprep.subr.mxu0 %v4352
    %7060 = vmatpush1.msra.mxu0 %v4351
    %7061 = vmatprep.subr.mxu0 %v4360
    %7062 = vmatpush1.msra.mxu0 %v4359
    %7063 = vmatprep.subr.mxu0 %v4368
    %7064 = vmatpush1.msra.mxu0 %v4367
    %7065 = vmatprep.subr.mxu0 %v4376
    %7066 = vmatpush1.msra.mxu0 %v4375
    %7067 = vmatprep.mubr.f32.mxu0 %v6858
    %7068 = vmatmul.mubr.f32.gmra.mrb[0].mxu0 %v6857
    %v7069 = vpop.f32.mrb[0].mxu0
    %v7070 = vadd.f32 0.0, %v7069
    %v7071 = vpop.f32.mrb[0].mxu0
    %v7072 = vadd.f32 0.0, %v7071
    %7073 = vdwg.mxu0
    %7074 = vmatprep.subr.mxu0 %v4130
    %7075 = vmatpush1.msra.mxu0 %v4129
    %7076 = vmatprep.subr.mxu0 %v4138
    %7077 = vmatpush1.msra.mxu0 %v4137
    %7078 = vmatprep.subr.mxu0 %v4146
    %7079 = vmatpush1.msra.mxu0 %v4145
    %7080 = vmatprep.subr.mxu0 %v4154
    %7081 = vmatpush1.msra.mxu0 %v4153
    %7082 = vmatprep.subr.mxu0 %v4162
    %7083 = vmatpush1.msra.mxu0 %v4161
    %7084 = vmatprep.subr.mxu0 %v4170
    %7085 = vmatpush1.msra.mxu0 %v4169
    %7086 = vmatprep.subr.mxu0 %v4178
    %7087 = vmatpush1.msra.mxu0 %v4177
    %7088 = vmatprep.subr.mxu0 %v4186
    %7089 = vmatpush1.msra.mxu0 %v4185
    %7090 = vmatprep.subr.mxu0 %v4194
    %7091 = vmatpush1.msra.mxu0 %v4193
    %7092 = vmatprep.subr.mxu0 %v4202
    %7093 = vmatpush1.msra.mxu0 %v4201
    %7094 = vmatprep.subr.mxu0 %v4210
    %7095 = vmatpush1.msra.mxu0 %v4209
    %7096 = vmatprep.subr.mxu0 %v4218
    %7097 = vmatpush1.msra.mxu0 %v4217
    %7098 = vmatprep.subr.mxu0 %v4226
    %7099 = vmatpush1.msra.mxu0 %v4225
    %7100 = vmatprep.subr.mxu0 %v4234
    %7101 = vmatpush1.msra.mxu0 %v4233
    %7102 = vmatprep.subr.mxu0 %v4242
    %7103 = vmatpush1.msra.mxu0 %v4241
    %7104 = vmatprep.subr.mxu0 %v4250
    %7105 = vmatpush1.msra.mxu0 %v4249
    %7106 = vmatprep.subr.mxu0 %v4258
    %7107 = vmatpush1.msra.mxu0 %v4257
    %7108 = vmatprep.subr.mxu0 %v4266
    %7109 = vmatpush1.msra.mxu0 %v4265
    %7110 = vmatprep.subr.mxu0 %v4274
    %7111 = vmatpush1.msra.mxu0 %v4273
    %7112 = vmatprep.subr.mxu0 %v4282
    %7113 = vmatpush1.msra.mxu0 %v4281
    %7114 = vmatprep.subr.mxu0 %v4290
    %7115 = vmatpush1.msra.mxu0 %v4289
    %7116 = vmatprep.subr.mxu0 %v4298
    %7117 = vmatpush1.msra.mxu0 %v4297
    %7118 = vmatprep.subr.mxu0 %v4306
    %7119 = vmatpush1.msra.mxu0 %v4305
    %7120 = vmatprep.subr.mxu0 %v4314
    %7121 = vmatpush1.msra.mxu0 %v4313
    %7122 = vmatprep.subr.mxu0 %v4322
    %7123 = vmatpush1.msra.mxu0 %v4321
    %7124 = vmatprep.subr.mxu0 %v4330
    %7125 = vmatpush1.msra.mxu0 %v4329
    %7126 = vmatprep.subr.mxu0 %v4338
    %7127 = vmatpush1.msra.mxu0 %v4337
    %7128 = vmatprep.subr.mxu0 %v4346
    %7129 = vmatpush1.msra.mxu0 %v4345
    %7130 = vmatprep.subr.mxu0 %v4354
    %7131 = vmatpush1.msra.mxu0 %v4353
    %7132 = vmatprep.subr.mxu0 %v4362
    %7133 = vmatpush1.msra.mxu0 %v4361
    %7134 = vmatprep.subr.mxu0 %v4370
    %7135 = vmatpush1.msra.mxu0 %v4369
    %7136 = vmatprep.subr.mxu0 %v4378
    %7137 = vmatpush1.msra.mxu0 %v4377
    %7138 = vmatprep.mubr.f32.mxu0 %v6858
    %7139 = vmatmul.mubr.f32.gmra.mrb[0].mxu0 %v6857
    %v7140 = vpop.f32.mrb[0].mxu0
    %v7141 = vadd.f32 0.0, %v7140
    %v7142 = vpop.f32.mrb[0].mxu0
    %v7143 = vadd.f32 0.0, %v7142
    %7144 = vdwg.mxu0
    %v7153 = vrot.slane %v6928, 2
    %v7154 = vrot.slane %v6930, 2
    %v7155 = vrot.slane %v6999, 2
    %v7156 = vrot.slane %v7001, 2
    %v7157 = vrot.slane %v7070, 2
    %v7158 = vrot.slane %v7072, 2
    %v7159 = vrot.slane %v7141, 2
    %v7160 = vrot.slane %v7143, 2
    %v7169 = vadd.f32 %v3888, %v7153
    %v7170 = vadd.f32 %v3890, %v7154
    %v7171 = vadd.f32 %v3965, %v7155
    %v7172 = vadd.f32 %v3967, %v7156
    %v7173 = vadd.f32 %v4042, %v7157
    %v7174 = vadd.f32 %v4044, %v7158
    %v7175 = vadd.f32 %v4119, %v7159
    %v7176 = vadd.f32 %v4121, %v7160
    %v7177 = vmul.f32 %v7169, 0.5
    %v7178 = vmul.f32 %v7170, 0.5
    %v7179 = vtanh.pop %v7177
    %v7180 = vtanh.pop %v7178
    %v7181 = vmul.f32 %v7179, 0.5
    %v7182 = vmul.f32 %v7180, 0.5
    %v7183 = vadd.f32 %v7181, 0.5
    %v7184 = vadd.f32 %v7182, 0.5
    %v7185 = vmul.f32 %v7171, 0.5
    %v7186 = vmul.f32 %v7172, 0.5
    %v7187 = vtanh.pop %v7185
    %v7188 = vtanh.pop %v7186
    %v7189 = vmul.f32 %v7187, 0.5
    %v7190 = vmul.f32 %v7188, 0.5
    %v7191 = vadd.f32 %v7189, 0.5
    %v7192 = vadd.f32 %v7190, 0.5
    %v7193 = vtanh.pop %v7173
    %v7194 = vtanh.pop %v7174
    %v7195 = vmul.f32 %v7175, 0.5
    %v7196 = vmul.f32 %v7176, 0.5
    %v7197 = vtanh.pop %v7195
    %v7198 = vtanh.pop %v7196
    %v7199 = vmul.f32 %v7197, 0.5
    %v7200 = vmul.f32 %v7198, 0.5
    %v7201 = vadd.f32 %v7199, 0.5
    %v7202 = vadd.f32 %v7200, 0.5
    %v7205 = vrot.slane %v6849, 6
    %v7206 = vrot.slane %v6850, 6
    %v7209 = vmul.f32 %v7191, %v7205
    %v7210 = vmul.f32 %v7192, %v7206
    %v7211 = vmul.f32 %v7183, %v7193
    %v7212 = vmul.f32 %v7184, %v7194
    %v7213 = vadd.f32 %v7209, %v7211
    %v7214 = vadd.f32 %v7210, %v7212
    %v7215 = vtanh.pop %v7213
    %v7216 = vtanh.pop %v7214
    %v7217 = vmul.f32 %v7201, %v7215
    %v7218 = vmul.f32 %v7202, %v7216
    %v7219 = vld [vmem:[#allocation17] sm:$0xff]
    %v7220 = vld [vmem:[#allocation17 + $0x8] sm:$0xff]
    %v7221 = vld [vmem:[#allocation17 + $0x10] sm:$0xff]
    %v7222 = vld [vmem:[#allocation17 + $0x18] sm:$0xff]
    %v7223 = vld [vmem:[#allocation17 + $0x20] sm:$0xff]
    %v7224 = vld [vmem:[#allocation17 + $0x28] sm:$0xff]
    %v7225 = vld [vmem:[#allocation17 + $0x30] sm:$0xff]
    %v7226 = vld [vmem:[#allocation17 + $0x38] sm:$0xff]
    %v7227 = vld [vmem:[#allocation17 + $0x40] sm:$0xff]
    %v7228 = vld [vmem:[#allocation17 + $0x48] sm:$0xff]
    %v7229 = vld [vmem:[#allocation17 + $0x50] sm:$0xff]
    %v7230 = vld [vmem:[#allocation17 + $0x58] sm:$0xff]
    %v7231 = vld [vmem:[#allocation17 + $0x60] sm:$0xff]
    %v7232 = vld [vmem:[#allocation17 + $0x68] sm:$0xff]
    %v7233 = vld [vmem:[#allocation17 + $0x70] sm:$0xff]
    %v7234 = vld [vmem:[#allocation17 + $0x78] sm:$0xff]
    %v7235 = vld [vmem:[#allocation17 + $0x80] sm:$0xff]
    %v7236 = vld [vmem:[#allocation17 + $0x88] sm:$0xff]
    %v7237 = vld [vmem:[#allocation17 + $0x90] sm:$0xff]
    %v7238 = vld [vmem:[#allocation17 + $0x98] sm:$0xff]
    %v7239 = vld [vmem:[#allocation17 + $0xa0] sm:$0xff]
    %v7240 = vld [vmem:[#allocation17 + $0xa8] sm:$0xff]
    %v7241 = vld [vmem:[#allocation17 + $0xb0] sm:$0xff]
    %v7242 = vld [vmem:[#allocation17 + $0xb8] sm:$0xff]
    %v7243 = vld [vmem:[#allocation17 + $0xc0] sm:$0xff]
    %v7244 = vld [vmem:[#allocation17 + $0xc8] sm:$0xff]
    %v7245 = vld [vmem:[#allocation17 + $0xd0] sm:$0xff]
    %v7246 = vld [vmem:[#allocation17 + $0xd8] sm:$0xff]
    %v7247 = vld [vmem:[#allocation17 + $0xe0] sm:$0xff]
    %v7248 = vld [vmem:[#allocation17 + $0xe8] sm:$0xff]
    %v7249 = vld [vmem:[#allocation17 + $0xf0] sm:$0xff]
    %v7250 = vld [vmem:[#allocation17 + $0xf8] sm:$0xff]
    %v7251 = vld [vmem:[#allocation17 + $0x100] sm:$0xff]
    %v7252 = vld [vmem:[#allocation17 + $0x108] sm:$0xff]
    %v7253 = vld [vmem:[#allocation17 + $0x110] sm:$0xff]
    %v7254 = vld [vmem:[#allocation17 + $0x118] sm:$0xff]
    %v7255 = vld [vmem:[#allocation17 + $0x120] sm:$0xff]
    %v7256 = vld [vmem:[#allocation17 + $0x128] sm:$0xff]
    %v7257 = vld [vmem:[#allocation17 + $0x130] sm:$0xff]
    %v7258 = vld [vmem:[#allocation17 + $0x138] sm:$0xff]
    %v7259 = vld [vmem:[#allocation17 + $0x140] sm:$0xff]
    %v7260 = vld [vmem:[#allocation17 + $0x148] sm:$0xff]
    %v7261 = vld [vmem:[#allocation17 + $0x150] sm:$0xff]
    %v7262 = vld [vmem:[#allocation17 + $0x158] sm:$0xff]
    %v7263 = vld [vmem:[#allocation17 + $0x160] sm:$0xff]
    %v7264 = vld [vmem:[#allocation17 + $0x168] sm:$0xff]
    %v7265 = vld [vmem:[#allocation17 + $0x170] sm:$0xff]
    %v7266 = vld [vmem:[#allocation17 + $0x178] sm:$0xff]
    %v7267 = vld [vmem:[#allocation17 + $0x180] sm:$0xff]
    %v7268 = vld [vmem:[#allocation17 + $0x188] sm:$0xff]
    %v7269 = vld [vmem:[#allocation17 + $0x190] sm:$0xff]
    %v7270 = vld [vmem:[#allocation17 + $0x198] sm:$0xff]
    %v7271 = vld [vmem:[#allocation17 + $0x1a0] sm:$0xff]
    %v7272 = vld [vmem:[#allocation17 + $0x1a8] sm:$0xff]
    %v7273 = vld [vmem:[#allocation17 + $0x1b0] sm:$0xff]
    %v7274 = vld [vmem:[#allocation17 + $0x1b8] sm:$0xff]
    %v7275 = vld [vmem:[#allocation17 + $0x1c0] sm:$0xff]
    %v7276 = vld [vmem:[#allocation17 + $0x1c8] sm:$0xff]
    %v7277 = vld [vmem:[#allocation17 + $0x1d0] sm:$0xff]
    %v7278 = vld [vmem:[#allocation17 + $0x1d8] sm:$0xff]
    %v7279 = vld [vmem:[#allocation17 + $0x1e0] sm:$0xff]
    %v7280 = vld [vmem:[#allocation17 + $0x1e8] sm:$0xff]
    %v7281 = vld [vmem:[#allocation17 + $0x1f0] sm:$0xff]
    %v7282 = vld [vmem:[#allocation17 + $0x1f8] sm:$0xff]
    %v7283 = vld [vmem:[#allocation19] sm:$0x3]
    %v7285 = vlaneseq
    %v7286 = vshrl.u32 %v7285, 7
    %v7287 = vsub.s32 0, %v7286
    %v7288 = vrot.slane %v7283, %v7287
    %v7289 = vlaneseq
    %v7290 = vshrl.u32 %v7289, 7
    %v7291 = vsub.s32 1, %v7290
    %v7292 = vrot.slane %v7283, %v7291
    %v7297 = vrot.slane %v7217, 6
    %v7298 = vrot.slane %v7218, 6
    %7301 = vmatprep.subr.mxu0 %v7220
    %7302 = vmatpush1.msra.mxu0 %v7219
    %7303 = vmatprep.subr.mxu0 %v7222
    %7304 = vmatpush1.msra.mxu0 %v7221
    %7305 = vmatprep.subr.mxu0 %v7224
    %7306 = vmatpush1.msra.mxu0 %v7223
    %7307 = vmatprep.subr.mxu0 %v7226
    %7308 = vmatpush1.msra.mxu0 %v7225
    %7309 = vmatprep.subr.mxu0 %v7228
    %7310 = vmatpush1.msra.mxu0 %v7227
    %7311 = vmatprep.subr.mxu0 %v7230
    %7312 = vmatpush1.msra.mxu0 %v7229
    %7313 = vmatprep.subr.mxu0 %v7232
    %7314 = vmatpush1.msra.mxu0 %v7231
    %7315 = vmatprep.subr.mxu0 %v7234
    %7316 = vmatpush1.msra.mxu0 %v7233
    %7317 = vmatprep.subr.mxu0 %v7236
    %7318 = vmatpush1.msra.mxu0 %v7235
    %7319 = vmatprep.subr.mxu0 %v7238
    %7320 = vmatpush1.msra.mxu0 %v7237
    %7321 = vmatprep.subr.mxu0 %v7240
    %7322 = vmatpush1.msra.mxu0 %v7239
    %7323 = vmatprep.subr.mxu0 %v7242
    %7324 = vmatpush1.msra.mxu0 %v7241
    %7325 = vmatprep.subr.mxu0 %v7244
    %7326 = vmatpush1.msra.mxu0 %v7243
    %7327 = vmatprep.subr.mxu0 %v7246
    %7328 = vmatpush1.msra.mxu0 %v7245
    %7329 = vmatprep.subr.mxu0 %v7248
    %7330 = vmatpush1.msra.mxu0 %v7247
    %7331 = vmatprep.subr.mxu0 %v7250
    %7332 = vmatpush1.msra.mxu0 %v7249
    %7333 = vmatprep.subr.mxu0 %v7252
    %7334 = vmatpush1.msra.mxu0 %v7251
    %7335 = vmatprep.subr.mxu0 %v7254
    %7336 = vmatpush1.msra.mxu0 %v7253
    %7337 = vmatprep.subr.mxu0 %v7256
    %7338 = vmatpush1.msra.mxu0 %v7255
    %7339 = vmatprep.subr.mxu0 %v7258
    %7340 = vmatpush1.msra.mxu0 %v7257
    %7341 = vmatprep.subr.mxu0 %v7260
    %7342 = vmatpush1.msra.mxu0 %v7259
    %7343 = vmatprep.subr.mxu0 %v7262
    %7344 = vmatpush1.msra.mxu0 %v7261
    %7345 = vmatprep.subr.mxu0 %v7264
    %7346 = vmatpush1.msra.mxu0 %v7263
    %7347 = vmatprep.subr.mxu0 %v7266
    %7348 = vmatpush1.msra.mxu0 %v7265
    %7349 = vmatprep.subr.mxu0 %v7268
    %7350 = vmatpush1.msra.mxu0 %v7267
    %7351 = vmatprep.subr.mxu0 %v7270
    %7352 = vmatpush1.msra.mxu0 %v7269
    %7353 = vmatprep.subr.mxu0 %v7272
    %7354 = vmatpush1.msra.mxu0 %v7271
    %7355 = vmatprep.subr.mxu0 %v7274
    %7356 = vmatpush1.msra.mxu0 %v7273
    %7357 = vmatprep.subr.mxu0 %v7276
    %7358 = vmatpush1.msra.mxu0 %v7275
    %7359 = vmatprep.subr.mxu0 %v7278
    %7360 = vmatpush1.msra.mxu0 %v7277
    %7361 = vmatprep.subr.mxu0 %v7280
    %7362 = vmatpush1.msra.mxu0 %v7279
    %7363 = vmatprep.subr.mxu0 %v7282
    %7364 = vmatpush1.msra.mxu0 %v7281
    %7365 = vmatprep.mubr.f32.mxu0 %v7298
    %7366 = vmatmul.mubr.f32.gmra.mrb[0].mxu0 %v7297
    %v7367 = vpop.f32.mrb[0].mxu0
    %v7368 = vadd.f32 %v7288, %v7367
    %v7369 = vpop.f32.mrb[0].mxu0
    %v7370 = vadd.f32 %v7292, %v7369
    %7371 = vdwg.mxu0
    %v7372 = vmax.f32 %v7368, 0.0
    %v7373 = vmax.f32 %v7370, 0.0
    %v7374 = vld [vmem:[#allocation20] sm:$0xff]
    %v7375 = vld [vmem:[#allocation20 + $0x8] sm:$0xff]
    %v7376 = vld [vmem:[#allocation20 + $0x10] sm:$0xff]
    %v7377 = vld [vmem:[#allocation20 + $0x18] sm:$0xff]
    %v7378 = vld [vmem:[#allocation20 + $0x20] sm:$0xff]
    %v7379 = vld [vmem:[#allocation20 + $0x28] sm:$0xff]
    %v7380 = vld [vmem:[#allocation20 + $0x30] sm:$0xff]
    %v7381 = vld [vmem:[#allocation20 + $0x38] sm:$0xff]
    %v7382 = vld [vmem:[#allocation20 + $0x40] sm:$0xff]
    %v7383 = vld [vmem:[#allocation20 + $0x48] sm:$0xff]
    %v7384 = vld [vmem:[#allocation20 + $0x50] sm:$0xff]
    %v7385 = vld [vmem:[#allocation20 + $0x58] sm:$0xff]
    %v7386 = vld [vmem:[#allocation20 + $0x60] sm:$0xff]
    %v7387 = vld [vmem:[#allocation20 + $0x68] sm:$0xff]
    %v7388 = vld [vmem:[#allocation20 + $0x70] sm:$0xff]
    %v7389 = vld [vmem:[#allocation20 + $0x78] sm:$0xff]
    %v7390 = vld [vmem:[#allocation20 + $0x80] sm:$0xff]
    %v7391 = vld [vmem:[#allocation20 + $0x88] sm:$0xff]
    %v7392 = vld [vmem:[#allocation20 + $0x90] sm:$0xff]
    %v7393 = vld [vmem:[#allocation20 + $0x98] sm:$0xff]
    %v7394 = vld [vmem:[#allocation20 + $0xa0] sm:$0xff]
    %v7395 = vld [vmem:[#allocation20 + $0xa8] sm:$0xff]
    %v7396 = vld [vmem:[#allocation20 + $0xb0] sm:$0xff]
    %v7397 = vld [vmem:[#allocation20 + $0xb8] sm:$0xff]
    %v7398 = vld [vmem:[#allocation20 + $0xc0] sm:$0xff]
    %v7399 = vld [vmem:[#allocation20 + $0xc8] sm:$0xff]
    %v7400 = vld [vmem:[#allocation20 + $0xd0] sm:$0xff]
    %v7401 = vld [vmem:[#allocation20 + $0xd8] sm:$0xff]
    %v7402 = vld [vmem:[#allocation20 + $0xe0] sm:$0xff]
    %v7403 = vld [vmem:[#allocation20 + $0xe8] sm:$0xff]
    %v7404 = vld [vmem:[#allocation20 + $0xf0] sm:$0xff]
    %v7405 = vld [vmem:[#allocation20 + $0xf8] sm:$0xff]
    %v7406 = vld [vmem:[#allocation20 + $0x100] sm:$0xff]
    %v7407 = vld [vmem:[#allocation20 + $0x108] sm:$0xff]
    %v7408 = vld [vmem:[#allocation20 + $0x110] sm:$0xff]
    %v7409 = vld [vmem:[#allocation20 + $0x118] sm:$0xff]
    %v7410 = vld [vmem:[#allocation20 + $0x120] sm:$0xff]
    %v7411 = vld [vmem:[#allocation20 + $0x128] sm:$0xff]
    %v7412 = vld [vmem:[#allocation20 + $0x130] sm:$0xff]
    %v7413 = vld [vmem:[#allocation20 + $0x138] sm:$0xff]
    %v7414 = vld [vmem:[#allocation20 + $0x140] sm:$0xff]
    %v7415 = vld [vmem:[#allocation20 + $0x148] sm:$0xff]
    %v7416 = vld [vmem:[#allocation20 + $0x150] sm:$0xff]
    %v7417 = vld [vmem:[#allocation20 + $0x158] sm:$0xff]
    %v7418 = vld [vmem:[#allocation20 + $0x160] sm:$0xff]
    %v7419 = vld [vmem:[#allocation20 + $0x168] sm:$0xff]
    %v7420 = vld [vmem:[#allocation20 + $0x170] sm:$0xff]
    %v7421 = vld [vmem:[#allocation20 + $0x178] sm:$0xff]
    %v7422 = vld [vmem:[#allocation20 + $0x180] sm:$0xff]
    %v7423 = vld [vmem:[#allocation20 + $0x188] sm:$0xff]
    %v7424 = vld [vmem:[#allocation20 + $0x190] sm:$0xff]
    %v7425 = vld [vmem:[#allocation20 + $0x198] sm:$0xff]
    %v7426 = vld [vmem:[#allocation20 + $0x1a0] sm:$0xff]
    %v7427 = vld [vmem:[#allocation20 + $0x1a8] sm:$0xff]
    %v7428 = vld [vmem:[#allocation20 + $0x1b0] sm:$0xff]
    %v7429 = vld [vmem:[#allocation20 + $0x1b8] sm:$0xff]
    %v7430 = vld [vmem:[#allocation20 + $0x1c0] sm:$0xff]
    %v7431 = vld [vmem:[#allocation20 + $0x1c8] sm:$0xff]
    %v7432 = vld [vmem:[#allocation20 + $0x1d0] sm:$0xff]
    %v7433 = vld [vmem:[#allocation20 + $0x1d8] sm:$0xff]
    %v7434 = vld [vmem:[#allocation20 + $0x1e0] sm:$0xff]
    %v7435 = vld [vmem:[#allocation20 + $0x1e8] sm:$0xff]
    %v7436 = vld [vmem:[#allocation20 + $0x1f0] sm:$0xff]
    %v7437 = vld [vmem:[#allocation20 + $0x1f8] sm:$0xff]
    %v7438 = vld [vmem:[#allocation20 + $0x200] sm:$0xff]
    %v7439 = vld [vmem:[#allocation20 + $0x208] sm:$0xff]
    %v7440 = vld [vmem:[#allocation20 + $0x210] sm:$0xff]
    %v7441 = vld [vmem:[#allocation20 + $0x218] sm:$0xff]
    %v7442 = vld [vmem:[#allocation20 + $0x220] sm:$0xff]
    %v7443 = vld [vmem:[#allocation20 + $0x228] sm:$0xff]
    %v7444 = vld [vmem:[#allocation20 + $0x230] sm:$0xff]
    %v7445 = vld [vmem:[#allocation20 + $0x238] sm:$0xff]
    %v7446 = vld [vmem:[#allocation20 + $0x240] sm:$0xff]
    %v7447 = vld [vmem:[#allocation20 + $0x248] sm:$0xff]
    %v7448 = vld [vmem:[#allocation20 + $0x250] sm:$0xff]
    %v7449 = vld [vmem:[#allocation20 + $0x258] sm:$0xff]
    %v7450 = vld [vmem:[#allocation20 + $0x260] sm:$0xff]
    %v7451 = vld [vmem:[#allocation20 + $0x268] sm:$0xff]
    %v7452 = vld [vmem:[#allocation20 + $0x270] sm:$0xff]
    %v7453 = vld [vmem:[#allocation20 + $0x278] sm:$0xff]
    %v7454 = vld [vmem:[#allocation20 + $0x280] sm:$0xff]
    %v7455 = vld [vmem:[#allocation20 + $0x288] sm:$0xff]
    %v7456 = vld [vmem:[#allocation20 + $0x290] sm:$0xff]
    %v7457 = vld [vmem:[#allocation20 + $0x298] sm:$0xff]
    %v7458 = vld [vmem:[#allocation20 + $0x2a0] sm:$0xff]
    %v7459 = vld [vmem:[#allocation20 + $0x2a8] sm:$0xff]
    %v7460 = vld [vmem:[#allocation20 + $0x2b0] sm:$0xff]
    %v7461 = vld [vmem:[#allocation20 + $0x2b8] sm:$0xff]
    %v7462 = vld [vmem:[#allocation20 + $0x2c0] sm:$0xff]
    %v7463 = vld [vmem:[#allocation20 + $0x2c8] sm:$0xff]
    %v7464 = vld [vmem:[#allocation20 + $0x2d0] sm:$0xff]
    %v7465 = vld [vmem:[#allocation20 + $0x2d8] sm:$0xff]
    %v7466 = vld [vmem:[#allocation20 + $0x2e0] sm:$0xff]
    %v7467 = vld [vmem:[#allocation20 + $0x2e8] sm:$0xff]
    %v7468 = vld [vmem:[#allocation20 + $0x2f0] sm:$0xff]
    %v7469 = vld [vmem:[#allocation20 + $0x2f8] sm:$0xff]
    %v7470 = vld [vmem:[#allocation20 + $0x300] sm:$0xff]
    %v7471 = vld [vmem:[#allocation20 + $0x308] sm:$0xff]
    %v7472 = vld [vmem:[#allocation20 + $0x310] sm:$0xff]
    %v7473 = vld [vmem:[#allocation20 + $0x318] sm:$0xff]
    %v7474 = vld [vmem:[#allocation20 + $0x320] sm:$0xff]
    %v7475 = vld [vmem:[#allocation20 + $0x328] sm:$0xff]
    %v7476 = vld [vmem:[#allocation20 + $0x330] sm:$0xff]
    %v7477 = vld [vmem:[#allocation20 + $0x338] sm:$0xff]
    %v7478 = vld [vmem:[#allocation20 + $0x340] sm:$0xff]
    %v7479 = vld [vmem:[#allocation20 + $0x348] sm:$0xff]
    %v7480 = vld [vmem:[#allocation20 + $0x350] sm:$0xff]
    %v7481 = vld [vmem:[#allocation20 + $0x358] sm:$0xff]
    %v7482 = vld [vmem:[#allocation20 + $0x360] sm:$0xff]
    %v7483 = vld [vmem:[#allocation20 + $0x368] sm:$0xff]
    %v7484 = vld [vmem:[#allocation20 + $0x370] sm:$0xff]
    %v7485 = vld [vmem:[#allocation20 + $0x378] sm:$0xff]
    %v7486 = vld [vmem:[#allocation20 + $0x380] sm:$0xff]
    %v7487 = vld [vmem:[#allocation20 + $0x388] sm:$0xff]
    %v7488 = vld [vmem:[#allocation20 + $0x390] sm:$0xff]
    %v7489 = vld [vmem:[#allocation20 + $0x398] sm:$0xff]
    %v7490 = vld [vmem:[#allocation20 + $0x3a0] sm:$0xff]
    %v7491 = vld [vmem:[#allocation20 + $0x3a8] sm:$0xff]
    %v7492 = vld [vmem:[#allocation20 + $0x3b0] sm:$0xff]
    %v7493 = vld [vmem:[#allocation20 + $0x3b8] sm:$0xff]
    %v7494 = vld [vmem:[#allocation20 + $0x3c0] sm:$0xff]
    %v7495 = vld [vmem:[#allocation20 + $0x3c8] sm:$0xff]
    %v7496 = vld [vmem:[#allocation20 + $0x3d0] sm:$0xff]
    %v7497 = vld [vmem:[#allocation20 + $0x3d8] sm:$0xff]
    %v7498 = vld [vmem:[#allocation20 + $0x3e0] sm:$0xff]
    %v7499 = vld [vmem:[#allocation20 + $0x3e8] sm:$0xff]
    %v7500 = vld [vmem:[#allocation20 + $0x3f0] sm:$0xff]
    %v7501 = vld [vmem:[#allocation20 + $0x3f8] sm:$0xff]
    %v7502 = vld [vmem:[#allocation20 + $0x400] sm:$0xff]
    %v7503 = vld [vmem:[#allocation20 + $0x408] sm:$0xff]
    %v7504 = vld [vmem:[#allocation20 + $0x410] sm:$0xff]
    %v7505 = vld [vmem:[#allocation20 + $0x418] sm:$0xff]
    %v7506 = vld [vmem:[#allocation20 + $0x420] sm:$0xff]
    %v7507 = vld [vmem:[#allocation20 + $0x428] sm:$0xff]
    %v7508 = vld [vmem:[#allocation20 + $0x430] sm:$0xff]
    %v7509 = vld [vmem:[#allocation20 + $0x438] sm:$0xff]
    %v7510 = vld [vmem:[#allocation20 + $0x440] sm:$0xff]
    %v7511 = vld [vmem:[#allocation20 + $0x448] sm:$0xff]
    %v7512 = vld [vmem:[#allocation20 + $0x450] sm:$0xff]
    %v7513 = vld [vmem:[#allocation20 + $0x458] sm:$0xff]
    %v7514 = vld [vmem:[#allocation20 + $0x460] sm:$0xff]
    %v7515 = vld [vmem:[#allocation20 + $0x468] sm:$0xff]
    %v7516 = vld [vmem:[#allocation20 + $0x470] sm:$0xff]
    %v7517 = vld [vmem:[#allocation20 + $0x478] sm:$0xff]
    %v7518 = vld [vmem:[#allocation20 + $0x480] sm:$0xff]
    %v7519 = vld [vmem:[#allocation20 + $0x488] sm:$0xff]
    %v7520 = vld [vmem:[#allocation20 + $0x490] sm:$0xff]
    %v7521 = vld [vmem:[#allocation20 + $0x498] sm:$0xff]
    %v7522 = vld [vmem:[#allocation20 + $0x4a0] sm:$0xff]
    %v7523 = vld [vmem:[#allocation20 + $0x4a8] sm:$0xff]
    %v7524 = vld [vmem:[#allocation20 + $0x4b0] sm:$0xff]
    %v7525 = vld [vmem:[#allocation20 + $0x4b8] sm:$0xff]
    %v7526 = vld [vmem:[#allocation20 + $0x4c0] sm:$0xff]
    %v7527 = vld [vmem:[#allocation20 + $0x4c8] sm:$0xff]
    %v7528 = vld [vmem:[#allocation20 + $0x4d0] sm:$0xff]
    %v7529 = vld [vmem:[#allocation20 + $0x4d8] sm:$0xff]
    %v7530 = vld [vmem:[#allocation20 + $0x4e0] sm:$0xff]
    %v7531 = vld [vmem:[#allocation20 + $0x4e8] sm:$0xff]
    %v7532 = vld [vmem:[#allocation20 + $0x4f0] sm:$0xff]
    %v7533 = vld [vmem:[#allocation20 + $0x4f8] sm:$0xff]
    %v7534 = vld [vmem:[#allocation20 + $0x500] sm:$0xff]
    %v7535 = vld [vmem:[#allocation20 + $0x508] sm:$0xff]
    %v7536 = vld [vmem:[#allocation20 + $0x510] sm:$0xff]
    %v7537 = vld [vmem:[#allocation20 + $0x518] sm:$0xff]
    %v7538 = vld [vmem:[#allocation20 + $0x520] sm:$0xff]
    %v7539 = vld [vmem:[#allocation20 + $0x528] sm:$0xff]
    %v7540 = vld [vmem:[#allocation20 + $0x530] sm:$0xff]
    %v7541 = vld [vmem:[#allocation20 + $0x538] sm:$0xff]
    %v7542 = vld [vmem:[#allocation20 + $0x540] sm:$0xff]
    %v7543 = vld [vmem:[#allocation20 + $0x548] sm:$0xff]
    %v7544 = vld [vmem:[#allocation20 + $0x550] sm:$0xff]
    %v7545 = vld [vmem:[#allocation20 + $0x558] sm:$0xff]
    %v7546 = vld [vmem:[#allocation20 + $0x560] sm:$0xff]
    %v7547 = vld [vmem:[#allocation20 + $0x568] sm:$0xff]
    %v7548 = vld [vmem:[#allocation20 + $0x570] sm:$0xff]
    %v7549 = vld [vmem:[#allocation20 + $0x578] sm:$0xff]
    %v7550 = vld [vmem:[#allocation20 + $0x580] sm:$0xff]
    %v7551 = vld [vmem:[#allocation20 + $0x588] sm:$0xff]
    %v7552 = vld [vmem:[#allocation20 + $0x590] sm:$0xff]
    %v7553 = vld [vmem:[#allocation20 + $0x598] sm:$0xff]
    %v7554 = vld [vmem:[#allocation20 + $0x5a0] sm:$0xff]
    %v7555 = vld [vmem:[#allocation20 + $0x5a8] sm:$0xff]
    %v7556 = vld [vmem:[#allocation20 + $0x5b0] sm:$0xff]
    %v7557 = vld [vmem:[#allocation20 + $0x5b8] sm:$0xff]
    %v7558 = vld [vmem:[#allocation20 + $0x5c0] sm:$0xff]
    %v7559 = vld [vmem:[#allocation20 + $0x5c8] sm:$0xff]
    %v7560 = vld [vmem:[#allocation20 + $0x5d0] sm:$0xff]
    %v7561 = vld [vmem:[#allocation20 + $0x5d8] sm:$0xff]
    %v7562 = vld [vmem:[#allocation20 + $0x5e0] sm:$0xff]
    %v7563 = vld [vmem:[#allocation20 + $0x5e8] sm:$0xff]
    %v7564 = vld [vmem:[#allocation20 + $0x5f0] sm:$0xff]
    %v7565 = vld [vmem:[#allocation20 + $0x5f8] sm:$0xff]
    %v7566 = vld [vmem:[#allocation20 + $0x600] sm:$0xff]
    %v7567 = vld [vmem:[#allocation20 + $0x608] sm:$0xff]
    %v7568 = vld [vmem:[#allocation20 + $0x610] sm:$0xff]
    %v7569 = vld [vmem:[#allocation20 + $0x618] sm:$0xff]
    %v7570 = vld [vmem:[#allocation20 + $0x620] sm:$0xff]
    %v7571 = vld [vmem:[#allocation20 + $0x628] sm:$0xff]
    %v7572 = vld [vmem:[#allocation20 + $0x630] sm:$0xff]
    %v7573 = vld [vmem:[#allocation20 + $0x638] sm:$0xff]
    %v7574 = vld [vmem:[#allocation20 + $0x640] sm:$0xff]
    %v7575 = vld [vmem:[#allocation20 + $0x648] sm:$0xff]
    %v7576 = vld [vmem:[#allocation20 + $0x650] sm:$0xff]
    %v7577 = vld [vmem:[#allocation20 + $0x658] sm:$0xff]
    %v7578 = vld [vmem:[#allocation20 + $0x660] sm:$0xff]
    %v7579 = vld [vmem:[#allocation20 + $0x668] sm:$0xff]
    %v7580 = vld [vmem:[#allocation20 + $0x670] sm:$0xff]
    %v7581 = vld [vmem:[#allocation20 + $0x678] sm:$0xff]
    %v7582 = vld [vmem:[#allocation20 + $0x680] sm:$0xff]
    %v7583 = vld [vmem:[#allocation20 + $0x688] sm:$0xff]
    %v7584 = vld [vmem:[#allocation20 + $0x690] sm:$0xff]
    %v7585 = vld [vmem:[#allocation20 + $0x698] sm:$0xff]
    %v7586 = vld [vmem:[#allocation20 + $0x6a0] sm:$0xff]
    %v7587 = vld [vmem:[#allocation20 + $0x6a8] sm:$0xff]
    %v7588 = vld [vmem:[#allocation20 + $0x6b0] sm:$0xff]
    %v7589 = vld [vmem:[#allocation20 + $0x6b8] sm:$0xff]
    %v7590 = vld [vmem:[#allocation20 + $0x6c0] sm:$0xff]
    %v7591 = vld [vmem:[#allocation20 + $0x6c8] sm:$0xff]
    %v7592 = vld [vmem:[#allocation20 + $0x6d0] sm:$0xff]
    %v7593 = vld [vmem:[#allocation20 + $0x6d8] sm:$0xff]
    %v7594 = vld [vmem:[#allocation20 + $0x6e0] sm:$0xff]
    %v7595 = vld [vmem:[#allocation20 + $0x6e8] sm:$0xff]
    %v7596 = vld [vmem:[#allocation20 + $0x6f0] sm:$0xff]
    %v7597 = vld [vmem:[#allocation20 + $0x6f8] sm:$0xff]
    %v7598 = vld [vmem:[#allocation20 + $0x700] sm:$0xff]
    %v7599 = vld [vmem:[#allocation20 + $0x708] sm:$0xff]
    %v7600 = vld [vmem:[#allocation20 + $0x710] sm:$0xff]
    %v7601 = vld [vmem:[#allocation20 + $0x718] sm:$0xff]
    %v7602 = vld [vmem:[#allocation20 + $0x720] sm:$0xff]
    %v7603 = vld [vmem:[#allocation20 + $0x728] sm:$0xff]
    %v7604 = vld [vmem:[#allocation20 + $0x730] sm:$0xff]
    %v7605 = vld [vmem:[#allocation20 + $0x738] sm:$0xff]
    %v7606 = vld [vmem:[#allocation20 + $0x740] sm:$0xff]
    %v7607 = vld [vmem:[#allocation20 + $0x748] sm:$0xff]
    %v7608 = vld [vmem:[#allocation20 + $0x750] sm:$0xff]
    %v7609 = vld [vmem:[#allocation20 + $0x758] sm:$0xff]
    %v7610 = vld [vmem:[#allocation20 + $0x760] sm:$0xff]
    %v7611 = vld [vmem:[#allocation20 + $0x768] sm:$0xff]
    %v7612 = vld [vmem:[#allocation20 + $0x770] sm:$0xff]
    %v7613 = vld [vmem:[#allocation20 + $0x778] sm:$0xff]
    %v7614 = vld [vmem:[#allocation20 + $0x780] sm:$0xff]
    %v7615 = vld [vmem:[#allocation20 + $0x788] sm:$0xff]
    %v7616 = vld [vmem:[#allocation20 + $0x790] sm:$0xff]
    %v7617 = vld [vmem:[#allocation20 + $0x798] sm:$0xff]
    %v7618 = vld [vmem:[#allocation20 + $0x7a0] sm:$0xff]
    %v7619 = vld [vmem:[#allocation20 + $0x7a8] sm:$0xff]
    %v7620 = vld [vmem:[#allocation20 + $0x7b0] sm:$0xff]
    %v7621 = vld [vmem:[#allocation20 + $0x7b8] sm:$0xff]
    %v7622 = vld [vmem:[#allocation20 + $0x7c0] sm:$0xff]
    %v7623 = vld [vmem:[#allocation20 + $0x7c8] sm:$0xff]
    %v7624 = vld [vmem:[#allocation20 + $0x7d0] sm:$0xff]
    %v7625 = vld [vmem:[#allocation20 + $0x7d8] sm:$0xff]
    %v7626 = vld [vmem:[#allocation20 + $0x7e0] sm:$0xff]
    %v7627 = vld [vmem:[#allocation20 + $0x7e8] sm:$0xff]
    %v7628 = vld [vmem:[#allocation20 + $0x7f0] sm:$0xff]
    %v7629 = vld [vmem:[#allocation20 + $0x7f8] sm:$0xff]
    %7630 = vmatprep.subr.mxu0 %v7503
    %7631 = vmatpush1.msra.mxu0 %v7502
    %7632 = vmatprep.subr.mxu0 %v7507
    %7633 = vmatpush1.msra.mxu0 %v7506
    %7634 = vmatprep.subr.mxu0 %v7511
    %7635 = vmatpush1.msra.mxu0 %v7510
    %7636 = vmatprep.subr.mxu0 %v7515
    %7637 = vmatpush1.msra.mxu0 %v7514
    %7638 = vmatprep.subr.mxu0 %v7519
    %7639 = vmatpush1.msra.mxu0 %v7518
    %7640 = vmatprep.subr.mxu0 %v7523
    %7641 = vmatpush1.msra.mxu0 %v7522
    %7642 = vmatprep.subr.mxu0 %v7527
    %7643 = vmatpush1.msra.mxu0 %v7526
    %7644 = vmatprep.subr.mxu0 %v7531
    %7645 = vmatpush1.msra.mxu0 %v7530
    %7646 = vmatprep.subr.mxu0 %v7535
    %7647 = vmatpush1.msra.mxu0 %v7534
    %7648 = vmatprep.subr.mxu0 %v7539
    %7649 = vmatpush1.msra.mxu0 %v7538
    %7650 = vmatprep.subr.mxu0 %v7543
    %7651 = vmatpush1.msra.mxu0 %v7542
    %7652 = vmatprep.subr.mxu0 %v7547
    %7653 = vmatpush1.msra.mxu0 %v7546
    %7654 = vmatprep.subr.mxu0 %v7551
    %7655 = vmatpush1.msra.mxu0 %v7550
    %7656 = vmatprep.subr.mxu0 %v7555
    %7657 = vmatpush1.msra.mxu0 %v7554
    %7658 = vmatprep.subr.mxu0 %v7559
    %7659 = vmatpush1.msra.mxu0 %v7558
    %7660 = vmatprep.subr.mxu0 %v7563
    %7661 = vmatpush1.msra.mxu0 %v7562
    %7662 = vmatprep.subr.mxu0 %v7567
    %7663 = vmatpush1.msra.mxu0 %v7566
    %7664 = vmatprep.subr.mxu0 %v7571
    %7665 = vmatpush1.msra.mxu0 %v7570
    %7666 = vmatprep.subr.mxu0 %v7575
    %7667 = vmatpush1.msra.mxu0 %v7574
    %7668 = vmatprep.subr.mxu0 %v7579
    %7669 = vmatpush1.msra.mxu0 %v7578
    %7670 = vmatprep.subr.mxu0 %v7583
    %7671 = vmatpush1.msra.mxu0 %v7582
    %7672 = vmatprep.subr.mxu0 %v7587
    %7673 = vmatpush1.msra.mxu0 %v7586
    %7674 = vmatprep.subr.mxu0 %v7591
    %7675 = vmatpush1.msra.mxu0 %v7590
    %7676 = vmatprep.subr.mxu0 %v7595
    %7677 = vmatpush1.msra.mxu0 %v7594
    %7678 = vmatprep.subr.mxu0 %v7599
    %7679 = vmatpush1.msra.mxu0 %v7598
    %7680 = vmatprep.subr.mxu0 %v7603
    %7681 = vmatpush1.msra.mxu0 %v7602
    %7682 = vmatprep.subr.mxu0 %v7607
    %7683 = vmatpush1.msra.mxu0 %v7606
    %7684 = vmatprep.subr.mxu0 %v7611
    %7685 = vmatpush1.msra.mxu0 %v7610
    %7686 = vmatprep.subr.mxu0 %v7615
    %7687 = vmatpush1.msra.mxu0 %v7614
    %7688 = vmatprep.subr.mxu0 %v7619
    %7689 = vmatpush1.msra.mxu0 %v7618
    %7690 = vmatprep.subr.mxu0 %v7623
    %7691 = vmatpush1.msra.mxu0 %v7622
    %7692 = vmatprep.subr.mxu0 %v7627
    %7693 = vmatpush1.msra.mxu0 %v7626
    %7694 = vmatprep.mubr.f32.mxu0 %v7373
    %7695 = vmatmul.mubr.f32.gmra.mrb[0].mxu0 %v7372
    %v7696 = vpop.f32.mrb[0].mxu0
    %v7697 = vadd.f32 0.0, %v7696
    %v7698 = vpop.f32.mrb[0].mxu0
    %v7699 = vadd.f32 0.0, %v7698
    %7700 = vdwg.mxu0
    %7701 = vmatprep.subr.mxu0 %v7505
    %7702 = vmatpush1.msra.mxu0 %v7504
    %7703 = vmatprep.subr.mxu0 %v7509
    %7704 = vmatpush1.msra.mxu0 %v7508
    %7705 = vmatprep.subr.mxu0 %v7513
    %7706 = vmatpush1.msra.mxu0 %v7512
    %7707 = vmatprep.subr.mxu0 %v7517
    %7708 = vmatpush1.msra.mxu0 %v7516
    %7709 = vmatprep.subr.mxu0 %v7521
    %7710 = vmatpush1.msra.mxu0 %v7520
    %7711 = vmatprep.subr.mxu0 %v7525
    %7712 = vmatpush1.msra.mxu0 %v7524
    %7713 = vmatprep.subr.mxu0 %v7529
    %7714 = vmatpush1.msra.mxu0 %v7528
    %7715 = vmatprep.subr.mxu0 %v7533
    %7716 = vmatpush1.msra.mxu0 %v7532
    %7717 = vmatprep.subr.mxu0 %v7537
    %7718 = vmatpush1.msra.mxu0 %v7536
    %7719 = vmatprep.subr.mxu0 %v7541
    %7720 = vmatpush1.msra.mxu0 %v7540
    %7721 = vmatprep.subr.mxu0 %v7545
    %7722 = vmatpush1.msra.mxu0 %v7544
    %7723 = vmatprep.subr.mxu0 %v7549
    %7724 = vmatpush1.msra.mxu0 %v7548
    %7725 = vmatprep.subr.mxu0 %v7553
    %7726 = vmatpush1.msra.mxu0 %v7552
    %7727 = vmatprep.subr.mxu0 %v7557
    %7728 = vmatpush1.msra.mxu0 %v7556
    %7729 = vmatprep.subr.mxu0 %v7561
    %7730 = vmatpush1.msra.mxu0 %v7560
    %7731 = vmatprep.subr.mxu0 %v7565
    %7732 = vmatpush1.msra.mxu0 %v7564
    %7733 = vmatprep.subr.mxu0 %v7569
    %7734 = vmatpush1.msra.mxu0 %v7568
    %7735 = vmatprep.subr.mxu0 %v7573
    %7736 = vmatpush1.msra.mxu0 %v7572
    %7737 = vmatprep.subr.mxu0 %v7577
    %7738 = vmatpush1.msra.mxu0 %v7576
    %7739 = vmatprep.subr.mxu0 %v7581
    %7740 = vmatpush1.msra.mxu0 %v7580
    %7741 = vmatprep.subr.mxu0 %v7585
    %7742 = vmatpush1.msra.mxu0 %v7584
    %7743 = vmatprep.subr.mxu0 %v7589
    %7744 = vmatpush1.msra.mxu0 %v7588
    %7745 = vmatprep.subr.mxu0 %v7593
    %7746 = vmatpush1.msra.mxu0 %v7592
    %7747 = vmatprep.subr.mxu0 %v7597
    %7748 = vmatpush1.msra.mxu0 %v7596
    %7749 = vmatprep.subr.mxu0 %v7601
    %7750 = vmatpush1.msra.mxu0 %v7600
    %7751 = vmatprep.subr.mxu0 %v7605
    %7752 = vmatpush1.msra.mxu0 %v7604
    %7753 = vmatprep.subr.mxu0 %v7609
    %7754 = vmatpush1.msra.mxu0 %v7608
    %7755 = vmatprep.subr.mxu0 %v7613
    %7756 = vmatpush1.msra.mxu0 %v7612
    %7757 = vmatprep.subr.mxu0 %v7617
    %7758 = vmatpush1.msra.mxu0 %v7616
    %7759 = vmatprep.subr.mxu0 %v7621
    %7760 = vmatpush1.msra.mxu0 %v7620
    %7761 = vmatprep.subr.mxu0 %v7625
    %7762 = vmatpush1.msra.mxu0 %v7624
    %7763 = vmatprep.subr.mxu0 %v7629
    %7764 = vmatpush1.msra.mxu0 %v7628
    %7765 = vmatprep.mubr.f32.mxu0 %v7373
    %7766 = vmatmul.mubr.f32.gmra.mrb[0].mxu0 %v7372
    %v7767 = vpop.f32.mrb[0].mxu0
    %v7768 = vadd.f32 0.0, %v7767
    %v7769 = vpop.f32.mrb[0].mxu0
    %v7770 = vadd.f32 0.0, %v7769
    %7771 = vdwg.mxu0
    %7772 = vmatprep.subr.mxu0 %v7375
    %7773 = vmatpush1.msra.mxu0 %v7374
    %7774 = vmatprep.subr.mxu0 %v7379
    %7775 = vmatpush1.msra.mxu0 %v7378
    %7776 = vmatprep.subr.mxu0 %v7383
    %7777 = vmatpush1.msra.mxu0 %v7382
    %7778 = vmatprep.subr.mxu0 %v7387
    %7779 = vmatpush1.msra.mxu0 %v7386
    %7780 = vmatprep.subr.mxu0 %v7391
    %7781 = vmatpush1.msra.mxu0 %v7390
    %7782 = vmatprep.subr.mxu0 %v7395
    %7783 = vmatpush1.msra.mxu0 %v7394
    %7784 = vmatprep.subr.mxu0 %v7399
    %7785 = vmatpush1.msra.mxu0 %v7398
    %7786 = vmatprep.subr.mxu0 %v7403
    %7787 = vmatpush1.msra.mxu0 %v7402
    %7788 = vmatprep.subr.mxu0 %v7407
    %7789 = vmatpush1.msra.mxu0 %v7406
    %7790 = vmatprep.subr.mxu0 %v7411
    %7791 = vmatpush1.msra.mxu0 %v7410
    %7792 = vmatprep.subr.mxu0 %v7415
    %7793 = vmatpush1.msra.mxu0 %v7414
    %7794 = vmatprep.subr.mxu0 %v7419
    %7795 = vmatpush1.msra.mxu0 %v7418
    %7796 = vmatprep.subr.mxu0 %v7423
    %7797 = vmatpush1.msra.mxu0 %v7422
    %7798 = vmatprep.subr.mxu0 %v7427
    %7799 = vmatpush1.msra.mxu0 %v7426
    %7800 = vmatprep.subr.mxu0 %v7431
    %7801 = vmatpush1.msra.mxu0 %v7430
    %7802 = vmatprep.subr.mxu0 %v7435
    %7803 = vmatpush1.msra.mxu0 %v7434
    %7804 = vmatprep.subr.mxu0 %v7439
    %7805 = vmatpush1.msra.mxu0 %v7438
    %7806 = vmatprep.subr.mxu0 %v7443
    %7807 = vmatpush1.msra.mxu0 %v7442
    %7808 = vmatprep.subr.mxu0 %v7447
    %7809 = vmatpush1.msra.mxu0 %v7446
    %7810 = vmatprep.subr.mxu0 %v7451
    %7811 = vmatpush1.msra.mxu0 %v7450
    %7812 = vmatprep.subr.mxu0 %v7455
    %7813 = vmatpush1.msra.mxu0 %v7454
    %7814 = vmatprep.subr.mxu0 %v7459
    %7815 = vmatpush1.msra.mxu0 %v7458
    %7816 = vmatprep.subr.mxu0 %v7463
    %7817 = vmatpush1.msra.mxu0 %v7462
    %7818 = vmatprep.subr.mxu0 %v7467
    %7819 = vmatpush1.msra.mxu0 %v7466
    %7820 = vmatprep.subr.mxu0 %v7471
    %7821 = vmatpush1.msra.mxu0 %v7470
    %7822 = vmatprep.subr.mxu0 %v7475
    %7823 = vmatpush1.msra.mxu0 %v7474
    %7824 = vmatprep.subr.mxu0 %v7479
    %7825 = vmatpush1.msra.mxu0 %v7478
    %7826 = vmatprep.subr.mxu0 %v7483
    %7827 = vmatpush1.msra.mxu0 %v7482
    %7828 = vmatprep.subr.mxu0 %v7487
    %7829 = vmatpush1.msra.mxu0 %v7486
    %7830 = vmatprep.subr.mxu0 %v7491
    %7831 = vmatpush1.msra.mxu0 %v7490
    %7832 = vmatprep.subr.mxu0 %v7495
    %7833 = vmatpush1.msra.mxu0 %v7494
    %7834 = vmatprep.subr.mxu0 %v7499
    %7835 = vmatpush1.msra.mxu0 %v7498
    %7836 = vmatprep.mubr.f32.mxu0 %v3747
    %7837 = vmatmul.mubr.f32.gmra.mrb[0].mxu0 %v3746
    %v7838 = vpop.f32.mrb[0].mxu0
    %v7839 = vadd.f32 %v7697, %v7838
    %v7840 = vpop.f32.mrb[0].mxu0
    %v7841 = vadd.f32 %v7699, %v7840
    %7842 = vdwg.mxu0
    %7843 = vmatprep.subr.mxu0 %v7377
    %7844 = vmatpush1.msra.mxu0 %v7376
    %7845 = vmatprep.subr.mxu0 %v7381
    %7846 = vmatpush1.msra.mxu0 %v7380
    %7847 = vmatprep.subr.mxu0 %v7385
    %7848 = vmatpush1.msra.mxu0 %v7384
    %7849 = vmatprep.subr.mxu0 %v7389
    %7850 = vmatpush1.msra.mxu0 %v7388
    %7851 = vmatprep.subr.mxu0 %v7393
    %7852 = vmatpush1.msra.mxu0 %v7392
    %7853 = vmatprep.subr.mxu0 %v7397
    %7854 = vmatpush1.msra.mxu0 %v7396
    %7855 = vmatprep.subr.mxu0 %v7401
    %7856 = vmatpush1.msra.mxu0 %v7400
    %7857 = vmatprep.subr.mxu0 %v7405
    %7858 = vmatpush1.msra.mxu0 %v7404
    %7859 = vmatprep.subr.mxu0 %v7409
    %7860 = vmatpush1.msra.mxu0 %v7408
    %7861 = vmatprep.subr.mxu0 %v7413
    %7862 = vmatpush1.msra.mxu0 %v7412
    %7863 = vmatprep.subr.mxu0 %v7417
    %7864 = vmatpush1.msra.mxu0 %v7416
    %7865 = vmatprep.subr.mxu0 %v7421
    %7866 = vmatpush1.msra.mxu0 %v7420
    %7867 = vmatprep.subr.mxu0 %v7425
    %7868 = vmatpush1.msra.mxu0 %v7424
    %7869 = vmatprep.subr.mxu0 %v7429
    %7870 = vmatpush1.msra.mxu0 %v7428
    %7871 = vmatprep.subr.mxu0 %v7433
    %7872 = vmatpush1.msra.mxu0 %v7432
    %7873 = vmatprep.subr.mxu0 %v7437
    %7874 = vmatpush1.msra.mxu0 %v7436
    %7875 = vmatprep.subr.mxu0 %v7441
    %7876 = vmatpush1.msra.mxu0 %v7440
    %7877 = vmatprep.subr.mxu0 %v7445
    %7878 = vmatpush1.msra.mxu0 %v7444
    %7879 = vmatprep.subr.mxu0 %v7449
    %7880 = vmatpush1.msra.mxu0 %v7448
    %7881 = vmatprep.subr.mxu0 %v7453
    %7882 = vmatpush1.msra.mxu0 %v7452
    %7883 = vmatprep.subr.mxu0 %v7457
    %7884 = vmatpush1.msra.mxu0 %v7456
    %7885 = vmatprep.subr.mxu0 %v7461
    %7886 = vmatpush1.msra.mxu0 %v7460
    %7887 = vmatprep.subr.mxu0 %v7465
    %7888 = vmatpush1.msra.mxu0 %v7464
    %7889 = vmatprep.subr.mxu0 %v7469
    %7890 = vmatpush1.msra.mxu0 %v7468
    %7891 = vmatprep.subr.mxu0 %v7473
    %7892 = vmatpush1.msra.mxu0 %v7472
    %7893 = vmatprep.subr.mxu0 %v7477
    %7894 = vmatpush1.msra.mxu0 %v7476
    %7895 = vmatprep.subr.mxu0 %v7481
    %7896 = vmatpush1.msra.mxu0 %v7480
    %7897 = vmatprep.subr.mxu0 %v7485
    %7898 = vmatpush1.msra.mxu0 %v7484
    %7899 = vmatprep.subr.mxu0 %v7489
    %7900 = vmatpush1.msra.mxu0 %v7488
    %7901 = vmatprep.subr.mxu0 %v7493
    %7902 = vmatpush1.msra.mxu0 %v7492
    %7903 = vmatprep.subr.mxu0 %v7497
    %7904 = vmatpush1.msra.mxu0 %v7496
    %7905 = vmatprep.subr.mxu0 %v7501
    %7906 = vmatpush1.msra.mxu0 %v7500
    %7907 = vmatprep.mubr.f32.mxu0 %v3747
    %7908 = vmatmul.mubr.f32.gmra.mrb[0].mxu0 %v3746
    %v7909 = vpop.f32.mrb[0].mxu0
    %v7910 = vadd.f32 %v7768, %v7909
    %v7911 = vpop.f32.mrb[0].mxu0
    %v7912 = vadd.f32 %v7770, %v7911
    %7913 = vdwg.mxu0
    %v7914 = vld [vmem:[#allocation22] sm:$0xf]
    %v7916 = vlaneseq
    %v7917 = vshrl.u32 %v7916, 7
    %v7918 = vsub.s32 0, %v7917
    %v7919 = vrot.slane %v7914, %v7918
    %v7920 = vlaneseq
    %v7921 = vshrl.u32 %v7920, 7
    %v7922 = vsub.s32 1, %v7921
    %v7923 = vrot.slane %v7914, %v7922
    %v7924 = vlaneseq
    %v7925 = vshrl.u32 %v7924, 7
    %v7926 = vsub.s32 2, %v7925
    %v7927 = vrot.slane %v7914, %v7926
    %v7928 = vlaneseq
    %v7929 = vshrl.u32 %v7928, 7
    %v7930 = vsub.s32 3, %v7929
    %v7931 = vrot.slane %v7914, %v7930
    %v7936 = vadd.f32 %v7839, %v7919
    %v7937 = vadd.f32 %v7841, %v7923
    %v7938 = vadd.f32 %v7910, %v7927
    %v7939 = vadd.f32 %v7912, %v7931
    %v7940 = vmax.f32 %v7936, 0.0
    %v7941 = vmax.f32 %v7937, 0.0
    %v7942 = vmax.f32 %v7938, 0.0
    %v7943 = vmax.f32 %v7939, 0.0
    %v7944 = vld [vmem:[%s15] sm:$0xff]
    %v7945 = vld [vmem:[%s15 + $0x8] sm:$0xff]
    %v7946 = vld [vmem:[%s15 + $0x10] sm:$0xff]
    %v7947 = vld [vmem:[%s15 + $0x18] sm:$0xff]
    %v7948 = vld [vmem:[%s15 + $0x20] sm:$0xff]
    %v7949 = vld [vmem:[%s15 + $0x28] sm:$0xff]
    %v7950 = vld [vmem:[%s15 + $0x30] sm:$0xff]
    %v7951 = vld [vmem:[%s15 + $0x38] sm:$0xff]
    %v7952 = vld [vmem:[%s15 + $0x40] sm:$0xff]
    %v7953 = vld [vmem:[%s15 + $0x48] sm:$0xff]
    %v7954 = vld [vmem:[%s15 + $0x50] sm:$0xff]
    %v7955 = vld [vmem:[%s15 + $0x58] sm:$0xff]
    %v7956 = vld [vmem:[%s15 + $0x60] sm:$0xff]
    %v7957 = vld [vmem:[%s15 + $0x68] sm:$0xff]
    %v7958 = vld [vmem:[%s15 + $0x70] sm:$0xff]
    %v7959 = vld [vmem:[%s15 + $0x78] sm:$0xff]
    %v7960 = vld [vmem:[%s15 + $0x80] sm:$0xff]
    %v7961 = vld [vmem:[%s15 + $0x88] sm:$0xff]
    %v7962 = vld [vmem:[%s15 + $0x90] sm:$0xff]
    %v7963 = vld [vmem:[%s15 + $0x98] sm:$0xff]
    %v7964 = vld [vmem:[%s15 + $0xa0] sm:$0xff]
    %v7965 = vld [vmem:[%s15 + $0xa8] sm:$0xff]
    %v7966 = vld [vmem:[%s15 + $0xb0] sm:$0xff]
    %v7967 = vld [vmem:[%s15 + $0xb8] sm:$0xff]
    %v7968 = vld [vmem:[%s15 + $0xc0] sm:$0xff]
    %v7969 = vld [vmem:[%s15 + $0xc8] sm:$0xff]
    %v7970 = vld [vmem:[%s15 + $0xd0] sm:$0xff]
    %v7971 = vld [vmem:[%s15 + $0xd8] sm:$0xff]
    %v7972 = vld [vmem:[%s15 + $0xe0] sm:$0xff]
    %v7973 = vld [vmem:[%s15 + $0xe8] sm:$0xff]
    %v7974 = vld [vmem:[%s15 + $0xf0] sm:$0xff]
    %v7975 = vld [vmem:[%s15 + $0xf8] sm:$0xff]
    %v7976 = vld [vmem:[%s15 + $0x100] sm:$0xff]
    %v7977 = vld [vmem:[%s15 + $0x108] sm:$0xff]
    %v7978 = vld [vmem:[%s15 + $0x110] sm:$0xff]
    %v7979 = vld [vmem:[%s15 + $0x118] sm:$0xff]
    %v7980 = vld [vmem:[%s15 + $0x120] sm:$0xff]
    %v7981 = vld [vmem:[%s15 + $0x128] sm:$0xff]
    %v7982 = vld [vmem:[%s15 + $0x130] sm:$0xff]
    %v7983 = vld [vmem:[%s15 + $0x138] sm:$0xff]
    %v7984 = vld [vmem:[%s15 + $0x140] sm:$0xff]
    %v7985 = vld [vmem:[%s15 + $0x148] sm:$0xff]
    %v7986 = vld [vmem:[%s15 + $0x150] sm:$0xff]
    %v7987 = vld [vmem:[%s15 + $0x158] sm:$0xff]
    %v7988 = vld [vmem:[%s15 + $0x160] sm:$0xff]
    %v7989 = vld [vmem:[%s15 + $0x168] sm:$0xff]
    %v7990 = vld [vmem:[%s15 + $0x170] sm:$0xff]
    %v7991 = vld [vmem:[%s15 + $0x178] sm:$0xff]
    %v7992 = vld [vmem:[%s15 + $0x180] sm:$0xff]
    %v7993 = vld [vmem:[%s15 + $0x188] sm:$0xff]
    %v7994 = vld [vmem:[%s15 + $0x190] sm:$0xff]
    %v7995 = vld [vmem:[%s15 + $0x198] sm:$0xff]
    %v7996 = vld [vmem:[%s15 + $0x1a0] sm:$0xff]
    %v7997 = vld [vmem:[%s15 + $0x1a8] sm:$0xff]
    %v7998 = vld [vmem:[%s15 + $0x1b0] sm:$0xff]
    %v7999 = vld [vmem:[%s15 + $0x1b8] sm:$0xff]
    %v8000 = vld [vmem:[%s15 + $0x1c0] sm:$0xff]
    %v8001 = vld [vmem:[%s15 + $0x1c8] sm:$0xff]
    %v8002 = vld [vmem:[%s15 + $0x1d0] sm:$0xff]
    %v8003 = vld [vmem:[%s15 + $0x1d8] sm:$0xff]
    %v8004 = vld [vmem:[%s15 + $0x1e0] sm:$0xff]
    %v8005 = vld [vmem:[%s15 + $0x1e8] sm:$0xff]
    %v8006 = vld [vmem:[%s15 + $0x1f0] sm:$0xff]
    %v8007 = vld [vmem:[%s15 + $0x1f8] sm:$0xff]
    %v8008 = vld [vmem:[#allocation2] sm:$0x1]
    %v8010 = vlaneseq
    %v8011 = vshrl.u32 %v8010, 7
    %v8012 = vsub.s32 0, %v8011
    %v8013 = vrot.slane %v8008, %v8012
    %8015 = vmatprep.subr.mxu0 0.0
    %8016 = vmatpush1.msra.mxu0 %v7944
    %8017 = vmatprep.subr.mxu0 0.0
    %8018 = vmatpush1.msra.mxu0 %v7945
    %8019 = vmatprep.subr.mxu0 0.0
    %8020 = vmatpush1.msra.mxu0 %v7946
    %8021 = vmatprep.subr.mxu0 0.0
    %8022 = vmatpush1.msra.mxu0 %v7947
    %8023 = vmatprep.subr.mxu0 0.0
    %8024 = vmatpush1.msra.mxu0 %v7948
    %8025 = vmatprep.subr.mxu0 0.0
    %8026 = vmatpush1.msra.mxu0 %v7949
    %8027 = vmatprep.subr.mxu0 0.0
    %8028 = vmatpush1.msra.mxu0 %v7950
    %8029 = vmatprep.subr.mxu0 0.0
    %8030 = vmatpush1.msra.mxu0 %v7951
    %8031 = vmatprep.subr.mxu0 0.0
    %8032 = vmatpush1.msra.mxu0 %v7952
    %8033 = vmatprep.subr.mxu0 0.0
    %8034 = vmatpush1.msra.mxu0 %v7953
    %8035 = vmatprep.subr.mxu0 0.0
    %8036 = vmatpush1.msra.mxu0 %v7954
    %8037 = vmatprep.subr.mxu0 0.0
    %8038 = vmatpush1.msra.mxu0 %v7955
    %8039 = vmatprep.subr.mxu0 0.0
    %8040 = vmatpush1.msra.mxu0 %v7956
    %8041 = vmatprep.subr.mxu0 0.0
    %8042 = vmatpush1.msra.mxu0 %v7957
    %8043 = vmatprep.subr.mxu0 0.0
    %8044 = vmatpush1.msra.mxu0 %v7958
    %8045 = vmatprep.subr.mxu0 0.0
    %8046 = vmatpush1.msra.mxu0 %v7959
    %8047 = vmatprep.subr.mxu0 0.0
    %8048 = vmatpush1.msra.mxu0 %v7960
    %8049 = vmatprep.subr.mxu0 0.0
    %8050 = vmatpush1.msra.mxu0 %v7961
    %8051 = vmatprep.subr.mxu0 0.0
    %8052 = vmatpush1.msra.mxu0 %v7962
    %8053 = vmatprep.subr.mxu0 0.0
    %8054 = vmatpush1.msra.mxu0 %v7963
    %8055 = vmatprep.subr.mxu0 0.0
    %8056 = vmatpush1.msra.mxu0 %v7964
    %8057 = vmatprep.subr.mxu0 0.0
    %8058 = vmatpush1.msra.mxu0 %v7965
    %8059 = vmatprep.subr.mxu0 0.0
    %8060 = vmatpush1.msra.mxu0 %v7966
    %8061 = vmatprep.subr.mxu0 0.0
    %8062 = vmatpush1.msra.mxu0 %v7967
    %8063 = vmatprep.subr.mxu0 0.0
    %8064 = vmatpush1.msra.mxu0 %v7968
    %8065 = vmatprep.subr.mxu0 0.0
    %8066 = vmatpush1.msra.mxu0 %v7969
    %8067 = vmatprep.subr.mxu0 0.0
    %8068 = vmatpush1.msra.mxu0 %v7970
    %8069 = vmatprep.subr.mxu0 0.0
    %8070 = vmatpush1.msra.mxu0 %v7971
    %8071 = vmatprep.subr.mxu0 0.0
    %8072 = vmatpush1.msra.mxu0 %v7972
    %8073 = vmatprep.subr.mxu0 0.0
    %8074 = vmatpush1.msra.mxu0 %v7973
    %8075 = vmatprep.subr.mxu0 0.0
    %8076 = vmatpush1.msra.mxu0 %v7974
    %8077 = vmatprep.subr.mxu0 0.0
    %8078 = vmatpush1.msra.mxu0 %v7975
    %8079 = vmatprep.mubr.f32.mxu0 %v7941
    %8080 = vmatmul.mubr.f32.gmra.mrb[0].mxu0 %v7940
    %v8081 = vpop.f32.mrb[0].mxu0
    %v8082 = vadd.f32 %v8013, %v8081
    %v8083 = vpop.f32.mrb[0].mxu0
    %8084 = vdwg.mxu0
    %8085 = vmatprep.subr.mxu0 0.0
    %8086 = vmatpush1.msra.mxu0 %v7976
    %8087 = vmatprep.subr.mxu0 0.0
    %8088 = vmatpush1.msra.mxu0 %v7977
    %8089 = vmatprep.subr.mxu0 0.0
    %8090 = vmatpush1.msra.mxu0 %v7978
    %8091 = vmatprep.subr.mxu0 0.0
    %8092 = vmatpush1.msra.mxu0 %v7979
    %8093 = vmatprep.subr.mxu0 0.0
    %8094 = vmatpush1.msra.mxu0 %v7980
    %8095 = vmatprep.subr.mxu0 0.0
    %8096 = vmatpush1.msra.mxu0 %v7981
    %8097 = vmatprep.subr.mxu0 0.0
    %8098 = vmatpush1.msra.mxu0 %v7982
    %8099 = vmatprep.subr.mxu0 0.0
    %8100 = vmatpush1.msra.mxu0 %v7983
    %8101 = vmatprep.subr.mxu0 0.0
    %8102 = vmatpush1.msra.mxu0 %v7984
    %8103 = vmatprep.subr.mxu0 0.0
    %8104 = vmatpush1.msra.mxu0 %v7985
    %8105 = vmatprep.subr.mxu0 0.0
    %8106 = vmatpush1.msra.mxu0 %v7986
    %8107 = vmatprep.subr.mxu0 0.0
    %8108 = vmatpush1.msra.mxu0 %v7987
    %8109 = vmatprep.subr.mxu0 0.0
    %8110 = vmatpush1.msra.mxu0 %v7988
    %8111 = vmatprep.subr.mxu0 0.0
    %8112 = vmatpush1.msra.mxu0 %v7989
    %8113 = vmatprep.subr.mxu0 0.0
    %8114 = vmatpush1.msra.mxu0 %v7990
    %8115 = vmatprep.subr.mxu0 0.0
    %8116 = vmatpush1.msra.mxu0 %v7991
    %8117 = vmatprep.subr.mxu0 0.0
    %8118 = vmatpush1.msra.mxu0 %v7992
    %8119 = vmatprep.subr.mxu0 0.0
    %8120 = vmatpush1.msra.mxu0 %v7993
    %8121 = vmatprep.subr.mxu0 0.0
    %8122 = vmatpush1.msra.mxu0 %v7994
    %8123 = vmatprep.subr.mxu0 0.0
    %8124 = vmatpush1.msra.mxu0 %v7995
    %8125 = vmatprep.subr.mxu0 0.0
    %8126 = vmatpush1.msra.mxu0 %v7996
    %8127 = vmatprep.subr.mxu0 0.0
    %8128 = vmatpush1.msra.mxu0 %v7997
    %8129 = vmatprep.subr.mxu0 0.0
    %8130 = vmatpush1.msra.mxu0 %v7998
    %8131 = vmatprep.subr.mxu0 0.0
    %8132 = vmatpush1.msra.mxu0 %v7999
    %8133 = vmatprep.subr.mxu0 0.0
    %8134 = vmatpush1.msra.mxu0 %v8000
    %8135 = vmatprep.subr.mxu0 0.0
    %8136 = vmatpush1.msra.mxu0 %v8001
    %8137 = vmatprep.subr.mxu0 0.0
    %8138 = vmatpush1.msra.mxu0 %v8002
    %8139 = vmatprep.subr.mxu0 0.0
    %8140 = vmatpush1.msra.mxu0 %v8003
    %8141 = vmatprep.subr.mxu0 0.0
    %8142 = vmatpush1.msra.mxu0 %v8004
    %8143 = vmatprep.subr.mxu0 0.0
    %8144 = vmatpush1.msra.mxu0 %v8005
    %8145 = vmatprep.subr.mxu0 0.0
    %8146 = vmatpush1.msra.mxu0 %v8006
    %8147 = vmatprep.subr.mxu0 0.0
    %8148 = vmatpush1.msra.mxu0 %v8007
    %8149 = vmatprep.mubr.f32.mxu0 %v7943
    %8150 = vmatmul.mubr.f32.gmra.mrb[0].mxu0 %v7942
    %v8151 = vpop.f32.mrb[0].mxu0
    %v8152 = vadd.f32 %v8082, %v8151
    %v8153 = vpop.f32.mrb[0].mxu0
    %8154 = vdwg.mxu0
    %vm8155 = vcmask 1024
    %8156 = vst.msk [vmem:[%s17] sm:$0x3] %vm8155, %v8152
    // Predicated region
    $region122: #{earthquake_rnncnn_forward.1} parent=1 // pred_check
      _
    $region123: #{earthquake_rnncnn_forward.1} parent=1 // pred_check_branch
      %8158 = sbr.rel (0) target = $region125
    $region124: #{earthquake_rnncnn_forward.1} parent=1 // pred_region
      _
    $region125: #{earthquake_rnncnn_forward.1} parent=1 // pred_fallthru
      _
    // Predicated region
    $region126: #{earthquake_rnncnn_forward.1} parent=1 // pred_check
      _
    $region127: #{earthquake_rnncnn_forward.1} parent=1 // pred_check_branch
      %8160 = sbr.rel (0) target = $region129
    $region128: #{earthquake_rnncnn_forward.1} parent=1 // pred_region
      _
    $region129: #{earthquake_rnncnn_forward.1} parent=1 // pred_fallthru
      _
    %8161 = vsyncpa [#allocation4], 1
    %8162 = vsyncpa [#allocation6], 1
    %8163 = vsyncpa [#allocation9], 1
    %8164 = vsyncpa [#allocation12], 1
    %8165 = vsyncpa [#allocation15], 1
    %8166 = vsyncpa [#allocation18], 1
    %8167 = vsyncpa [#allocation21], 1

</llo_original>
